<compile_context>
chip_gen: v7x
topology: tpu7x:2x2x1
jax: 0.10.0
libtpu: 0.0.40
codegen_flags: <defaults>
</compile_context>

<pallas_src>
import math
import jax
import jax.numpy as jnp
from jax.experimental import pallas as pl
from jax.experimental.pallas import tpu as pltpu

# -------------------- model hyper-parameters (small, synthetic) ---------------
EMBED = 32
HEADS = 4
HEAD_DIM = EMBED // HEADS
FF_DIM = 64
NUM_LAYERS = 2
MAX_LEN = 8                 # max_length (and our seq length)
MAX_POS = 32                # max_position_embeddings hard-coded in TransformerBlockDeberta
VOCAB = 50
PAD_IDX = 0
CLS_HIDDEN = 16
NUM_CLASSES = 3

VEC_W = 3 * EMBED           # packed bias/LN row width (>= 3E, >= FF_DIM, >= E)
NEG_BIAS = -1e9             # finite additive mask bias (same softmax result as -inf)

assert EMBED % HEADS == 0
assert VEC_W >= FF_DIM and VEC_W >= EMBED


# ------------------------------ kernel helpers --------------------------------
def _layer_norm(x, gamma, beta, eps=1e-5):
    mu = jnp.mean(x, axis=-1, keepdims=True)
    var = jnp.mean((x - mu) ** 2, axis=-1, keepdims=True)
    return (x - mu) * jax.lax.rsqrt(var + eps) * gamma + beta


def _make_fused_kernel(N, S, E, H, D, FF, L, C):
    NS = N * S

    def kernel(x_ref, bias_ref, kp_ref,
               wqkv_ref, wfc_ref, wf1_ref, wf2_ref, vec_ref,
               wc1_ref, bc1_ref, wc2_ref, bc2_ref,
               logits_ref, attn_ref):
        x = x_ref[...]                        # (N*S, E) current activations
        bias = bias_ref[...]                  # (N, 1, S) additive mask (0 / -1e9)

        for l in range(L):                    # static unroll over layers
            vec = vec_ref[l]                  # (8, VEC_W) packed biases + LN params
            bqkv = vec[0:1, :3 * E]
            bfc = vec[1:2, :E]
            bf1 = vec[2:3, :FF]
            bf2 = vec[3:4, :E]
            g1, be1 = vec[4:5, :E], vec[5:6, :E]
            g2, be2 = vec[6:7, :E], vec[7:8, :E]

            # fused Q / K-content / V projection (Q columns pre-scaled by 1/sqrt(E))
            qkv = jnp.dot(x, wqkv_ref[l], preferred_element_type=jnp.float32) + bqkv
            q3 = qkv[:, 0 * E:1 * E].reshape(N, S, E)
            k3 = qkv[:, 1 * E:2 * E].reshape(N, S, E)
            v3 = qkv[:, 2 * E:3 * E].reshape(N, S, E)

            # fc_out projection accumulated across heads in registers
            # (replaces the old o_sc scratch + masked lane stores + reload).
            ctx = jnp.zeros((NS, E), jnp.float32)

            for h in range(H):                # static unroll over heads (batched over N)
                sl = slice(h * D, (h + 1) * D)
                qh, kh, vh = q3[:, :, sl], k3[:, :, sl], v3[:, :, sl]
                kph = kp_ref[l, h]            # (S, S, D): leading-dim index, no lane slice

                # content scores (MXU): einsum('nqhd,nkhd->nhqk') for this head
                sc = jnp.einsum('nqd,nkd->nqk', qh, kh,
                                preferred_element_type=jnp.float32)      # (N,S,S)
                # disentangled position scores (query-dependent, tiny D=8 reduce)
                sp = jnp.sum(qh[:, :, None, :] * kph[None, :, :, :], axis=-1)

                # 1/sqrt(E) already folded into q; mask is additive (-1e9 ~ -inf)
                s = sc + sp + bias
                m = jnp.max(s, axis=-1, keepdims=True)
                e = jnp.exp(s - m)
                a = e / jnp.sum(e, axis=-1, keepdims=True)   # exact softmax (exported)

                # store attention directly in the final (L, N, H, S, S) layout;
                # per-n leading-int stores (N is tiny) avoid any wrapper relayout.
                for n in range(N):
                    attn_ref[l, n, h] = a[n]

                # attention * V, then straight through this head's (D, E) slice
                # of fc_out, accumulated in registers.
                o_h = jnp.einsum('nqk,nkd->nqd', a, vh,
                                 preferred_element_type=jnp.float32)     # (N,S,D)
                ctx = ctx + jnp.dot(o_h.reshape(NS, D), wfc_ref[l, h],
                                    preferred_element_type=jnp.float32)  # (NS,E)

            o = ctx + bfc

            # x = dropout(norm1(attn_out + query))   (dropout = identity, eval mode)
            y = _layer_norm(o + x, g1, be1)
            f = jnp.dot(y, wf1_ref[l], preferred_element_type=jnp.float32) + bf1
            f = jnp.maximum(f, 0.0)
            f = jnp.dot(f, wf2_ref[l], preferred_element_type=jnp.float32) + bf2
            # out = dropout(norm2(ff + x))
            x = _layer_norm(f + y, g2, be2)

        # classification head: (unmasked) mean over sequence, two linears
        pooled = jnp.mean(x.reshape(N, S, E), axis=1)                    # (N, E)
        hcls = jnp.dot(pooled, wc1_ref[...],
                       preferred_element_type=jnp.float32) + bc1_ref[...]
        logits_ref[...] = jnp.dot(hcls, wc2_ref[...],
                                  preferred_element_type=jnp.float32) + bc2_ref[...]

    return kernel


# ------------------------------- plain-JAX glue --------------------------------
def positional_encoding(d_model, max_len):
    even_i = jnp.arange(0, d_model, 2, dtype=jnp.float32)
    denominator = jnp.power(10000.0, even_i / d_model)
    position = jnp.arange(max_len, dtype=jnp.float32).reshape(max_len, 1)
    even_pe = jnp.sin(position / denominator)
    odd_pe = jnp.cos(position / denominator)
    stacked = jnp.stack([even_pe, odd_pe], axis=2)
    return stacked.reshape(max_len, d_model)


def init_params(key):
    keys = iter(jax.random.split(key, 64))

    def lin(in_f, out_f):
        w = jax.random.normal(next(keys), (in_f, out_f), jnp.float32) * 0.08
        b = jax.random.normal(next(keys), (1, out_f), jnp.float32) * 0.02
        return w, b

    params = {'word_emb': jax.random.normal(next(keys), (VOCAB, EMBED), jnp.float32) * 0.1}
    layers = []
    for _ in range(NUM_LAYERS):
        p = {}
        p['wq'], p['bq'] = lin(EMBED, EMBED)
        p['wkc'], p['bkc'] = lin(EMBED, EMBED)
        p['wkp'], p['bkp'] = lin(EMBED, EMBED)
        p['wv'], p['bv'] = lin(EMBED, EMBED)
        p['wfc'], p['bfc'] = lin(EMBED, EMBED)        # fc_out
        p['g1'] = jnp.ones((1, EMBED), jnp.float32)
        p['beta1'] = jnp.zeros((1, EMBED), jnp.float32)
        p['g2'] = jnp.ones((1, EMBED), jnp.float32)
        p['beta2'] = jnp.zeros((1, EMBED), jnp.float32)
        p['wf1'], p['bf1'] = lin(EMBED, FF_DIM)
        p['wf2'], p['bf2'] = lin(FF_DIM, EMBED)
        p['pos_table'] = jax.random.normal(next(keys), (2 * MAX_POS, EMBED), jnp.float32) * 0.1
        layers.append(p)
    params['layers'] = layers
    params['wc1'], params['bc1'] = lin(EMBED, CLS_HIDDEN)
    params['wc2'], params['bc2'] = lin(CLS_HIDDEN, NUM_CLASSES)
    return params


def _pack_layer_params(params):
    """Stack per-layer matrices per category; pack biases/LN into one buffer.

    The 1/sqrt(E) attention scale is folded into the Q weight/bias columns here
    (wrapper glue on weights, done once), so the kernel never scales scores.
    fc_out is pre-split per head into (L, H, D, E) so the kernel can accumulate
    the output projection head-by-head without a scratch slab.
    """
    layers = params['layers']
    scale = 1.0 / math.sqrt(EMBED)
    wqkv = jnp.stack([jnp.concatenate([p['wq'] * scale, p['wkc'], p['wv']], axis=1)
                      for p in layers])                                   # (L, E, 3E)
    wfc = jnp.stack([p['wfc'].reshape(HEADS, HEAD_DIM, EMBED) for p in layers])  # (L,H,D,E)
    wf1 = jnp.stack([p['wf1'] for p in layers])
    wf2 = jnp.stack([p['wf2'] for p in layers])

    def row(v):
        return jnp.pad(v, ((0, 0), (0, VEC_W - v.shape[1])))

    vecs = []
    for p in layers:
        rows = [jnp.concatenate([p['bq'] * scale, p['bkc'], p['bv']], axis=1),  # (1, 3E)
                row(p['bfc']), row(p['bf1']), row(p['bf2']),
                row(p['g1']), row(p['beta1']), row(p['g2']), row(p['beta2'])]
        vecs.append(jnp.concatenate(rows, axis=0))                        # (8, VEC_W)
    vec = jnp.stack(vecs)                                                 # (L, 8, VEC_W)
    return wqkv, wfc, wf1, wf2, vec


def _rel_pos_keys(params, S):
    """Query-independent relative-position key projection, pre-split per head."""
    pos = jnp.arange(S)
    rel = pos[None, :] - pos[:, None] + MAX_POS          # (S, S) relative positions
    kps = []
    for p in params['layers']:
        pe = p['pos_table'][rel]                         # (S, S, E) embedding gather (glue)
        kp = jnp.dot(pe, p['wkp']) + p['bkp']            # (S, S, E)
        kp = kp.reshape(S, S, HEADS, HEAD_DIM)
        kps.append(jnp.transpose(kp, (2, 0, 1, 3)))      # (H, S, S, D)
    return jnp.stack(kps)                                # (L, H, S, S, D)


@jax.jit
def forward(tokens, params):
    N, S = tokens.shape
    E, H, D, FF, L, C = EMBED, HEADS, HEAD_DIM, FF_DIM, NUM_LAYERS, NUM_CLASSES

    # make_src_mask -> additive bias (0 keep / -1e9 pad), broadcast over heads & queries
    mask_bias = jnp.where(tokens == PAD_IDX, NEG_BIAS, 0.0).astype(jnp.float32).reshape(N, 1, S)
    pos_enc = positional_encoding(E, MAX_LEN)[:S]
    x = (params['word_emb'][tokens] + pos_enc[None, :, :]).reshape(N * S, E)
    # TODO(synk): nn.Dropout is identity in eval mode; training-mode dropout not implemented.

    kp = _rel_pos_keys(params, S)
    wqkv, wfc, wf1, wf2, vec = _pack_layer_params(params)

    kernel = _make_fused_kernel(N, S, E, H, D, FF, L, C)
    vspec = pl.BlockSpec(memory_space=pltpu.MemorySpace.VMEM)
    logits, attn = pl.pallas_call(
        kernel,
        out_shape=(jax.ShapeDtypeStruct((N, C), jnp.float32),
                   jax.ShapeDtypeStruct((L, N, H, S, S), jnp.float32)),
        in_specs=[vspec] * 12,
        out_specs=(vspec, vspec),
    )(x, mask_bias, kp, wqkv, wfc, wf1, wf2, vec,
      params['wc1'], params['bc1'], params['wc2'], params['bc2'])

    # per-layer attention matrices already in PyTorch layout (N, H, S, S)
    attention_matrices = [attn[l] for l in range(L)]
    return logits, attention_matrices


if __name__ == "__main__":
    key = jax.random.PRNGKey(0)
    pkey, tkey = jax.random.split(key)
    params = init_params(pkey)

    N, S = 2, MAX_LEN
    tokens = jax.random.randint(tkey, (N, S), 1, VOCAB)
    tokens = tokens.at[0, -1].set(PAD_IDX)     # exercise the padding mask

    logits, attn_mats = forward(tokens, params)
    logits = jax.block_until_ready(logits)
    attn_mats = [jax.block_until_ready(a) for a in attn_mats]

    assert logits.shape == (N, NUM_CLASSES)
    assert all(a.shape == (N, HEADS, S, S) for a in attn_mats)
    print("KERNEL_OK")
</pallas_src>

<mosaic_0001>
module attributes {stable_mosaic.version = 11 : i64} {
  func.func @kernel(%arg0: memref<16x32xf32, #tpu.memory_space<vmem>>, %arg1: memref<2x1x8xf32, #tpu.memory_space<vmem>>, %arg2: memref<2x4x8x8x8xf32, #tpu.memory_space<vmem>>, %arg3: memref<2x32x96xf32, #tpu.memory_space<vmem>>, %arg4: memref<2x4x8x32xf32, #tpu.memory_space<vmem>>, %arg5: memref<2x32x64xf32, #tpu.memory_space<vmem>>, %arg6: memref<2x64x32xf32, #tpu.memory_space<vmem>>, %arg7: memref<2x8x96xf32, #tpu.memory_space<vmem>>, %arg8: memref<32x16xf32, #tpu.memory_space<vmem>>, %arg9: memref<1x16xf32, #tpu.memory_space<vmem>>, %arg10: memref<16x3xf32, #tpu.memory_space<vmem>>, %arg11: memref<1x3xf32, #tpu.memory_space<vmem>>, %arg12: memref<2x3xf32, #tpu.memory_space<vmem>>, %arg13: memref<2x2x4x8x8xf32, #tpu.memory_space<vmem>>) attributes {dimension_semantics = [], scalar_prefetch = 0 : i64, scratch_operands = 0 : i64, tpu.core_type = #tpu.core_type<tc>} {
    %c0 = arith.constant 0 : index
    %c0_0 = arith.constant 0 : index
    %0 = vector.load %arg0[%c0, %c0_0] : memref<16x32xf32, #tpu.memory_space<vmem>>, vector<16x32xf32>
    %c0_1 = arith.constant 0 : index
    %c0_2 = arith.constant 0 : index
    %c0_3 = arith.constant 0 : index
    %1 = vector.load %arg1[%c0_1, %c0_2, %c0_3] : memref<2x1x8xf32, #tpu.memory_space<vmem>>, vector<2x1x8xf32>
    %c0_4 = arith.constant 0 : index
    %c0_5 = arith.constant 0 : index
    %c0_6 = arith.constant 0 : index
    %2 = vector.load %arg7[%c0_4, %c0_5, %c0_6] : memref<2x8x96xf32, #tpu.memory_space<vmem>>, vector<1x8x96xf32>
    %3 = vector.shape_cast %2 : vector<1x8x96xf32> to vector<8x96xf32>
    %4 = vector.extract_strided_slice %3 {offsets = [0, 0], sizes = [1, 96], strides = [1, 1]} : vector<8x96xf32> to vector<1x96xf32>
    %5 = vector.extract_strided_slice %3 {offsets = [1, 0], sizes = [1, 32], strides = [1, 1]} : vector<8x96xf32> to vector<1x32xf32>
    %6 = vector.extract_strided_slice %3 {offsets = [2, 0], sizes = [1, 64], strides = [1, 1]} : vector<8x96xf32> to vector<1x64xf32>
    %7 = vector.extract_strided_slice %3 {offsets = [3, 0], sizes = [1, 32], strides = [1, 1]} : vector<8x96xf32> to vector<1x32xf32>
    %8 = vector.extract_strided_slice %3 {offsets = [4, 0], sizes = [1, 32], strides = [1, 1]} : vector<8x96xf32> to vector<1x32xf32>
    %9 = vector.extract_strided_slice %3 {offsets = [5, 0], sizes = [1, 32], strides = [1, 1]} : vector<8x96xf32> to vector<1x32xf32>
    %10 = vector.extract_strided_slice %3 {offsets = [6, 0], sizes = [1, 32], strides = [1, 1]} : vector<8x96xf32> to vector<1x32xf32>
    %11 = vector.extract_strided_slice %3 {offsets = [7, 0], sizes = [1, 32], strides = [1, 1]} : vector<8x96xf32> to vector<1x32xf32>
    %c0_7 = arith.constant 0 : index
    %c0_8 = arith.constant 0 : index
    %c0_9 = arith.constant 0 : index
    %12 = vector.load %arg3[%c0_7, %c0_8, %c0_9] : memref<2x32x96xf32, #tpu.memory_space<vmem>>, vector<1x32x96xf32>
    %13 = vector.shape_cast %12 : vector<1x32x96xf32> to vector<32x96xf32>
    %cst = arith.constant dense<0.000000e+00> : vector<16x96xf32>
    %14 = tpu.matmul %0, %13, %cst {dimension_numbers = #tpu.dot_dimension_numbers<[1], [0], [0], [1], [0, 0, 1, 1], [], []>} : vector<16x32xf32>, vector<32x96xf32>, vector<16x96xf32> -> vector<16x96xf32>
    %15 = vector.broadcast %4 : vector<1x96xf32> to vector<16x96xf32>
    %16 = arith.addf %14, %15 : vector<16x96xf32>
    %17 = vector.extract_strided_slice %16 {offsets = [0, 0], sizes = [16, 32], strides = [1, 1]} : vector<16x96xf32> to vector<16x32xf32>
    %18 = vector.shape_cast %17 : vector<16x32xf32> to vector<2x8x32xf32>
    %19 = vector.extract_strided_slice %16 {offsets = [0, 32], sizes = [16, 32], strides = [1, 1]} : vector<16x96xf32> to vector<16x32xf32>
    %20 = vector.shape_cast %19 : vector<16x32xf32> to vector<2x8x32xf32>
    %21 = vector.extract_strided_slice %16 {offsets = [0, 64], sizes = [16, 32], strides = [1, 1]} : vector<16x96xf32> to vector<16x32xf32>
    %22 = vector.shape_cast %21 : vector<16x32xf32> to vector<2x8x32xf32>
    %cst_10 = arith.constant 0.000000e+00 : f32
    %23 = vector.broadcast %cst_10 : f32 to vector<16x32xf32>
    %24 = vector.extract_strided_slice %18 {offsets = [0, 0, 0], sizes = [2, 8, 8], strides = [1, 1, 1]} : vector<2x8x32xf32> to vector<2x8x8xf32>
    %25 = vector.extract_strided_slice %20 {offsets = [0, 0, 0], sizes = [2, 8, 8], strides = [1, 1, 1]} : vector<2x8x32xf32> to vector<2x8x8xf32>
    %26 = vector.extract_strided_slice %22 {offsets = [0, 0, 0], sizes = [2, 8, 8], strides = [1, 1, 1]} : vector<2x8x32xf32> to vector<2x8x8xf32>
    %c0_11 = arith.constant 0 : index
    %c0_12 = arith.constant 0 : index
    %c0_13 = arith.constant 0 : index
    %c0_14 = arith.constant 0 : index
    %c0_15 = arith.constant 0 : index
    %27 = vector.load %arg2[%c0_11, %c0_12, %c0_13, %c0_14, %c0_15] : memref<2x4x8x8x8xf32, #tpu.memory_space<vmem>>, vector<1x1x8x8x8xf32>
    %28 = vector.shape_cast %27 : vector<1x1x8x8x8xf32> to vector<8x8x8xf32>
    "tpu.trace_start"() <{level = 10 : i32, message = "nqd,nkd->nqk"}> : () -> ()
    %cst_16 = arith.constant dense<0.000000e+00> : vector<2x8x8xf32>
    %29 = tpu.matmul %24, %25, %cst_16 {dimension_numbers = #tpu.dot_dimension_numbers<[2], [2], [1], [1], [0, 0, 0, 1, 1, 1], [0], [0]>} : vector<2x8x8xf32>, vector<2x8x8xf32>, vector<2x8x8xf32> -> vector<2x8x8xf32>
    "tpu.trace_stop"() : () -> ()
    %30 = vector.shape_cast %24 : vector<2x8x8xf32> to vector<2x8x1x8xf32>
    %31 = vector.shape_cast %28 : vector<8x8x8xf32> to vector<1x8x8x8xf32>
    %32 = vector.broadcast %30 : vector<2x8x1x8xf32> to vector<2x8x8x8xf32>
    %33 = vector.broadcast %31 : vector<1x8x8x8xf32> to vector<2x8x8x8xf32>
    %34 = arith.mulf %32, %33 : vector<2x8x8x8xf32>
    %cst_17 = arith.constant dense<0.000000e+00> : vector<2x8x8xf32>
    %35 = vector.multi_reduction <add>, %34, %cst_17 [3] : vector<2x8x8x8xf32> to vector<2x8x8xf32>
    %36 = arith.addf %29, %35 : vector<2x8x8xf32>
    %37 = vector.broadcast %1 : vector<2x1x8xf32> to vector<2x8x8xf32>
    %38 = arith.addf %36, %37 : vector<2x8x8xf32>
    %cst_18 = arith.constant dense<0xFF800000> : vector<2x8xf32>
    %39 = vector.multi_reduction <maximumf>, %38, %cst_18 [2] : vector<2x8x8xf32> to vector<2x8xf32>
    %40 = vector.shape_cast %39 : vector<2x8xf32> to vector<2x8x1xf32>
    %41 = vector.broadcast %40 : vector<2x8x1xf32> to vector<2x8x8xf32>
    %42 = arith.subf %38, %41 : vector<2x8x8xf32>
    %43 = math.exp %42 : vector<2x8x8xf32>
    %cst_19 = arith.constant dense<0.000000e+00> : vector<2x8xf32>
    %44 = vector.multi_reduction <add>, %43, %cst_19 [2] : vector<2x8x8xf32> to vector<2x8xf32>
    %45 = vector.shape_cast %44 : vector<2x8xf32> to vector<2x8x1xf32>
    %46 = vector.broadcast %45 : vector<2x8x1xf32> to vector<2x8x8xf32>
    %47 = arith.divf %43, %46 : vector<2x8x8xf32>
    %48 = vector.extract_strided_slice %47 {offsets = [0, 0, 0], sizes = [1, 8, 8], strides = [1, 1, 1]} : vector<2x8x8xf32> to vector<1x8x8xf32>
    %49 = vector.shape_cast %48 : vector<1x8x8xf32> to vector<8x8xf32>
    %c0_20 = arith.constant 0 : index
    %c0_21 = arith.constant 0 : index
    %c0_22 = arith.constant 0 : index
    %c0_23 = arith.constant 0 : index
    %c0_24 = arith.constant 0 : index
    %50 = vector.load %arg13[%c0_20, %c0_21, %c0_22, %c0_23, %c0_24] : memref<2x2x4x8x8xf32, #tpu.memory_space<vmem>>, vector<1x1x1x8x8xf32>
    %51 = vector.shape_cast %50 : vector<1x1x1x8x8xf32> to vector<8x8xf32>
    %52 = vector.shape_cast %49 : vector<8x8xf32> to vector<1x1x1x8x8xf32>
    tpu.vector_store %arg13[%c0_20, %c0_21, %c0_22, %c0_23, %c0_24], %52 {strides = array<i32>} : memref<2x2x4x8x8xf32, #tpu.memory_space<vmem>>, vector<1x1x1x8x8xf32>,
    %53 = vector.extract_strided_slice %47 {offsets = [1, 0, 0], sizes = [1, 8, 8], strides = [1, 1, 1]} : vector<2x8x8xf32> to vector<1x8x8xf32>
    %54 = vector.shape_cast %53 : vector<1x8x8xf32> to vector<8x8xf32>
    %c0_25 = arith.constant 0 : index
    %c1 = arith.constant 1 : index
    %c0_26 = arith.constant 0 : index
    %c0_27 = arith.constant 0 : index
    %c0_28 = arith.constant 0 : index
    %55 = vector.load %arg13[%c0_25, %c1, %c0_26, %c0_27, %c0_28] : memref<2x2x4x8x8xf32, #tpu.memory_space<vmem>>, vector<1x1x1x8x8xf32>
    %56 = vector.shape_cast %55 : vector<1x1x1x8x8xf32> to vector<8x8xf32>
    %57 = vector.shape_cast %54 : vector<8x8xf32> to vector<1x1x1x8x8xf32>
    tpu.vector_store %arg13[%c0_25, %c1, %c0_26, %c0_27, %c0_28], %57 {strides = array<i32>} : memref<2x2x4x8x8xf32, #tpu.memory_space<vmem>>, vector<1x1x1x8x8xf32>,
    "tpu.trace_start"() <{level = 10 : i32, message = "nqk,nkd->nqd"}> : () -> ()
    %cst_29 = arith.constant dense<0.000000e+00> : vector<2x8x8xf32>
    %58 = tpu.matmul %47, %26, %cst_29 {dimension_numbers = #tpu.dot_dimension_numbers<[2], [1], [1], [2], [0, 0, 0, 1, 1, 2], [0], [0]>} : vector<2x8x8xf32>, vector<2x8x8xf32>, vector<2x8x8xf32> -> vector<2x8x8xf32>
    "tpu.trace_stop"() : () -> ()
    %59 = vector.shape_cast %58 : vector<2x8x8xf32> to vector<16x8xf32>
    %c0_30 = arith.constant 0 : index
    %c0_31 = arith.constant 0 : index
    %c0_32 = arith.constant 0 : index
    %c0_33 = arith.constant 0 : index
    %60 = vector.load %arg4[%c0_30, %c0_31, %c0_32, %c0_33] : memref<2x4x8x32xf32, #tpu.memory_space<vmem>>, vector<1x1x8x32xf32>
    %61 = vector.shape_cast %60 : vector<1x1x8x32xf32> to vector<8x32xf32>
    %cst_34 = arith.constant dense<0.000000e+00> : vector<16x32xf32>
    %62 = tpu.matmul %59, %61, %cst_34 {dimension_numbers = #tpu.dot_dimension_numbers<[1], [0], [0], [1], [0, 0, 1, 1], [], []>} : vector<16x8xf32>, vector<8x32xf32>, vector<16x32xf32> -> vector<16x32xf32>
    %63 = arith.addf %23, %62 : vector<16x32xf32>
    %64 = vector.extract_strided_slice %18 {offsets = [0, 0, 8], sizes = [2, 8, 8], strides = [1, 1, 1]} : vector<2x8x32xf32> to vector<2x8x8xf32>
    %65 = vector.extract_strided_slice %20 {offsets = [0, 0, 8], sizes = [2, 8, 8], strides = [1, 1, 1]} : vector<2x8x32xf32> to vector<2x8x8xf32>
    %66 = vector.extract_strided_slice %22 {offsets = [0, 0, 8], sizes = [2, 8, 8], strides = [1, 1, 1]} : vector<2x8x32xf32> to vector<2x8x8xf32>
    %c0_35 = arith.constant 0 : index
    %c1_36 = arith.constant 1 : index
    %c0_37 = arith.constant 0 : index
    %c0_38 = arith.constant 0 : index
    %c0_39 = arith.constant 0 : index
    %67 = vector.load %arg2[%c0_35, %c1_36, %c0_37, %c0_38, %c0_39] : memref<2x4x8x8x8xf32, #tpu.memory_space<vmem>>, vector<1x1x8x8x8xf32>
    %68 = vector.shape_cast %67 : vector<1x1x8x8x8xf32> to vector<8x8x8xf32>
    "tpu.trace_start"() <{level = 10 : i32, message = "nqd,nkd->nqk"}> : () -> ()
    %cst_40 = arith.constant dense<0.000000e+00> : vector<2x8x8xf32>
    %69 = tpu.matmul %64, %65, %cst_40 {dimension_numbers = #tpu.dot_dimension_numbers<[2], [2], [1], [1], [0, 0, 0, 1, 1, 1], [0], [0]>} : vector<2x8x8xf32>, vector<2x8x8xf32>, vector<2x8x8xf32> -> vector<2x8x8xf32>
    "tpu.trace_stop"() : () -> ()
    %70 = vector.shape_cast %64 : vector<2x8x8xf32> to vector<2x8x1x8xf32>
    %71 = vector.shape_cast %68 : vector<8x8x8xf32> to vector<1x8x8x8xf32>
    %72 = vector.broadcast %70 : vector<2x8x1x8xf32> to vector<2x8x8x8xf32>
    %73 = vector.broadcast %71 : vector<1x8x8x8xf32> to vector<2x8x8x8xf32>
    %74 = arith.mulf %72, %73 : vector<2x8x8x8xf32>
    %cst_41 = arith.constant dense<0.000000e+00> : vector<2x8x8xf32>
    %75 = vector.multi_reduction <add>, %74, %cst_41 [3] : vector<2x8x8x8xf32> to vector<2x8x8xf32>
    %76 = arith.addf %69, %75 : vector<2x8x8xf32>
    %77 = vector.broadcast %1 : vector<2x1x8xf32> to vector<2x8x8xf32>
    %78 = arith.addf %76, %77 : vector<2x8x8xf32>
    %cst_42 = arith.constant dense<0xFF800000> : vector<2x8xf32>
    %79 = vector.multi_reduction <maximumf>, %78, %cst_42 [2] : vector<2x8x8xf32> to vector<2x8xf32>
    %80 = vector.shape_cast %79 : vector<2x8xf32> to vector<2x8x1xf32>
    %81 = vector.broadcast %80 : vector<2x8x1xf32> to vector<2x8x8xf32>
    %82 = arith.subf %78, %81 : vector<2x8x8xf32>
    %83 = math.exp %82 : vector<2x8x8xf32>
    %cst_43 = arith.constant dense<0.000000e+00> : vector<2x8xf32>
    %84 = vector.multi_reduction <add>, %83, %cst_43 [2] : vector<2x8x8xf32> to vector<2x8xf32>
    %85 = vector.shape_cast %84 : vector<2x8xf32> to vector<2x8x1xf32>
    %86 = vector.broadcast %85 : vector<2x8x1xf32> to vector<2x8x8xf32>
    %87 = arith.divf %83, %86 : vector<2x8x8xf32>
    %88 = vector.extract_strided_slice %87 {offsets = [0, 0, 0], sizes = [1, 8, 8], strides = [1, 1, 1]} : vector<2x8x8xf32> to vector<1x8x8xf32>
    %89 = vector.shape_cast %88 : vector<1x8x8xf32> to vector<8x8xf32>
    %c0_44 = arith.constant 0 : index
    %c0_45 = arith.constant 0 : index
    %c1_46 = arith.constant 1 : index
    %c0_47 = arith.constant 0 : index
    %c0_48 = arith.constant 0 : index
    %90 = vector.load %arg13[%c0_44, %c0_45, %c1_46, %c0_47, %c0_48] : memref<2x2x4x8x8xf32, #tpu.memory_space<vmem>>, vector<1x1x1x8x8xf32>
    %91 = vector.shape_cast %90 : vector<1x1x1x8x8xf32> to vector<8x8xf32>
    %92 = vector.shape_cast %89 : vector<8x8xf32> to vector<1x1x1x8x8xf32>
    tpu.vector_store %arg13[%c0_44, %c0_45, %c1_46, %c0_47, %c0_48], %92 {strides = array<i32>} : memref<2x2x4x8x8xf32, #tpu.memory_space<vmem>>, vector<1x1x1x8x8xf32>,
    %93 = vector.extract_strided_slice %87 {offsets = [1, 0, 0], sizes = [1, 8, 8], strides = [1, 1, 1]} : vector<2x8x8xf32> to vector<1x8x8xf32>
    %94 = vector.shape_cast %93 : vector<1x8x8xf32> to vector<8x8xf32>
    %c0_49 = arith.constant 0 : index
    %c1_50 = arith.constant 1 : index
    %c1_51 = arith.constant 1 : index
    %c0_52 = arith.constant 0 : index
    %c0_53 = arith.constant 0 : index
    %95 = vector.load %arg13[%c0_49, %c1_50, %c1_51, %c0_52, %c0_53] : memref<2x2x4x8x8xf32, #tpu.memory_space<vmem>>, vector<1x1x1x8x8xf32>
    %96 = vector.shape_cast %95 : vector<1x1x1x8x8xf32> to vector<8x8xf32>
    %97 = vector.shape_cast %94 : vector<8x8xf32> to vector<1x1x1x8x8xf32>
    tpu.vector_store %arg13[%c0_49, %c1_50, %c1_51, %c0_52, %c0_53], %97 {strides = array<i32>} : memref<2x2x4x8x8xf32, #tpu.memory_space<vmem>>, vector<1x1x1x8x8xf32>,
    "tpu.trace_start"() <{level = 10 : i32, message = "nqk,nkd->nqd"}> : () -> ()
    %cst_54 = arith.constant dense<0.000000e+00> : vector<2x8x8xf32>
    %98 = tpu.matmul %87, %66, %cst_54 {dimension_numbers = #tpu.dot_dimension_numbers<[2], [1], [1], [2], [0, 0, 0, 1, 1, 2], [0], [0]>} : vector<2x8x8xf32>, vector<2x8x8xf32>, vector<2x8x8xf32> -> vector<2x8x8xf32>
    "tpu.trace_stop"() : () -> ()
    %99 = vector.shape_cast %98 : vector<2x8x8xf32> to vector<16x8xf32>
    %c0_55 = arith.constant 0 : index
    %c1_56 = arith.constant 1 : index
    %c0_57 = arith.constant 0 : index
    %c0_58 = arith.constant 0 : index
    %100 = vector.load %arg4[%c0_55, %c1_56, %c0_57, %c0_58] : memref<2x4x8x32xf32, #tpu.memory_space<vmem>>, vector<1x1x8x32xf32>
    %101 = vector.shape_cast %100 : vector<1x1x8x32xf32> to vector<8x32xf32>
    %cst_59 = arith.constant dense<0.000000e+00> : vector<16x32xf32>
    %102 = tpu.matmul %99, %101, %cst_59 {dimension_numbers = #tpu.dot_dimension_numbers<[1], [0], [0], [1], [0, 0, 1, 1], [], []>} : vector<16x8xf32>, vector<8x32xf32>, vector<16x32xf32> -> vector<16x32xf32>
    %103 = arith.addf %63, %102 : vector<16x32xf32>
    %104 = vector.extract_strided_slice %18 {offsets = [0, 0, 16], sizes = [2, 8, 8], strides = [1, 1, 1]} : vector<2x8x32xf32> to vector<2x8x8xf32>
    %105 = vector.extract_strided_slice %20 {offsets = [0, 0, 16], sizes = [2, 8, 8], strides = [1, 1, 1]} : vector<2x8x32xf32> to vector<2x8x8xf32>
    %106 = vector.extract_strided_slice %22 {offsets = [0, 0, 16], sizes = [2, 8, 8], strides = [1, 1, 1]} : vector<2x8x32xf32> to vector<2x8x8xf32>
    %c0_60 = arith.constant 0 : index
    %c2 = arith.constant 2 : index
    %c0_61 = arith.constant 0 : index
    %c0_62 = arith.constant 0 : index
    %c0_63 = arith.constant 0 : index
    %107 = vector.load %arg2[%c0_60, %c2, %c0_61, %c0_62, %c0_63] : memref<2x4x8x8x8xf32, #tpu.memory_space<vmem>>, vector<1x1x8x8x8xf32>
    %108 = vector.shape_cast %107 : vector<1x1x8x8x8xf32> to vector<8x8x8xf32>
    "tpu.trace_start"() <{level = 10 : i32, message = "nqd,nkd->nqk"}> : () -> ()
    %cst_64 = arith.constant dense<0.000000e+00> : vector<2x8x8xf32>
    %109 = tpu.matmul %104, %105, %cst_64 {dimension_numbers = #tpu.dot_dimension_numbers<[2], [2], [1], [1], [0, 0, 0, 1, 1, 1], [0], [0]>} : vector<2x8x8xf32>, vector<2x8x8xf32>, vector<2x8x8xf32> -> vector<2x8x8xf32>
    "tpu.trace_stop"() : () -> ()
    %110 = vector.shape_cast %104 : vector<2x8x8xf32> to vector<2x8x1x8xf32>
    %111 = vector.shape_cast %108 : vector<8x8x8xf32> to vector<1x8x8x8xf32>
    %112 = vector.broadcast %110 : vector<2x8x1x8xf32> to vector<2x8x8x8xf32>
    %113 = vector.broadcast %111 : vector<1x8x8x8xf32> to vector<2x8x8x8xf32>
    %114 = arith.mulf %112, %113 : vector<2x8x8x8xf32>
    %cst_65 = arith.constant dense<0.000000e+00> : vector<2x8x8xf32>
    %115 = vector.multi_reduction <add>, %114, %cst_65 [3] : vector<2x8x8x8xf32> to vector<2x8x8xf32>
    %116 = arith.addf %109, %115 : vector<2x8x8xf32>
    %117 = vector.broadcast %1 : vector<2x1x8xf32> to vector<2x8x8xf32>
    %118 = arith.addf %116, %117 : vector<2x8x8xf32>
    %cst_66 = arith.constant dense<0xFF800000> : vector<2x8xf32>
    %119 = vector.multi_reduction <maximumf>, %118, %cst_66 [2] : vector<2x8x8xf32> to vector<2x8xf32>
    %120 = vector.shape_cast %119 : vector<2x8xf32> to vector<2x8x1xf32>
    %121 = vector.broadcast %120 : vector<2x8x1xf32> to vector<2x8x8xf32>
    %122 = arith.subf %118, %121 : vector<2x8x8xf32>
    %123 = math.exp %122 : vector<2x8x8xf32>
    %cst_67 = arith.constant dense<0.000000e+00> : vector<2x8xf32>
    %124 = vector.multi_reduction <add>, %123, %cst_67 [2] : vector<2x8x8xf32> to vector<2x8xf32>
    %125 = vector.shape_cast %124 : vector<2x8xf32> to vector<2x8x1xf32>
    %126 = vector.broadcast %125 : vector<2x8x1xf32> to vector<2x8x8xf32>
    %127 = arith.divf %123, %126 : vector<2x8x8xf32>
    %128 = vector.extract_strided_slice %127 {offsets = [0, 0, 0], sizes = [1, 8, 8], strides = [1, 1, 1]} : vector<2x8x8xf32> to vector<1x8x8xf32>
    %129 = vector.shape_cast %128 : vector<1x8x8xf32> to vector<8x8xf32>
    %c0_68 = arith.constant 0 : index
    %c0_69 = arith.constant 0 : index
    %c2_70 = arith.constant 2 : index
    %c0_71 = arith.constant 0 : index
    %c0_72 = arith.constant 0 : index
    %130 = vector.load %arg13[%c0_68, %c0_69, %c2_70, %c0_71, %c0_72] : memref<2x2x4x8x8xf32, #tpu.memory_space<vmem>>, vector<1x1x1x8x8xf32>
    %131 = vector.shape_cast %130 : vector<1x1x1x8x8xf32> to vector<8x8xf32>
    %132 = vector.shape_cast %129 : vector<8x8xf32> to vector<1x1x1x8x8xf32>
    tpu.vector_store %arg13[%c0_68, %c0_69, %c2_70, %c0_71, %c0_72], %132 {strides = array<i32>} : memref<2x2x4x8x8xf32, #tpu.memory_space<vmem>>, vector<1x1x1x8x8xf32>,
    %133 = vector.extract_strided_slice %127 {offsets = [1, 0, 0], sizes = [1, 8, 8], strides = [1, 1, 1]} : vector<2x8x8xf32> to vector<1x8x8xf32>
    %134 = vector.shape_cast %133 : vector<1x8x8xf32> to vector<8x8xf32>
    %c0_73 = arith.constant 0 : index
    %c1_74 = arith.constant 1 : index
    %c2_75 = arith.constant 2 : index
    %c0_76 = arith.constant 0 : index
    %c0_77 = arith.constant 0 : index
    %135 = vector.load %arg13[%c0_73, %c1_74, %c2_75, %c0_76, %c0_77] : memref<2x2x4x8x8xf32, #tpu.memory_space<vmem>>, vector<1x1x1x8x8xf32>
    %136 = vector.shape_cast %135 : vector<1x1x1x8x8xf32> to vector<8x8xf32>
    %137 = vector.shape_cast %134 : vector<8x8xf32> to vector<1x1x1x8x8xf32>
    tpu.vector_store %arg13[%c0_73, %c1_74, %c2_75, %c0_76, %c0_77], %137 {strides = array<i32>} : memref<2x2x4x8x8xf32, #tpu.memory_space<vmem>>, vector<1x1x1x8x8xf32>,
    "tpu.trace_start"() <{level = 10 : i32, message = "nqk,nkd->nqd"}> : () -> ()
    %cst_78 = arith.constant dense<0.000000e+00> : vector<2x8x8xf32>
    %138 = tpu.matmul %127, %106, %cst_78 {dimension_numbers = #tpu.dot_dimension_numbers<[2], [1], [1], [2], [0, 0, 0, 1, 1, 2], [0], [0]>} : vector<2x8x8xf32>, vector<2x8x8xf32>, vector<2x8x8xf32> -> vector<2x8x8xf32>
    "tpu.trace_stop"() : () -> ()
    %139 = vector.shape_cast %138 : vector<2x8x8xf32> to vector<16x8xf32>
    %c0_79 = arith.constant 0 : index
    %c2_80 = arith.constant 2 : index
    %c0_81 = arith.constant 0 : index
    %c0_82 = arith.constant 0 : index
    %140 = vector.load %arg4[%c0_79, %c2_80, %c0_81, %c0_82] : memref<2x4x8x32xf32, #tpu.memory_space<vmem>>, vector<1x1x8x32xf32>
    %141 = vector.shape_cast %140 : vector<1x1x8x32xf32> to vector<8x32xf32>
    %cst_83 = arith.constant dense<0.000000e+00> : vector<16x32xf32>
    %142 = tpu.matmul %139, %141, %cst_83 {dimension_numbers = #tpu.dot_dimension_numbers<[1], [0], [0], [1], [0, 0, 1, 1], [], []>} : vector<16x8xf32>, vector<8x32xf32>, vector<16x32xf32> -> vector<16x32xf32>
    %143 = arith.addf %103, %142 : vector<16x32xf32>
    %144 = vector.extract_strided_slice %18 {offsets = [0, 0, 24], sizes = [2, 8, 8], strides = [1, 1, 1]} : vector<2x8x32xf32> to vector<2x8x8xf32>
    %145 = vector.extract_strided_slice %20 {offsets = [0, 0, 24], sizes = [2, 8, 8], strides = [1, 1, 1]} : vector<2x8x32xf32> to vector<2x8x8xf32>
    %146 = vector.extract_strided_slice %22 {offsets = [0, 0, 24], sizes = [2, 8, 8], strides = [1, 1, 1]} : vector<2x8x32xf32> to vector<2x8x8xf32>
    %c0_84 = arith.constant 0 : index
    %c3 = arith.constant 3 : index
    %c0_85 = arith.constant 0 : index
    %c0_86 = arith.constant 0 : index
    %c0_87 = arith.constant 0 : index
    %147 = vector.load %arg2[%c0_84, %c3, %c0_85, %c0_86, %c0_87] : memref<2x4x8x8x8xf32, #tpu.memory_space<vmem>>, vector<1x1x8x8x8xf32>
    %148 = vector.shape_cast %147 : vector<1x1x8x8x8xf32> to vector<8x8x8xf32>
    "tpu.trace_start"() <{level = 10 : i32, message = "nqd,nkd->nqk"}> : () -> ()
    %cst_88 = arith.constant dense<0.000000e+00> : vector<2x8x8xf32>
    %149 = tpu.matmul %144, %145, %cst_88 {dimension_numbers = #tpu.dot_dimension_numbers<[2], [2], [1], [1], [0, 0, 0, 1, 1, 1], [0], [0]>} : vector<2x8x8xf32>, vector<2x8x8xf32>, vector<2x8x8xf32> -> vector<2x8x8xf32>
    "tpu.trace_stop"() : () -> ()
    %150 = vector.shape_cast %144 : vector<2x8x8xf32> to vector<2x8x1x8xf32>
    %151 = vector.shape_cast %148 : vector<8x8x8xf32> to vector<1x8x8x8xf32>
    %152 = vector.broadcast %150 : vector<2x8x1x8xf32> to vector<2x8x8x8xf32>
    %153 = vector.broadcast %151 : vector<1x8x8x8xf32> to vector<2x8x8x8xf32>
    %154 = arith.mulf %152, %153 : vector<2x8x8x8xf32>
    %cst_89 = arith.constant dense<0.000000e+00> : vector<2x8x8xf32>
    %155 = vector.multi_reduction <add>, %154, %cst_89 [3] : vector<2x8x8x8xf32> to vector<2x8x8xf32>
    %156 = arith.addf %149, %155 : vector<2x8x8xf32>
    %157 = vector.broadcast %1 : vector<2x1x8xf32> to vector<2x8x8xf32>
    %158 = arith.addf %156, %157 : vector<2x8x8xf32>
    %cst_90 = arith.constant dense<0xFF800000> : vector<2x8xf32>
    %159 = vector.multi_reduction <maximumf>, %158, %cst_90 [2] : vector<2x8x8xf32> to vector<2x8xf32>
    %160 = vector.shape_cast %159 : vector<2x8xf32> to vector<2x8x1xf32>
    %161 = vector.broadcast %160 : vector<2x8x1xf32> to vector<2x8x8xf32>
    %162 = arith.subf %158, %161 : vector<2x8x8xf32>
    %163 = math.exp %162 : vector<2x8x8xf32>
    %cst_91 = arith.constant dense<0.000000e+00> : vector<2x8xf32>
    %164 = vector.multi_reduction <add>, %163, %cst_91 [2] : vector<2x8x8xf32> to vector<2x8xf32>
    %165 = vector.shape_cast %164 : vector<2x8xf32> to vector<2x8x1xf32>
    %166 = vector.broadcast %165 : vector<2x8x1xf32> to vector<2x8x8xf32>
    %167 = arith.divf %163, %166 : vector<2x8x8xf32>
    %168 = vector.extract_strided_slice %167 {offsets = [0, 0, 0], sizes = [1, 8, 8], strides = [1, 1, 1]} : vector<2x8x8xf32> to vector<1x8x8xf32>
    %169 = vector.shape_cast %168 : vector<1x8x8xf32> to vector<8x8xf32>
    %c0_92 = arith.constant 0 : index
    %c0_93 = arith.constant 0 : index
    %c3_94 = arith.constant 3 : index
    %c0_95 = arith.constant 0 : index
    %c0_96 = arith.constant 0 : index
    %170 = vector.load %arg13[%c0_92, %c0_93, %c3_94, %c0_95, %c0_96] : memref<2x2x4x8x8xf32, #tpu.memory_space<vmem>>, vector<1x1x1x8x8xf32>
    %171 = vector.shape_cast %170 : vector<1x1x1x8x8xf32> to vector<8x8xf32>
    %172 = vector.shape_cast %169 : vector<8x8xf32> to vector<1x1x1x8x8xf32>
    tpu.vector_store %arg13[%c0_92, %c0_93, %c3_94, %c0_95, %c0_96], %172 {strides = array<i32>} : memref<2x2x4x8x8xf32, #tpu.memory_space<vmem>>, vector<1x1x1x8x8xf32>,
    %173 = vector.extract_strided_slice %167 {offsets = [1, 0, 0], sizes = [1, 8, 8], strides = [1, 1, 1]} : vector<2x8x8xf32> to vector<1x8x8xf32>
    %174 = vector.shape_cast %173 : vector<1x8x8xf32> to vector<8x8xf32>
    %c0_97 = arith.constant 0 : index
    %c1_98 = arith.constant 1 : index
    %c3_99 = arith.constant 3 : index
    %c0_100 = arith.constant 0 : index
    %c0_101 = arith.constant 0 : index
    %175 = vector.load %arg13[%c0_97, %c1_98, %c3_99, %c0_100, %c0_101] : memref<2x2x4x8x8xf32, #tpu.memory_space<vmem>>, vector<1x1x1x8x8xf32>
    %176 = vector.shape_cast %175 : vector<1x1x1x8x8xf32> to vector<8x8xf32>
    %177 = vector.shape_cast %174 : vector<8x8xf32> to vector<1x1x1x8x8xf32>
    tpu.vector_store %arg13[%c0_97, %c1_98, %c3_99, %c0_100, %c0_101], %177 {strides = array<i32>} : memref<2x2x4x8x8xf32, #tpu.memory_space<vmem>>, vector<1x1x1x8x8xf32>,
    "tpu.trace_start"() <{level = 10 : i32, message = "nqk,nkd->nqd"}> : () -> ()
    %cst_102 = arith.constant dense<0.000000e+00> : vector<2x8x8xf32>
    %178 = tpu.matmul %167, %146, %cst_102 {dimension_numbers = #tpu.dot_dimension_numbers<[2], [1], [1], [2], [0, 0, 0, 1, 1, 2], [0], [0]>} : vector<2x8x8xf32>, vector<2x8x8xf32>, vector<2x8x8xf32> -> vector<2x8x8xf32>
    "tpu.trace_stop"() : () -> ()
    %179 = vector.shape_cast %178 : vector<2x8x8xf32> to vector<16x8xf32>
    %c0_103 = arith.constant 0 : index
    %c3_104 = arith.constant 3 : index
    %c0_105 = arith.constant 0 : index
    %c0_106 = arith.constant 0 : index
    %180 = vector.load %arg4[%c0_103, %c3_104, %c0_105, %c0_106] : memref<2x4x8x32xf32, #tpu.memory_space<vmem>>, vector<1x1x8x32xf32>
    %181 = vector.shape_cast %180 : vector<1x1x8x32xf32> to vector<8x32xf32>
    %cst_107 = arith.constant dense<0.000000e+00> : vector<16x32xf32>
    %182 = tpu.matmul %179, %181, %cst_107 {dimension_numbers = #tpu.dot_dimension_numbers<[1], [0], [0], [1], [0, 0, 1, 1], [], []>} : vector<16x8xf32>, vector<8x32xf32>, vector<16x32xf32> -> vector<16x32xf32>
    %183 = arith.addf %143, %182 : vector<16x32xf32>
    %184 = vector.broadcast %5 : vector<1x32xf32> to vector<16x32xf32>
    %185 = arith.addf %183, %184 : vector<16x32xf32>
    %186 = arith.addf %185, %0 : vector<16x32xf32>
    %cst_108 = arith.constant dense<0.000000e+00> : vector<16xf32>
    %187 = vector.multi_reduction <add>, %186, %cst_108 [1] : vector<16x32xf32> to vector<16xf32>
    %188 = vector.shape_cast %187 : vector<16xf32> to vector<16x1xf32>
    %cst_109 = arith.constant 3.200000e+01 : f32
    %189 = vector.broadcast %cst_109 : f32 to vector<16x1xf32>
    %190 = arith.divf %188, %189 : vector<16x1xf32>
    %191 = vector.broadcast %190 : vector<16x1xf32> to vector<16x32xf32>
    %192 = arith.subf %186, %191 : vector<16x32xf32>
    %193 = arith.mulf %192, %192 : vector<16x32xf32>
    %cst_110 = arith.constant dense<0.000000e+00> : vector<16xf32>
    %194 = vector.multi_reduction <add>, %193, %cst_110 [1] : vector<16x32xf32> to vector<16xf32>
    %195 = vector.shape_cast %194 : vector<16xf32> to vector<16x1xf32>
    %cst_111 = arith.constant 3.200000e+01 : f32
    %196 = vector.broadcast %cst_111 : f32 to vector<16x1xf32>
    %197 = arith.divf %195, %196 : vector<16x1xf32>
    %198 = vector.broadcast %190 : vector<16x1xf32> to vector<16x32xf32>
    %199 = arith.subf %186, %198 : vector<16x32xf32>
    %cst_112 = arith.constant 9.99999974E-6 : f32
    %200 = vector.broadcast %cst_112 : f32 to vector<16x1xf32>
    %201 = arith.addf %197, %200 : vector<16x1xf32>
    %202 = math.rsqrt %201 : vector<16x1xf32>
    %203 = vector.broadcast %202 : vector<16x1xf32> to vector<16x32xf32>
    %204 = arith.mulf %199, %203 : vector<16x32xf32>
    %205 = vector.broadcast %8 : vector<1x32xf32> to vector<16x32xf32>
    %206 = arith.mulf %204, %205 : vector<16x32xf32>
    %207 = vector.broadcast %9 : vector<1x32xf32> to vector<16x32xf32>
    %208 = arith.addf %206, %207 : vector<16x32xf32>
    %c0_113 = arith.constant 0 : index
    %c0_114 = arith.constant 0 : index
    %c0_115 = arith.constant 0 : index
    %209 = vector.load %arg5[%c0_113, %c0_114, %c0_115] : memref<2x32x64xf32, #tpu.memory_space<vmem>>, vector<1x32x64xf32>
    %210 = vector.shape_cast %209 : vector<1x32x64xf32> to vector<32x64xf32>
    %cst_116 = arith.constant dense<0.000000e+00> : vector<16x64xf32>
    %211 = tpu.matmul %208, %210, %cst_116 {dimension_numbers = #tpu.dot_dimension_numbers<[1], [0], [0], [1], [0, 0, 1, 1], [], []>} : vector<16x32xf32>, vector<32x64xf32>, vector<16x64xf32> -> vector<16x64xf32>
    %212 = vector.broadcast %6 : vector<1x64xf32> to vector<16x64xf32>
    %213 = arith.addf %211, %212 : vector<16x64xf32>
    %cst_117 = arith.constant 0.000000e+00 : f32
    %214 = vector.broadcast %cst_117 : f32 to vector<16x64xf32>
    %215 = arith.maximumf %213, %214 : vector<16x64xf32>
    %c0_118 = arith.constant 0 : index
    %c0_119 = arith.constant 0 : index
    %c0_120 = arith.constant 0 : index
    %216 = vector.load %arg6[%c0_118, %c0_119, %c0_120] : memref<2x64x32xf32, #tpu.memory_space<vmem>>, vector<1x64x32xf32>
    %217 = vector.shape_cast %216 : vector<1x64x32xf32> to vector<64x32xf32>
    %cst_121 = arith.constant dense<0.000000e+00> : vector<16x32xf32>
    %218 = tpu.matmul %215, %217, %cst_121 {dimension_numbers = #tpu.dot_dimension_numbers<[1], [0], [0], [1], [0, 0, 1, 1], [], []>} : vector<16x64xf32>, vector<64x32xf32>, vector<16x32xf32> -> vector<16x32xf32>
    %219 = vector.broadcast %7 : vector<1x32xf32> to vector<16x32xf32>
    %220 = arith.addf %218, %219 : vector<16x32xf32>
    %221 = arith.addf %220, %208 : vector<16x32xf32>
    %cst_122 = arith.constant dense<0.000000e+00> : vector<16xf32>
    %222 = vector.multi_reduction <add>, %221, %cst_122 [1] : vector<16x32xf32> to vector<16xf32>
    %223 = vector.shape_cast %222 : vector<16xf32> to vector<16x1xf32>
    %cst_123 = arith.constant 3.200000e+01 : f32
    %224 = vector.broadcast %cst_123 : f32 to vector<16x1xf32>
    %225 = arith.divf %223, %224 : vector<16x1xf32>
    %226 = vector.broadcast %225 : vector<16x1xf32> to vector<16x32xf32>
    %227 = arith.subf %221, %226 : vector<16x32xf32>
    %228 = arith.mulf %227, %227 : vector<16x32xf32>
    %cst_124 = arith.constant dense<0.000000e+00> : vector<16xf32>
    %229 = vector.multi_reduction <add>, %228, %cst_124 [1] : vector<16x32xf32> to vector<16xf32>
    %230 = vector.shape_cast %229 : vector<16xf32> to vector<16x1xf32>
    %cst_125 = arith.constant 3.200000e+01 : f32
    %231 = vector.broadcast %cst_125 : f32 to vector<16x1xf32>
    %232 = arith.divf %230, %231 : vector<16x1xf32>
    %233 = vector.broadcast %225 : vector<16x1xf32> to vector<16x32xf32>
    %234 = arith.subf %221, %233 : vector<16x32xf32>
    %cst_126 = arith.constant 9.99999974E-6 : f32
    %235 = vector.broadcast %cst_126 : f32 to vector<16x1xf32>
    %236 = arith.addf %232, %235 : vector<16x1xf32>
    %237 = math.rsqrt %236 : vector<16x1xf32>
    %238 = vector.broadcast %237 : vector<16x1xf32> to vector<16x32xf32>
    %239 = arith.mulf %234, %238 : vector<16x32xf32>
    %240 = vector.broadcast %10 : vector<1x32xf32> to vector<16x32xf32>
    %241 = arith.mulf %239, %240 : vector<16x32xf32>
    %242 = vector.broadcast %11 : vector<1x32xf32> to vector<16x32xf32>
    %243 = arith.addf %241, %242 : vector<16x32xf32>
    %c1_127 = arith.constant 1 : index
    %c0_128 = arith.constant 0 : index
    %c0_129 = arith.constant 0 : index
    %244 = vector.load %arg7[%c1_127, %c0_128, %c0_129] : memref<2x8x96xf32, #tpu.memory_space<vmem>>, vector<1x8x96xf32>
    %245 = vector.shape_cast %244 : vector<1x8x96xf32> to vector<8x96xf32>
    %246 = vector.extract_strided_slice %245 {offsets = [0, 0], sizes = [1, 96], strides = [1, 1]} : vector<8x96xf32> to vector<1x96xf32>
    %247 = vector.extract_strided_slice %245 {offsets = [1, 0], sizes = [1, 32], strides = [1, 1]} : vector<8x96xf32> to vector<1x32xf32>
    %248 = vector.extract_strided_slice %245 {offsets = [2, 0], sizes = [1, 64], strides = [1, 1]} : vector<8x96xf32> to vector<1x64xf32>
    %249 = vector.extract_strided_slice %245 {offsets = [3, 0], sizes = [1, 32], strides = [1, 1]} : vector<8x96xf32> to vector<1x32xf32>
    %250 = vector.extract_strided_slice %245 {offsets = [4, 0], sizes = [1, 32], strides = [1, 1]} : vector<8x96xf32> to vector<1x32xf32>
    %251 = vector.extract_strided_slice %245 {offsets = [5, 0], sizes = [1, 32], strides = [1, 1]} : vector<8x96xf32> to vector<1x32xf32>
    %252 = vector.extract_strided_slice %245 {offsets = [6, 0], sizes = [1, 32], strides = [1, 1]} : vector<8x96xf32> to vector<1x32xf32>
    %253 = vector.extract_strided_slice %245 {offsets = [7, 0], sizes = [1, 32], strides = [1, 1]} : vector<8x96xf32> to vector<1x32xf32>
    %c1_130 = arith.constant 1 : index
    %c0_131 = arith.constant 0 : index
    %c0_132 = arith.constant 0 : index
    %254 = vector.load %arg3[%c1_130, %c0_131, %c0_132] : memref<2x32x96xf32, #tpu.memory_space<vmem>>, vector<1x32x96xf32>
    %255 = vector.shape_cast %254 : vector<1x32x96xf32> to vector<32x96xf32>
    %cst_133 = arith.constant dense<0.000000e+00> : vector<16x96xf32>
    %256 = tpu.matmul %243, %255, %cst_133 {dimension_numbers = #tpu.dot_dimension_numbers<[1], [0], [0], [1], [0, 0, 1, 1], [], []>} : vector<16x32xf32>, vector<32x96xf32>, vector<16x96xf32> -> vector<16x96xf32>
    %257 = vector.broadcast %246 : vector<1x96xf32> to vector<16x96xf32>
    %258 = arith.addf %256, %257 : vector<16x96xf32>
    %259 = vector.extract_strided_slice %258 {offsets = [0, 0], sizes = [16, 32], strides = [1, 1]} : vector<16x96xf32> to vector<16x32xf32>
    %260 = vector.shape_cast %259 : vector<16x32xf32> to vector<2x8x32xf32>
    %261 = vector.extract_strided_slice %258 {offsets = [0, 32], sizes = [16, 32], strides = [1, 1]} : vector<16x96xf32> to vector<16x32xf32>
    %262 = vector.shape_cast %261 : vector<16x32xf32> to vector<2x8x32xf32>
    %263 = vector.extract_strided_slice %258 {offsets = [0, 64], sizes = [16, 32], strides = [1, 1]} : vector<16x96xf32> to vector<16x32xf32>
    %264 = vector.shape_cast %263 : vector<16x32xf32> to vector<2x8x32xf32>
    %cst_134 = arith.constant 0.000000e+00 : f32
    %265 = vector.broadcast %cst_134 : f32 to vector<16x32xf32>
    %266 = vector.extract_strided_slice %260 {offsets = [0, 0, 0], sizes = [2, 8, 8], strides = [1, 1, 1]} : vector<2x8x32xf32> to vector<2x8x8xf32>
    %267 = vector.extract_strided_slice %262 {offsets = [0, 0, 0], sizes = [2, 8, 8], strides = [1, 1, 1]} : vector<2x8x32xf32> to vector<2x8x8xf32>
    %268 = vector.extract_strided_slice %264 {offsets = [0, 0, 0], sizes = [2, 8, 8], strides = [1, 1, 1]} : vector<2x8x32xf32> to vector<2x8x8xf32>
    %c1_135 = arith.constant 1 : index
    %c0_136 = arith.constant 0 : index
    %c0_137 = arith.constant 0 : index
    %c0_138 = arith.constant 0 : index
    %c0_139 = arith.constant 0 : index
    %269 = vector.load %arg2[%c1_135, %c0_136, %c0_137, %c0_138, %c0_139] : memref<2x4x8x8x8xf32, #tpu.memory_space<vmem>>, vector<1x1x8x8x8xf32>
    %270 = vector.shape_cast %269 : vector<1x1x8x8x8xf32> to vector<8x8x8xf32>
    "tpu.trace_start"() <{level = 10 : i32, message = "nqd,nkd->nqk"}> : () -> ()
    %cst_140 = arith.constant dense<0.000000e+00> : vector<2x8x8xf32>
    %271 = tpu.matmul %266, %267, %cst_140 {dimension_numbers = #tpu.dot_dimension_numbers<[2], [2], [1], [1], [0, 0, 0, 1, 1, 1], [0], [0]>} : vector<2x8x8xf32>, vector<2x8x8xf32>, vector<2x8x8xf32> -> vector<2x8x8xf32>
    "tpu.trace_stop"() : () -> ()
    %272 = vector.shape_cast %266 : vector<2x8x8xf32> to vector<2x8x1x8xf32>
    %273 = vector.shape_cast %270 : vector<8x8x8xf32> to vector<1x8x8x8xf32>
    %274 = vector.broadcast %272 : vector<2x8x1x8xf32> to vector<2x8x8x8xf32>
    %275 = vector.broadcast %273 : vector<1x8x8x8xf32> to vector<2x8x8x8xf32>
    %276 = arith.mulf %274, %275 : vector<2x8x8x8xf32>
    %cst_141 = arith.constant dense<0.000000e+00> : vector<2x8x8xf32>
    %277 = vector.multi_reduction <add>, %276, %cst_141 [3] : vector<2x8x8x8xf32> to vector<2x8x8xf32>
    %278 = arith.addf %271, %277 : vector<2x8x8xf32>
    %279 = vector.broadcast %1 : vector<2x1x8xf32> to vector<2x8x8xf32>
    %280 = arith.addf %278, %279 : vector<2x8x8xf32>
    %cst_142 = arith.constant dense<0xFF800000> : vector<2x8xf32>
    %281 = vector.multi_reduction <maximumf>, %280, %cst_142 [2] : vector<2x8x8xf32> to vector<2x8xf32>
    %282 = vector.shape_cast %281 : vector<2x8xf32> to vector<2x8x1xf32>
    %283 = vector.broadcast %282 : vector<2x8x1xf32> to vector<2x8x8xf32>
    %284 = arith.subf %280, %283 : vector<2x8x8xf32>
    %285 = math.exp %284 : vector<2x8x8xf32>
    %cst_143 = arith.constant dense<0.000000e+00> : vector<2x8xf32>
    %286 = vector.multi_reduction <add>, %285, %cst_143 [2] : vector<2x8x8xf32> to vector<2x8xf32>
    %287 = vector.shape_cast %286 : vector<2x8xf32> to vector<2x8x1xf32>
    %288 = vector.broadcast %287 : vector<2x8x1xf32> to vector<2x8x8xf32>
    %289 = arith.divf %285, %288 : vector<2x8x8xf32>
    %290 = vector.extract_strided_slice %289 {offsets = [0, 0, 0], sizes = [1, 8, 8], strides = [1, 1, 1]} : vector<2x8x8xf32> to vector<1x8x8xf32>
    %291 = vector.shape_cast %290 : vector<1x8x8xf32> to vector<8x8xf32>
    %c1_144 = arith.constant 1 : index
    %c0_145 = arith.constant 0 : index
    %c0_146 = arith.constant 0 : index
    %c0_147 = arith.constant 0 : index
    %c0_148 = arith.constant 0 : index
    %292 = vector.load %arg13[%c1_144, %c0_145, %c0_146, %c0_147, %c0_148] : memref<2x2x4x8x8xf32, #tpu.memory_space<vmem>>, vector<1x1x1x8x8xf32>
    %293 = vector.shape_cast %292 : vector<1x1x1x8x8xf32> to vector<8x8xf32>
    %294 = vector.shape_cast %291 : vector<8x8xf32> to vector<1x1x1x8x8xf32>
    tpu.vector_store %arg13[%c1_144, %c0_145, %c0_146, %c0_147, %c0_148], %294 {strides = array<i32>} : memref<2x2x4x8x8xf32, #tpu.memory_space<vmem>>, vector<1x1x1x8x8xf32>,
    %295 = vector.extract_strided_slice %289 {offsets = [1, 0, 0], sizes = [1, 8, 8], strides = [1, 1, 1]} : vector<2x8x8xf32> to vector<1x8x8xf32>
    %296 = vector.shape_cast %295 : vector<1x8x8xf32> to vector<8x8xf32>
    %c1_149 = arith.constant 1 : index
    %c1_150 = arith.constant 1 : index
    %c0_151 = arith.constant 0 : index
    %c0_152 = arith.constant 0 : index
    %c0_153 = arith.constant 0 : index
    %297 = vector.load %arg13[%c1_149, %c1_150, %c0_151, %c0_152, %c0_153] : memref<2x2x4x8x8xf32, #tpu.memory_space<vmem>>, vector<1x1x1x8x8xf32>
    %298 = vector.shape_cast %297 : vector<1x1x1x8x8xf32> to vector<8x8xf32>
    %299 = vector.shape_cast %296 : vector<8x8xf32> to vector<1x1x1x8x8xf32>
    tpu.vector_store %arg13[%c1_149, %c1_150, %c0_151, %c0_152, %c0_153], %299 {strides = array<i32>} : memref<2x2x4x8x8xf32, #tpu.memory_space<vmem>>, vector<1x1x1x8x8xf32>,
    "tpu.trace_start"() <{level = 10 : i32, message = "nqk,nkd->nqd"}> : () -> ()
    %cst_154 = arith.constant dense<0.000000e+00> : vector<2x8x8xf32>
    %300 = tpu.matmul %289, %268, %cst_154 {dimension_numbers = #tpu.dot_dimension_numbers<[2], [1], [1], [2], [0, 0, 0, 1, 1, 2], [0], [0]>} : vector<2x8x8xf32>, vector<2x8x8xf32>, vector<2x8x8xf32> -> vector<2x8x8xf32>
    "tpu.trace_stop"() : () -> ()
    %301 = vector.shape_cast %300 : vector<2x8x8xf32> to vector<16x8xf32>
    %c1_155 = arith.constant 1 : index
    %c0_156 = arith.constant 0 : index
    %c0_157 = arith.constant 0 : index
    %c0_158 = arith.constant 0 : index
    %302 = vector.load %arg4[%c1_155, %c0_156, %c0_157, %c0_158] : memref<2x4x8x32xf32, #tpu.memory_space<vmem>>, vector<1x1x8x32xf32>
    %303 = vector.shape_cast %302 : vector<1x1x8x32xf32> to vector<8x32xf32>
    %cst_159 = arith.constant dense<0.000000e+00> : vector<16x32xf32>
    %304 = tpu.matmul %301, %303, %cst_159 {dimension_numbers = #tpu.dot_dimension_numbers<[1], [0], [0], [1], [0, 0, 1, 1], [], []>} : vector<16x8xf32>, vector<8x32xf32>, vector<16x32xf32> -> vector<16x32xf32>
    %305 = arith.addf %265, %304 : vector<16x32xf32>
    %306 = vector.extract_strided_slice %260 {offsets = [0, 0, 8], sizes = [2, 8, 8], strides = [1, 1, 1]} : vector<2x8x32xf32> to vector<2x8x8xf32>
    %307 = vector.extract_strided_slice %262 {offsets = [0, 0, 8], sizes = [2, 8, 8], strides = [1, 1, 1]} : vector<2x8x32xf32> to vector<2x8x8xf32>
    %308 = vector.extract_strided_slice %264 {offsets = [0, 0, 8], sizes = [2, 8, 8], strides = [1, 1, 1]} : vector<2x8x32xf32> to vector<2x8x8xf32>
    %c1_160 = arith.constant 1 : index
    %c1_161 = arith.constant 1 : index
    %c0_162 = arith.constant 0 : index
    %c0_163 = arith.constant 0 : index
    %c0_164 = arith.constant 0 : index
    %309 = vector.load %arg2[%c1_160, %c1_161, %c0_162, %c0_163, %c0_164] : memref<2x4x8x8x8xf32, #tpu.memory_space<vmem>>, vector<1x1x8x8x8xf32>
    %310 = vector.shape_cast %309 : vector<1x1x8x8x8xf32> to vector<8x8x8xf32>
    "tpu.trace_start"() <{level = 10 : i32, message = "nqd,nkd->nqk"}> : () -> ()
    %cst_165 = arith.constant dense<0.000000e+00> : vector<2x8x8xf32>
    %311 = tpu.matmul %306, %307, %cst_165 {dimension_numbers = #tpu.dot_dimension_numbers<[2], [2], [1], [1], [0, 0, 0, 1, 1, 1], [0], [0]>} : vector<2x8x8xf32>, vector<2x8x8xf32>, vector<2x8x8xf32> -> vector<2x8x8xf32>
    "tpu.trace_stop"() : () -> ()
    %312 = vector.shape_cast %306 : vector<2x8x8xf32> to vector<2x8x1x8xf32>
    %313 = vector.shape_cast %310 : vector<8x8x8xf32> to vector<1x8x8x8xf32>
    %314 = vector.broadcast %312 : vector<2x8x1x8xf32> to vector<2x8x8x8xf32>
    %315 = vector.broadcast %313 : vector<1x8x8x8xf32> to vector<2x8x8x8xf32>
    %316 = arith.mulf %314, %315 : vector<2x8x8x8xf32>
    %cst_166 = arith.constant dense<0.000000e+00> : vector<2x8x8xf32>
    %317 = vector.multi_reduction <add>, %316, %cst_166 [3] : vector<2x8x8x8xf32> to vector<2x8x8xf32>
    %318 = arith.addf %311, %317 : vector<2x8x8xf32>
    %319 = vector.broadcast %1 : vector<2x1x8xf32> to vector<2x8x8xf32>
    %320 = arith.addf %318, %319 : vector<2x8x8xf32>
    %cst_167 = arith.constant dense<0xFF800000> : vector<2x8xf32>
    %321 = vector.multi_reduction <maximumf>, %320, %cst_167 [2] : vector<2x8x8xf32> to vector<2x8xf32>
    %322 = vector.shape_cast %321 : vector<2x8xf32> to vector<2x8x1xf32>
    %323 = vector.broadcast %322 : vector<2x8x1xf32> to vector<2x8x8xf32>
    %324 = arith.subf %320, %323 : vector<2x8x8xf32>
    %325 = math.exp %324 : vector<2x8x8xf32>
    %cst_168 = arith.constant dense<0.000000e+00> : vector<2x8xf32>
    %326 = vector.multi_reduction <add>, %325, %cst_168 [2] : vector<2x8x8xf32> to vector<2x8xf32>
    %327 = vector.shape_cast %326 : vector<2x8xf32> to vector<2x8x1xf32>
    %328 = vector.broadcast %327 : vector<2x8x1xf32> to vector<2x8x8xf32>
    %329 = arith.divf %325, %328 : vector<2x8x8xf32>
    %330 = vector.extract_strided_slice %329 {offsets = [0, 0, 0], sizes = [1, 8, 8], strides = [1, 1, 1]} : vector<2x8x8xf32> to vector<1x8x8xf32>
    %331 = vector.shape_cast %330 : vector<1x8x8xf32> to vector<8x8xf32>
    %c1_169 = arith.constant 1 : index
    %c0_170 = arith.constant 0 : index
    %c1_171 = arith.constant 1 : index
    %c0_172 = arith.constant 0 : index
    %c0_173 = arith.constant 0 : index
    %332 = vector.load %arg13[%c1_169, %c0_170, %c1_171, %c0_172, %c0_173] : memref<2x2x4x8x8xf32, #tpu.memory_space<vmem>>, vector<1x1x1x8x8xf32>
    %333 = vector.shape_cast %332 : vector<1x1x1x8x8xf32> to vector<8x8xf32>
    %334 = vector.shape_cast %331 : vector<8x8xf32> to vector<1x1x1x8x8xf32>
    tpu.vector_store %arg13[%c1_169, %c0_170, %c1_171, %c0_172, %c0_173], %334 {strides = array<i32>} : memref<2x2x4x8x8xf32, #tpu.memory_space<vmem>>, vector<1x1x1x8x8xf32>,
    %335 = vector.extract_strided_slice %329 {offsets = [1, 0, 0], sizes = [1, 8, 8], strides = [1, 1, 1]} : vector<2x8x8xf32> to vector<1x8x8xf32>
    %336 = vector.shape_cast %335 : vector<1x8x8xf32> to vector<8x8xf32>
    %c1_174 = arith.constant 1 : index
    %c1_175 = arith.constant 1 : index
    %c1_176 = arith.constant 1 : index
    %c0_177 = arith.constant 0 : index
    %c0_178 = arith.constant 0 : index
    %337 = vector.load %arg13[%c1_174, %c1_175, %c1_176, %c0_177, %c0_178] : memref<2x2x4x8x8xf32, #tpu.memory_space<vmem>>, vector<1x1x1x8x8xf32>
    %338 = vector.shape_cast %337 : vector<1x1x1x8x8xf32> to vector<8x8xf32>
    %339 = vector.shape_cast %336 : vector<8x8xf32> to vector<1x1x1x8x8xf32>
    tpu.vector_store %arg13[%c1_174, %c1_175, %c1_176, %c0_177, %c0_178], %339 {strides = array<i32>} : memref<2x2x4x8x8xf32, #tpu.memory_space<vmem>>, vector<1x1x1x8x8xf32>,
    "tpu.trace_start"() <{level = 10 : i32, message = "nqk,nkd->nqd"}> : () -> ()
    %cst_179 = arith.constant dense<0.000000e+00> : vector<2x8x8xf32>
    %340 = tpu.matmul %329, %308, %cst_179 {dimension_numbers = #tpu.dot_dimension_numbers<[2], [1], [1], [2], [0, 0, 0, 1, 1, 2], [0], [0]>} : vector<2x8x8xf32>, vector<2x8x8xf32>, vector<2x8x8xf32> -> vector<2x8x8xf32>
    "tpu.trace_stop"() : () -> ()
    %341 = vector.shape_cast %340 : vector<2x8x8xf32> to vector<16x8xf32>
    %c1_180 = arith.constant 1 : index
    %c1_181 = arith.constant 1 : index
    %c0_182 = arith.constant 0 : index
    %c0_183 = arith.constant 0 : index
    %342 = vector.load %arg4[%c1_180, %c1_181, %c0_182, %c0_183] : memref<2x4x8x32xf32, #tpu.memory_space<vmem>>, vector<1x1x8x32xf32>
    %343 = vector.shape_cast %342 : vector<1x1x8x32xf32> to vector<8x32xf32>
    %cst_184 = arith.constant dense<0.000000e+00> : vector<16x32xf32>
    %344 = tpu.matmul %341, %343, %cst_184 {dimension_numbers = #tpu.dot_dimension_numbers<[1], [0], [0], [1], [0, 0, 1, 1], [], []>} : vector<16x8xf32>, vector<8x32xf32>, vector<16x32xf32> -> vector<16x32xf32>
    %345 = arith.addf %305, %344 : vector<16x32xf32>
    %346 = vector.extract_strided_slice %260 {offsets = [0, 0, 16], sizes = [2, 8, 8], strides = [1, 1, 1]} : vector<2x8x32xf32> to vector<2x8x8xf32>
    %347 = vector.extract_strided_slice %262 {offsets = [0, 0, 16], sizes = [2, 8, 8], strides = [1, 1, 1]} : vector<2x8x32xf32> to vector<2x8x8xf32>
    %348 = vector.extract_strided_slice %264 {offsets = [0, 0, 16], sizes = [2, 8, 8], strides = [1, 1, 1]} : vector<2x8x32xf32> to vector<2x8x8xf32>
    %c1_185 = arith.constant 1 : index
    %c2_186 = arith.constant 2 : index
    %c0_187 = arith.constant 0 : index
    %c0_188 = arith.constant 0 : index
    %c0_189 = arith.constant 0 : index
    %349 = vector.load %arg2[%c1_185, %c2_186, %c0_187, %c0_188, %c0_189] : memref<2x4x8x8x8xf32, #tpu.memory_space<vmem>>, vector<1x1x8x8x8xf32>
    %350 = vector.shape_cast %349 : vector<1x1x8x8x8xf32> to vector<8x8x8xf32>
    "tpu.trace_start"() <{level = 10 : i32, message = "nqd,nkd->nqk"}> : () -> ()
    %cst_190 = arith.constant dense<0.000000e+00> : vector<2x8x8xf32>
    %351 = tpu.matmul %346, %347, %cst_190 {dimension_numbers = #tpu.dot_dimension_numbers<[2], [2], [1], [1], [0, 0, 0, 1, 1, 1], [0], [0]>} : vector<2x8x8xf32>, vector<2x8x8xf32>, vector<2x8x8xf32> -> vector<2x8x8xf32>
    "tpu.trace_stop"() : () -> ()
    %352 = vector.shape_cast %346 : vector<2x8x8xf32> to vector<2x8x1x8xf32>
    %353 = vector.shape_cast %350 : vector<8x8x8xf32> to vector<1x8x8x8xf32>
    %354 = vector.broadcast %352 : vector<2x8x1x8xf32> to vector<2x8x8x8xf32>
    %355 = vector.broadcast %353 : vector<1x8x8x8xf32> to vector<2x8x8x8xf32>
    %356 = arith.mulf %354, %355 : vector<2x8x8x8xf32>
    %cst_191 = arith.constant dense<0.000000e+00> : vector<2x8x8xf32>
    %357 = vector.multi_reduction <add>, %356, %cst_191 [3] : vector<2x8x8x8xf32> to vector<2x8x8xf32>
    %358 = arith.addf %351, %357 : vector<2x8x8xf32>
    %359 = vector.broadcast %1 : vector<2x1x8xf32> to vector<2x8x8xf32>
    %360 = arith.addf %358, %359 : vector<2x8x8xf32>
    %cst_192 = arith.constant dense<0xFF800000> : vector<2x8xf32>
    %361 = vector.multi_reduction <maximumf>, %360, %cst_192 [2] : vector<2x8x8xf32> to vector<2x8xf32>
    %362 = vector.shape_cast %361 : vector<2x8xf32> to vector<2x8x1xf32>
    %363 = vector.broadcast %362 : vector<2x8x1xf32> to vector<2x8x8xf32>
    %364 = arith.subf %360, %363 : vector<2x8x8xf32>
    %365 = math.exp %364 : vector<2x8x8xf32>
    %cst_193 = arith.constant dense<0.000000e+00> : vector<2x8xf32>
    %366 = vector.multi_reduction <add>, %365, %cst_193 [2] : vector<2x8x8xf32> to vector<2x8xf32>
    %367 = vector.shape_cast %366 : vector<2x8xf32> to vector<2x8x1xf32>
    %368 = vector.broadcast %367 : vector<2x8x1xf32> to vector<2x8x8xf32>
    %369 = arith.divf %365, %368 : vector<2x8x8xf32>
    %370 = vector.extract_strided_slice %369 {offsets = [0, 0, 0], sizes = [1, 8, 8], strides = [1, 1, 1]} : vector<2x8x8xf32> to vector<1x8x8xf32>
    %371 = vector.shape_cast %370 : vector<1x8x8xf32> to vector<8x8xf32>
    %c1_194 = arith.constant 1 : index
    %c0_195 = arith.constant 0 : index
    %c2_196 = arith.constant 2 : index
    %c0_197 = arith.constant 0 : index
    %c0_198 = arith.constant 0 : index
    %372 = vector.load %arg13[%c1_194, %c0_195, %c2_196, %c0_197, %c0_198] : memref<2x2x4x8x8xf32, #tpu.memory_space<vmem>>, vector<1x1x1x8x8xf32>
    %373 = vector.shape_cast %372 : vector<1x1x1x8x8xf32> to vector<8x8xf32>
    %374 = vector.shape_cast %371 : vector<8x8xf32> to vector<1x1x1x8x8xf32>
    tpu.vector_store %arg13[%c1_194, %c0_195, %c2_196, %c0_197, %c0_198], %374 {strides = array<i32>} : memref<2x2x4x8x8xf32, #tpu.memory_space<vmem>>, vector<1x1x1x8x8xf32>,
    %375 = vector.extract_strided_slice %369 {offsets = [1, 0, 0], sizes = [1, 8, 8], strides = [1, 1, 1]} : vector<2x8x8xf32> to vector<1x8x8xf32>
    %376 = vector.shape_cast %375 : vector<1x8x8xf32> to vector<8x8xf32>
    %c1_199 = arith.constant 1 : index
    %c1_200 = arith.constant 1 : index
    %c2_201 = arith.constant 2 : index
    %c0_202 = arith.constant 0 : index
    %c0_203 = arith.constant 0 : index
    %377 = vector.load %arg13[%c1_199, %c1_200, %c2_201, %c0_202, %c0_203] : memref<2x2x4x8x8xf32, #tpu.memory_space<vmem>>, vector<1x1x1x8x8xf32>
    %378 = vector.shape_cast %377 : vector<1x1x1x8x8xf32> to vector<8x8xf32>
    %379 = vector.shape_cast %376 : vector<8x8xf32> to vector<1x1x1x8x8xf32>
    tpu.vector_store %arg13[%c1_199, %c1_200, %c2_201, %c0_202, %c0_203], %379 {strides = array<i32>} : memref<2x2x4x8x8xf32, #tpu.memory_space<vmem>>, vector<1x1x1x8x8xf32>,
    "tpu.trace_start"() <{level = 10 : i32, message = "nqk,nkd->nqd"}> : () -> ()
    %cst_204 = arith.constant dense<0.000000e+00> : vector<2x8x8xf32>
    %380 = tpu.matmul %369, %348, %cst_204 {dimension_numbers = #tpu.dot_dimension_numbers<[2], [1], [1], [2], [0, 0, 0, 1, 1, 2], [0], [0]>} : vector<2x8x8xf32>, vector<2x8x8xf32>, vector<2x8x8xf32> -> vector<2x8x8xf32>
    "tpu.trace_stop"() : () -> ()
    %381 = vector.shape_cast %380 : vector<2x8x8xf32> to vector<16x8xf32>
    %c1_205 = arith.constant 1 : index
    %c2_206 = arith.constant 2 : index
    %c0_207 = arith.constant 0 : index
    %c0_208 = arith.constant 0 : index
    %382 = vector.load %arg4[%c1_205, %c2_206, %c0_207, %c0_208] : memref<2x4x8x32xf32, #tpu.memory_space<vmem>>, vector<1x1x8x32xf32>
    %383 = vector.shape_cast %382 : vector<1x1x8x32xf32> to vector<8x32xf32>
    %cst_209 = arith.constant dense<0.000000e+00> : vector<16x32xf32>
    %384 = tpu.matmul %381, %383, %cst_209 {dimension_numbers = #tpu.dot_dimension_numbers<[1], [0], [0], [1], [0, 0, 1, 1], [], []>} : vector<16x8xf32>, vector<8x32xf32>, vector<16x32xf32> -> vector<16x32xf32>
    %385 = arith.addf %345, %384 : vector<16x32xf32>
    %386 = vector.extract_strided_slice %260 {offsets = [0, 0, 24], sizes = [2, 8, 8], strides = [1, 1, 1]} : vector<2x8x32xf32> to vector<2x8x8xf32>
    %387 = vector.extract_strided_slice %262 {offsets = [0, 0, 24], sizes = [2, 8, 8], strides = [1, 1, 1]} : vector<2x8x32xf32> to vector<2x8x8xf32>
    %388 = vector.extract_strided_slice %264 {offsets = [0, 0, 24], sizes = [2, 8, 8], strides = [1, 1, 1]} : vector<2x8x32xf32> to vector<2x8x8xf32>
    %c1_210 = arith.constant 1 : index
    %c3_211 = arith.constant 3 : index
    %c0_212 = arith.constant 0 : index
    %c0_213 = arith.constant 0 : index
    %c0_214 = arith.constant 0 : index
    %389 = vector.load %arg2[%c1_210, %c3_211, %c0_212, %c0_213, %c0_214] : memref<2x4x8x8x8xf32, #tpu.memory_space<vmem>>, vector<1x1x8x8x8xf32>
    %390 = vector.shape_cast %389 : vector<1x1x8x8x8xf32> to vector<8x8x8xf32>
    "tpu.trace_start"() <{level = 10 : i32, message = "nqd,nkd->nqk"}> : () -> ()
    %cst_215 = arith.constant dense<0.000000e+00> : vector<2x8x8xf32>
    %391 = tpu.matmul %386, %387, %cst_215 {dimension_numbers = #tpu.dot_dimension_numbers<[2], [2], [1], [1], [0, 0, 0, 1, 1, 1], [0], [0]>} : vector<2x8x8xf32>, vector<2x8x8xf32>, vector<2x8x8xf32> -> vector<2x8x8xf32>
    "tpu.trace_stop"() : () -> ()
    %392 = vector.shape_cast %386 : vector<2x8x8xf32> to vector<2x8x1x8xf32>
    %393 = vector.shape_cast %390 : vector<8x8x8xf32> to vector<1x8x8x8xf32>
    %394 = vector.broadcast %392 : vector<2x8x1x8xf32> to vector<2x8x8x8xf32>
    %395 = vector.broadcast %393 : vector<1x8x8x8xf32> to vector<2x8x8x8xf32>
    %396 = arith.mulf %394, %395 : vector<2x8x8x8xf32>
    %cst_216 = arith.constant dense<0.000000e+00> : vector<2x8x8xf32>
    %397 = vector.multi_reduction <add>, %396, %cst_216 [3] : vector<2x8x8x8xf32> to vector<2x8x8xf32>
    %398 = arith.addf %391, %397 : vector<2x8x8xf32>
    %399 = vector.broadcast %1 : vector<2x1x8xf32> to vector<2x8x8xf32>
    %400 = arith.addf %398, %399 : vector<2x8x8xf32>
    %cst_217 = arith.constant dense<0xFF800000> : vector<2x8xf32>
    %401 = vector.multi_reduction <maximumf>, %400, %cst_217 [2] : vector<2x8x8xf32> to vector<2x8xf32>
    %402 = vector.shape_cast %401 : vector<2x8xf32> to vector<2x8x1xf32>
    %403 = vector.broadcast %402 : vector<2x8x1xf32> to vector<2x8x8xf32>
    %404 = arith.subf %400, %403 : vector<2x8x8xf32>
    %405 = math.exp %404 : vector<2x8x8xf32>
    %cst_218 = arith.constant dense<0.000000e+00> : vector<2x8xf32>
    %406 = vector.multi_reduction <add>, %405, %cst_218 [2] : vector<2x8x8xf32> to vector<2x8xf32>
    %407 = vector.shape_cast %406 : vector<2x8xf32> to vector<2x8x1xf32>
    %408 = vector.broadcast %407 : vector<2x8x1xf32> to vector<2x8x8xf32>
    %409 = arith.divf %405, %408 : vector<2x8x8xf32>
    %410 = vector.extract_strided_slice %409 {offsets = [0, 0, 0], sizes = [1, 8, 8], strides = [1, 1, 1]} : vector<2x8x8xf32> to vector<1x8x8xf32>
    %411 = vector.shape_cast %410 : vector<1x8x8xf32> to vector<8x8xf32>
    %c1_219 = arith.constant 1 : index
    %c0_220 = arith.constant 0 : index
    %c3_221 = arith.constant 3 : index
    %c0_222 = arith.constant 0 : index
    %c0_223 = arith.constant 0 : index
    %412 = vector.load %arg13[%c1_219, %c0_220, %c3_221, %c0_222, %c0_223] : memref<2x2x4x8x8xf32, #tpu.memory_space<vmem>>, vector<1x1x1x8x8xf32>
    %413 = vector.shape_cast %412 : vector<1x1x1x8x8xf32> to vector<8x8xf32>
    %414 = vector.shape_cast %411 : vector<8x8xf32> to vector<1x1x1x8x8xf32>
    tpu.vector_store %arg13[%c1_219, %c0_220, %c3_221, %c0_222, %c0_223], %414 {strides = array<i32>} : memref<2x2x4x8x8xf32, #tpu.memory_space<vmem>>, vector<1x1x1x8x8xf32>,
    %415 = vector.extract_strided_slice %409 {offsets = [1, 0, 0], sizes = [1, 8, 8], strides = [1, 1, 1]} : vector<2x8x8xf32> to vector<1x8x8xf32>
    %416 = vector.shape_cast %415 : vector<1x8x8xf32> to vector<8x8xf32>
    %c1_224 = arith.constant 1 : index
    %c1_225 = arith.constant 1 : index
    %c3_226 = arith.constant 3 : index
    %c0_227 = arith.constant 0 : index
    %c0_228 = arith.constant 0 : index
    %417 = vector.load %arg13[%c1_224, %c1_225, %c3_226, %c0_227, %c0_228] : memref<2x2x4x8x8xf32, #tpu.memory_space<vmem>>, vector<1x1x1x8x8xf32>
    %418 = vector.shape_cast %417 : vector<1x1x1x8x8xf32> to vector<8x8xf32>
    %419 = vector.shape_cast %416 : vector<8x8xf32> to vector<1x1x1x8x8xf32>
    tpu.vector_store %arg13[%c1_224, %c1_225, %c3_226, %c0_227, %c0_228], %419 {strides = array<i32>} : memref<2x2x4x8x8xf32, #tpu.memory_space<vmem>>, vector<1x1x1x8x8xf32>,
    "tpu.trace_start"() <{level = 10 : i32, message = "nqk,nkd->nqd"}> : () -> ()
    %cst_229 = arith.constant dense<0.000000e+00> : vector<2x8x8xf32>
    %420 = tpu.matmul %409, %388, %cst_229 {dimension_numbers = #tpu.dot_dimension_numbers<[2], [1], [1], [2], [0, 0, 0, 1, 1, 2], [0], [0]>} : vector<2x8x8xf32>, vector<2x8x8xf32>, vector<2x8x8xf32> -> vector<2x8x8xf32>
    "tpu.trace_stop"() : () -> ()
    %421 = vector.shape_cast %420 : vector<2x8x8xf32> to vector<16x8xf32>
    %c1_230 = arith.constant 1 : index
    %c3_231 = arith.constant 3 : index
    %c0_232 = arith.constant 0 : index
    %c0_233 = arith.constant 0 : index
    %422 = vector.load %arg4[%c1_230, %c3_231, %c0_232, %c0_233] : memref<2x4x8x32xf32, #tpu.memory_space<vmem>>, vector<1x1x8x32xf32>
    %423 = vector.shape_cast %422 : vector<1x1x8x32xf32> to vector<8x32xf32>
    %cst_234 = arith.constant dense<0.000000e+00> : vector<16x32xf32>
    %424 = tpu.matmul %421, %423, %cst_234 {dimension_numbers = #tpu.dot_dimension_numbers<[1], [0], [0], [1], [0, 0, 1, 1], [], []>} : vector<16x8xf32>, vector<8x32xf32>, vector<16x32xf32> -> vector<16x32xf32>
    %425 = arith.addf %385, %424 : vector<16x32xf32>
    %426 = vector.broadcast %247 : vector<1x32xf32> to vector<16x32xf32>
    %427 = arith.addf %425, %426 : vector<16x32xf32>
    %428 = arith.addf %427, %243 : vector<16x32xf32>
    %cst_235 = arith.constant dense<0.000000e+00> : vector<16xf32>
    %429 = vector.multi_reduction <add>, %428, %cst_235 [1] : vector<16x32xf32> to vector<16xf32>
    %430 = vector.shape_cast %429 : vector<16xf32> to vector<16x1xf32>
    %cst_236 = arith.constant 3.200000e+01 : f32
    %431 = vector.broadcast %cst_236 : f32 to vector<16x1xf32>
    %432 = arith.divf %430, %431 : vector<16x1xf32>
    %433 = vector.broadcast %432 : vector<16x1xf32> to vector<16x32xf32>
    %434 = arith.subf %428, %433 : vector<16x32xf32>
    %435 = arith.mulf %434, %434 : vector<16x32xf32>
    %cst_237 = arith.constant dense<0.000000e+00> : vector<16xf32>
    %436 = vector.multi_reduction <add>, %435, %cst_237 [1] : vector<16x32xf32> to vector<16xf32>
    %437 = vector.shape_cast %436 : vector<16xf32> to vector<16x1xf32>
    %cst_238 = arith.constant 3.200000e+01 : f32
    %438 = vector.broadcast %cst_238 : f32 to vector<16x1xf32>
    %439 = arith.divf %437, %438 : vector<16x1xf32>
    %440 = vector.broadcast %432 : vector<16x1xf32> to vector<16x32xf32>
    %441 = arith.subf %428, %440 : vector<16x32xf32>
    %cst_239 = arith.constant 9.99999974E-6 : f32
    %442 = vector.broadcast %cst_239 : f32 to vector<16x1xf32>
    %443 = arith.addf %439, %442 : vector<16x1xf32>
    %444 = math.rsqrt %443 : vector<16x1xf32>
    %445 = vector.broadcast %444 : vector<16x1xf32> to vector<16x32xf32>
    %446 = arith.mulf %441, %445 : vector<16x32xf32>
    %447 = vector.broadcast %250 : vector<1x32xf32> to vector<16x32xf32>
    %448 = arith.mulf %446, %447 : vector<16x32xf32>
    %449 = vector.broadcast %251 : vector<1x32xf32> to vector<16x32xf32>
    %450 = arith.addf %448, %449 : vector<16x32xf32>
    %c1_240 = arith.constant 1 : index
    %c0_241 = arith.constant 0 : index
    %c0_242 = arith.constant 0 : index
    %451 = vector.load %arg5[%c1_240, %c0_241, %c0_242] : memref<2x32x64xf32, #tpu.memory_space<vmem>>, vector<1x32x64xf32>
    %452 = vector.shape_cast %451 : vector<1x32x64xf32> to vector<32x64xf32>
    %cst_243 = arith.constant dense<0.000000e+00> : vector<16x64xf32>
    %453 = tpu.matmul %450, %452, %cst_243 {dimension_numbers = #tpu.dot_dimension_numbers<[1], [0], [0], [1], [0, 0, 1, 1], [], []>} : vector<16x32xf32>, vector<32x64xf32>, vector<16x64xf32> -> vector<16x64xf32>
    %454 = vector.broadcast %248 : vector<1x64xf32> to vector<16x64xf32>
    %455 = arith.addf %453, %454 : vector<16x64xf32>
    %cst_244 = arith.constant 0.000000e+00 : f32
    %456 = vector.broadcast %cst_244 : f32 to vector<16x64xf32>
    %457 = arith.maximumf %455, %456 : vector<16x64xf32>
    %c1_245 = arith.constant 1 : index
    %c0_246 = arith.constant 0 : index
    %c0_247 = arith.constant 0 : index
    %458 = vector.load %arg6[%c1_245, %c0_246, %c0_247] : memref<2x64x32xf32, #tpu.memory_space<vmem>>, vector<1x64x32xf32>
    %459 = vector.shape_cast %458 : vector<1x64x32xf32> to vector<64x32xf32>
    %cst_248 = arith.constant dense<0.000000e+00> : vector<16x32xf32>
    %460 = tpu.matmul %457, %459, %cst_248 {dimension_numbers = #tpu.dot_dimension_numbers<[1], [0], [0], [1], [0, 0, 1, 1], [], []>} : vector<16x64xf32>, vector<64x32xf32>, vector<16x32xf32> -> vector<16x32xf32>
    %461 = vector.broadcast %249 : vector<1x32xf32> to vector<16x32xf32>
    %462 = arith.addf %460, %461 : vector<16x32xf32>
    %463 = arith.addf %462, %450 : vector<16x32xf32>
    %cst_249 = arith.constant dense<0.000000e+00> : vector<16xf32>
    %464 = vector.multi_reduction <add>, %463, %cst_249 [1] : vector<16x32xf32> to vector<16xf32>
    %465 = vector.shape_cast %464 : vector<16xf32> to vector<16x1xf32>
    %cst_250 = arith.constant 3.200000e+01 : f32
    %466 = vector.broadcast %cst_250 : f32 to vector<16x1xf32>
    %467 = arith.divf %465, %466 : vector<16x1xf32>
    %468 = vector.broadcast %467 : vector<16x1xf32> to vector<16x32xf32>
    %469 = arith.subf %463, %468 : vector<16x32xf32>
    %470 = arith.mulf %469, %469 : vector<16x32xf32>
    %cst_251 = arith.constant dense<0.000000e+00> : vector<16xf32>
    %471 = vector.multi_reduction <add>, %470, %cst_251 [1] : vector<16x32xf32> to vector<16xf32>
    %472 = vector.shape_cast %471 : vector<16xf32> to vector<16x1xf32>
    %cst_252 = arith.constant 3.200000e+01 : f32
    %473 = vector.broadcast %cst_252 : f32 to vector<16x1xf32>
    %474 = arith.divf %472, %473 : vector<16x1xf32>
    %475 = vector.broadcast %467 : vector<16x1xf32> to vector<16x32xf32>
    %476 = arith.subf %463, %475 : vector<16x32xf32>
    %cst_253 = arith.constant 9.99999974E-6 : f32
    %477 = vector.broadcast %cst_253 : f32 to vector<16x1xf32>
    %478 = arith.addf %474, %477 : vector<16x1xf32>
    %479 = math.rsqrt %478 : vector<16x1xf32>
    %480 = vector.broadcast %479 : vector<16x1xf32> to vector<16x32xf32>
    %481 = arith.mulf %476, %480 : vector<16x32xf32>
    %482 = vector.broadcast %252 : vector<1x32xf32> to vector<16x32xf32>
    %483 = arith.mulf %481, %482 : vector<16x32xf32>
    %484 = vector.broadcast %253 : vector<1x32xf32> to vector<16x32xf32>
    %485 = arith.addf %483, %484 : vector<16x32xf32>
    %486 = vector.shape_cast %485 : vector<16x32xf32> to vector<2x8x32xf32>
    %cst_254 = arith.constant dense<0.000000e+00> : vector<2x32xf32>
    %487 = vector.multi_reduction <add>, %486, %cst_254 [1] : vector<2x8x32xf32> to vector<2x32xf32>
    %cst_255 = arith.constant 8.000000e+00 : f32
    %488 = vector.broadcast %cst_255 : f32 to vector<2x32xf32>
    %489 = arith.divf %487, %488 : vector<2x32xf32>
    %c0_256 = arith.constant 0 : index
    %c0_257 = arith.constant 0 : index
    %490 = vector.load %arg8[%c0_256, %c0_257] : memref<32x16xf32, #tpu.memory_space<vmem>>, vector<32x16xf32>
    %cst_258 = arith.constant dense<0.000000e+00> : vector<2x16xf32>
    %491 = tpu.matmul %489, %490, %cst_258 {dimension_numbers = #tpu.dot_dimension_numbers<[1], [0], [0], [1], [0, 0, 1, 1], [], []>} : vector<2x32xf32>, vector<32x16xf32>, vector<2x16xf32> -> vector<2x16xf32>
    %c0_259 = arith.constant 0 : index
    %c0_260 = arith.constant 0 : index
    %492 = vector.load %arg9[%c0_259, %c0_260] : memref<1x16xf32, #tpu.memory_space<vmem>>, vector<1x16xf32>
    %493 = vector.broadcast %492 : vector<1x16xf32> to vector<2x16xf32>
    %494 = arith.addf %491, %493 : vector<2x16xf32>
    %c0_261 = arith.constant 0 : index
    %c0_262 = arith.constant 0 : index
    %495 = vector.load %arg10[%c0_261, %c0_262] : memref<16x3xf32, #tpu.memory_space<vmem>>, vector<16x3xf32>
    %cst_263 = arith.constant dense<0.000000e+00> : vector<2x3xf32>
    %496 = tpu.matmul %494, %495, %cst_263 {dimension_numbers = #tpu.dot_dimension_numbers<[1], [0], [0], [1], [0, 0, 1, 1], [], []>} : vector<2x16xf32>, vector<16x3xf32>, vector<2x3xf32> -> vector<2x3xf32>
    %c0_264 = arith.constant 0 : index
    %c0_265 = arith.constant 0 : index
    %497 = vector.load %arg11[%c0_264, %c0_265] : memref<1x3xf32, #tpu.memory_space<vmem>>, vector<1x3xf32>
    %498 = vector.broadcast %497 : vector<1x3xf32> to vector<2x3xf32>
    %499 = arith.addf %496, %498 : vector<2x3xf32>
    %c0_266 = arith.constant 0 : index
    %c0_267 = arith.constant 0 : index
    %500 = vector.load %arg12[%c0_266, %c0_267] : memref<2x3xf32, #tpu.memory_space<vmem>>, vector<2x3xf32>
    tpu.vector_store %arg12[%c0_266, %c0_267], %499 {strides = array<i32>} : memref<2x3xf32, #tpu.memory_space<vmem>>, vector<2x3xf32>,
    return
  }
}

</mosaic_0001>

<llo_original>
// kernel: forward.1
$region0: #{forward.1}
  #allocation0 [shape = 'u32[]', space=smem, size = 0x4, offset = 0x4, fixed_abs, tag = 'smem constant byte address 0x4 - core index']
  #allocation1 [shape = 'u32[144,128]{1,0:T(1,128)}', space=vmem, size = 0x12000, scoped, tag = 'internal scratch']
  %s0 = inlined_call_operand.vmem [shape: f32[16,32], index: 0, kind: input, shape index: {}]
  %s1 = inlined_call_operand.vmem [shape: f32[2,1,8], index: 1, kind: input, shape index: {}]
  %s2 = inlined_call_operand.vmem [shape: f32[2,4,8,8,8], index: 2, kind: input, shape index: {}]
  %s3 = inlined_call_operand.vmem [shape: f32[2,32,96], index: 3, kind: input, shape index: {}]
  %s4 = inlined_call_operand.vmem [shape: f32[2,4,8,32], index: 4, kind: input, shape index: {}]
  %s5 = inlined_call_operand.vmem [shape: f32[2,32,64], index: 5, kind: input, shape index: {}]
  %s6 = inlined_call_operand.vmem [shape: f32[2,64,32], index: 6, kind: input, shape index: {}]
  %s7 = inlined_call_operand.vmem [shape: f32[2,8,96], index: 7, kind: input, shape index: {}]
  %s8 = inlined_call_operand.vmem [shape: f32[32,16], index: 8, kind: input, shape index: {}]
  %s9 = inlined_call_operand.vmem [shape: f32[1,16], index: 9, kind: input, shape index: {}]
  %s10 = inlined_call_operand.vmem [shape: f32[16,3], index: 10, kind: input, shape index: {}]
  %s11 = inlined_call_operand.vmem [shape: f32[1,3], index: 11, kind: input, shape index: {}]
  %s12 = inlined_call_operand.hbm [shape: f32[2,3], index: 12, kind: output, shape index: {0}]
  %s13 = inlined_call_operand.vmem [shape: f32[2,2,4,8,8], index: 13, kind: output, shape index: {1}]
  %14 = xla_tuple %s12, %s13
  %s15 = sld [smem:[#allocation0]]
  $region66: #{forward.1} parent=0
    _
  %s17 = ssub.s32 1, %s15
  %s18 = scalar_select 0, %s17, %s15
  $region1: #{forward.1} parent=0
    #allocation2 [shape = 'u8[1024]{0}', space=vmem, size = 0x400, scoped, tag = 'output window, operand 0, single buffered']
    #allocation3 [shape = 's32[1]{0}', space=sflag, size = 0x4, scoped, tag = 'scoped memory for forward.1']
    %19 = vsyncpa [#allocation3], 0
    // Predicated region
    $region2: #{forward.1} parent=1 // pred_check
      _
    $region3: #{forward.1} parent=1 // pred_check_branch
      %21 = sbr.rel (0) target = $region5
    $region4: #{forward.1} parent=1 // pred_region
      _
    $region5: #{forward.1} parent=1 // pred_fallthru
      _
    // Predicated region
    $region6: #{forward.1} parent=1 // pred_check
      _
    $region7: #{forward.1} parent=1 // pred_check_branch
      %23 = sbr.rel (0) target = $region9
    $region8: #{forward.1} parent=1 // pred_region
      _
    $region9: #{forward.1} parent=1 // pred_fallthru
      _
    // Predicated region
    $region10: #{forward.1} parent=1 // pred_check
      _
    $region11: #{forward.1} parent=1 // pred_check_branch
      %25 = sbr.rel (0) target = $region13
    $region12: #{forward.1} parent=1 // pred_region
      _
    $region13: #{forward.1} parent=1 // pred_fallthru
      _
    // Predicated region
    $region14: #{forward.1} parent=1 // pred_check
      _
    $region15: #{forward.1} parent=1 // pred_check_branch
      %27 = sbr.rel (0) target = $region17
    $region16: #{forward.1} parent=1 // pred_region
      _
    $region17: #{forward.1} parent=1 // pred_fallthru
      _
    // Predicated region
    $region18: #{forward.1} parent=1 // pred_check
      _
    $region19: #{forward.1} parent=1 // pred_check_branch
      %29 = sbr.rel (0) target = $region21
    $region20: #{forward.1} parent=1 // pred_region
      _
    $region21: #{forward.1} parent=1 // pred_fallthru
      _
    // Predicated region
    $region22: #{forward.1} parent=1 // pred_check
      _
    $region23: #{forward.1} parent=1 // pred_check_branch
      %31 = sbr.rel (0) target = $region25
    $region24: #{forward.1} parent=1 // pred_region
      _
    $region25: #{forward.1} parent=1 // pred_fallthru
      _
    // Predicated region
    $region26: #{forward.1} parent=1 // pred_check
      _
    $region27: #{forward.1} parent=1 // pred_check_branch
      %33 = sbr.rel (0) target = $region29
    $region28: #{forward.1} parent=1 // pred_region
      _
    $region29: #{forward.1} parent=1 // pred_fallthru
      _
    // Predicated region
    $region30: #{forward.1} parent=1 // pred_check
      _
    $region31: #{forward.1} parent=1 // pred_check_branch
      %35 = sbr.rel (0) target = $region33
    $region32: #{forward.1} parent=1 // pred_region
      _
    $region33: #{forward.1} parent=1 // pred_fallthru
      _
    // Predicated region
    $region34: #{forward.1} parent=1 // pred_check
      _
    $region35: #{forward.1} parent=1 // pred_check_branch
      %37 = sbr.rel (0) target = $region37
    $region36: #{forward.1} parent=1 // pred_region
      _
    $region37: #{forward.1} parent=1 // pred_fallthru
      _
    // Predicated region
    $region38: #{forward.1} parent=1 // pred_check
      _
    $region39: #{forward.1} parent=1 // pred_check_branch
      %39 = sbr.rel (0) target = $region41
    $region40: #{forward.1} parent=1 // pred_region
      _
    $region41: #{forward.1} parent=1 // pred_fallthru
      _
    // Predicated region
    $region42: #{forward.1} parent=1 // pred_check
      _
    $region43: #{forward.1} parent=1 // pred_check_branch
      %41 = sbr.rel (0) target = $region45
    $region44: #{forward.1} parent=1 // pred_region
      _
    $region45: #{forward.1} parent=1 // pred_fallthru
      _
    // Predicated region
    $region46: #{forward.1} parent=1 // pred_check
      _
    $region47: #{forward.1} parent=1 // pred_check_branch
      %43 = sbr.rel (0) target = $region49
    $region48: #{forward.1} parent=1 // pred_region
      _
    $region49: #{forward.1} parent=1 // pred_fallthru
      _
    %v44 = vld [vmem:[%s0] sm:$0xff]
    %v45 = vld [vmem:[%s0 + $0x8] sm:$0xff]
    %v46 = vld [vmem:[%s1] sm:$0x1]
    %v47 = vld [vmem:[%s1 + $0x1] sm:$0x1]
    %v48 = vld [vmem:[%s7] sm:$0xff]
    %v49 = vld [vmem:[%s3] sm:$0xff]
    %v50 = vld [vmem:[%s3 + $0x8] sm:$0xff]
    %v51 = vld [vmem:[%s3 + $0x10] sm:$0xff]
    %v52 = vld [vmem:[%s3 + $0x18] sm:$0xff]
    %v53 = vlaneseq
    %v54 = vshrl.u32 %v53, 7
    %v55 = vsub.s32 0, %v54
    %v56 = vrot.slane %v48, %v55
    %vm57 = vcmask 261120
    %v59 = vsel %vm57, %v44, 0
    %v62 = vsel %vm57, %v45, 0
    %64 = vmatprep.subr.mxu0 0.0
    %65 = vmatpush1.msra.mxu0 %v49
    %66 = vmatprep.subr.mxu0 0.0
    %67 = vmatpush1.msra.mxu0 %v50
    %68 = vmatprep.subr.mxu0 0.0
    %69 = vmatpush1.msra.mxu0 %v51
    %70 = vmatprep.subr.mxu0 0.0
    %71 = vmatpush1.msra.mxu0 %v52
    %72 = vmatprep.subr.mxu0 0.0
    %73 = vmatpush1.msra.mxu0 0.0
    %74 = vmatprep.subr.mxu0 0.0
    %75 = vmatpush1.msra.mxu0 0.0
    %76 = vmatprep.subr.mxu0 0.0
    %77 = vmatpush1.msra.mxu0 0.0
    %78 = vmatprep.subr.mxu0 0.0
    %79 = vmatpush1.msra.mxu0 0.0
    %80 = vmatprep.subr.mxu0 0.0
    %81 = vmatpush1.msra.mxu0 0.0
    %82 = vmatprep.subr.mxu0 0.0
    %83 = vmatpush1.msra.mxu0 0.0
    %84 = vmatprep.subr.mxu0 0.0
    %85 = vmatpush1.msra.mxu0 0.0
    %86 = vmatprep.subr.mxu0 0.0
    %87 = vmatpush1.msra.mxu0 0.0
    %88 = vmatprep.subr.mxu0 0.0
    %89 = vmatpush1.msra.mxu0 0.0
    %90 = vmatprep.subr.mxu0 0.0
    %91 = vmatpush1.msra.mxu0 0.0
    %92 = vmatprep.subr.mxu0 0.0
    %93 = vmatpush1.msra.mxu0 0.0
    %94 = vmatprep.subr.mxu0 0.0
    %95 = vmatpush1.msra.mxu0 0.0
    %96 = vmatprep.subr.mxu0 0.0
    %97 = vmatpush1.msra.mxu0 0.0
    %98 = vmatprep.subr.mxu0 0.0
    %99 = vmatpush1.msra.mxu0 0.0
    %100 = vmatprep.subr.mxu0 0.0
    %101 = vmatpush1.msra.mxu0 0.0
    %102 = vmatprep.subr.mxu0 0.0
    %103 = vmatpush1.msra.mxu0 0.0
    %104 = vmatprep.subr.mxu0 0.0
    %105 = vmatpush1.msra.mxu0 0.0
    %106 = vmatprep.subr.mxu0 0.0
    %107 = vmatpush1.msra.mxu0 0.0
    %108 = vmatprep.subr.mxu0 0.0
    %109 = vmatpush1.msra.mxu0 0.0
    %110 = vmatprep.subr.mxu0 0.0
    %111 = vmatpush1.msra.mxu0 0.0
    %112 = vmatprep.subr.mxu0 0.0
    %113 = vmatpush1.msra.mxu0 0.0
    %114 = vmatprep.subr.mxu0 0.0
    %115 = vmatpush1.msra.mxu0 0.0
    %116 = vmatprep.subr.mxu0 0.0
    %117 = vmatpush1.msra.mxu0 0.0
    %118 = vmatprep.subr.mxu0 0.0
    %119 = vmatpush1.msra.mxu0 0.0
    %120 = vmatprep.subr.mxu0 0.0
    %121 = vmatpush1.msra.mxu0 0.0
    %122 = vmatprep.subr.mxu0 0.0
    %123 = vmatpush1.msra.mxu0 0.0
    %124 = vmatprep.subr.mxu0 0.0
    %125 = vmatpush1.msra.mxu0 0.0
    %126 = vmatprep.subr.mxu0 0.0
    %127 = vmatpush1.msra.mxu0 0.0
    %128 = vmatprep.mubr.f32.mxu0 0.0
    %129 = vmatmul.mubr.f32.gmra.mrb[0].mxu0 %v59
    %v130 = vpop.f32.mrb[0].mxu0
    %v131 = vadd.f32 %v56, %v130
    %v132 = vpop.f32.mrb[0].mxu0
    %133 = vmatprep.mubr.f32.mxu0 0.0
    %134 = vmatmul.mubr.f32.gmra.mrb[0].mxu0 %v62
    %v135 = vpop.f32.mrb[0].mxu0
    %v136 = vadd.f32 %v56, %v135
    %v137 = vpop.f32.mrb[0].mxu0
    %138 = vdwg.mxu0
    %v139 = vld [vmem:[%s2] sm:$0xff]
    %v140 = vld [vmem:[%s2 + $0x8] sm:$0xff]
    %v141 = vld [vmem:[%s2 + $0x10] sm:$0xff]
    %v142 = vld [vmem:[%s2 + $0x18] sm:$0xff]
    %v143 = vld [vmem:[%s2 + $0x20] sm:$0xff]
    %v144 = vld [vmem:[%s2 + $0x28] sm:$0xff]
    %v145 = vld [vmem:[%s2 + $0x30] sm:$0xff]
    %v146 = vld [vmem:[%s2 + $0x38] sm:$0xff]
    %v149 = vcombine.high %v131, %v131
    %v151 = vunpack.c.l.s4 1966171168
    %v152 = vunpack.c.0.s8 %v151
    %v153 = vlaneseq
    %v154 = vshrl.u32 %v153, 7
    %v155 = vsub.s32 %v152, %v154
    %v156 = vrot.slane %v131, %v155
    %v158 = vunpack.c.l.s4 1966171168
    %v159 = vunpack.c.0.s8 %v158
    %v160 = vlaneseq
    %v161 = vshrl.u32 %v160, 7
    %v162 = vsub.s32 %v159, %v161
    %v163 = vrot.slane %v149, %v162
    %v164 = vcombine.high %v156, %v156
    %v165 = vcombine.high %v163, %v163
    %v167 = vunpack.c.l.s4 1966171168
    %v168 = vunpack.c.0.s8 %v167
    %v169 = vlaneseq
    %v170 = vshrl.u32 %v169, 7
    %v171 = vsub.s32 %v168, %v170
    %v172 = vrot.slane %v156, %v171
    %v174 = vunpack.c.l.s4 1966171168
    %v175 = vunpack.c.0.s8 %v174
    %v176 = vlaneseq
    %v177 = vshrl.u32 %v176, 7
    %v178 = vsub.s32 %v175, %v177
    %v179 = vrot.slane %v163, %v178
    %v181 = vunpack.c.l.s4 1966171168
    %v182 = vunpack.c.0.s8 %v181
    %v183 = vlaneseq
    %v184 = vshrl.u32 %v183, 7
    %v185 = vsub.s32 %v182, %v184
    %v186 = vrot.slane %v164, %v185
    %v188 = vunpack.c.l.s4 1966171168
    %v189 = vunpack.c.0.s8 %v188
    %v190 = vlaneseq
    %v191 = vshrl.u32 %v190, 7
    %v192 = vsub.s32 %v189, %v191
    %v193 = vrot.slane %v165, %v192
    %v194 = vcombine.high %v172, %v172
    %v195 = vcombine.high %v179, %v179
    %v196 = vcombine.high %v186, %v186
    %v197 = vcombine.high %v193, %v193
    %v198 = vcombine.high %v136, %v136
    %v200 = vunpack.c.l.s4 1966171168
    %v201 = vunpack.c.0.s8 %v200
    %v202 = vlaneseq
    %v203 = vshrl.u32 %v202, 7
    %v204 = vsub.s32 %v201, %v203
    %v205 = vrot.slane %v136, %v204
    %v207 = vunpack.c.l.s4 1966171168
    %v208 = vunpack.c.0.s8 %v207
    %v209 = vlaneseq
    %v210 = vshrl.u32 %v209, 7
    %v211 = vsub.s32 %v208, %v210
    %v212 = vrot.slane %v198, %v211
    %v213 = vcombine.high %v205, %v205
    %v214 = vcombine.high %v212, %v212
    %v216 = vunpack.c.l.s4 1966171168
    %v217 = vunpack.c.0.s8 %v216
    %v218 = vlaneseq
    %v219 = vshrl.u32 %v218, 7
    %v220 = vsub.s32 %v217, %v219
    %v221 = vrot.slane %v205, %v220
    %v223 = vunpack.c.l.s4 1966171168
    %v224 = vunpack.c.0.s8 %v223
    %v225 = vlaneseq
    %v226 = vshrl.u32 %v225, 7
    %v227 = vsub.s32 %v224, %v226
    %v228 = vrot.slane %v212, %v227
    %v230 = vunpack.c.l.s4 1966171168
    %v231 = vunpack.c.0.s8 %v230
    %v232 = vlaneseq
    %v233 = vshrl.u32 %v232, 7
    %v234 = vsub.s32 %v231, %v233
    %v235 = vrot.slane %v213, %v234
    %v237 = vunpack.c.l.s4 1966171168
    %v238 = vunpack.c.0.s8 %v237
    %v239 = vlaneseq
    %v240 = vshrl.u32 %v239, 7
    %v241 = vsub.s32 %v238, %v240
    %v242 = vrot.slane %v214, %v241
    %v243 = vcombine.high %v221, %v221
    %v244 = vcombine.high %v228, %v228
    %v245 = vcombine.high %v235, %v235
    %v246 = vcombine.high %v242, %v242
    %v247 = vlaneseq
    %v248 = vshrl.u32 %v247, 7
    %v249 = vsub.s32 0, %v248
    %v250 = vrot.slane %v172, %v249
    %v251 = vlaneseq
    %v252 = vshrl.u32 %v251, 7
    %v253 = vsub.s32 0, %v252
    %v254 = vrot.slane %v186, %v253
    %v255 = vlaneseq
    %v256 = vshrl.u32 %v255, 7
    %v257 = vsub.s32 0, %v256
    %v258 = vrot.slane %v194, %v257
    %v259 = vlaneseq
    %v260 = vshrl.u32 %v259, 7
    %v261 = vsub.s32 0, %v260
    %v262 = vrot.slane %v196, %v261
    %v263 = vlaneseq
    %v264 = vshrl.u32 %v263, 7
    %v265 = vsub.s32 0, %v264
    %v266 = vrot.slane %v179, %v265
    %v267 = vlaneseq
    %v268 = vshrl.u32 %v267, 7
    %v269 = vsub.s32 0, %v268
    %v270 = vrot.slane %v193, %v269
    %v271 = vlaneseq
    %v272 = vshrl.u32 %v271, 7
    %v273 = vsub.s32 0, %v272
    %v274 = vrot.slane %v195, %v273
    %v275 = vlaneseq
    %v276 = vshrl.u32 %v275, 7
    %v277 = vsub.s32 0, %v276
    %v278 = vrot.slane %v197, %v277
    %v279 = vlaneseq
    %v280 = vshrl.u32 %v279, 7
    %v281 = vsub.s32 0, %v280
    %v282 = vrot.slane %v221, %v281
    %v283 = vlaneseq
    %v284 = vshrl.u32 %v283, 7
    %v285 = vsub.s32 0, %v284
    %v286 = vrot.slane %v235, %v285
    %v287 = vlaneseq
    %v288 = vshrl.u32 %v287, 7
    %v289 = vsub.s32 0, %v288
    %v290 = vrot.slane %v243, %v289
    %v291 = vlaneseq
    %v292 = vshrl.u32 %v291, 7
    %v293 = vsub.s32 0, %v292
    %v294 = vrot.slane %v245, %v293
    %v295 = vlaneseq
    %v296 = vshrl.u32 %v295, 7
    %v297 = vsub.s32 0, %v296
    %v298 = vrot.slane %v228, %v297
    %v299 = vlaneseq
    %v300 = vshrl.u32 %v299, 7
    %v301 = vsub.s32 0, %v300
    %v302 = vrot.slane %v242, %v301
    %v303 = vlaneseq
    %v304 = vshrl.u32 %v303, 7
    %v305 = vsub.s32 0, %v304
    %v306 = vrot.slane %v244, %v305
    %v307 = vlaneseq
    %v308 = vshrl.u32 %v307, 7
    %v309 = vsub.s32 0, %v308
    %v310 = vrot.slane %v246, %v309
    %v327 = vmul.f32 %v250, %v139
    %v328 = vmul.f32 %v254, %v140
    %v329 = vmul.f32 %v258, %v141
    %v330 = vmul.f32 %v262, %v142
    %v331 = vmul.f32 %v266, %v143
    %v332 = vmul.f32 %v270, %v144
    %v333 = vmul.f32 %v274, %v145
    %v334 = vmul.f32 %v278, %v146
    %v335 = vmul.f32 %v282, %v139
    %v336 = vmul.f32 %v286, %v140
    %v337 = vmul.f32 %v290, %v141
    %v338 = vmul.f32 %v294, %v142
    %v339 = vmul.f32 %v298, %v143
    %v340 = vmul.f32 %v302, %v144
    %v341 = vmul.f32 %v306, %v145
    %v342 = vmul.f32 %v310, %v146
    %vm343 = vcmask 64512
    %v344 = vsel %vm343, %v327, 0.0
    %345 = vadd.xlane.f32.xlu0 %v344
    %v346 = vpop.xlane.xlu0 %345
    %v347 = vsel %vm343, %v328, 0.0
    %348 = vadd.xlane.f32.xlu0 %v347
    %v349 = vpop.xlane.xlu0 %348
    %v350 = vsel %vm343, %v329, 0.0
    %351 = vadd.xlane.f32.xlu0 %v350
    %v352 = vpop.xlane.xlu0 %351
    %v353 = vsel %vm343, %v330, 0.0
    %354 = vadd.xlane.f32.xlu0 %v353
    %v355 = vpop.xlane.xlu0 %354
    %v356 = vsel %vm343, %v331, 0.0
    %357 = vadd.xlane.f32.xlu0 %v356
    %v358 = vpop.xlane.xlu0 %357
    %v359 = vsel %vm343, %v332, 0.0
    %360 = vadd.xlane.f32.xlu0 %v359
    %v361 = vpop.xlane.xlu0 %360
    %v362 = vsel %vm343, %v333, 0.0
    %363 = vadd.xlane.f32.xlu0 %v362
    %v364 = vpop.xlane.xlu0 %363
    %v365 = vsel %vm343, %v334, 0.0
    %366 = vadd.xlane.f32.xlu0 %v365
    %v367 = vpop.xlane.xlu0 %366
    %v368 = vsel %vm343, %v335, 0.0
    %369 = vadd.xlane.f32.xlu0 %v368
    %v370 = vpop.xlane.xlu0 %369
    %v371 = vsel %vm343, %v336, 0.0
    %372 = vadd.xlane.f32.xlu0 %v371
    %v373 = vpop.xlane.xlu0 %372
    %v374 = vsel %vm343, %v337, 0.0
    %375 = vadd.xlane.f32.xlu0 %v374
    %v376 = vpop.xlane.xlu0 %375
    %v377 = vsel %vm343, %v338, 0.0
    %378 = vadd.xlane.f32.xlu0 %v377
    %v379 = vpop.xlane.xlu0 %378
    %v380 = vsel %vm343, %v339, 0.0
    %381 = vadd.xlane.f32.xlu0 %v380
    %v382 = vpop.xlane.xlu0 %381
    %v383 = vsel %vm343, %v340, 0.0
    %384 = vadd.xlane.f32.xlu0 %v383
    %v385 = vpop.xlane.xlu0 %384
    %v386 = vsel %vm343, %v341, 0.0
    %387 = vadd.xlane.f32.xlu0 %v386
    %v388 = vpop.xlane.xlu0 %387
    %v389 = vsel %vm343, %v342, 0.0
    %390 = vadd.xlane.f32.xlu0 %v389
    %v391 = vpop.xlane.xlu0 %390
    %392 = vrot.lane.b32.xlu0 %v131, 96
    %v393 = vpop.permute.xlu0 %392
    %v402 = vlaneseq
    %v403 = vand.u32 %v402, 127
    %v404 = vlaneseq
    %v405 = vshrl.u32 %v404, 7
    %v406 = vsub.s32 %v403, %v405
    %v407 = vrot.slane %v346, %v406
    %v408 = vlaneseq
    %v409 = vshrl.u32 %v408, 7
    %v410 = vsub.s32 %v403, %v409
    %v411 = vrot.slane %v349, %v410
    %v412 = vlaneseq
    %v413 = vshrl.u32 %v412, 7
    %v414 = vsub.s32 %v403, %v413
    %v415 = vrot.slane %v352, %v414
    %v416 = vlaneseq
    %v417 = vshrl.u32 %v416, 7
    %v418 = vsub.s32 %v403, %v417
    %v419 = vrot.slane %v355, %v418
    %v420 = vlaneseq
    %v421 = vshrl.u32 %v420, 7
    %v422 = vsub.s32 %v403, %v421
    %v423 = vrot.slane %v358, %v422
    %v424 = vlaneseq
    %v425 = vshrl.u32 %v424, 7
    %v426 = vsub.s32 %v403, %v425
    %v427 = vrot.slane %v361, %v426
    %v428 = vlaneseq
    %v429 = vshrl.u32 %v428, 7
    %v430 = vsub.s32 %v403, %v429
    %v431 = vrot.slane %v364, %v430
    %v432 = vlaneseq
    %v433 = vshrl.u32 %v432, 7
    %v434 = vsub.s32 %v403, %v433
    %v435 = vrot.slane %v367, %v434
    %vm436 = vcmask 1041409
    %v437 = vsel %vm436, %v411, %v407
    %vm438 = vcmask 1042434
    %v439 = vsel %vm438, %v415, %v437
    %vm440 = vcmask 1043459
    %v441 = vsel %vm440, %v419, %v439
    %vm442 = vcmask 1044484
    %v443 = vsel %vm442, %v423, %v441
    %vm444 = vcmask 1045509
    %v445 = vsel %vm444, %v427, %v443
    %vm446 = vcmask 1046534
    %v447 = vsel %vm446, %v431, %v445
    %vm448 = vcmask 1047559
    %v449 = vsel %vm448, %v435, %v447
    %v451 = vsel %vm343, %v131, 0
    %v453 = vsel %vm343, %v393, 0
    %455 = vmatprep.subr.mxu0 0.0
    %456 = vmatpush1.xpose.msra.mxu0 %v453
    %457 = vmatprep.subr.mxu0 0.0
    %458 = vmatpush1.xpose.msra.mxu0 0.0
    %459 = vmatprep.subr.mxu0 0.0
    %460 = vmatpush1.xpose.msra.mxu0 0.0
    %461 = vmatprep.subr.mxu0 0.0
    %462 = vmatpush1.xpose.msra.mxu0 0.0
    %463 = vmatprep.subr.mxu0 0.0
    %464 = vmatpush1.xpose.msra.mxu0 0.0
    %465 = vmatprep.subr.mxu0 0.0
    %466 = vmatpush1.xpose.msra.mxu0 0.0
    %467 = vmatprep.subr.mxu0 0.0
    %468 = vmatpush1.xpose.msra.mxu0 0.0
    %469 = vmatprep.subr.mxu0 0.0
    %470 = vmatpush1.xpose.msra.mxu0 0.0
    %471 = vmatprep.subr.mxu0 0.0
    %472 = vmatpush1.xpose.msra.mxu0 0.0
    %473 = vmatprep.subr.mxu0 0.0
    %474 = vmatpush1.xpose.msra.mxu0 0.0
    %475 = vmatprep.subr.mxu0 0.0
    %476 = vmatpush1.xpose.msra.mxu0 0.0
    %477 = vmatprep.subr.mxu0 0.0
    %478 = vmatpush1.xpose.msra.mxu0 0.0
    %479 = vmatprep.subr.mxu0 0.0
    %480 = vmatpush1.xpose.msra.mxu0 0.0
    %481 = vmatprep.subr.mxu0 0.0
    %482 = vmatpush1.xpose.msra.mxu0 0.0
    %483 = vmatprep.subr.mxu0 0.0
    %484 = vmatpush1.xpose.msra.mxu0 0.0
    %485 = vmatprep.subr.mxu0 0.0
    %486 = vmatpush1.xpose.msra.mxu0 0.0
    %487 = vmatprep.subr.mxu0 0.0
    %488 = vmatpush1.xpose.msra.mxu0 0.0
    %489 = vmatprep.subr.mxu0 0.0
    %490 = vmatpush1.xpose.msra.mxu0 0.0
    %491 = vmatprep.subr.mxu0 0.0
    %492 = vmatpush1.xpose.msra.mxu0 0.0
    %493 = vmatprep.subr.mxu0 0.0
    %494 = vmatpush1.xpose.msra.mxu0 0.0
    %495 = vmatprep.subr.mxu0 0.0
    %496 = vmatpush1.xpose.msra.mxu0 0.0
    %497 = vmatprep.subr.mxu0 0.0
    %498 = vmatpush1.xpose.msra.mxu0 0.0
    %499 = vmatprep.subr.mxu0 0.0
    %500 = vmatpush1.xpose.msra.mxu0 0.0
    %501 = vmatprep.subr.mxu0 0.0
    %502 = vmatpush1.xpose.msra.mxu0 0.0
    %503 = vmatprep.subr.mxu0 0.0
    %504 = vmatpush1.xpose.msra.mxu0 0.0
    %505 = vmatprep.subr.mxu0 0.0
    %506 = vmatpush1.xpose.msra.mxu0 0.0
    %507 = vmatprep.subr.mxu0 0.0
    %508 = vmatpush1.xpose.msra.mxu0 0.0
    %509 = vmatprep.subr.mxu0 0.0
    %510 = vmatpush1.xpose.msra.mxu0 0.0
    %511 = vmatprep.subr.mxu0 0.0
    %512 = vmatpush1.xpose.msra.mxu0 0.0
    %513 = vmatprep.subr.mxu0 0.0
    %514 = vmatpush1.xpose.msra.mxu0 0.0
    %515 = vmatprep.subr.mxu0 0.0
    %516 = vmatpush1.xpose.msra.mxu0 0.0
    %517 = vmatprep.subr.mxu0 0.0
    %518 = vmatpush1.xpose.msra.mxu0 0.0
    %519 = vmatprep.mubr.f32.mxu0 0.0
    %520 = vmatmul.mubr.f32.gmra.mrb[0].mxu0 %v451
    %v521 = vpop.f32.mrb[0].mxu0
    %v522 = vadd.f32 %v449, %v521
    %v523 = vpop.f32.mrb[0].mxu0
    %524 = vdwg.mxu0
    %525 = vrot.lane.b32.xlu0 %v136, 96
    %v526 = vpop.permute.xlu0 %525
    %v535 = vlaneseq
    %v536 = vshrl.u32 %v535, 7
    %v537 = vsub.s32 %v403, %v536
    %v538 = vrot.slane %v370, %v537
    %v539 = vlaneseq
    %v540 = vshrl.u32 %v539, 7
    %v541 = vsub.s32 %v403, %v540
    %v542 = vrot.slane %v373, %v541
    %v543 = vlaneseq
    %v544 = vshrl.u32 %v543, 7
    %v545 = vsub.s32 %v403, %v544
    %v546 = vrot.slane %v376, %v545
    %v547 = vlaneseq
    %v548 = vshrl.u32 %v547, 7
    %v549 = vsub.s32 %v403, %v548
    %v550 = vrot.slane %v379, %v549
    %v551 = vlaneseq
    %v552 = vshrl.u32 %v551, 7
    %v553 = vsub.s32 %v403, %v552
    %v554 = vrot.slane %v382, %v553
    %v555 = vlaneseq
    %v556 = vshrl.u32 %v555, 7
    %v557 = vsub.s32 %v403, %v556
    %v558 = vrot.slane %v385, %v557
    %v559 = vlaneseq
    %v560 = vshrl.u32 %v559, 7
    %v561 = vsub.s32 %v403, %v560
    %v562 = vrot.slane %v388, %v561
    %v563 = vlaneseq
    %v564 = vshrl.u32 %v563, 7
    %v565 = vsub.s32 %v403, %v564
    %v566 = vrot.slane %v391, %v565
    %v567 = vsel %vm436, %v542, %v538
    %v568 = vsel %vm438, %v546, %v567
    %v569 = vsel %vm440, %v550, %v568
    %v570 = vsel %vm442, %v554, %v569
    %v571 = vsel %vm444, %v558, %v570
    %v572 = vsel %vm446, %v562, %v571
    %v573 = vsel %vm448, %v566, %v572
    %v575 = vsel %vm343, %v136, 0
    %v577 = vsel %vm343, %v526, 0
    %579 = vmatprep.subr.mxu0 0.0
    %580 = vmatpush1.xpose.msra.mxu0 %v577
    %581 = vmatprep.subr.mxu0 0.0
    %582 = vmatpush1.xpose.msra.mxu0 0.0
    %583 = vmatprep.subr.mxu0 0.0
    %584 = vmatpush1.xpose.msra.mxu0 0.0
    %585 = vmatprep.subr.mxu0 0.0
    %586 = vmatpush1.xpose.msra.mxu0 0.0
    %587 = vmatprep.subr.mxu0 0.0
    %588 = vmatpush1.xpose.msra.mxu0 0.0
    %589 = vmatprep.subr.mxu0 0.0
    %590 = vmatpush1.xpose.msra.mxu0 0.0
    %591 = vmatprep.subr.mxu0 0.0
    %592 = vmatpush1.xpose.msra.mxu0 0.0
    %593 = vmatprep.subr.mxu0 0.0
    %594 = vmatpush1.xpose.msra.mxu0 0.0
    %595 = vmatprep.subr.mxu0 0.0
    %596 = vmatpush1.xpose.msra.mxu0 0.0
    %597 = vmatprep.subr.mxu0 0.0
    %598 = vmatpush1.xpose.msra.mxu0 0.0
    %599 = vmatprep.subr.mxu0 0.0
    %600 = vmatpush1.xpose.msra.mxu0 0.0
    %601 = vmatprep.subr.mxu0 0.0
    %602 = vmatpush1.xpose.msra.mxu0 0.0
    %603 = vmatprep.subr.mxu0 0.0
    %604 = vmatpush1.xpose.msra.mxu0 0.0
    %605 = vmatprep.subr.mxu0 0.0
    %606 = vmatpush1.xpose.msra.mxu0 0.0
    %607 = vmatprep.subr.mxu0 0.0
    %608 = vmatpush1.xpose.msra.mxu0 0.0
    %609 = vmatprep.subr.mxu0 0.0
    %610 = vmatpush1.xpose.msra.mxu0 0.0
    %611 = vmatprep.subr.mxu0 0.0
    %612 = vmatpush1.xpose.msra.mxu0 0.0
    %613 = vmatprep.subr.mxu0 0.0
    %614 = vmatpush1.xpose.msra.mxu0 0.0
    %615 = vmatprep.subr.mxu0 0.0
    %616 = vmatpush1.xpose.msra.mxu0 0.0
    %617 = vmatprep.subr.mxu0 0.0
    %618 = vmatpush1.xpose.msra.mxu0 0.0
    %619 = vmatprep.subr.mxu0 0.0
    %620 = vmatpush1.xpose.msra.mxu0 0.0
    %621 = vmatprep.subr.mxu0 0.0
    %622 = vmatpush1.xpose.msra.mxu0 0.0
    %623 = vmatprep.subr.mxu0 0.0
    %624 = vmatpush1.xpose.msra.mxu0 0.0
    %625 = vmatprep.subr.mxu0 0.0
    %626 = vmatpush1.xpose.msra.mxu0 0.0
    %627 = vmatprep.subr.mxu0 0.0
    %628 = vmatpush1.xpose.msra.mxu0 0.0
    %629 = vmatprep.subr.mxu0 0.0
    %630 = vmatpush1.xpose.msra.mxu0 0.0
    %631 = vmatprep.subr.mxu0 0.0
    %632 = vmatpush1.xpose.msra.mxu0 0.0
    %633 = vmatprep.subr.mxu0 0.0
    %634 = vmatpush1.xpose.msra.mxu0 0.0
    %635 = vmatprep.subr.mxu0 0.0
    %636 = vmatpush1.xpose.msra.mxu0 0.0
    %637 = vmatprep.subr.mxu0 0.0
    %638 = vmatpush1.xpose.msra.mxu0 0.0
    %639 = vmatprep.subr.mxu0 0.0
    %640 = vmatpush1.xpose.msra.mxu0 0.0
    %641 = vmatprep.subr.mxu0 0.0
    %642 = vmatpush1.xpose.msra.mxu0 0.0
    %643 = vmatprep.mubr.f32.mxu0 0.0
    %644 = vmatmul.mubr.f32.gmra.mrb[0].mxu0 %v575
    %v645 = vpop.f32.mrb[0].mxu0
    %v646 = vadd.f32 %v573, %v645
    %v647 = vpop.f32.mrb[0].mxu0
    %648 = vdwg.mxu0
    %v651 = vlaneseq
    %v652 = vshrl.u32 %v651, 7
    %v653 = vsub.s32 0, %v652
    %v654 = vrot.slane %v46, %v653
    %v655 = vlaneseq
    %v656 = vshrl.u32 %v655, 7
    %v657 = vsub.s32 0, %v656
    %v658 = vrot.slane %v47, %v657
    %v661 = vadd.f32 %v522, %v654
    %v662 = vadd.f32 %v646, %v658
    %v663 = vsel %vm343, %v661, -inf
    %664 = vmax.xlane.f32.xlu0 %v663
    %v665 = vpop.xlane.xlu0 %664
    %v666 = vsel %vm343, %v662, -inf
    %667 = vmax.xlane.f32.xlu0 %v666
    %v668 = vpop.xlane.xlu0 %667
    %v669 = vsub.f32 %v661, %v665
    %v670 = vsub.f32 %v662, %v668
    %v671 = vmul.f32 %v669, 1.442695
    %v672 = vpow.pop %v671
    %v673 = vmul.f32 %v670, 1.442695
    %v674 = vpow.pop %v673
    %v675 = vsel %vm343, %v672, 0.0
    %676 = vadd.xlane.f32.xlu0 %v675
    %v677 = vpop.xlane.xlu0 %676
    %v678 = vsel %vm343, %v674, 0.0
    %679 = vadd.xlane.f32.xlu0 %v678
    %v680 = vpop.xlane.xlu0 %679
    %v681 = vrcp.pop %v677
    %v682 = vmul.f32 %v672, %v681
    %v683 = vrcp.pop %v680
    %v684 = vmul.f32 %v674, %v683
    %685 = vst.msk [vmem:[%s13] sm:$0xff] %vm343, %v682
    %s686 = scalar_lea.vmem %s13, 32
    %687 = vst.msk [vmem:[%s686] sm:$0xff] %vm343, %v684
    %688 = vrot.lane.b32.xlu0 %v131, 64
    %v689 = vpop.permute.xlu0 %688
    %v692 = vsel %vm343, %v682, 0
    %694 = vmatprep.subr.mxu0 0.0
    %695 = vmatpush1.msra.mxu0 %v689
    %696 = vmatprep.subr.mxu0 0.0
    %697 = vmatpush1.msra.mxu0 0.0
    %698 = vmatprep.subr.mxu0 0.0
    %699 = vmatpush1.msra.mxu0 0.0
    %700 = vmatprep.subr.mxu0 0.0
    %701 = vmatpush1.msra.mxu0 0.0
    %702 = vmatprep.subr.mxu0 0.0
    %703 = vmatpush1.msra.mxu0 0.0
    %704 = vmatprep.subr.mxu0 0.0
    %705 = vmatpush1.msra.mxu0 0.0
    %706 = vmatprep.subr.mxu0 0.0
    %707 = vmatpush1.msra.mxu0 0.0
    %708 = vmatprep.subr.mxu0 0.0
    %709 = vmatpush1.msra.mxu0 0.0
    %710 = vmatprep.subr.mxu0 0.0
    %711 = vmatpush1.msra.mxu0 0.0
    %712 = vmatprep.subr.mxu0 0.0
    %713 = vmatpush1.msra.mxu0 0.0
    %714 = vmatprep.subr.mxu0 0.0
    %715 = vmatpush1.msra.mxu0 0.0
    %716 = vmatprep.subr.mxu0 0.0
    %717 = vmatpush1.msra.mxu0 0.0
    %718 = vmatprep.subr.mxu0 0.0
    %719 = vmatpush1.msra.mxu0 0.0
    %720 = vmatprep.subr.mxu0 0.0
    %721 = vmatpush1.msra.mxu0 0.0
    %722 = vmatprep.subr.mxu0 0.0
    %723 = vmatpush1.msra.mxu0 0.0
    %724 = vmatprep.subr.mxu0 0.0
    %725 = vmatpush1.msra.mxu0 0.0
    %726 = vmatprep.subr.mxu0 0.0
    %727 = vmatpush1.msra.mxu0 0.0
    %728 = vmatprep.subr.mxu0 0.0
    %729 = vmatpush1.msra.mxu0 0.0
    %730 = vmatprep.subr.mxu0 0.0
    %731 = vmatpush1.msra.mxu0 0.0
    %732 = vmatprep.subr.mxu0 0.0
    %733 = vmatpush1.msra.mxu0 0.0
    %734 = vmatprep.subr.mxu0 0.0
    %735 = vmatpush1.msra.mxu0 0.0
    %736 = vmatprep.subr.mxu0 0.0
    %737 = vmatpush1.msra.mxu0 0.0
    %738 = vmatprep.subr.mxu0 0.0
    %739 = vmatpush1.msra.mxu0 0.0
    %740 = vmatprep.subr.mxu0 0.0
    %741 = vmatpush1.msra.mxu0 0.0
    %742 = vmatprep.subr.mxu0 0.0
    %743 = vmatpush1.msra.mxu0 0.0
    %744 = vmatprep.subr.mxu0 0.0
    %745 = vmatpush1.msra.mxu0 0.0
    %746 = vmatprep.subr.mxu0 0.0
    %747 = vmatpush1.msra.mxu0 0.0
    %748 = vmatprep.subr.mxu0 0.0
    %749 = vmatpush1.msra.mxu0 0.0
    %750 = vmatprep.subr.mxu0 0.0
    %751 = vmatpush1.msra.mxu0 0.0
    %752 = vmatprep.subr.mxu0 0.0
    %753 = vmatpush1.msra.mxu0 0.0
    %754 = vmatprep.subr.mxu0 0.0
    %755 = vmatpush1.msra.mxu0 0.0
    %756 = vmatprep.subr.mxu0 0.0
    %757 = vmatpush1.msra.mxu0 0.0
    %758 = vmatprep.mubr.f32.mxu0 0.0
    %759 = vmatmul.mubr.f32.gmra.mrb[0].mxu0 %v692
    %v760 = vpop.f32.mrb[0].mxu0
    %v761 = vadd.f32 0.0, %v760
    %v762 = vpop.f32.mrb[0].mxu0
    %763 = vdwg.mxu0
    %764 = vrot.lane.b32.xlu0 %v136, 64
    %v765 = vpop.permute.xlu0 %764
    %v768 = vsel %vm343, %v684, 0
    %770 = vmatprep.subr.mxu0 0.0
    %771 = vmatpush1.msra.mxu0 %v765
    %772 = vmatprep.subr.mxu0 0.0
    %773 = vmatpush1.msra.mxu0 0.0
    %774 = vmatprep.subr.mxu0 0.0
    %775 = vmatpush1.msra.mxu0 0.0
    %776 = vmatprep.subr.mxu0 0.0
    %777 = vmatpush1.msra.mxu0 0.0
    %778 = vmatprep.subr.mxu0 0.0
    %779 = vmatpush1.msra.mxu0 0.0
    %780 = vmatprep.subr.mxu0 0.0
    %781 = vmatpush1.msra.mxu0 0.0
    %782 = vmatprep.subr.mxu0 0.0
    %783 = vmatpush1.msra.mxu0 0.0
    %784 = vmatprep.subr.mxu0 0.0
    %785 = vmatpush1.msra.mxu0 0.0
    %786 = vmatprep.subr.mxu0 0.0
    %787 = vmatpush1.msra.mxu0 0.0
    %788 = vmatprep.subr.mxu0 0.0
    %789 = vmatpush1.msra.mxu0 0.0
    %790 = vmatprep.subr.mxu0 0.0
    %791 = vmatpush1.msra.mxu0 0.0
    %792 = vmatprep.subr.mxu0 0.0
    %793 = vmatpush1.msra.mxu0 0.0
    %794 = vmatprep.subr.mxu0 0.0
    %795 = vmatpush1.msra.mxu0 0.0
    %796 = vmatprep.subr.mxu0 0.0
    %797 = vmatpush1.msra.mxu0 0.0
    %798 = vmatprep.subr.mxu0 0.0
    %799 = vmatpush1.msra.mxu0 0.0
    %800 = vmatprep.subr.mxu0 0.0
    %801 = vmatpush1.msra.mxu0 0.0
    %802 = vmatprep.subr.mxu0 0.0
    %803 = vmatpush1.msra.mxu0 0.0
    %804 = vmatprep.subr.mxu0 0.0
    %805 = vmatpush1.msra.mxu0 0.0
    %806 = vmatprep.subr.mxu0 0.0
    %807 = vmatpush1.msra.mxu0 0.0
    %808 = vmatprep.subr.mxu0 0.0
    %809 = vmatpush1.msra.mxu0 0.0
    %810 = vmatprep.subr.mxu0 0.0
    %811 = vmatpush1.msra.mxu0 0.0
    %812 = vmatprep.subr.mxu0 0.0
    %813 = vmatpush1.msra.mxu0 0.0
    %814 = vmatprep.subr.mxu0 0.0
    %815 = vmatpush1.msra.mxu0 0.0
    %816 = vmatprep.subr.mxu0 0.0
    %817 = vmatpush1.msra.mxu0 0.0
    %818 = vmatprep.subr.mxu0 0.0
    %819 = vmatpush1.msra.mxu0 0.0
    %820 = vmatprep.subr.mxu0 0.0
    %821 = vmatpush1.msra.mxu0 0.0
    %822 = vmatprep.subr.mxu0 0.0
    %823 = vmatpush1.msra.mxu0 0.0
    %824 = vmatprep.subr.mxu0 0.0
    %825 = vmatpush1.msra.mxu0 0.0
    %826 = vmatprep.subr.mxu0 0.0
    %827 = vmatpush1.msra.mxu0 0.0
    %828 = vmatprep.subr.mxu0 0.0
    %829 = vmatpush1.msra.mxu0 0.0
    %830 = vmatprep.subr.mxu0 0.0
    %831 = vmatpush1.msra.mxu0 0.0
    %832 = vmatprep.subr.mxu0 0.0
    %833 = vmatpush1.msra.mxu0 0.0
    %834 = vmatprep.mubr.f32.mxu0 0.0
    %835 = vmatmul.mubr.f32.gmra.mrb[0].mxu0 %v768
    %v836 = vpop.f32.mrb[0].mxu0
    %v837 = vadd.f32 0.0, %v836
    %v838 = vpop.f32.mrb[0].mxu0
    %839 = vdwg.mxu0
    %v840 = vld [vmem:[%s4] sm:$0xff]
    %s841 = scalar_lea.vmem %s2, 64
    %v842 = vld [vmem:[%s841] sm:$0xff]
    %v843 = vld [vmem:[%s841 + $0x8] sm:$0xff]
    %v844 = vld [vmem:[%s841 + $0x10] sm:$0xff]
    %v845 = vld [vmem:[%s841 + $0x18] sm:$0xff]
    %v846 = vld [vmem:[%s841 + $0x20] sm:$0xff]
    %v847 = vld [vmem:[%s841 + $0x28] sm:$0xff]
    %v848 = vld [vmem:[%s841 + $0x30] sm:$0xff]
    %v849 = vld [vmem:[%s841 + $0x38] sm:$0xff]
    %858 = vrot.lane.b32.xlu0 %v842, 8
    %v859 = vpop.permute.xlu0 %858
    %860 = vrot.lane.b32.xlu0 %v843, 8
    %v861 = vpop.permute.xlu0 %860
    %862 = vrot.lane.b32.xlu0 %v844, 8
    %v863 = vpop.permute.xlu0 %862
    %864 = vrot.lane.b32.xlu0 %v845, 8
    %v865 = vpop.permute.xlu0 %864
    %866 = vrot.lane.b32.xlu0 %v846, 8
    %v867 = vpop.permute.xlu0 %866
    %868 = vrot.lane.b32.xlu0 %v847, 8
    %v869 = vpop.permute.xlu0 %868
    %870 = vrot.lane.b32.xlu0 %v848, 8
    %v871 = vpop.permute.xlu0 %870
    %872 = vrot.lane.b32.xlu0 %v849, 8
    %v873 = vpop.permute.xlu0 %872
    %v882 = vmul.f32 %v250, %v859
    %v883 = vmul.f32 %v254, %v861
    %v884 = vmul.f32 %v258, %v863
    %v885 = vmul.f32 %v262, %v865
    %v886 = vmul.f32 %v266, %v867
    %v887 = vmul.f32 %v270, %v869
    %v888 = vmul.f32 %v274, %v871
    %v889 = vmul.f32 %v278, %v873
    %v890 = vmul.f32 %v282, %v859
    %v891 = vmul.f32 %v286, %v861
    %v892 = vmul.f32 %v290, %v863
    %v893 = vmul.f32 %v294, %v865
    %v894 = vmul.f32 %v298, %v867
    %v895 = vmul.f32 %v302, %v869
    %v896 = vmul.f32 %v306, %v871
    %v897 = vmul.f32 %v310, %v873
    %914 = vrot.lane.b32.xlu0 %v882, 120
    %v915 = vpop.permute.xlu0 %914
    %916 = vrot.lane.b32.xlu0 %v883, 120
    %v917 = vpop.permute.xlu0 %916
    %918 = vrot.lane.b32.xlu0 %v884, 120
    %v919 = vpop.permute.xlu0 %918
    %920 = vrot.lane.b32.xlu0 %v885, 120
    %v921 = vpop.permute.xlu0 %920
    %922 = vrot.lane.b32.xlu0 %v886, 120
    %v923 = vpop.permute.xlu0 %922
    %924 = vrot.lane.b32.xlu0 %v887, 120
    %v925 = vpop.permute.xlu0 %924
    %926 = vrot.lane.b32.xlu0 %v888, 120
    %v927 = vpop.permute.xlu0 %926
    %928 = vrot.lane.b32.xlu0 %v889, 120
    %v929 = vpop.permute.xlu0 %928
    %930 = vrot.lane.b32.xlu0 %v890, 120
    %v931 = vpop.permute.xlu0 %930
    %932 = vrot.lane.b32.xlu0 %v891, 120
    %v933 = vpop.permute.xlu0 %932
    %934 = vrot.lane.b32.xlu0 %v892, 120
    %v935 = vpop.permute.xlu0 %934
    %936 = vrot.lane.b32.xlu0 %v893, 120
    %v937 = vpop.permute.xlu0 %936
    %938 = vrot.lane.b32.xlu0 %v894, 120
    %v939 = vpop.permute.xlu0 %938
    %940 = vrot.lane.b32.xlu0 %v895, 120
    %v941 = vpop.permute.xlu0 %940
    %942 = vrot.lane.b32.xlu0 %v896, 120
    %v943 = vpop.permute.xlu0 %942
    %944 = vrot.lane.b32.xlu0 %v897, 120
    %v945 = vpop.permute.xlu0 %944
    %v962 = vsel %vm343, %v915, 0.0
    %963 = vadd.xlane.f32.xlu0 %v962
    %v964 = vpop.xlane.xlu0 %963
    %v965 = vsel %vm343, %v917, 0.0
    %966 = vadd.xlane.f32.xlu0 %v965
    %v967 = vpop.xlane.xlu0 %966
    %v968 = vsel %vm343, %v919, 0.0
    %969 = vadd.xlane.f32.xlu0 %v968
    %v970 = vpop.xlane.xlu0 %969
    %v971 = vsel %vm343, %v921, 0.0
    %972 = vadd.xlane.f32.xlu0 %v971
    %v973 = vpop.xlane.xlu0 %972
    %v974 = vsel %vm343, %v923, 0.0
    %975 = vadd.xlane.f32.xlu0 %v974
    %v976 = vpop.xlane.xlu0 %975
    %v977 = vsel %vm343, %v925, 0.0
    %978 = vadd.xlane.f32.xlu0 %v977
    %v979 = vpop.xlane.xlu0 %978
    %v980 = vsel %vm343, %v927, 0.0
    %981 = vadd.xlane.f32.xlu0 %v980
    %v982 = vpop.xlane.xlu0 %981
    %v983 = vsel %vm343, %v929, 0.0
    %984 = vadd.xlane.f32.xlu0 %v983
    %v985 = vpop.xlane.xlu0 %984
    %v986 = vsel %vm343, %v931, 0.0
    %987 = vadd.xlane.f32.xlu0 %v986
    %v988 = vpop.xlane.xlu0 %987
    %v989 = vsel %vm343, %v933, 0.0
    %990 = vadd.xlane.f32.xlu0 %v989
    %v991 = vpop.xlane.xlu0 %990
    %v992 = vsel %vm343, %v935, 0.0
    %993 = vadd.xlane.f32.xlu0 %v992
    %v994 = vpop.xlane.xlu0 %993
    %v995 = vsel %vm343, %v937, 0.0
    %996 = vadd.xlane.f32.xlu0 %v995
    %v997 = vpop.xlane.xlu0 %996
    %v998 = vsel %vm343, %v939, 0.0
    %999 = vadd.xlane.f32.xlu0 %v998
    %v1000 = vpop.xlane.xlu0 %999
    %v1001 = vsel %vm343, %v941, 0.0
    %1002 = vadd.xlane.f32.xlu0 %v1001
    %v1003 = vpop.xlane.xlu0 %1002
    %v1004 = vsel %vm343, %v943, 0.0
    %1005 = vadd.xlane.f32.xlu0 %v1004
    %v1006 = vpop.xlane.xlu0 %1005
    %v1007 = vsel %vm343, %v945, 0.0
    %1008 = vadd.xlane.f32.xlu0 %v1007
    %v1009 = vpop.xlane.xlu0 %1008
    %1010 = vrot.lane.b32.xlu0 %v131, 120
    %v1011 = vpop.permute.xlu0 %1010
    %1012 = vrot.lane.b32.xlu0 %v131, 88
    %v1013 = vpop.permute.xlu0 %1012
    %v1022 = vlaneseq
    %v1023 = vshrl.u32 %v1022, 7
    %v1024 = vsub.s32 %v403, %v1023
    %v1025 = vrot.slane %v964, %v1024
    %v1026 = vlaneseq
    %v1027 = vshrl.u32 %v1026, 7
    %v1028 = vsub.s32 %v403, %v1027
    %v1029 = vrot.slane %v967, %v1028
    %v1030 = vlaneseq
    %v1031 = vshrl.u32 %v1030, 7
    %v1032 = vsub.s32 %v403, %v1031
    %v1033 = vrot.slane %v970, %v1032
    %v1034 = vlaneseq
    %v1035 = vshrl.u32 %v1034, 7
    %v1036 = vsub.s32 %v403, %v1035
    %v1037 = vrot.slane %v973, %v1036
    %v1038 = vlaneseq
    %v1039 = vshrl.u32 %v1038, 7
    %v1040 = vsub.s32 %v403, %v1039
    %v1041 = vrot.slane %v976, %v1040
    %v1042 = vlaneseq
    %v1043 = vshrl.u32 %v1042, 7
    %v1044 = vsub.s32 %v403, %v1043
    %v1045 = vrot.slane %v979, %v1044
    %v1046 = vlaneseq
    %v1047 = vshrl.u32 %v1046, 7
    %v1048 = vsub.s32 %v403, %v1047
    %v1049 = vrot.slane %v982, %v1048
    %v1050 = vlaneseq
    %v1051 = vshrl.u32 %v1050, 7
    %v1052 = vsub.s32 %v403, %v1051
    %v1053 = vrot.slane %v985, %v1052
    %v1054 = vsel %vm436, %v1029, %v1025
    %v1055 = vsel %vm438, %v1033, %v1054
    %v1056 = vsel %vm440, %v1037, %v1055
    %v1057 = vsel %vm442, %v1041, %v1056
    %v1058 = vsel %vm444, %v1045, %v1057
    %v1059 = vsel %vm446, %v1049, %v1058
    %v1060 = vsel %vm448, %v1053, %v1059
    %v1062 = vsel %vm343, %v1011, 0
    %v1064 = vsel %vm343, %v1013, 0
    %1066 = vmatprep.subr.mxu0 0.0
    %1067 = vmatpush1.xpose.msra.mxu0 %v1064
    %1068 = vmatprep.subr.mxu0 0.0
    %1069 = vmatpush1.xpose.msra.mxu0 0.0
    %1070 = vmatprep.subr.mxu0 0.0
    %1071 = vmatpush1.xpose.msra.mxu0 0.0
    %1072 = vmatprep.subr.mxu0 0.0
    %1073 = vmatpush1.xpose.msra.mxu0 0.0
    %1074 = vmatprep.subr.mxu0 0.0
    %1075 = vmatpush1.xpose.msra.mxu0 0.0
    %1076 = vmatprep.subr.mxu0 0.0
    %1077 = vmatpush1.xpose.msra.mxu0 0.0
    %1078 = vmatprep.subr.mxu0 0.0
    %1079 = vmatpush1.xpose.msra.mxu0 0.0
    %1080 = vmatprep.subr.mxu0 0.0
    %1081 = vmatpush1.xpose.msra.mxu0 0.0
    %1082 = vmatprep.subr.mxu0 0.0
    %1083 = vmatpush1.xpose.msra.mxu0 0.0
    %1084 = vmatprep.subr.mxu0 0.0
    %1085 = vmatpush1.xpose.msra.mxu0 0.0
    %1086 = vmatprep.subr.mxu0 0.0
    %1087 = vmatpush1.xpose.msra.mxu0 0.0
    %1088 = vmatprep.subr.mxu0 0.0
    %1089 = vmatpush1.xpose.msra.mxu0 0.0
    %1090 = vmatprep.subr.mxu0 0.0
    %1091 = vmatpush1.xpose.msra.mxu0 0.0
    %1092 = vmatprep.subr.mxu0 0.0
    %1093 = vmatpush1.xpose.msra.mxu0 0.0
    %1094 = vmatprep.subr.mxu0 0.0
    %1095 = vmatpush1.xpose.msra.mxu0 0.0
    %1096 = vmatprep.subr.mxu0 0.0
    %1097 = vmatpush1.xpose.msra.mxu0 0.0
    %1098 = vmatprep.subr.mxu0 0.0
    %1099 = vmatpush1.xpose.msra.mxu0 0.0
    %1100 = vmatprep.subr.mxu0 0.0
    %1101 = vmatpush1.xpose.msra.mxu0 0.0
    %1102 = vmatprep.subr.mxu0 0.0
    %1103 = vmatpush1.xpose.msra.mxu0 0.0
    %1104 = vmatprep.subr.mxu0 0.0
    %1105 = vmatpush1.xpose.msra.mxu0 0.0
    %1106 = vmatprep.subr.mxu0 0.0
    %1107 = vmatpush1.xpose.msra.mxu0 0.0
    %1108 = vmatprep.subr.mxu0 0.0
    %1109 = vmatpush1.xpose.msra.mxu0 0.0
    %1110 = vmatprep.subr.mxu0 0.0
    %1111 = vmatpush1.xpose.msra.mxu0 0.0
    %1112 = vmatprep.subr.mxu0 0.0
    %1113 = vmatpush1.xpose.msra.mxu0 0.0
    %1114 = vmatprep.subr.mxu0 0.0
    %1115 = vmatpush1.xpose.msra.mxu0 0.0
    %1116 = vmatprep.subr.mxu0 0.0
    %1117 = vmatpush1.xpose.msra.mxu0 0.0
    %1118 = vmatprep.subr.mxu0 0.0
    %1119 = vmatpush1.xpose.msra.mxu0 0.0
    %1120 = vmatprep.subr.mxu0 0.0
    %1121 = vmatpush1.xpose.msra.mxu0 0.0
    %1122 = vmatprep.subr.mxu0 0.0
    %1123 = vmatpush1.xpose.msra.mxu0 0.0
    %1124 = vmatprep.subr.mxu0 0.0
    %1125 = vmatpush1.xpose.msra.mxu0 0.0
    %1126 = vmatprep.subr.mxu0 0.0
    %1127 = vmatpush1.xpose.msra.mxu0 0.0
    %1128 = vmatprep.subr.mxu0 0.0
    %1129 = vmatpush1.xpose.msra.mxu0 0.0
    %1130 = vmatprep.mubr.f32.mxu0 0.0
    %1131 = vmatmul.mubr.f32.gmra.mrb[0].mxu0 %v1062
    %v1132 = vpop.f32.mrb[0].mxu0
    %v1133 = vadd.f32 %v1060, %v1132
    %v1134 = vpop.f32.mrb[0].mxu0
    %1135 = vdwg.mxu0
    %1136 = vrot.lane.b32.xlu0 %v136, 120
    %v1137 = vpop.permute.xlu0 %1136
    %1138 = vrot.lane.b32.xlu0 %v136, 88
    %v1139 = vpop.permute.xlu0 %1138
    %v1148 = vlaneseq
    %v1149 = vshrl.u32 %v1148, 7
    %v1150 = vsub.s32 %v403, %v1149
    %v1151 = vrot.slane %v988, %v1150
    %v1152 = vlaneseq
    %v1153 = vshrl.u32 %v1152, 7
    %v1154 = vsub.s32 %v403, %v1153
    %v1155 = vrot.slane %v991, %v1154
    %v1156 = vlaneseq
    %v1157 = vshrl.u32 %v1156, 7
    %v1158 = vsub.s32 %v403, %v1157
    %v1159 = vrot.slane %v994, %v1158
    %v1160 = vlaneseq
    %v1161 = vshrl.u32 %v1160, 7
    %v1162 = vsub.s32 %v403, %v1161
    %v1163 = vrot.slane %v997, %v1162
    %v1164 = vlaneseq
    %v1165 = vshrl.u32 %v1164, 7
    %v1166 = vsub.s32 %v403, %v1165
    %v1167 = vrot.slane %v1000, %v1166
    %v1168 = vlaneseq
    %v1169 = vshrl.u32 %v1168, 7
    %v1170 = vsub.s32 %v403, %v1169
    %v1171 = vrot.slane %v1003, %v1170
    %v1172 = vlaneseq
    %v1173 = vshrl.u32 %v1172, 7
    %v1174 = vsub.s32 %v403, %v1173
    %v1175 = vrot.slane %v1006, %v1174
    %v1176 = vlaneseq
    %v1177 = vshrl.u32 %v1176, 7
    %v1178 = vsub.s32 %v403, %v1177
    %v1179 = vrot.slane %v1009, %v1178
    %v1180 = vsel %vm436, %v1155, %v1151
    %v1181 = vsel %vm438, %v1159, %v1180
    %v1182 = vsel %vm440, %v1163, %v1181
    %v1183 = vsel %vm442, %v1167, %v1182
    %v1184 = vsel %vm444, %v1171, %v1183
    %v1185 = vsel %vm446, %v1175, %v1184
    %v1186 = vsel %vm448, %v1179, %v1185
    %v1188 = vsel %vm343, %v1137, 0
    %v1190 = vsel %vm343, %v1139, 0
    %1192 = vmatprep.subr.mxu0 0.0
    %1193 = vmatpush1.xpose.msra.mxu0 %v1190
    %1194 = vmatprep.subr.mxu0 0.0
    %1195 = vmatpush1.xpose.msra.mxu0 0.0
    %1196 = vmatprep.subr.mxu0 0.0
    %1197 = vmatpush1.xpose.msra.mxu0 0.0
    %1198 = vmatprep.subr.mxu0 0.0
    %1199 = vmatpush1.xpose.msra.mxu0 0.0
    %1200 = vmatprep.subr.mxu0 0.0
    %1201 = vmatpush1.xpose.msra.mxu0 0.0
    %1202 = vmatprep.subr.mxu0 0.0
    %1203 = vmatpush1.xpose.msra.mxu0 0.0
    %1204 = vmatprep.subr.mxu0 0.0
    %1205 = vmatpush1.xpose.msra.mxu0 0.0
    %1206 = vmatprep.subr.mxu0 0.0
    %1207 = vmatpush1.xpose.msra.mxu0 0.0
    %1208 = vmatprep.subr.mxu0 0.0
    %1209 = vmatpush1.xpose.msra.mxu0 0.0
    %1210 = vmatprep.subr.mxu0 0.0
    %1211 = vmatpush1.xpose.msra.mxu0 0.0
    %1212 = vmatprep.subr.mxu0 0.0
    %1213 = vmatpush1.xpose.msra.mxu0 0.0
    %1214 = vmatprep.subr.mxu0 0.0
    %1215 = vmatpush1.xpose.msra.mxu0 0.0
    %1216 = vmatprep.subr.mxu0 0.0
    %1217 = vmatpush1.xpose.msra.mxu0 0.0
    %1218 = vmatprep.subr.mxu0 0.0
    %1219 = vmatpush1.xpose.msra.mxu0 0.0
    %1220 = vmatprep.subr.mxu0 0.0
    %1221 = vmatpush1.xpose.msra.mxu0 0.0
    %1222 = vmatprep.subr.mxu0 0.0
    %1223 = vmatpush1.xpose.msra.mxu0 0.0
    %1224 = vmatprep.subr.mxu0 0.0
    %1225 = vmatpush1.xpose.msra.mxu0 0.0
    %1226 = vmatprep.subr.mxu0 0.0
    %1227 = vmatpush1.xpose.msra.mxu0 0.0
    %1228 = vmatprep.subr.mxu0 0.0
    %1229 = vmatpush1.xpose.msra.mxu0 0.0
    %1230 = vmatprep.subr.mxu0 0.0
    %1231 = vmatpush1.xpose.msra.mxu0 0.0
    %1232 = vmatprep.subr.mxu0 0.0
    %1233 = vmatpush1.xpose.msra.mxu0 0.0
    %1234 = vmatprep.subr.mxu0 0.0
    %1235 = vmatpush1.xpose.msra.mxu0 0.0
    %1236 = vmatprep.subr.mxu0 0.0
    %1237 = vmatpush1.xpose.msra.mxu0 0.0
    %1238 = vmatprep.subr.mxu0 0.0
    %1239 = vmatpush1.xpose.msra.mxu0 0.0
    %1240 = vmatprep.subr.mxu0 0.0
    %1241 = vmatpush1.xpose.msra.mxu0 0.0
    %1242 = vmatprep.subr.mxu0 0.0
    %1243 = vmatpush1.xpose.msra.mxu0 0.0
    %1244 = vmatprep.subr.mxu0 0.0
    %1245 = vmatpush1.xpose.msra.mxu0 0.0
    %1246 = vmatprep.subr.mxu0 0.0
    %1247 = vmatpush1.xpose.msra.mxu0 0.0
    %1248 = vmatprep.subr.mxu0 0.0
    %1249 = vmatpush1.xpose.msra.mxu0 0.0
    %1250 = vmatprep.subr.mxu0 0.0
    %1251 = vmatpush1.xpose.msra.mxu0 0.0
    %1252 = vmatprep.subr.mxu0 0.0
    %1253 = vmatpush1.xpose.msra.mxu0 0.0
    %1254 = vmatprep.subr.mxu0 0.0
    %1255 = vmatpush1.xpose.msra.mxu0 0.0
    %1256 = vmatprep.mubr.f32.mxu0 0.0
    %1257 = vmatmul.mubr.f32.gmra.mrb[0].mxu0 %v1188
    %v1258 = vpop.f32.mrb[0].mxu0
    %v1259 = vadd.f32 %v1186, %v1258
    %v1260 = vpop.f32.mrb[0].mxu0
    %1261 = vdwg.mxu0
    %v1262 = vadd.f32 %v1133, %v654
    %v1263 = vadd.f32 %v1259, %v658
    %v1264 = vsel %vm343, %v1262, -inf
    %1265 = vmax.xlane.f32.xlu0 %v1264
    %v1266 = vpop.xlane.xlu0 %1265
    %v1267 = vsel %vm343, %v1263, -inf
    %1268 = vmax.xlane.f32.xlu0 %v1267
    %v1269 = vpop.xlane.xlu0 %1268
    %v1270 = vsub.f32 %v1262, %v1266
    %v1271 = vsub.f32 %v1263, %v1269
    %v1272 = vmul.f32 %v1270, 1.442695
    %v1273 = vpow.pop %v1272
    %v1274 = vmul.f32 %v1271, 1.442695
    %v1275 = vpow.pop %v1274
    %v1276 = vsel %vm343, %v1273, 0.0
    %1277 = vadd.xlane.f32.xlu0 %v1276
    %v1278 = vpop.xlane.xlu0 %1277
    %v1279 = vsel %vm343, %v1275, 0.0
    %1280 = vadd.xlane.f32.xlu0 %v1279
    %v1281 = vpop.xlane.xlu0 %1280
    %v1282 = vrcp.pop %v1278
    %v1283 = vmul.f32 %v1273, %v1282
    %v1284 = vrcp.pop %v1281
    %v1285 = vmul.f32 %v1275, %v1284
    %s1286 = scalar_lea.vmem %s13, 8
    %1287 = vst.msk [vmem:[%s1286] sm:$0xff] %vm343, %v1283
    %s1288 = scalar_lea.vmem %s13, 40
    %1289 = vst.msk [vmem:[%s1288] sm:$0xff] %vm343, %v1285
    %1290 = vrot.lane.b32.xlu0 %v131, 56
    %v1291 = vpop.permute.xlu0 %1290
    %v1294 = vsel %vm343, %v1283, 0
    %1296 = vmatprep.subr.mxu0 0.0
    %1297 = vmatpush1.msra.mxu0 %v1291
    %1298 = vmatprep.subr.mxu0 0.0
    %1299 = vmatpush1.msra.mxu0 0.0
    %1300 = vmatprep.subr.mxu0 0.0
    %1301 = vmatpush1.msra.mxu0 0.0
    %1302 = vmatprep.subr.mxu0 0.0
    %1303 = vmatpush1.msra.mxu0 0.0
    %1304 = vmatprep.subr.mxu0 0.0
    %1305 = vmatpush1.msra.mxu0 0.0
    %1306 = vmatprep.subr.mxu0 0.0
    %1307 = vmatpush1.msra.mxu0 0.0
    %1308 = vmatprep.subr.mxu0 0.0
    %1309 = vmatpush1.msra.mxu0 0.0
    %1310 = vmatprep.subr.mxu0 0.0
    %1311 = vmatpush1.msra.mxu0 0.0
    %1312 = vmatprep.subr.mxu0 0.0
    %1313 = vmatpush1.msra.mxu0 0.0
    %1314 = vmatprep.subr.mxu0 0.0
    %1315 = vmatpush1.msra.mxu0 0.0
    %1316 = vmatprep.subr.mxu0 0.0
    %1317 = vmatpush1.msra.mxu0 0.0
    %1318 = vmatprep.subr.mxu0 0.0
    %1319 = vmatpush1.msra.mxu0 0.0
    %1320 = vmatprep.subr.mxu0 0.0
    %1321 = vmatpush1.msra.mxu0 0.0
    %1322 = vmatprep.subr.mxu0 0.0
    %1323 = vmatpush1.msra.mxu0 0.0
    %1324 = vmatprep.subr.mxu0 0.0
    %1325 = vmatpush1.msra.mxu0 0.0
    %1326 = vmatprep.subr.mxu0 0.0
    %1327 = vmatpush1.msra.mxu0 0.0
    %1328 = vmatprep.subr.mxu0 0.0
    %1329 = vmatpush1.msra.mxu0 0.0
    %1330 = vmatprep.subr.mxu0 0.0
    %1331 = vmatpush1.msra.mxu0 0.0
    %1332 = vmatprep.subr.mxu0 0.0
    %1333 = vmatpush1.msra.mxu0 0.0
    %1334 = vmatprep.subr.mxu0 0.0
    %1335 = vmatpush1.msra.mxu0 0.0
    %1336 = vmatprep.subr.mxu0 0.0
    %1337 = vmatpush1.msra.mxu0 0.0
    %1338 = vmatprep.subr.mxu0 0.0
    %1339 = vmatpush1.msra.mxu0 0.0
    %1340 = vmatprep.subr.mxu0 0.0
    %1341 = vmatpush1.msra.mxu0 0.0
    %1342 = vmatprep.subr.mxu0 0.0
    %1343 = vmatpush1.msra.mxu0 0.0
    %1344 = vmatprep.subr.mxu0 0.0
    %1345 = vmatpush1.msra.mxu0 0.0
    %1346 = vmatprep.subr.mxu0 0.0
    %1347 = vmatpush1.msra.mxu0 0.0
    %1348 = vmatprep.subr.mxu0 0.0
    %1349 = vmatpush1.msra.mxu0 0.0
    %1350 = vmatprep.subr.mxu0 0.0
    %1351 = vmatpush1.msra.mxu0 0.0
    %1352 = vmatprep.subr.mxu0 0.0
    %1353 = vmatpush1.msra.mxu0 0.0
    %1354 = vmatprep.subr.mxu0 0.0
    %1355 = vmatpush1.msra.mxu0 0.0
    %1356 = vmatprep.subr.mxu0 0.0
    %1357 = vmatpush1.msra.mxu0 0.0
    %1358 = vmatprep.subr.mxu0 0.0
    %1359 = vmatpush1.msra.mxu0 0.0
    %1360 = vmatprep.mubr.f32.mxu0 0.0
    %1361 = vmatmul.mubr.f32.gmra.mrb[0].mxu0 %v1294
    %v1362 = vpop.f32.mrb[0].mxu0
    %v1363 = vadd.f32 0.0, %v1362
    %v1364 = vpop.f32.mrb[0].mxu0
    %1365 = vdwg.mxu0
    %1366 = vrot.lane.b32.xlu0 %v136, 56
    %v1367 = vpop.permute.xlu0 %1366
    %v1370 = vsel %vm343, %v1285, 0
    %1372 = vmatprep.subr.mxu0 0.0
    %1373 = vmatpush1.msra.mxu0 %v1367
    %1374 = vmatprep.subr.mxu0 0.0
    %1375 = vmatpush1.msra.mxu0 0.0
    %1376 = vmatprep.subr.mxu0 0.0
    %1377 = vmatpush1.msra.mxu0 0.0
    %1378 = vmatprep.subr.mxu0 0.0
    %1379 = vmatpush1.msra.mxu0 0.0
    %1380 = vmatprep.subr.mxu0 0.0
    %1381 = vmatpush1.msra.mxu0 0.0
    %1382 = vmatprep.subr.mxu0 0.0
    %1383 = vmatpush1.msra.mxu0 0.0
    %1384 = vmatprep.subr.mxu0 0.0
    %1385 = vmatpush1.msra.mxu0 0.0
    %1386 = vmatprep.subr.mxu0 0.0
    %1387 = vmatpush1.msra.mxu0 0.0
    %1388 = vmatprep.subr.mxu0 0.0
    %1389 = vmatpush1.msra.mxu0 0.0
    %1390 = vmatprep.subr.mxu0 0.0
    %1391 = vmatpush1.msra.mxu0 0.0
    %1392 = vmatprep.subr.mxu0 0.0
    %1393 = vmatpush1.msra.mxu0 0.0
    %1394 = vmatprep.subr.mxu0 0.0
    %1395 = vmatpush1.msra.mxu0 0.0
    %1396 = vmatprep.subr.mxu0 0.0
    %1397 = vmatpush1.msra.mxu0 0.0
    %1398 = vmatprep.subr.mxu0 0.0
    %1399 = vmatpush1.msra.mxu0 0.0
    %1400 = vmatprep.subr.mxu0 0.0
    %1401 = vmatpush1.msra.mxu0 0.0
    %1402 = vmatprep.subr.mxu0 0.0
    %1403 = vmatpush1.msra.mxu0 0.0
    %1404 = vmatprep.subr.mxu0 0.0
    %1405 = vmatpush1.msra.mxu0 0.0
    %1406 = vmatprep.subr.mxu0 0.0
    %1407 = vmatpush1.msra.mxu0 0.0
    %1408 = vmatprep.subr.mxu0 0.0
    %1409 = vmatpush1.msra.mxu0 0.0
    %1410 = vmatprep.subr.mxu0 0.0
    %1411 = vmatpush1.msra.mxu0 0.0
    %1412 = vmatprep.subr.mxu0 0.0
    %1413 = vmatpush1.msra.mxu0 0.0
    %1414 = vmatprep.subr.mxu0 0.0
    %1415 = vmatpush1.msra.mxu0 0.0
    %1416 = vmatprep.subr.mxu0 0.0
    %1417 = vmatpush1.msra.mxu0 0.0
    %1418 = vmatprep.subr.mxu0 0.0
    %1419 = vmatpush1.msra.mxu0 0.0
    %1420 = vmatprep.subr.mxu0 0.0
    %1421 = vmatpush1.msra.mxu0 0.0
    %1422 = vmatprep.subr.mxu0 0.0
    %1423 = vmatpush1.msra.mxu0 0.0
    %1424 = vmatprep.subr.mxu0 0.0
    %1425 = vmatpush1.msra.mxu0 0.0
    %1426 = vmatprep.subr.mxu0 0.0
    %1427 = vmatpush1.msra.mxu0 0.0
    %1428 = vmatprep.subr.mxu0 0.0
    %1429 = vmatpush1.msra.mxu0 0.0
    %1430 = vmatprep.subr.mxu0 0.0
    %1431 = vmatpush1.msra.mxu0 0.0
    %1432 = vmatprep.subr.mxu0 0.0
    %1433 = vmatpush1.msra.mxu0 0.0
    %1434 = vmatprep.subr.mxu0 0.0
    %1435 = vmatpush1.msra.mxu0 0.0
    %1436 = vmatprep.mubr.f32.mxu0 0.0
    %1437 = vmatmul.mubr.f32.gmra.mrb[0].mxu0 %v1370
    %v1438 = vpop.f32.mrb[0].mxu0
    %v1439 = vadd.f32 0.0, %v1438
    %v1440 = vpop.f32.mrb[0].mxu0
    %1441 = vdwg.mxu0
    %s1442 = scalar_lea.vmem %s4, 8
    %v1443 = vld [vmem:[%s1442] sm:$0xff]
    %v1445 = vsel %vm343, %v1363, 0
    %v1448 = vsel %vm343, %v1439, 0
    %1450 = vmatprep.subr.mxu0 0.0
    %1451 = vmatpush1.msra.mxu0 %v1443
    %1452 = vmatprep.subr.mxu0 0.0
    %1453 = vmatpush1.msra.mxu0 0.0
    %1454 = vmatprep.subr.mxu0 0.0
    %1455 = vmatpush1.msra.mxu0 0.0
    %1456 = vmatprep.subr.mxu0 0.0
    %1457 = vmatpush1.msra.mxu0 0.0
    %1458 = vmatprep.subr.mxu0 0.0
    %1459 = vmatpush1.msra.mxu0 0.0
    %1460 = vmatprep.subr.mxu0 0.0
    %1461 = vmatpush1.msra.mxu0 0.0
    %1462 = vmatprep.subr.mxu0 0.0
    %1463 = vmatpush1.msra.mxu0 0.0
    %1464 = vmatprep.subr.mxu0 0.0
    %1465 = vmatpush1.msra.mxu0 0.0
    %1466 = vmatprep.subr.mxu0 0.0
    %1467 = vmatpush1.msra.mxu0 0.0
    %1468 = vmatprep.subr.mxu0 0.0
    %1469 = vmatpush1.msra.mxu0 0.0
    %1470 = vmatprep.subr.mxu0 0.0
    %1471 = vmatpush1.msra.mxu0 0.0
    %1472 = vmatprep.subr.mxu0 0.0
    %1473 = vmatpush1.msra.mxu0 0.0
    %1474 = vmatprep.subr.mxu0 0.0
    %1475 = vmatpush1.msra.mxu0 0.0
    %1476 = vmatprep.subr.mxu0 0.0
    %1477 = vmatpush1.msra.mxu0 0.0
    %1478 = vmatprep.subr.mxu0 0.0
    %1479 = vmatpush1.msra.mxu0 0.0
    %1480 = vmatprep.subr.mxu0 0.0
    %1481 = vmatpush1.msra.mxu0 0.0
    %1482 = vmatprep.subr.mxu0 0.0
    %1483 = vmatpush1.msra.mxu0 0.0
    %1484 = vmatprep.subr.mxu0 0.0
    %1485 = vmatpush1.msra.mxu0 0.0
    %1486 = vmatprep.subr.mxu0 0.0
    %1487 = vmatpush1.msra.mxu0 0.0
    %1488 = vmatprep.subr.mxu0 0.0
    %1489 = vmatpush1.msra.mxu0 0.0
    %1490 = vmatprep.subr.mxu0 0.0
    %1491 = vmatpush1.msra.mxu0 0.0
    %1492 = vmatprep.subr.mxu0 0.0
    %1493 = vmatpush1.msra.mxu0 0.0
    %1494 = vmatprep.subr.mxu0 0.0
    %1495 = vmatpush1.msra.mxu0 0.0
    %1496 = vmatprep.subr.mxu0 0.0
    %1497 = vmatpush1.msra.mxu0 0.0
    %1498 = vmatprep.subr.mxu0 0.0
    %1499 = vmatpush1.msra.mxu0 0.0
    %1500 = vmatprep.subr.mxu0 0.0
    %1501 = vmatpush1.msra.mxu0 0.0
    %1502 = vmatprep.subr.mxu0 0.0
    %1503 = vmatpush1.msra.mxu0 0.0
    %1504 = vmatprep.subr.mxu0 0.0
    %1505 = vmatpush1.msra.mxu0 0.0
    %1506 = vmatprep.subr.mxu0 0.0
    %1507 = vmatpush1.msra.mxu0 0.0
    %1508 = vmatprep.subr.mxu0 0.0
    %1509 = vmatpush1.msra.mxu0 0.0
    %1510 = vmatprep.subr.mxu0 0.0
    %1511 = vmatpush1.msra.mxu0 0.0
    %1512 = vmatprep.subr.mxu0 0.0
    %1513 = vmatpush1.msra.mxu0 0.0
    %1514 = vmatprep.mubr.f32.mxu0 0.0
    %1515 = vmatmul.mubr.f32.gmra.mrb[0].mxu0 %v1445
    %v1516 = vpop.f32.mrb[0].mxu0
    %v1517 = vadd.f32 0.0, %v1516
    %v1518 = vpop.f32.mrb[0].mxu0
    %1519 = vmatprep.mubr.f32.mxu0 0.0
    %1520 = vmatmul.mubr.f32.gmra.mrb[0].mxu0 %v1448
    %v1521 = vpop.f32.mrb[0].mxu0
    %v1522 = vadd.f32 0.0, %v1521
    %v1523 = vpop.f32.mrb[0].mxu0
    %1524 = vdwg.mxu0
    %v1526 = vsel %vm343, %v761, 0
    %v1529 = vsel %vm343, %v837, 0
    %1531 = vmatprep.subr.mxu0 0.0
    %1532 = vmatpush1.msra.mxu0 %v840
    %1533 = vmatprep.subr.mxu0 0.0
    %1534 = vmatpush1.msra.mxu0 0.0
    %1535 = vmatprep.subr.mxu0 0.0
    %1536 = vmatpush1.msra.mxu0 0.0
    %1537 = vmatprep.subr.mxu0 0.0
    %1538 = vmatpush1.msra.mxu0 0.0
    %1539 = vmatprep.subr.mxu0 0.0
    %1540 = vmatpush1.msra.mxu0 0.0
    %1541 = vmatprep.subr.mxu0 0.0
    %1542 = vmatpush1.msra.mxu0 0.0
    %1543 = vmatprep.subr.mxu0 0.0
    %1544 = vmatpush1.msra.mxu0 0.0
    %1545 = vmatprep.subr.mxu0 0.0
    %1546 = vmatpush1.msra.mxu0 0.0
    %1547 = vmatprep.subr.mxu0 0.0
    %1548 = vmatpush1.msra.mxu0 0.0
    %1549 = vmatprep.subr.mxu0 0.0
    %1550 = vmatpush1.msra.mxu0 0.0
    %1551 = vmatprep.subr.mxu0 0.0
    %1552 = vmatpush1.msra.mxu0 0.0
    %1553 = vmatprep.subr.mxu0 0.0
    %1554 = vmatpush1.msra.mxu0 0.0
    %1555 = vmatprep.subr.mxu0 0.0
    %1556 = vmatpush1.msra.mxu0 0.0
    %1557 = vmatprep.subr.mxu0 0.0
    %1558 = vmatpush1.msra.mxu0 0.0
    %1559 = vmatprep.subr.mxu0 0.0
    %1560 = vmatpush1.msra.mxu0 0.0
    %1561 = vmatprep.subr.mxu0 0.0
    %1562 = vmatpush1.msra.mxu0 0.0
    %1563 = vmatprep.subr.mxu0 0.0
    %1564 = vmatpush1.msra.mxu0 0.0
    %1565 = vmatprep.subr.mxu0 0.0
    %1566 = vmatpush1.msra.mxu0 0.0
    %1567 = vmatprep.subr.mxu0 0.0
    %1568 = vmatpush1.msra.mxu0 0.0
    %1569 = vmatprep.subr.mxu0 0.0
    %1570 = vmatpush1.msra.mxu0 0.0
    %1571 = vmatprep.subr.mxu0 0.0
    %1572 = vmatpush1.msra.mxu0 0.0
    %1573 = vmatprep.subr.mxu0 0.0
    %1574 = vmatpush1.msra.mxu0 0.0
    %1575 = vmatprep.subr.mxu0 0.0
    %1576 = vmatpush1.msra.mxu0 0.0
    %1577 = vmatprep.subr.mxu0 0.0
    %1578 = vmatpush1.msra.mxu0 0.0
    %1579 = vmatprep.subr.mxu0 0.0
    %1580 = vmatpush1.msra.mxu0 0.0
    %1581 = vmatprep.subr.mxu0 0.0
    %1582 = vmatpush1.msra.mxu0 0.0
    %1583 = vmatprep.subr.mxu0 0.0
    %1584 = vmatpush1.msra.mxu0 0.0
    %1585 = vmatprep.subr.mxu0 0.0
    %1586 = vmatpush1.msra.mxu0 0.0
    %1587 = vmatprep.subr.mxu0 0.0
    %1588 = vmatpush1.msra.mxu0 0.0
    %1589 = vmatprep.subr.mxu0 0.0
    %1590 = vmatpush1.msra.mxu0 0.0
    %1591 = vmatprep.subr.mxu0 0.0
    %1592 = vmatpush1.msra.mxu0 0.0
    %1593 = vmatprep.subr.mxu0 0.0
    %1594 = vmatpush1.msra.mxu0 0.0
    %1595 = vmatprep.mubr.f32.mxu0 0.0
    %1596 = vmatmul.mubr.f32.gmra.mrb[0].mxu0 %v1526
    %v1597 = vpop.f32.mrb[0].mxu0
    %v1598 = vadd.f32 %v1517, %v1597
    %v1599 = vpop.f32.mrb[0].mxu0
    %1600 = vmatprep.mubr.f32.mxu0 0.0
    %1601 = vmatmul.mubr.f32.gmra.mrb[0].mxu0 %v1529
    %v1602 = vpop.f32.mrb[0].mxu0
    %v1603 = vadd.f32 %v1522, %v1602
    %v1604 = vpop.f32.mrb[0].mxu0
    %1605 = vdwg.mxu0
    %s1606 = scalar_lea.vmem %s2, 128
    %v1607 = vld [vmem:[%s1606] sm:$0xff]
    %v1608 = vld [vmem:[%s1606 + $0x8] sm:$0xff]
    %v1609 = vld [vmem:[%s1606 + $0x10] sm:$0xff]
    %v1610 = vld [vmem:[%s1606 + $0x18] sm:$0xff]
    %v1611 = vld [vmem:[%s1606 + $0x20] sm:$0xff]
    %v1612 = vld [vmem:[%s1606 + $0x28] sm:$0xff]
    %v1613 = vld [vmem:[%s1606 + $0x30] sm:$0xff]
    %v1614 = vld [vmem:[%s1606 + $0x38] sm:$0xff]
    %1623 = vrot.lane.b32.xlu0 %v1607, 16
    %v1624 = vpop.permute.xlu0 %1623
    %1625 = vrot.lane.b32.xlu0 %v1608, 16
    %v1626 = vpop.permute.xlu0 %1625
    %1627 = vrot.lane.b32.xlu0 %v1609, 16
    %v1628 = vpop.permute.xlu0 %1627
    %1629 = vrot.lane.b32.xlu0 %v1610, 16
    %v1630 = vpop.permute.xlu0 %1629
    %1631 = vrot.lane.b32.xlu0 %v1611, 16
    %v1632 = vpop.permute.xlu0 %1631
    %1633 = vrot.lane.b32.xlu0 %v1612, 16
    %v1634 = vpop.permute.xlu0 %1633
    %1635 = vrot.lane.b32.xlu0 %v1613, 16
    %v1636 = vpop.permute.xlu0 %1635
    %1637 = vrot.lane.b32.xlu0 %v1614, 16
    %v1638 = vpop.permute.xlu0 %1637
    %v1647 = vmul.f32 %v250, %v1624
    %v1648 = vmul.f32 %v254, %v1626
    %v1649 = vmul.f32 %v258, %v1628
    %v1650 = vmul.f32 %v262, %v1630
    %v1651 = vmul.f32 %v266, %v1632
    %v1652 = vmul.f32 %v270, %v1634
    %v1653 = vmul.f32 %v274, %v1636
    %v1654 = vmul.f32 %v278, %v1638
    %v1655 = vmul.f32 %v282, %v1624
    %v1656 = vmul.f32 %v286, %v1626
    %v1657 = vmul.f32 %v290, %v1628
    %v1658 = vmul.f32 %v294, %v1630
    %v1659 = vmul.f32 %v298, %v1632
    %v1660 = vmul.f32 %v302, %v1634
    %v1661 = vmul.f32 %v306, %v1636
    %v1662 = vmul.f32 %v310, %v1638
    %1679 = vrot.lane.b32.xlu0 %v1647, 112
    %v1680 = vpop.permute.xlu0 %1679
    %1681 = vrot.lane.b32.xlu0 %v1648, 112
    %v1682 = vpop.permute.xlu0 %1681
    %1683 = vrot.lane.b32.xlu0 %v1649, 112
    %v1684 = vpop.permute.xlu0 %1683
    %1685 = vrot.lane.b32.xlu0 %v1650, 112
    %v1686 = vpop.permute.xlu0 %1685
    %1687 = vrot.lane.b32.xlu0 %v1651, 112
    %v1688 = vpop.permute.xlu0 %1687
    %1689 = vrot.lane.b32.xlu0 %v1652, 112
    %v1690 = vpop.permute.xlu0 %1689
    %1691 = vrot.lane.b32.xlu0 %v1653, 112
    %v1692 = vpop.permute.xlu0 %1691
    %1693 = vrot.lane.b32.xlu0 %v1654, 112
    %v1694 = vpop.permute.xlu0 %1693
    %1695 = vrot.lane.b32.xlu0 %v1655, 112
    %v1696 = vpop.permute.xlu0 %1695
    %1697 = vrot.lane.b32.xlu0 %v1656, 112
    %v1698 = vpop.permute.xlu0 %1697
    %1699 = vrot.lane.b32.xlu0 %v1657, 112
    %v1700 = vpop.permute.xlu0 %1699
    %1701 = vrot.lane.b32.xlu0 %v1658, 112
    %v1702 = vpop.permute.xlu0 %1701
    %1703 = vrot.lane.b32.xlu0 %v1659, 112
    %v1704 = vpop.permute.xlu0 %1703
    %1705 = vrot.lane.b32.xlu0 %v1660, 112
    %v1706 = vpop.permute.xlu0 %1705
    %1707 = vrot.lane.b32.xlu0 %v1661, 112
    %v1708 = vpop.permute.xlu0 %1707
    %1709 = vrot.lane.b32.xlu0 %v1662, 112
    %v1710 = vpop.permute.xlu0 %1709
    %v1727 = vsel %vm343, %v1680, 0.0
    %1728 = vadd.xlane.f32.xlu0 %v1727
    %v1729 = vpop.xlane.xlu0 %1728
    %v1730 = vsel %vm343, %v1682, 0.0
    %1731 = vadd.xlane.f32.xlu0 %v1730
    %v1732 = vpop.xlane.xlu0 %1731
    %v1733 = vsel %vm343, %v1684, 0.0
    %1734 = vadd.xlane.f32.xlu0 %v1733
    %v1735 = vpop.xlane.xlu0 %1734
    %v1736 = vsel %vm343, %v1686, 0.0
    %1737 = vadd.xlane.f32.xlu0 %v1736
    %v1738 = vpop.xlane.xlu0 %1737
    %v1739 = vsel %vm343, %v1688, 0.0
    %1740 = vadd.xlane.f32.xlu0 %v1739
    %v1741 = vpop.xlane.xlu0 %1740
    %v1742 = vsel %vm343, %v1690, 0.0
    %1743 = vadd.xlane.f32.xlu0 %v1742
    %v1744 = vpop.xlane.xlu0 %1743
    %v1745 = vsel %vm343, %v1692, 0.0
    %1746 = vadd.xlane.f32.xlu0 %v1745
    %v1747 = vpop.xlane.xlu0 %1746
    %v1748 = vsel %vm343, %v1694, 0.0
    %1749 = vadd.xlane.f32.xlu0 %v1748
    %v1750 = vpop.xlane.xlu0 %1749
    %v1751 = vsel %vm343, %v1696, 0.0
    %1752 = vadd.xlane.f32.xlu0 %v1751
    %v1753 = vpop.xlane.xlu0 %1752
    %v1754 = vsel %vm343, %v1698, 0.0
    %1755 = vadd.xlane.f32.xlu0 %v1754
    %v1756 = vpop.xlane.xlu0 %1755
    %v1757 = vsel %vm343, %v1700, 0.0
    %1758 = vadd.xlane.f32.xlu0 %v1757
    %v1759 = vpop.xlane.xlu0 %1758
    %v1760 = vsel %vm343, %v1702, 0.0
    %1761 = vadd.xlane.f32.xlu0 %v1760
    %v1762 = vpop.xlane.xlu0 %1761
    %v1763 = vsel %vm343, %v1704, 0.0
    %1764 = vadd.xlane.f32.xlu0 %v1763
    %v1765 = vpop.xlane.xlu0 %1764
    %v1766 = vsel %vm343, %v1706, 0.0
    %1767 = vadd.xlane.f32.xlu0 %v1766
    %v1768 = vpop.xlane.xlu0 %1767
    %v1769 = vsel %vm343, %v1708, 0.0
    %1770 = vadd.xlane.f32.xlu0 %v1769
    %v1771 = vpop.xlane.xlu0 %1770
    %v1772 = vsel %vm343, %v1710, 0.0
    %1773 = vadd.xlane.f32.xlu0 %v1772
    %v1774 = vpop.xlane.xlu0 %1773
    %1775 = vrot.lane.b32.xlu0 %v131, 112
    %v1776 = vpop.permute.xlu0 %1775
    %1777 = vrot.lane.b32.xlu0 %v131, 80
    %v1778 = vpop.permute.xlu0 %1777
    %v1787 = vlaneseq
    %v1788 = vshrl.u32 %v1787, 7
    %v1789 = vsub.s32 %v403, %v1788
    %v1790 = vrot.slane %v1729, %v1789
    %v1791 = vlaneseq
    %v1792 = vshrl.u32 %v1791, 7
    %v1793 = vsub.s32 %v403, %v1792
    %v1794 = vrot.slane %v1732, %v1793
    %v1795 = vlaneseq
    %v1796 = vshrl.u32 %v1795, 7
    %v1797 = vsub.s32 %v403, %v1796
    %v1798 = vrot.slane %v1735, %v1797
    %v1799 = vlaneseq
    %v1800 = vshrl.u32 %v1799, 7
    %v1801 = vsub.s32 %v403, %v1800
    %v1802 = vrot.slane %v1738, %v1801
    %v1803 = vlaneseq
    %v1804 = vshrl.u32 %v1803, 7
    %v1805 = vsub.s32 %v403, %v1804
    %v1806 = vrot.slane %v1741, %v1805
    %v1807 = vlaneseq
    %v1808 = vshrl.u32 %v1807, 7
    %v1809 = vsub.s32 %v403, %v1808
    %v1810 = vrot.slane %v1744, %v1809
    %v1811 = vlaneseq
    %v1812 = vshrl.u32 %v1811, 7
    %v1813 = vsub.s32 %v403, %v1812
    %v1814 = vrot.slane %v1747, %v1813
    %v1815 = vlaneseq
    %v1816 = vshrl.u32 %v1815, 7
    %v1817 = vsub.s32 %v403, %v1816
    %v1818 = vrot.slane %v1750, %v1817
    %v1819 = vsel %vm436, %v1794, %v1790
    %v1820 = vsel %vm438, %v1798, %v1819
    %v1821 = vsel %vm440, %v1802, %v1820
    %v1822 = vsel %vm442, %v1806, %v1821
    %v1823 = vsel %vm444, %v1810, %v1822
    %v1824 = vsel %vm446, %v1814, %v1823
    %v1825 = vsel %vm448, %v1818, %v1824
    %v1827 = vsel %vm343, %v1776, 0
    %v1829 = vsel %vm343, %v1778, 0
    %1831 = vmatprep.subr.mxu0 0.0
    %1832 = vmatpush1.xpose.msra.mxu0 %v1829
    %1833 = vmatprep.subr.mxu0 0.0
    %1834 = vmatpush1.xpose.msra.mxu0 0.0
    %1835 = vmatprep.subr.mxu0 0.0
    %1836 = vmatpush1.xpose.msra.mxu0 0.0
    %1837 = vmatprep.subr.mxu0 0.0
    %1838 = vmatpush1.xpose.msra.mxu0 0.0
    %1839 = vmatprep.subr.mxu0 0.0
    %1840 = vmatpush1.xpose.msra.mxu0 0.0
    %1841 = vmatprep.subr.mxu0 0.0
    %1842 = vmatpush1.xpose.msra.mxu0 0.0
    %1843 = vmatprep.subr.mxu0 0.0
    %1844 = vmatpush1.xpose.msra.mxu0 0.0
    %1845 = vmatprep.subr.mxu0 0.0
    %1846 = vmatpush1.xpose.msra.mxu0 0.0
    %1847 = vmatprep.subr.mxu0 0.0
    %1848 = vmatpush1.xpose.msra.mxu0 0.0
    %1849 = vmatprep.subr.mxu0 0.0
    %1850 = vmatpush1.xpose.msra.mxu0 0.0
    %1851 = vmatprep.subr.mxu0 0.0
    %1852 = vmatpush1.xpose.msra.mxu0 0.0
    %1853 = vmatprep.subr.mxu0 0.0
    %1854 = vmatpush1.xpose.msra.mxu0 0.0
    %1855 = vmatprep.subr.mxu0 0.0
    %1856 = vmatpush1.xpose.msra.mxu0 0.0
    %1857 = vmatprep.subr.mxu0 0.0
    %1858 = vmatpush1.xpose.msra.mxu0 0.0
    %1859 = vmatprep.subr.mxu0 0.0
    %1860 = vmatpush1.xpose.msra.mxu0 0.0
    %1861 = vmatprep.subr.mxu0 0.0
    %1862 = vmatpush1.xpose.msra.mxu0 0.0
    %1863 = vmatprep.subr.mxu0 0.0
    %1864 = vmatpush1.xpose.msra.mxu0 0.0
    %1865 = vmatprep.subr.mxu0 0.0
    %1866 = vmatpush1.xpose.msra.mxu0 0.0
    %1867 = vmatprep.subr.mxu0 0.0
    %1868 = vmatpush1.xpose.msra.mxu0 0.0
    %1869 = vmatprep.subr.mxu0 0.0
    %1870 = vmatpush1.xpose.msra.mxu0 0.0
    %1871 = vmatprep.subr.mxu0 0.0
    %1872 = vmatpush1.xpose.msra.mxu0 0.0
    %1873 = vmatprep.subr.mxu0 0.0
    %1874 = vmatpush1.xpose.msra.mxu0 0.0
    %1875 = vmatprep.subr.mxu0 0.0
    %1876 = vmatpush1.xpose.msra.mxu0 0.0
    %1877 = vmatprep.subr.mxu0 0.0
    %1878 = vmatpush1.xpose.msra.mxu0 0.0
    %1879 = vmatprep.subr.mxu0 0.0
    %1880 = vmatpush1.xpose.msra.mxu0 0.0
    %1881 = vmatprep.subr.mxu0 0.0
    %1882 = vmatpush1.xpose.msra.mxu0 0.0
    %1883 = vmatprep.subr.mxu0 0.0
    %1884 = vmatpush1.xpose.msra.mxu0 0.0
    %1885 = vmatprep.subr.mxu0 0.0
    %1886 = vmatpush1.xpose.msra.mxu0 0.0
    %1887 = vmatprep.subr.mxu0 0.0
    %1888 = vmatpush1.xpose.msra.mxu0 0.0
    %1889 = vmatprep.subr.mxu0 0.0
    %1890 = vmatpush1.xpose.msra.mxu0 0.0
    %1891 = vmatprep.subr.mxu0 0.0
    %1892 = vmatpush1.xpose.msra.mxu0 0.0
    %1893 = vmatprep.subr.mxu0 0.0
    %1894 = vmatpush1.xpose.msra.mxu0 0.0
    %1895 = vmatprep.mubr.f32.mxu0 0.0
    %1896 = vmatmul.mubr.f32.gmra.mrb[0].mxu0 %v1827
    %v1897 = vpop.f32.mrb[0].mxu0
    %v1898 = vadd.f32 %v1825, %v1897
    %v1899 = vpop.f32.mrb[0].mxu0
    %1900 = vdwg.mxu0
    %1901 = vrot.lane.b32.xlu0 %v136, 112
    %v1902 = vpop.permute.xlu0 %1901
    %1903 = vrot.lane.b32.xlu0 %v136, 80
    %v1904 = vpop.permute.xlu0 %1903
    %v1913 = vlaneseq
    %v1914 = vshrl.u32 %v1913, 7
    %v1915 = vsub.s32 %v403, %v1914
    %v1916 = vrot.slane %v1753, %v1915
    %v1917 = vlaneseq
    %v1918 = vshrl.u32 %v1917, 7
    %v1919 = vsub.s32 %v403, %v1918
    %v1920 = vrot.slane %v1756, %v1919
    %v1921 = vlaneseq
    %v1922 = vshrl.u32 %v1921, 7
    %v1923 = vsub.s32 %v403, %v1922
    %v1924 = vrot.slane %v1759, %v1923
    %v1925 = vlaneseq
    %v1926 = vshrl.u32 %v1925, 7
    %v1927 = vsub.s32 %v403, %v1926
    %v1928 = vrot.slane %v1762, %v1927
    %v1929 = vlaneseq
    %v1930 = vshrl.u32 %v1929, 7
    %v1931 = vsub.s32 %v403, %v1930
    %v1932 = vrot.slane %v1765, %v1931
    %v1933 = vlaneseq
    %v1934 = vshrl.u32 %v1933, 7
    %v1935 = vsub.s32 %v403, %v1934
    %v1936 = vrot.slane %v1768, %v1935
    %v1937 = vlaneseq
    %v1938 = vshrl.u32 %v1937, 7
    %v1939 = vsub.s32 %v403, %v1938
    %v1940 = vrot.slane %v1771, %v1939
    %v1941 = vlaneseq
    %v1942 = vshrl.u32 %v1941, 7
    %v1943 = vsub.s32 %v403, %v1942
    %v1944 = vrot.slane %v1774, %v1943
    %v1945 = vsel %vm436, %v1920, %v1916
    %v1946 = vsel %vm438, %v1924, %v1945
    %v1947 = vsel %vm440, %v1928, %v1946
    %v1948 = vsel %vm442, %v1932, %v1947
    %v1949 = vsel %vm444, %v1936, %v1948
    %v1950 = vsel %vm446, %v1940, %v1949
    %v1951 = vsel %vm448, %v1944, %v1950
    %v1953 = vsel %vm343, %v1902, 0
    %v1955 = vsel %vm343, %v1904, 0
    %1957 = vmatprep.subr.mxu0 0.0
    %1958 = vmatpush1.xpose.msra.mxu0 %v1955
    %1959 = vmatprep.subr.mxu0 0.0
    %1960 = vmatpush1.xpose.msra.mxu0 0.0
    %1961 = vmatprep.subr.mxu0 0.0
    %1962 = vmatpush1.xpose.msra.mxu0 0.0
    %1963 = vmatprep.subr.mxu0 0.0
    %1964 = vmatpush1.xpose.msra.mxu0 0.0
    %1965 = vmatprep.subr.mxu0 0.0
    %1966 = vmatpush1.xpose.msra.mxu0 0.0
    %1967 = vmatprep.subr.mxu0 0.0
    %1968 = vmatpush1.xpose.msra.mxu0 0.0
    %1969 = vmatprep.subr.mxu0 0.0
    %1970 = vmatpush1.xpose.msra.mxu0 0.0
    %1971 = vmatprep.subr.mxu0 0.0
    %1972 = vmatpush1.xpose.msra.mxu0 0.0
    %1973 = vmatprep.subr.mxu0 0.0
    %1974 = vmatpush1.xpose.msra.mxu0 0.0
    %1975 = vmatprep.subr.mxu0 0.0
    %1976 = vmatpush1.xpose.msra.mxu0 0.0
    %1977 = vmatprep.subr.mxu0 0.0
    %1978 = vmatpush1.xpose.msra.mxu0 0.0
    %1979 = vmatprep.subr.mxu0 0.0
    %1980 = vmatpush1.xpose.msra.mxu0 0.0
    %1981 = vmatprep.subr.mxu0 0.0
    %1982 = vmatpush1.xpose.msra.mxu0 0.0
    %1983 = vmatprep.subr.mxu0 0.0
    %1984 = vmatpush1.xpose.msra.mxu0 0.0
    %1985 = vmatprep.subr.mxu0 0.0
    %1986 = vmatpush1.xpose.msra.mxu0 0.0
    %1987 = vmatprep.subr.mxu0 0.0
    %1988 = vmatpush1.xpose.msra.mxu0 0.0
    %1989 = vmatprep.subr.mxu0 0.0
    %1990 = vmatpush1.xpose.msra.mxu0 0.0
    %1991 = vmatprep.subr.mxu0 0.0
    %1992 = vmatpush1.xpose.msra.mxu0 0.0
    %1993 = vmatprep.subr.mxu0 0.0
    %1994 = vmatpush1.xpose.msra.mxu0 0.0
    %1995 = vmatprep.subr.mxu0 0.0
    %1996 = vmatpush1.xpose.msra.mxu0 0.0
    %1997 = vmatprep.subr.mxu0 0.0
    %1998 = vmatpush1.xpose.msra.mxu0 0.0
    %1999 = vmatprep.subr.mxu0 0.0
    %2000 = vmatpush1.xpose.msra.mxu0 0.0
    %2001 = vmatprep.subr.mxu0 0.0
    %2002 = vmatpush1.xpose.msra.mxu0 0.0
    %2003 = vmatprep.subr.mxu0 0.0
    %2004 = vmatpush1.xpose.msra.mxu0 0.0
    %2005 = vmatprep.subr.mxu0 0.0
    %2006 = vmatpush1.xpose.msra.mxu0 0.0
    %2007 = vmatprep.subr.mxu0 0.0
    %2008 = vmatpush1.xpose.msra.mxu0 0.0
    %2009 = vmatprep.subr.mxu0 0.0
    %2010 = vmatpush1.xpose.msra.mxu0 0.0
    %2011 = vmatprep.subr.mxu0 0.0
    %2012 = vmatpush1.xpose.msra.mxu0 0.0
    %2013 = vmatprep.subr.mxu0 0.0
    %2014 = vmatpush1.xpose.msra.mxu0 0.0
    %2015 = vmatprep.subr.mxu0 0.0
    %2016 = vmatpush1.xpose.msra.mxu0 0.0
    %2017 = vmatprep.subr.mxu0 0.0
    %2018 = vmatpush1.xpose.msra.mxu0 0.0
    %2019 = vmatprep.subr.mxu0 0.0
    %2020 = vmatpush1.xpose.msra.mxu0 0.0
    %2021 = vmatprep.mubr.f32.mxu0 0.0
    %2022 = vmatmul.mubr.f32.gmra.mrb[0].mxu0 %v1953
    %v2023 = vpop.f32.mrb[0].mxu0
    %v2024 = vadd.f32 %v1951, %v2023
    %v2025 = vpop.f32.mrb[0].mxu0
    %2026 = vdwg.mxu0
    %v2027 = vadd.f32 %v1898, %v654
    %v2028 = vadd.f32 %v2024, %v658
    %v2029 = vsel %vm343, %v2027, -inf
    %2030 = vmax.xlane.f32.xlu0 %v2029
    %v2031 = vpop.xlane.xlu0 %2030
    %v2032 = vsel %vm343, %v2028, -inf
    %2033 = vmax.xlane.f32.xlu0 %v2032
    %v2034 = vpop.xlane.xlu0 %2033
    %v2035 = vsub.f32 %v2027, %v2031
    %v2036 = vsub.f32 %v2028, %v2034
    %v2037 = vmul.f32 %v2035, 1.442695
    %v2038 = vpow.pop %v2037
    %v2039 = vmul.f32 %v2036, 1.442695
    %v2040 = vpow.pop %v2039
    %v2041 = vsel %vm343, %v2038, 0.0
    %2042 = vadd.xlane.f32.xlu0 %v2041
    %v2043 = vpop.xlane.xlu0 %2042
    %v2044 = vsel %vm343, %v2040, 0.0
    %2045 = vadd.xlane.f32.xlu0 %v2044
    %v2046 = vpop.xlane.xlu0 %2045
    %v2047 = vrcp.pop %v2043
    %v2048 = vmul.f32 %v2038, %v2047
    %v2049 = vrcp.pop %v2046
    %v2050 = vmul.f32 %v2040, %v2049
    %s2051 = scalar_lea.vmem %s13, 16
    %2052 = vst.msk [vmem:[%s2051] sm:$0xff] %vm343, %v2048
    %s2053 = scalar_lea.vmem %s13, 48
    %2054 = vst.msk [vmem:[%s2053] sm:$0xff] %vm343, %v2050
    %2055 = vrot.lane.b32.xlu0 %v131, 48
    %v2056 = vpop.permute.xlu0 %2055
    %v2059 = vsel %vm343, %v2048, 0
    %2061 = vmatprep.subr.mxu0 0.0
    %2062 = vmatpush1.msra.mxu0 %v2056
    %2063 = vmatprep.subr.mxu0 0.0
    %2064 = vmatpush1.msra.mxu0 0.0
    %2065 = vmatprep.subr.mxu0 0.0
    %2066 = vmatpush1.msra.mxu0 0.0
    %2067 = vmatprep.subr.mxu0 0.0
    %2068 = vmatpush1.msra.mxu0 0.0
    %2069 = vmatprep.subr.mxu0 0.0
    %2070 = vmatpush1.msra.mxu0 0.0
    %2071 = vmatprep.subr.mxu0 0.0
    %2072 = vmatpush1.msra.mxu0 0.0
    %2073 = vmatprep.subr.mxu0 0.0
    %2074 = vmatpush1.msra.mxu0 0.0
    %2075 = vmatprep.subr.mxu0 0.0
    %2076 = vmatpush1.msra.mxu0 0.0
    %2077 = vmatprep.subr.mxu0 0.0
    %2078 = vmatpush1.msra.mxu0 0.0
    %2079 = vmatprep.subr.mxu0 0.0
    %2080 = vmatpush1.msra.mxu0 0.0
    %2081 = vmatprep.subr.mxu0 0.0
    %2082 = vmatpush1.msra.mxu0 0.0
    %2083 = vmatprep.subr.mxu0 0.0
    %2084 = vmatpush1.msra.mxu0 0.0
    %2085 = vmatprep.subr.mxu0 0.0
    %2086 = vmatpush1.msra.mxu0 0.0
    %2087 = vmatprep.subr.mxu0 0.0
    %2088 = vmatpush1.msra.mxu0 0.0
    %2089 = vmatprep.subr.mxu0 0.0
    %2090 = vmatpush1.msra.mxu0 0.0
    %2091 = vmatprep.subr.mxu0 0.0
    %2092 = vmatpush1.msra.mxu0 0.0
    %2093 = vmatprep.subr.mxu0 0.0
    %2094 = vmatpush1.msra.mxu0 0.0
    %2095 = vmatprep.subr.mxu0 0.0
    %2096 = vmatpush1.msra.mxu0 0.0
    %2097 = vmatprep.subr.mxu0 0.0
    %2098 = vmatpush1.msra.mxu0 0.0
    %2099 = vmatprep.subr.mxu0 0.0
    %2100 = vmatpush1.msra.mxu0 0.0
    %2101 = vmatprep.subr.mxu0 0.0
    %2102 = vmatpush1.msra.mxu0 0.0
    %2103 = vmatprep.subr.mxu0 0.0
    %2104 = vmatpush1.msra.mxu0 0.0
    %2105 = vmatprep.subr.mxu0 0.0
    %2106 = vmatpush1.msra.mxu0 0.0
    %2107 = vmatprep.subr.mxu0 0.0
    %2108 = vmatpush1.msra.mxu0 0.0
    %2109 = vmatprep.subr.mxu0 0.0
    %2110 = vmatpush1.msra.mxu0 0.0
    %2111 = vmatprep.subr.mxu0 0.0
    %2112 = vmatpush1.msra.mxu0 0.0
    %2113 = vmatprep.subr.mxu0 0.0
    %2114 = vmatpush1.msra.mxu0 0.0
    %2115 = vmatprep.subr.mxu0 0.0
    %2116 = vmatpush1.msra.mxu0 0.0
    %2117 = vmatprep.subr.mxu0 0.0
    %2118 = vmatpush1.msra.mxu0 0.0
    %2119 = vmatprep.subr.mxu0 0.0
    %2120 = vmatpush1.msra.mxu0 0.0
    %2121 = vmatprep.subr.mxu0 0.0
    %2122 = vmatpush1.msra.mxu0 0.0
    %2123 = vmatprep.subr.mxu0 0.0
    %2124 = vmatpush1.msra.mxu0 0.0
    %2125 = vmatprep.mubr.f32.mxu0 0.0
    %2126 = vmatmul.mubr.f32.gmra.mrb[0].mxu0 %v2059
    %v2127 = vpop.f32.mrb[0].mxu0
    %v2128 = vadd.f32 0.0, %v2127
    %v2129 = vpop.f32.mrb[0].mxu0
    %2130 = vdwg.mxu0
    %2131 = vrot.lane.b32.xlu0 %v136, 48
    %v2132 = vpop.permute.xlu0 %2131
    %v2135 = vsel %vm343, %v2050, 0
    %2137 = vmatprep.subr.mxu0 0.0
    %2138 = vmatpush1.msra.mxu0 %v2132
    %2139 = vmatprep.subr.mxu0 0.0
    %2140 = vmatpush1.msra.mxu0 0.0
    %2141 = vmatprep.subr.mxu0 0.0
    %2142 = vmatpush1.msra.mxu0 0.0
    %2143 = vmatprep.subr.mxu0 0.0
    %2144 = vmatpush1.msra.mxu0 0.0
    %2145 = vmatprep.subr.mxu0 0.0
    %2146 = vmatpush1.msra.mxu0 0.0
    %2147 = vmatprep.subr.mxu0 0.0
    %2148 = vmatpush1.msra.mxu0 0.0
    %2149 = vmatprep.subr.mxu0 0.0
    %2150 = vmatpush1.msra.mxu0 0.0
    %2151 = vmatprep.subr.mxu0 0.0
    %2152 = vmatpush1.msra.mxu0 0.0
    %2153 = vmatprep.subr.mxu0 0.0
    %2154 = vmatpush1.msra.mxu0 0.0
    %2155 = vmatprep.subr.mxu0 0.0
    %2156 = vmatpush1.msra.mxu0 0.0
    %2157 = vmatprep.subr.mxu0 0.0
    %2158 = vmatpush1.msra.mxu0 0.0
    %2159 = vmatprep.subr.mxu0 0.0
    %2160 = vmatpush1.msra.mxu0 0.0
    %2161 = vmatprep.subr.mxu0 0.0
    %2162 = vmatpush1.msra.mxu0 0.0
    %2163 = vmatprep.subr.mxu0 0.0
    %2164 = vmatpush1.msra.mxu0 0.0
    %2165 = vmatprep.subr.mxu0 0.0
    %2166 = vmatpush1.msra.mxu0 0.0
    %2167 = vmatprep.subr.mxu0 0.0
    %2168 = vmatpush1.msra.mxu0 0.0
    %2169 = vmatprep.subr.mxu0 0.0
    %2170 = vmatpush1.msra.mxu0 0.0
    %2171 = vmatprep.subr.mxu0 0.0
    %2172 = vmatpush1.msra.mxu0 0.0
    %2173 = vmatprep.subr.mxu0 0.0
    %2174 = vmatpush1.msra.mxu0 0.0
    %2175 = vmatprep.subr.mxu0 0.0
    %2176 = vmatpush1.msra.mxu0 0.0
    %2177 = vmatprep.subr.mxu0 0.0
    %2178 = vmatpush1.msra.mxu0 0.0
    %2179 = vmatprep.subr.mxu0 0.0
    %2180 = vmatpush1.msra.mxu0 0.0
    %2181 = vmatprep.subr.mxu0 0.0
    %2182 = vmatpush1.msra.mxu0 0.0
    %2183 = vmatprep.subr.mxu0 0.0
    %2184 = vmatpush1.msra.mxu0 0.0
    %2185 = vmatprep.subr.mxu0 0.0
    %2186 = vmatpush1.msra.mxu0 0.0
    %2187 = vmatprep.subr.mxu0 0.0
    %2188 = vmatpush1.msra.mxu0 0.0
    %2189 = vmatprep.subr.mxu0 0.0
    %2190 = vmatpush1.msra.mxu0 0.0
    %2191 = vmatprep.subr.mxu0 0.0
    %2192 = vmatpush1.msra.mxu0 0.0
    %2193 = vmatprep.subr.mxu0 0.0
    %2194 = vmatpush1.msra.mxu0 0.0
    %2195 = vmatprep.subr.mxu0 0.0
    %2196 = vmatpush1.msra.mxu0 0.0
    %2197 = vmatprep.subr.mxu0 0.0
    %2198 = vmatpush1.msra.mxu0 0.0
    %2199 = vmatprep.subr.mxu0 0.0
    %2200 = vmatpush1.msra.mxu0 0.0
    %2201 = vmatprep.mubr.f32.mxu0 0.0
    %2202 = vmatmul.mubr.f32.gmra.mrb[0].mxu0 %v2135
    %v2203 = vpop.f32.mrb[0].mxu0
    %v2204 = vadd.f32 0.0, %v2203
    %v2205 = vpop.f32.mrb[0].mxu0
    %2206 = vdwg.mxu0
    %s2207 = scalar_lea.vmem %s4, 16
    %v2208 = vld [vmem:[%s2207] sm:$0xff]
    %v2210 = vsel %vm343, %v2128, 0
    %v2213 = vsel %vm343, %v2204, 0
    %2215 = vmatprep.subr.mxu0 0.0
    %2216 = vmatpush1.msra.mxu0 %v2208
    %2217 = vmatprep.subr.mxu0 0.0
    %2218 = vmatpush1.msra.mxu0 0.0
    %2219 = vmatprep.subr.mxu0 0.0
    %2220 = vmatpush1.msra.mxu0 0.0
    %2221 = vmatprep.subr.mxu0 0.0
    %2222 = vmatpush1.msra.mxu0 0.0
    %2223 = vmatprep.subr.mxu0 0.0
    %2224 = vmatpush1.msra.mxu0 0.0
    %2225 = vmatprep.subr.mxu0 0.0
    %2226 = vmatpush1.msra.mxu0 0.0
    %2227 = vmatprep.subr.mxu0 0.0
    %2228 = vmatpush1.msra.mxu0 0.0
    %2229 = vmatprep.subr.mxu0 0.0
    %2230 = vmatpush1.msra.mxu0 0.0
    %2231 = vmatprep.subr.mxu0 0.0
    %2232 = vmatpush1.msra.mxu0 0.0
    %2233 = vmatprep.subr.mxu0 0.0
    %2234 = vmatpush1.msra.mxu0 0.0
    %2235 = vmatprep.subr.mxu0 0.0
    %2236 = vmatpush1.msra.mxu0 0.0
    %2237 = vmatprep.subr.mxu0 0.0
    %2238 = vmatpush1.msra.mxu0 0.0
    %2239 = vmatprep.subr.mxu0 0.0
    %2240 = vmatpush1.msra.mxu0 0.0
    %2241 = vmatprep.subr.mxu0 0.0
    %2242 = vmatpush1.msra.mxu0 0.0
    %2243 = vmatprep.subr.mxu0 0.0
    %2244 = vmatpush1.msra.mxu0 0.0
    %2245 = vmatprep.subr.mxu0 0.0
    %2246 = vmatpush1.msra.mxu0 0.0
    %2247 = vmatprep.subr.mxu0 0.0
    %2248 = vmatpush1.msra.mxu0 0.0
    %2249 = vmatprep.subr.mxu0 0.0
    %2250 = vmatpush1.msra.mxu0 0.0
    %2251 = vmatprep.subr.mxu0 0.0
    %2252 = vmatpush1.msra.mxu0 0.0
    %2253 = vmatprep.subr.mxu0 0.0
    %2254 = vmatpush1.msra.mxu0 0.0
    %2255 = vmatprep.subr.mxu0 0.0
    %2256 = vmatpush1.msra.mxu0 0.0
    %2257 = vmatprep.subr.mxu0 0.0
    %2258 = vmatpush1.msra.mxu0 0.0
    %2259 = vmatprep.subr.mxu0 0.0
    %2260 = vmatpush1.msra.mxu0 0.0
    %2261 = vmatprep.subr.mxu0 0.0
    %2262 = vmatpush1.msra.mxu0 0.0
    %2263 = vmatprep.subr.mxu0 0.0
    %2264 = vmatpush1.msra.mxu0 0.0
    %2265 = vmatprep.subr.mxu0 0.0
    %2266 = vmatpush1.msra.mxu0 0.0
    %2267 = vmatprep.subr.mxu0 0.0
    %2268 = vmatpush1.msra.mxu0 0.0
    %2269 = vmatprep.subr.mxu0 0.0
    %2270 = vmatpush1.msra.mxu0 0.0
    %2271 = vmatprep.subr.mxu0 0.0
    %2272 = vmatpush1.msra.mxu0 0.0
    %2273 = vmatprep.subr.mxu0 0.0
    %2274 = vmatpush1.msra.mxu0 0.0
    %2275 = vmatprep.subr.mxu0 0.0
    %2276 = vmatpush1.msra.mxu0 0.0
    %2277 = vmatprep.subr.mxu0 0.0
    %2278 = vmatpush1.msra.mxu0 0.0
    %2279 = vmatprep.mubr.f32.mxu0 0.0
    %2280 = vmatmul.mubr.f32.gmra.mrb[0].mxu0 %v2210
    %v2281 = vpop.f32.mrb[0].mxu0
    %v2282 = vadd.f32 0.0, %v2281
    %v2283 = vpop.f32.mrb[0].mxu0
    %2284 = vmatprep.mubr.f32.mxu0 0.0
    %2285 = vmatmul.mubr.f32.gmra.mrb[0].mxu0 %v2213
    %v2286 = vpop.f32.mrb[0].mxu0
    %v2287 = vadd.f32 0.0, %v2286
    %v2288 = vpop.f32.mrb[0].mxu0
    %2289 = vdwg.mxu0
    %v2290 = vadd.f32 %v1598, %v2282
    %v2291 = vadd.f32 %v1603, %v2287
    %s2292 = scalar_lea.vmem %s2, 192
    %v2293 = vld [vmem:[%s2292] sm:$0xff]
    %v2294 = vld [vmem:[%s2292 + $0x8] sm:$0xff]
    %v2295 = vld [vmem:[%s2292 + $0x10] sm:$0xff]
    %v2296 = vld [vmem:[%s2292 + $0x18] sm:$0xff]
    %v2297 = vld [vmem:[%s2292 + $0x20] sm:$0xff]
    %v2298 = vld [vmem:[%s2292 + $0x28] sm:$0xff]
    %v2299 = vld [vmem:[%s2292 + $0x30] sm:$0xff]
    %v2300 = vld [vmem:[%s2292 + $0x38] sm:$0xff]
    %2309 = vrot.lane.b32.xlu0 %v2293, 24
    %v2310 = vpop.permute.xlu0 %2309
    %2311 = vrot.lane.b32.xlu0 %v2294, 24
    %v2312 = vpop.permute.xlu0 %2311
    %2313 = vrot.lane.b32.xlu0 %v2295, 24
    %v2314 = vpop.permute.xlu0 %2313
    %2315 = vrot.lane.b32.xlu0 %v2296, 24
    %v2316 = vpop.permute.xlu0 %2315
    %2317 = vrot.lane.b32.xlu0 %v2297, 24
    %v2318 = vpop.permute.xlu0 %2317
    %2319 = vrot.lane.b32.xlu0 %v2298, 24
    %v2320 = vpop.permute.xlu0 %2319
    %2321 = vrot.lane.b32.xlu0 %v2299, 24
    %v2322 = vpop.permute.xlu0 %2321
    %2323 = vrot.lane.b32.xlu0 %v2300, 24
    %v2324 = vpop.permute.xlu0 %2323
    %v2333 = vmul.f32 %v250, %v2310
    %v2334 = vmul.f32 %v254, %v2312
    %v2335 = vmul.f32 %v258, %v2314
    %v2336 = vmul.f32 %v262, %v2316
    %v2337 = vmul.f32 %v266, %v2318
    %v2338 = vmul.f32 %v270, %v2320
    %v2339 = vmul.f32 %v274, %v2322
    %v2340 = vmul.f32 %v278, %v2324
    %v2341 = vmul.f32 %v282, %v2310
    %v2342 = vmul.f32 %v286, %v2312
    %v2343 = vmul.f32 %v290, %v2314
    %v2344 = vmul.f32 %v294, %v2316
    %v2345 = vmul.f32 %v298, %v2318
    %v2346 = vmul.f32 %v302, %v2320
    %v2347 = vmul.f32 %v306, %v2322
    %v2348 = vmul.f32 %v310, %v2324
    %2365 = vrot.lane.b32.xlu0 %v2333, 104
    %v2366 = vpop.permute.xlu0 %2365
    %2367 = vrot.lane.b32.xlu0 %v2334, 104
    %v2368 = vpop.permute.xlu0 %2367
    %2369 = vrot.lane.b32.xlu0 %v2335, 104
    %v2370 = vpop.permute.xlu0 %2369
    %2371 = vrot.lane.b32.xlu0 %v2336, 104
    %v2372 = vpop.permute.xlu0 %2371
    %2373 = vrot.lane.b32.xlu0 %v2337, 104
    %v2374 = vpop.permute.xlu0 %2373
    %2375 = vrot.lane.b32.xlu0 %v2338, 104
    %v2376 = vpop.permute.xlu0 %2375
    %2377 = vrot.lane.b32.xlu0 %v2339, 104
    %v2378 = vpop.permute.xlu0 %2377
    %2379 = vrot.lane.b32.xlu0 %v2340, 104
    %v2380 = vpop.permute.xlu0 %2379
    %2381 = vrot.lane.b32.xlu0 %v2341, 104
    %v2382 = vpop.permute.xlu0 %2381
    %2383 = vrot.lane.b32.xlu0 %v2342, 104
    %v2384 = vpop.permute.xlu0 %2383
    %2385 = vrot.lane.b32.xlu0 %v2343, 104
    %v2386 = vpop.permute.xlu0 %2385
    %2387 = vrot.lane.b32.xlu0 %v2344, 104
    %v2388 = vpop.permute.xlu0 %2387
    %2389 = vrot.lane.b32.xlu0 %v2345, 104
    %v2390 = vpop.permute.xlu0 %2389
    %2391 = vrot.lane.b32.xlu0 %v2346, 104
    %v2392 = vpop.permute.xlu0 %2391
    %2393 = vrot.lane.b32.xlu0 %v2347, 104
    %v2394 = vpop.permute.xlu0 %2393
    %2395 = vrot.lane.b32.xlu0 %v2348, 104
    %v2396 = vpop.permute.xlu0 %2395
    %v2413 = vsel %vm343, %v2366, 0.0
    %2414 = vadd.xlane.f32.xlu0 %v2413
    %v2415 = vpop.xlane.xlu0 %2414
    %v2416 = vsel %vm343, %v2368, 0.0
    %2417 = vadd.xlane.f32.xlu0 %v2416
    %v2418 = vpop.xlane.xlu0 %2417
    %v2419 = vsel %vm343, %v2370, 0.0
    %2420 = vadd.xlane.f32.xlu0 %v2419
    %v2421 = vpop.xlane.xlu0 %2420
    %v2422 = vsel %vm343, %v2372, 0.0
    %2423 = vadd.xlane.f32.xlu0 %v2422
    %v2424 = vpop.xlane.xlu0 %2423
    %v2425 = vsel %vm343, %v2374, 0.0
    %2426 = vadd.xlane.f32.xlu0 %v2425
    %v2427 = vpop.xlane.xlu0 %2426
    %v2428 = vsel %vm343, %v2376, 0.0
    %2429 = vadd.xlane.f32.xlu0 %v2428
    %v2430 = vpop.xlane.xlu0 %2429
    %v2431 = vsel %vm343, %v2378, 0.0
    %2432 = vadd.xlane.f32.xlu0 %v2431
    %v2433 = vpop.xlane.xlu0 %2432
    %v2434 = vsel %vm343, %v2380, 0.0
    %2435 = vadd.xlane.f32.xlu0 %v2434
    %v2436 = vpop.xlane.xlu0 %2435
    %v2437 = vsel %vm343, %v2382, 0.0
    %2438 = vadd.xlane.f32.xlu0 %v2437
    %v2439 = vpop.xlane.xlu0 %2438
    %v2440 = vsel %vm343, %v2384, 0.0
    %2441 = vadd.xlane.f32.xlu0 %v2440
    %v2442 = vpop.xlane.xlu0 %2441
    %v2443 = vsel %vm343, %v2386, 0.0
    %2444 = vadd.xlane.f32.xlu0 %v2443
    %v2445 = vpop.xlane.xlu0 %2444
    %v2446 = vsel %vm343, %v2388, 0.0
    %2447 = vadd.xlane.f32.xlu0 %v2446
    %v2448 = vpop.xlane.xlu0 %2447
    %v2449 = vsel %vm343, %v2390, 0.0
    %2450 = vadd.xlane.f32.xlu0 %v2449
    %v2451 = vpop.xlane.xlu0 %2450
    %v2452 = vsel %vm343, %v2392, 0.0
    %2453 = vadd.xlane.f32.xlu0 %v2452
    %v2454 = vpop.xlane.xlu0 %2453
    %v2455 = vsel %vm343, %v2394, 0.0
    %2456 = vadd.xlane.f32.xlu0 %v2455
    %v2457 = vpop.xlane.xlu0 %2456
    %v2458 = vsel %vm343, %v2396, 0.0
    %2459 = vadd.xlane.f32.xlu0 %v2458
    %v2460 = vpop.xlane.xlu0 %2459
    %2461 = vrot.lane.b32.xlu0 %v131, 104
    %v2462 = vpop.permute.xlu0 %2461
    %2463 = vrot.lane.b32.xlu0 %v131, 72
    %v2464 = vpop.permute.xlu0 %2463
    %v2473 = vlaneseq
    %v2474 = vshrl.u32 %v2473, 7
    %v2475 = vsub.s32 %v403, %v2474
    %v2476 = vrot.slane %v2415, %v2475
    %v2477 = vlaneseq
    %v2478 = vshrl.u32 %v2477, 7
    %v2479 = vsub.s32 %v403, %v2478
    %v2480 = vrot.slane %v2418, %v2479
    %v2481 = vlaneseq
    %v2482 = vshrl.u32 %v2481, 7
    %v2483 = vsub.s32 %v403, %v2482
    %v2484 = vrot.slane %v2421, %v2483
    %v2485 = vlaneseq
    %v2486 = vshrl.u32 %v2485, 7
    %v2487 = vsub.s32 %v403, %v2486
    %v2488 = vrot.slane %v2424, %v2487
    %v2489 = vlaneseq
    %v2490 = vshrl.u32 %v2489, 7
    %v2491 = vsub.s32 %v403, %v2490
    %v2492 = vrot.slane %v2427, %v2491
    %v2493 = vlaneseq
    %v2494 = vshrl.u32 %v2493, 7
    %v2495 = vsub.s32 %v403, %v2494
    %v2496 = vrot.slane %v2430, %v2495
    %v2497 = vlaneseq
    %v2498 = vshrl.u32 %v2497, 7
    %v2499 = vsub.s32 %v403, %v2498
    %v2500 = vrot.slane %v2433, %v2499
    %v2501 = vlaneseq
    %v2502 = vshrl.u32 %v2501, 7
    %v2503 = vsub.s32 %v403, %v2502
    %v2504 = vrot.slane %v2436, %v2503
    %v2505 = vsel %vm436, %v2480, %v2476
    %v2506 = vsel %vm438, %v2484, %v2505
    %v2507 = vsel %vm440, %v2488, %v2506
    %v2508 = vsel %vm442, %v2492, %v2507
    %v2509 = vsel %vm444, %v2496, %v2508
    %v2510 = vsel %vm446, %v2500, %v2509
    %v2511 = vsel %vm448, %v2504, %v2510
    %v2513 = vsel %vm343, %v2462, 0
    %v2515 = vsel %vm343, %v2464, 0
    %2517 = vmatprep.subr.mxu0 0.0
    %2518 = vmatpush1.xpose.msra.mxu0 %v2515
    %2519 = vmatprep.subr.mxu0 0.0
    %2520 = vmatpush1.xpose.msra.mxu0 0.0
    %2521 = vmatprep.subr.mxu0 0.0
    %2522 = vmatpush1.xpose.msra.mxu0 0.0
    %2523 = vmatprep.subr.mxu0 0.0
    %2524 = vmatpush1.xpose.msra.mxu0 0.0
    %2525 = vmatprep.subr.mxu0 0.0
    %2526 = vmatpush1.xpose.msra.mxu0 0.0
    %2527 = vmatprep.subr.mxu0 0.0
    %2528 = vmatpush1.xpose.msra.mxu0 0.0
    %2529 = vmatprep.subr.mxu0 0.0
    %2530 = vmatpush1.xpose.msra.mxu0 0.0
    %2531 = vmatprep.subr.mxu0 0.0
    %2532 = vmatpush1.xpose.msra.mxu0 0.0
    %2533 = vmatprep.subr.mxu0 0.0
    %2534 = vmatpush1.xpose.msra.mxu0 0.0
    %2535 = vmatprep.subr.mxu0 0.0
    %2536 = vmatpush1.xpose.msra.mxu0 0.0
    %2537 = vmatprep.subr.mxu0 0.0
    %2538 = vmatpush1.xpose.msra.mxu0 0.0
    %2539 = vmatprep.subr.mxu0 0.0
    %2540 = vmatpush1.xpose.msra.mxu0 0.0
    %2541 = vmatprep.subr.mxu0 0.0
    %2542 = vmatpush1.xpose.msra.mxu0 0.0
    %2543 = vmatprep.subr.mxu0 0.0
    %2544 = vmatpush1.xpose.msra.mxu0 0.0
    %2545 = vmatprep.subr.mxu0 0.0
    %2546 = vmatpush1.xpose.msra.mxu0 0.0
    %2547 = vmatprep.subr.mxu0 0.0
    %2548 = vmatpush1.xpose.msra.mxu0 0.0
    %2549 = vmatprep.subr.mxu0 0.0
    %2550 = vmatpush1.xpose.msra.mxu0 0.0
    %2551 = vmatprep.subr.mxu0 0.0
    %2552 = vmatpush1.xpose.msra.mxu0 0.0
    %2553 = vmatprep.subr.mxu0 0.0
    %2554 = vmatpush1.xpose.msra.mxu0 0.0
    %2555 = vmatprep.subr.mxu0 0.0
    %2556 = vmatpush1.xpose.msra.mxu0 0.0
    %2557 = vmatprep.subr.mxu0 0.0
    %2558 = vmatpush1.xpose.msra.mxu0 0.0
    %2559 = vmatprep.subr.mxu0 0.0
    %2560 = vmatpush1.xpose.msra.mxu0 0.0
    %2561 = vmatprep.subr.mxu0 0.0
    %2562 = vmatpush1.xpose.msra.mxu0 0.0
    %2563 = vmatprep.subr.mxu0 0.0
    %2564 = vmatpush1.xpose.msra.mxu0 0.0
    %2565 = vmatprep.subr.mxu0 0.0
    %2566 = vmatpush1.xpose.msra.mxu0 0.0
    %2567 = vmatprep.subr.mxu0 0.0
    %2568 = vmatpush1.xpose.msra.mxu0 0.0
    %2569 = vmatprep.subr.mxu0 0.0
    %2570 = vmatpush1.xpose.msra.mxu0 0.0
    %2571 = vmatprep.subr.mxu0 0.0
    %2572 = vmatpush1.xpose.msra.mxu0 0.0
    %2573 = vmatprep.subr.mxu0 0.0
    %2574 = vmatpush1.xpose.msra.mxu0 0.0
    %2575 = vmatprep.subr.mxu0 0.0
    %2576 = vmatpush1.xpose.msra.mxu0 0.0
    %2577 = vmatprep.subr.mxu0 0.0
    %2578 = vmatpush1.xpose.msra.mxu0 0.0
    %2579 = vmatprep.subr.mxu0 0.0
    %2580 = vmatpush1.xpose.msra.mxu0 0.0
    %2581 = vmatprep.mubr.f32.mxu0 0.0
    %2582 = vmatmul.mubr.f32.gmra.mrb[0].mxu0 %v2513
    %v2583 = vpop.f32.mrb[0].mxu0
    %v2584 = vadd.f32 %v2511, %v2583
    %v2585 = vpop.f32.mrb[0].mxu0
    %2586 = vdwg.mxu0
    %2587 = vrot.lane.b32.xlu0 %v136, 104
    %v2588 = vpop.permute.xlu0 %2587
    %2589 = vrot.lane.b32.xlu0 %v136, 72
    %v2590 = vpop.permute.xlu0 %2589
    %v2599 = vlaneseq
    %v2600 = vshrl.u32 %v2599, 7
    %v2601 = vsub.s32 %v403, %v2600
    %v2602 = vrot.slane %v2439, %v2601
    %v2603 = vlaneseq
    %v2604 = vshrl.u32 %v2603, 7
    %v2605 = vsub.s32 %v403, %v2604
    %v2606 = vrot.slane %v2442, %v2605
    %v2607 = vlaneseq
    %v2608 = vshrl.u32 %v2607, 7
    %v2609 = vsub.s32 %v403, %v2608
    %v2610 = vrot.slane %v2445, %v2609
    %v2611 = vlaneseq
    %v2612 = vshrl.u32 %v2611, 7
    %v2613 = vsub.s32 %v403, %v2612
    %v2614 = vrot.slane %v2448, %v2613
    %v2615 = vlaneseq
    %v2616 = vshrl.u32 %v2615, 7
    %v2617 = vsub.s32 %v403, %v2616
    %v2618 = vrot.slane %v2451, %v2617
    %v2619 = vlaneseq
    %v2620 = vshrl.u32 %v2619, 7
    %v2621 = vsub.s32 %v403, %v2620
    %v2622 = vrot.slane %v2454, %v2621
    %v2623 = vlaneseq
    %v2624 = vshrl.u32 %v2623, 7
    %v2625 = vsub.s32 %v403, %v2624
    %v2626 = vrot.slane %v2457, %v2625
    %v2627 = vlaneseq
    %v2628 = vshrl.u32 %v2627, 7
    %v2629 = vsub.s32 %v403, %v2628
    %v2630 = vrot.slane %v2460, %v2629
    %v2631 = vsel %vm436, %v2606, %v2602
    %v2632 = vsel %vm438, %v2610, %v2631
    %v2633 = vsel %vm440, %v2614, %v2632
    %v2634 = vsel %vm442, %v2618, %v2633
    %v2635 = vsel %vm444, %v2622, %v2634
    %v2636 = vsel %vm446, %v2626, %v2635
    %v2637 = vsel %vm448, %v2630, %v2636
    %v2639 = vsel %vm343, %v2588, 0
    %v2641 = vsel %vm343, %v2590, 0
    %2643 = vmatprep.subr.mxu0 0.0
    %2644 = vmatpush1.xpose.msra.mxu0 %v2641
    %2645 = vmatprep.subr.mxu0 0.0
    %2646 = vmatpush1.xpose.msra.mxu0 0.0
    %2647 = vmatprep.subr.mxu0 0.0
    %2648 = vmatpush1.xpose.msra.mxu0 0.0
    %2649 = vmatprep.subr.mxu0 0.0
    %2650 = vmatpush1.xpose.msra.mxu0 0.0
    %2651 = vmatprep.subr.mxu0 0.0
    %2652 = vmatpush1.xpose.msra.mxu0 0.0
    %2653 = vmatprep.subr.mxu0 0.0
    %2654 = vmatpush1.xpose.msra.mxu0 0.0
    %2655 = vmatprep.subr.mxu0 0.0
    %2656 = vmatpush1.xpose.msra.mxu0 0.0
    %2657 = vmatprep.subr.mxu0 0.0
    %2658 = vmatpush1.xpose.msra.mxu0 0.0
    %2659 = vmatprep.subr.mxu0 0.0
    %2660 = vmatpush1.xpose.msra.mxu0 0.0
    %2661 = vmatprep.subr.mxu0 0.0
    %2662 = vmatpush1.xpose.msra.mxu0 0.0
    %2663 = vmatprep.subr.mxu0 0.0
    %2664 = vmatpush1.xpose.msra.mxu0 0.0
    %2665 = vmatprep.subr.mxu0 0.0
    %2666 = vmatpush1.xpose.msra.mxu0 0.0
    %2667 = vmatprep.subr.mxu0 0.0
    %2668 = vmatpush1.xpose.msra.mxu0 0.0
    %2669 = vmatprep.subr.mxu0 0.0
    %2670 = vmatpush1.xpose.msra.mxu0 0.0
    %2671 = vmatprep.subr.mxu0 0.0
    %2672 = vmatpush1.xpose.msra.mxu0 0.0
    %2673 = vmatprep.subr.mxu0 0.0
    %2674 = vmatpush1.xpose.msra.mxu0 0.0
    %2675 = vmatprep.subr.mxu0 0.0
    %2676 = vmatpush1.xpose.msra.mxu0 0.0
    %2677 = vmatprep.subr.mxu0 0.0
    %2678 = vmatpush1.xpose.msra.mxu0 0.0
    %2679 = vmatprep.subr.mxu0 0.0
    %2680 = vmatpush1.xpose.msra.mxu0 0.0
    %2681 = vmatprep.subr.mxu0 0.0
    %2682 = vmatpush1.xpose.msra.mxu0 0.0
    %2683 = vmatprep.subr.mxu0 0.0
    %2684 = vmatpush1.xpose.msra.mxu0 0.0
    %2685 = vmatprep.subr.mxu0 0.0
    %2686 = vmatpush1.xpose.msra.mxu0 0.0
    %2687 = vmatprep.subr.mxu0 0.0
    %2688 = vmatpush1.xpose.msra.mxu0 0.0
    %2689 = vmatprep.subr.mxu0 0.0
    %2690 = vmatpush1.xpose.msra.mxu0 0.0
    %2691 = vmatprep.subr.mxu0 0.0
    %2692 = vmatpush1.xpose.msra.mxu0 0.0
    %2693 = vmatprep.subr.mxu0 0.0
    %2694 = vmatpush1.xpose.msra.mxu0 0.0
    %2695 = vmatprep.subr.mxu0 0.0
    %2696 = vmatpush1.xpose.msra.mxu0 0.0
    %2697 = vmatprep.subr.mxu0 0.0
    %2698 = vmatpush1.xpose.msra.mxu0 0.0
    %2699 = vmatprep.subr.mxu0 0.0
    %2700 = vmatpush1.xpose.msra.mxu0 0.0
    %2701 = vmatprep.subr.mxu0 0.0
    %2702 = vmatpush1.xpose.msra.mxu0 0.0
    %2703 = vmatprep.subr.mxu0 0.0
    %2704 = vmatpush1.xpose.msra.mxu0 0.0
    %2705 = vmatprep.subr.mxu0 0.0
    %2706 = vmatpush1.xpose.msra.mxu0 0.0
    %2707 = vmatprep.mubr.f32.mxu0 0.0
    %2708 = vmatmul.mubr.f32.gmra.mrb[0].mxu0 %v2639
    %v2709 = vpop.f32.mrb[0].mxu0
    %v2710 = vadd.f32 %v2637, %v2709
    %v2711 = vpop.f32.mrb[0].mxu0
    %2712 = vdwg.mxu0
    %v2713 = vadd.f32 %v2584, %v654
    %v2714 = vadd.f32 %v2710, %v658
    %v2715 = vsel %vm343, %v2713, -inf
    %2716 = vmax.xlane.f32.xlu0 %v2715
    %v2717 = vpop.xlane.xlu0 %2716
    %v2718 = vsel %vm343, %v2714, -inf
    %2719 = vmax.xlane.f32.xlu0 %v2718
    %v2720 = vpop.xlane.xlu0 %2719
    %v2721 = vsub.f32 %v2713, %v2717
    %v2722 = vsub.f32 %v2714, %v2720
    %v2723 = vmul.f32 %v2721, 1.442695
    %v2724 = vpow.pop %v2723
    %v2725 = vmul.f32 %v2722, 1.442695
    %v2726 = vpow.pop %v2725
    %v2727 = vsel %vm343, %v2724, 0.0
    %2728 = vadd.xlane.f32.xlu0 %v2727
    %v2729 = vpop.xlane.xlu0 %2728
    %v2730 = vsel %vm343, %v2726, 0.0
    %2731 = vadd.xlane.f32.xlu0 %v2730
    %v2732 = vpop.xlane.xlu0 %2731
    %v2733 = vrcp.pop %v2729
    %v2734 = vmul.f32 %v2724, %v2733
    %v2735 = vrcp.pop %v2732
    %v2736 = vmul.f32 %v2726, %v2735
    %s2737 = scalar_lea.vmem %s13, 24
    %2738 = vst.msk [vmem:[%s2737] sm:$0xff] %vm343, %v2734
    %s2739 = scalar_lea.vmem %s13, 56
    %2740 = vst.msk [vmem:[%s2739] sm:$0xff] %vm343, %v2736
    %2741 = vrot.lane.b32.xlu0 %v131, 40
    %v2742 = vpop.permute.xlu0 %2741
    %v2745 = vsel %vm343, %v2734, 0
    %2747 = vmatprep.subr.mxu0 0.0
    %2748 = vmatpush1.msra.mxu0 %v2742
    %2749 = vmatprep.subr.mxu0 0.0
    %2750 = vmatpush1.msra.mxu0 0.0
    %2751 = vmatprep.subr.mxu0 0.0
    %2752 = vmatpush1.msra.mxu0 0.0
    %2753 = vmatprep.subr.mxu0 0.0
    %2754 = vmatpush1.msra.mxu0 0.0
    %2755 = vmatprep.subr.mxu0 0.0
    %2756 = vmatpush1.msra.mxu0 0.0
    %2757 = vmatprep.subr.mxu0 0.0
    %2758 = vmatpush1.msra.mxu0 0.0
    %2759 = vmatprep.subr.mxu0 0.0
    %2760 = vmatpush1.msra.mxu0 0.0
    %2761 = vmatprep.subr.mxu0 0.0
    %2762 = vmatpush1.msra.mxu0 0.0
    %2763 = vmatprep.subr.mxu0 0.0
    %2764 = vmatpush1.msra.mxu0 0.0
    %2765 = vmatprep.subr.mxu0 0.0
    %2766 = vmatpush1.msra.mxu0 0.0
    %2767 = vmatprep.subr.mxu0 0.0
    %2768 = vmatpush1.msra.mxu0 0.0
    %2769 = vmatprep.subr.mxu0 0.0
    %2770 = vmatpush1.msra.mxu0 0.0
    %2771 = vmatprep.subr.mxu0 0.0
    %2772 = vmatpush1.msra.mxu0 0.0
    %2773 = vmatprep.subr.mxu0 0.0
    %2774 = vmatpush1.msra.mxu0 0.0
    %2775 = vmatprep.subr.mxu0 0.0
    %2776 = vmatpush1.msra.mxu0 0.0
    %2777 = vmatprep.subr.mxu0 0.0
    %2778 = vmatpush1.msra.mxu0 0.0
    %2779 = vmatprep.subr.mxu0 0.0
    %2780 = vmatpush1.msra.mxu0 0.0
    %2781 = vmatprep.subr.mxu0 0.0
    %2782 = vmatpush1.msra.mxu0 0.0
    %2783 = vmatprep.subr.mxu0 0.0
    %2784 = vmatpush1.msra.mxu0 0.0
    %2785 = vmatprep.subr.mxu0 0.0
    %2786 = vmatpush1.msra.mxu0 0.0
    %2787 = vmatprep.subr.mxu0 0.0
    %2788 = vmatpush1.msra.mxu0 0.0
    %2789 = vmatprep.subr.mxu0 0.0
    %2790 = vmatpush1.msra.mxu0 0.0
    %2791 = vmatprep.subr.mxu0 0.0
    %2792 = vmatpush1.msra.mxu0 0.0
    %2793 = vmatprep.subr.mxu0 0.0
    %2794 = vmatpush1.msra.mxu0 0.0
    %2795 = vmatprep.subr.mxu0 0.0
    %2796 = vmatpush1.msra.mxu0 0.0
    %2797 = vmatprep.subr.mxu0 0.0
    %2798 = vmatpush1.msra.mxu0 0.0
    %2799 = vmatprep.subr.mxu0 0.0
    %2800 = vmatpush1.msra.mxu0 0.0
    %2801 = vmatprep.subr.mxu0 0.0
    %2802 = vmatpush1.msra.mxu0 0.0
    %2803 = vmatprep.subr.mxu0 0.0
    %2804 = vmatpush1.msra.mxu0 0.0
    %2805 = vmatprep.subr.mxu0 0.0
    %2806 = vmatpush1.msra.mxu0 0.0
    %2807 = vmatprep.subr.mxu0 0.0
    %2808 = vmatpush1.msra.mxu0 0.0
    %2809 = vmatprep.subr.mxu0 0.0
    %2810 = vmatpush1.msra.mxu0 0.0
    %2811 = vmatprep.mubr.f32.mxu0 0.0
    %2812 = vmatmul.mubr.f32.gmra.mrb[0].mxu0 %v2745
    %v2813 = vpop.f32.mrb[0].mxu0
    %v2814 = vadd.f32 0.0, %v2813
    %v2815 = vpop.f32.mrb[0].mxu0
    %2816 = vdwg.mxu0
    %2817 = vrot.lane.b32.xlu0 %v136, 40
    %v2818 = vpop.permute.xlu0 %2817
    %v2821 = vsel %vm343, %v2736, 0
    %2823 = vmatprep.subr.mxu0 0.0
    %2824 = vmatpush1.msra.mxu0 %v2818
    %2825 = vmatprep.subr.mxu0 0.0
    %2826 = vmatpush1.msra.mxu0 0.0
    %2827 = vmatprep.subr.mxu0 0.0
    %2828 = vmatpush1.msra.mxu0 0.0
    %2829 = vmatprep.subr.mxu0 0.0
    %2830 = vmatpush1.msra.mxu0 0.0
    %2831 = vmatprep.subr.mxu0 0.0
    %2832 = vmatpush1.msra.mxu0 0.0
    %2833 = vmatprep.subr.mxu0 0.0
    %2834 = vmatpush1.msra.mxu0 0.0
    %2835 = vmatprep.subr.mxu0 0.0
    %2836 = vmatpush1.msra.mxu0 0.0
    %2837 = vmatprep.subr.mxu0 0.0
    %2838 = vmatpush1.msra.mxu0 0.0
    %2839 = vmatprep.subr.mxu0 0.0
    %2840 = vmatpush1.msra.mxu0 0.0
    %2841 = vmatprep.subr.mxu0 0.0
    %2842 = vmatpush1.msra.mxu0 0.0
    %2843 = vmatprep.subr.mxu0 0.0
    %2844 = vmatpush1.msra.mxu0 0.0
    %2845 = vmatprep.subr.mxu0 0.0
    %2846 = vmatpush1.msra.mxu0 0.0
    %2847 = vmatprep.subr.mxu0 0.0
    %2848 = vmatpush1.msra.mxu0 0.0
    %2849 = vmatprep.subr.mxu0 0.0
    %2850 = vmatpush1.msra.mxu0 0.0
    %2851 = vmatprep.subr.mxu0 0.0
    %2852 = vmatpush1.msra.mxu0 0.0
    %2853 = vmatprep.subr.mxu0 0.0
    %2854 = vmatpush1.msra.mxu0 0.0
    %2855 = vmatprep.subr.mxu0 0.0
    %2856 = vmatpush1.msra.mxu0 0.0
    %2857 = vmatprep.subr.mxu0 0.0
    %2858 = vmatpush1.msra.mxu0 0.0
    %2859 = vmatprep.subr.mxu0 0.0
    %2860 = vmatpush1.msra.mxu0 0.0
    %2861 = vmatprep.subr.mxu0 0.0
    %2862 = vmatpush1.msra.mxu0 0.0
    %2863 = vmatprep.subr.mxu0 0.0
    %2864 = vmatpush1.msra.mxu0 0.0
    %2865 = vmatprep.subr.mxu0 0.0
    %2866 = vmatpush1.msra.mxu0 0.0
    %2867 = vmatprep.subr.mxu0 0.0
    %2868 = vmatpush1.msra.mxu0 0.0
    %2869 = vmatprep.subr.mxu0 0.0
    %2870 = vmatpush1.msra.mxu0 0.0
    %2871 = vmatprep.subr.mxu0 0.0
    %2872 = vmatpush1.msra.mxu0 0.0
    %2873 = vmatprep.subr.mxu0 0.0
    %2874 = vmatpush1.msra.mxu0 0.0
    %2875 = vmatprep.subr.mxu0 0.0
    %2876 = vmatpush1.msra.mxu0 0.0
    %2877 = vmatprep.subr.mxu0 0.0
    %2878 = vmatpush1.msra.mxu0 0.0
    %2879 = vmatprep.subr.mxu0 0.0
    %2880 = vmatpush1.msra.mxu0 0.0
    %2881 = vmatprep.subr.mxu0 0.0
    %2882 = vmatpush1.msra.mxu0 0.0
    %2883 = vmatprep.subr.mxu0 0.0
    %2884 = vmatpush1.msra.mxu0 0.0
    %2885 = vmatprep.subr.mxu0 0.0
    %2886 = vmatpush1.msra.mxu0 0.0
    %2887 = vmatprep.mubr.f32.mxu0 0.0
    %2888 = vmatmul.mubr.f32.gmra.mrb[0].mxu0 %v2821
    %v2889 = vpop.f32.mrb[0].mxu0
    %v2890 = vadd.f32 0.0, %v2889
    %v2891 = vpop.f32.mrb[0].mxu0
    %2892 = vdwg.mxu0
    %s2893 = scalar_lea.vmem %s4, 24
    %v2894 = vld [vmem:[%s2893] sm:$0xff]
    %v2896 = vsel %vm343, %v2814, 0
    %v2899 = vsel %vm343, %v2890, 0
    %2901 = vmatprep.subr.mxu0 0.0
    %2902 = vmatpush1.msra.mxu0 %v2894
    %2903 = vmatprep.subr.mxu0 0.0
    %2904 = vmatpush1.msra.mxu0 0.0
    %2905 = vmatprep.subr.mxu0 0.0
    %2906 = vmatpush1.msra.mxu0 0.0
    %2907 = vmatprep.subr.mxu0 0.0
    %2908 = vmatpush1.msra.mxu0 0.0
    %2909 = vmatprep.subr.mxu0 0.0
    %2910 = vmatpush1.msra.mxu0 0.0
    %2911 = vmatprep.subr.mxu0 0.0
    %2912 = vmatpush1.msra.mxu0 0.0
    %2913 = vmatprep.subr.mxu0 0.0
    %2914 = vmatpush1.msra.mxu0 0.0
    %2915 = vmatprep.subr.mxu0 0.0
    %2916 = vmatpush1.msra.mxu0 0.0
    %2917 = vmatprep.subr.mxu0 0.0
    %2918 = vmatpush1.msra.mxu0 0.0
    %2919 = vmatprep.subr.mxu0 0.0
    %2920 = vmatpush1.msra.mxu0 0.0
    %2921 = vmatprep.subr.mxu0 0.0
    %2922 = vmatpush1.msra.mxu0 0.0
    %2923 = vmatprep.subr.mxu0 0.0
    %2924 = vmatpush1.msra.mxu0 0.0
    %2925 = vmatprep.subr.mxu0 0.0
    %2926 = vmatpush1.msra.mxu0 0.0
    %2927 = vmatprep.subr.mxu0 0.0
    %2928 = vmatpush1.msra.mxu0 0.0
    %2929 = vmatprep.subr.mxu0 0.0
    %2930 = vmatpush1.msra.mxu0 0.0
    %2931 = vmatprep.subr.mxu0 0.0
    %2932 = vmatpush1.msra.mxu0 0.0
    %2933 = vmatprep.subr.mxu0 0.0
    %2934 = vmatpush1.msra.mxu0 0.0
    %2935 = vmatprep.subr.mxu0 0.0
    %2936 = vmatpush1.msra.mxu0 0.0
    %2937 = vmatprep.subr.mxu0 0.0
    %2938 = vmatpush1.msra.mxu0 0.0
    %2939 = vmatprep.subr.mxu0 0.0
    %2940 = vmatpush1.msra.mxu0 0.0
    %2941 = vmatprep.subr.mxu0 0.0
    %2942 = vmatpush1.msra.mxu0 0.0
    %2943 = vmatprep.subr.mxu0 0.0
    %2944 = vmatpush1.msra.mxu0 0.0
    %2945 = vmatprep.subr.mxu0 0.0
    %2946 = vmatpush1.msra.mxu0 0.0
    %2947 = vmatprep.subr.mxu0 0.0
    %2948 = vmatpush1.msra.mxu0 0.0
    %2949 = vmatprep.subr.mxu0 0.0
    %2950 = vmatpush1.msra.mxu0 0.0
    %2951 = vmatprep.subr.mxu0 0.0
    %2952 = vmatpush1.msra.mxu0 0.0
    %2953 = vmatprep.subr.mxu0 0.0
    %2954 = vmatpush1.msra.mxu0 0.0
    %2955 = vmatprep.subr.mxu0 0.0
    %2956 = vmatpush1.msra.mxu0 0.0
    %2957 = vmatprep.subr.mxu0 0.0
    %2958 = vmatpush1.msra.mxu0 0.0
    %2959 = vmatprep.subr.mxu0 0.0
    %2960 = vmatpush1.msra.mxu0 0.0
    %2961 = vmatprep.subr.mxu0 0.0
    %2962 = vmatpush1.msra.mxu0 0.0
    %2963 = vmatprep.subr.mxu0 0.0
    %2964 = vmatpush1.msra.mxu0 0.0
    %2965 = vmatprep.mubr.f32.mxu0 0.0
    %2966 = vmatmul.mubr.f32.gmra.mrb[0].mxu0 %v2896
    %v2967 = vpop.f32.mrb[0].mxu0
    %v2968 = vadd.f32 0.0, %v2967
    %v2969 = vpop.f32.mrb[0].mxu0
    %2970 = vmatprep.mubr.f32.mxu0 0.0
    %2971 = vmatmul.mubr.f32.gmra.mrb[0].mxu0 %v2899
    %v2972 = vpop.f32.mrb[0].mxu0
    %v2973 = vadd.f32 0.0, %v2972
    %v2974 = vpop.f32.mrb[0].mxu0
    %2975 = vdwg.mxu0
    %v2976 = vadd.f32 %v2290, %v2968
    %v2977 = vadd.f32 %v2291, %v2973
    %v2978 = vlaneseq
    %v2979 = vshrl.u32 %v2978, 7
    %v2980 = vsub.s32 1, %v2979
    %v2981 = vrot.slane %v48, %v2980
    %v2982 = vadd.f32 %v2976, %v2981
    %v2983 = vadd.f32 %v2977, %v2981
    %v2984 = vadd.f32 %v2982, %v44
    %v2985 = vadd.f32 %v2983, %v45
    %v2986 = vsel %vm57, %v2984, 0.0
    %2987 = vadd.xlane.f32.xlu0 %v2986
    %v2988 = vpop.xlane.xlu0 %2987
    %v2989 = vsel %vm57, %v2985, 0.0
    %2990 = vadd.xlane.f32.xlu0 %v2989
    %v2991 = vpop.xlane.xlu0 %2990
    %v2992 = vrcp.pop 32.0
    %v2993 = vmul.f32 %v2988, %v2992
    %v2994 = vmul.f32 %v2991, %v2992
    %v2995 = vsub.f32 %v2984, %v2993
    %v2996 = vsub.f32 %v2985, %v2994
    %v2997 = vmul.f32 %v2995, %v2995
    %v2998 = vmul.f32 %v2996, %v2996
    %v2999 = vsel %vm57, %v2997, 0.0
    %3000 = vadd.xlane.f32.xlu0 %v2999
    %v3001 = vpop.xlane.xlu0 %3000
    %v3002 = vsel %vm57, %v2998, 0.0
    %3003 = vadd.xlane.f32.xlu0 %v3002
    %v3004 = vpop.xlane.xlu0 %3003
    %v3005 = vmul.f32 %v3001, %v2992
    %v3006 = vmul.f32 %v3004, %v2992
    %v3007 = vadd.f32 %v3005, 1e-05
    %v3008 = vadd.f32 %v3006, 1e-05
    %v3009 = vrsqrt.pop %v3007
    %v3010 = vrsqrt.pop %v3008
    %v3011 = vmul.f32 %v2995, %v3009
    %v3012 = vmul.f32 %v2996, %v3010
    %v3013 = vlaneseq
    %v3014 = vshrl.u32 %v3013, 7
    %v3015 = vsub.s32 4, %v3014
    %v3016 = vrot.slane %v48, %v3015
    %v3017 = vmul.f32 %v3011, %v3016
    %v3018 = vmul.f32 %v3012, %v3016
    %v3019 = vlaneseq
    %v3020 = vshrl.u32 %v3019, 7
    %v3021 = vsub.s32 5, %v3020
    %v3022 = vrot.slane %v48, %v3021
    %v3023 = vadd.f32 %v3017, %v3022
    %v3024 = vadd.f32 %v3018, %v3022
    %v3025 = vld [vmem:[%s5] sm:$0xff]
    %v3026 = vld [vmem:[%s5 + $0x8] sm:$0xff]
    %v3027 = vld [vmem:[%s5 + $0x10] sm:$0xff]
    %v3028 = vld [vmem:[%s5 + $0x18] sm:$0xff]
    %v3029 = vlaneseq
    %v3030 = vshrl.u32 %v3029, 7
    %v3031 = vsub.s32 2, %v3030
    %v3032 = vrot.slane %v48, %v3031
    %v3034 = vsel %vm57, %v3023, 0
    %v3037 = vsel %vm57, %v3024, 0
    %3039 = vmatprep.subr.mxu0 0.0
    %3040 = vmatpush1.msra.mxu0 %v3025
    %3041 = vmatprep.subr.mxu0 0.0
    %3042 = vmatpush1.msra.mxu0 %v3026
    %3043 = vmatprep.subr.mxu0 0.0
    %3044 = vmatpush1.msra.mxu0 %v3027
    %3045 = vmatprep.subr.mxu0 0.0
    %3046 = vmatpush1.msra.mxu0 %v3028
    %3047 = vmatprep.subr.mxu0 0.0
    %3048 = vmatpush1.msra.mxu0 0.0
    %3049 = vmatprep.subr.mxu0 0.0
    %3050 = vmatpush1.msra.mxu0 0.0
    %3051 = vmatprep.subr.mxu0 0.0
    %3052 = vmatpush1.msra.mxu0 0.0
    %3053 = vmatprep.subr.mxu0 0.0
    %3054 = vmatpush1.msra.mxu0 0.0
    %3055 = vmatprep.subr.mxu0 0.0
    %3056 = vmatpush1.msra.mxu0 0.0
    %3057 = vmatprep.subr.mxu0 0.0
    %3058 = vmatpush1.msra.mxu0 0.0
    %3059 = vmatprep.subr.mxu0 0.0
    %3060 = vmatpush1.msra.mxu0 0.0
    %3061 = vmatprep.subr.mxu0 0.0
    %3062 = vmatpush1.msra.mxu0 0.0
    %3063 = vmatprep.subr.mxu0 0.0
    %3064 = vmatpush1.msra.mxu0 0.0
    %3065 = vmatprep.subr.mxu0 0.0
    %3066 = vmatpush1.msra.mxu0 0.0
    %3067 = vmatprep.subr.mxu0 0.0
    %3068 = vmatpush1.msra.mxu0 0.0
    %3069 = vmatprep.subr.mxu0 0.0
    %3070 = vmatpush1.msra.mxu0 0.0
    %3071 = vmatprep.subr.mxu0 0.0
    %3072 = vmatpush1.msra.mxu0 0.0
    %3073 = vmatprep.subr.mxu0 0.0
    %3074 = vmatpush1.msra.mxu0 0.0
    %3075 = vmatprep.subr.mxu0 0.0
    %3076 = vmatpush1.msra.mxu0 0.0
    %3077 = vmatprep.subr.mxu0 0.0
    %3078 = vmatpush1.msra.mxu0 0.0
    %3079 = vmatprep.subr.mxu0 0.0
    %3080 = vmatpush1.msra.mxu0 0.0
    %3081 = vmatprep.subr.mxu0 0.0
    %3082 = vmatpush1.msra.mxu0 0.0
    %3083 = vmatprep.subr.mxu0 0.0
    %3084 = vmatpush1.msra.mxu0 0.0
    %3085 = vmatprep.subr.mxu0 0.0
    %3086 = vmatpush1.msra.mxu0 0.0
    %3087 = vmatprep.subr.mxu0 0.0
    %3088 = vmatpush1.msra.mxu0 0.0
    %3089 = vmatprep.subr.mxu0 0.0
    %3090 = vmatpush1.msra.mxu0 0.0
    %3091 = vmatprep.subr.mxu0 0.0
    %3092 = vmatpush1.msra.mxu0 0.0
    %3093 = vmatprep.subr.mxu0 0.0
    %3094 = vmatpush1.msra.mxu0 0.0
    %3095 = vmatprep.subr.mxu0 0.0
    %3096 = vmatpush1.msra.mxu0 0.0
    %3097 = vmatprep.subr.mxu0 0.0
    %3098 = vmatpush1.msra.mxu0 0.0
    %3099 = vmatprep.subr.mxu0 0.0
    %3100 = vmatpush1.msra.mxu0 0.0
    %3101 = vmatprep.subr.mxu0 0.0
    %3102 = vmatpush1.msra.mxu0 0.0
    %3103 = vmatprep.mubr.f32.mxu0 0.0
    %3104 = vmatmul.mubr.f32.gmra.mrb[0].mxu0 %v3034
    %v3105 = vpop.f32.mrb[0].mxu0
    %v3106 = vadd.f32 %v3032, %v3105
    %v3107 = vpop.f32.mrb[0].mxu0
    %3108 = vmatprep.mubr.f32.mxu0 0.0
    %3109 = vmatmul.mubr.f32.gmra.mrb[0].mxu0 %v3037
    %v3110 = vpop.f32.mrb[0].mxu0
    %v3111 = vadd.f32 %v3032, %v3110
    %v3112 = vpop.f32.mrb[0].mxu0
    %3113 = vdwg.mxu0
    %v3114 = vmax.f32 %v3106, 0.0
    %v3115 = vmax.f32 %v3111, 0.0
    %v3116 = vld [vmem:[%s6] sm:$0xff]
    %v3117 = vld [vmem:[%s6 + $0x8] sm:$0xff]
    %v3118 = vld [vmem:[%s6 + $0x10] sm:$0xff]
    %v3119 = vld [vmem:[%s6 + $0x18] sm:$0xff]
    %v3120 = vld [vmem:[%s6 + $0x20] sm:$0xff]
    %v3121 = vld [vmem:[%s6 + $0x28] sm:$0xff]
    %v3122 = vld [vmem:[%s6 + $0x30] sm:$0xff]
    %v3123 = vld [vmem:[%s6 + $0x38] sm:$0xff]
    %v3124 = vlaneseq
    %v3125 = vshrl.u32 %v3124, 7
    %v3126 = vsub.s32 3, %v3125
    %v3127 = vrot.slane %v48, %v3126
    %vm3128 = vcmask 523264
    %v3130 = vsel %vm3128, %v3114, 0
    %v3133 = vsel %vm3128, %v3115, 0
    %3135 = vmatprep.subr.mxu0 0.0
    %3136 = vmatpush1.msra.mxu0 %v3116
    %3137 = vmatprep.subr.mxu0 0.0
    %3138 = vmatpush1.msra.mxu0 %v3117
    %3139 = vmatprep.subr.mxu0 0.0
    %3140 = vmatpush1.msra.mxu0 %v3118
    %3141 = vmatprep.subr.mxu0 0.0
    %3142 = vmatpush1.msra.mxu0 %v3119
    %3143 = vmatprep.subr.mxu0 0.0
    %3144 = vmatpush1.msra.mxu0 %v3120
    %3145 = vmatprep.subr.mxu0 0.0
    %3146 = vmatpush1.msra.mxu0 %v3121
    %3147 = vmatprep.subr.mxu0 0.0
    %3148 = vmatpush1.msra.mxu0 %v3122
    %3149 = vmatprep.subr.mxu0 0.0
    %3150 = vmatpush1.msra.mxu0 %v3123
    %3151 = vmatprep.subr.mxu0 0.0
    %3152 = vmatpush1.msra.mxu0 0.0
    %3153 = vmatprep.subr.mxu0 0.0
    %3154 = vmatpush1.msra.mxu0 0.0
    %3155 = vmatprep.subr.mxu0 0.0
    %3156 = vmatpush1.msra.mxu0 0.0
    %3157 = vmatprep.subr.mxu0 0.0
    %3158 = vmatpush1.msra.mxu0 0.0
    %3159 = vmatprep.subr.mxu0 0.0
    %3160 = vmatpush1.msra.mxu0 0.0
    %3161 = vmatprep.subr.mxu0 0.0
    %3162 = vmatpush1.msra.mxu0 0.0
    %3163 = vmatprep.subr.mxu0 0.0
    %3164 = vmatpush1.msra.mxu0 0.0
    %3165 = vmatprep.subr.mxu0 0.0
    %3166 = vmatpush1.msra.mxu0 0.0
    %3167 = vmatprep.subr.mxu0 0.0
    %3168 = vmatpush1.msra.mxu0 0.0
    %3169 = vmatprep.subr.mxu0 0.0
    %3170 = vmatpush1.msra.mxu0 0.0
    %3171 = vmatprep.subr.mxu0 0.0
    %3172 = vmatpush1.msra.mxu0 0.0
    %3173 = vmatprep.subr.mxu0 0.0
    %3174 = vmatpush1.msra.mxu0 0.0
    %3175 = vmatprep.subr.mxu0 0.0
    %3176 = vmatpush1.msra.mxu0 0.0
    %3177 = vmatprep.subr.mxu0 0.0
    %3178 = vmatpush1.msra.mxu0 0.0
    %3179 = vmatprep.subr.mxu0 0.0
    %3180 = vmatpush1.msra.mxu0 0.0
    %3181 = vmatprep.subr.mxu0 0.0
    %3182 = vmatpush1.msra.mxu0 0.0
    %3183 = vmatprep.subr.mxu0 0.0
    %3184 = vmatpush1.msra.mxu0 0.0
    %3185 = vmatprep.subr.mxu0 0.0
    %3186 = vmatpush1.msra.mxu0 0.0
    %3187 = vmatprep.subr.mxu0 0.0
    %3188 = vmatpush1.msra.mxu0 0.0
    %3189 = vmatprep.subr.mxu0 0.0
    %3190 = vmatpush1.msra.mxu0 0.0
    %3191 = vmatprep.subr.mxu0 0.0
    %3192 = vmatpush1.msra.mxu0 0.0
    %3193 = vmatprep.subr.mxu0 0.0
    %3194 = vmatpush1.msra.mxu0 0.0
    %3195 = vmatprep.subr.mxu0 0.0
    %3196 = vmatpush1.msra.mxu0 0.0
    %3197 = vmatprep.subr.mxu0 0.0
    %3198 = vmatpush1.msra.mxu0 0.0
    %3199 = vmatprep.mubr.f32.mxu0 0.0
    %3200 = vmatmul.mubr.f32.gmra.mrb[0].mxu0 %v3130
    %v3201 = vpop.f32.mrb[0].mxu0
    %v3202 = vadd.f32 %v3127, %v3201
    %v3203 = vpop.f32.mrb[0].mxu0
    %3204 = vmatprep.mubr.f32.mxu0 0.0
    %3205 = vmatmul.mubr.f32.gmra.mrb[0].mxu0 %v3133
    %v3206 = vpop.f32.mrb[0].mxu0
    %v3207 = vadd.f32 %v3127, %v3206
    %v3208 = vpop.f32.mrb[0].mxu0
    %3209 = vdwg.mxu0
    %v3210 = vadd.f32 %v3202, %v3023
    %v3211 = vadd.f32 %v3207, %v3024
    %v3212 = vsel %vm57, %v3210, 0.0
    %3213 = vadd.xlane.f32.xlu0 %v3212
    %v3214 = vpop.xlane.xlu0 %3213
    %v3215 = vsel %vm57, %v3211, 0.0
    %3216 = vadd.xlane.f32.xlu0 %v3215
    %v3217 = vpop.xlane.xlu0 %3216
    %v3218 = vmul.f32 %v3214, %v2992
    %v3219 = vmul.f32 %v3217, %v2992
    %v3220 = vsub.f32 %v3210, %v3218
    %v3221 = vsub.f32 %v3211, %v3219
    %v3222 = vmul.f32 %v3220, %v3220
    %v3223 = vmul.f32 %v3221, %v3221
    %v3224 = vsel %vm57, %v3222, 0.0
    %3225 = vadd.xlane.f32.xlu0 %v3224
    %v3226 = vpop.xlane.xlu0 %3225
    %v3227 = vsel %vm57, %v3223, 0.0
    %3228 = vadd.xlane.f32.xlu0 %v3227
    %v3229 = vpop.xlane.xlu0 %3228
    %v3230 = vmul.f32 %v3226, %v2992
    %v3231 = vmul.f32 %v3229, %v2992
    %v3232 = vadd.f32 %v3230, 1e-05
    %v3233 = vadd.f32 %v3231, 1e-05
    %v3234 = vrsqrt.pop %v3232
    %v3235 = vrsqrt.pop %v3233
    %v3236 = vmul.f32 %v3220, %v3234
    %v3237 = vmul.f32 %v3221, %v3235
    %v3238 = vlaneseq
    %v3239 = vshrl.u32 %v3238, 7
    %v3240 = vsub.s32 6, %v3239
    %v3241 = vrot.slane %v48, %v3240
    %v3242 = vmul.f32 %v3236, %v3241
    %v3243 = vmul.f32 %v3237, %v3241
    %v3244 = vlaneseq
    %v3245 = vshrl.u32 %v3244, 7
    %v3246 = vsub.s32 7, %v3245
    %v3247 = vrot.slane %v48, %v3246
    %v3248 = vadd.f32 %v3242, %v3247
    %v3249 = vadd.f32 %v3243, %v3247
    %s3250 = scalar_lea.vmem %s7, 8
    %v3251 = vld [vmem:[%s3250] sm:$0xff]
    %s3252 = scalar_lea.vmem %s3, 32
    %v3253 = vld [vmem:[%s3252] sm:$0xff]
    %v3254 = vld [vmem:[%s3252 + $0x8] sm:$0xff]
    %v3255 = vld [vmem:[%s3252 + $0x10] sm:$0xff]
    %v3256 = vld [vmem:[%s3252 + $0x18] sm:$0xff]
    %v3257 = vlaneseq
    %v3258 = vshrl.u32 %v3257, 7
    %v3259 = vsub.s32 0, %v3258
    %v3260 = vrot.slane %v3251, %v3259
    %v3262 = vsel %vm57, %v3248, 0
    %v3265 = vsel %vm57, %v3249, 0
    %3267 = vmatprep.subr.mxu0 0.0
    %3268 = vmatpush1.msra.mxu0 %v3253
    %3269 = vmatprep.subr.mxu0 0.0
    %3270 = vmatpush1.msra.mxu0 %v3254
    %3271 = vmatprep.subr.mxu0 0.0
    %3272 = vmatpush1.msra.mxu0 %v3255
    %3273 = vmatprep.subr.mxu0 0.0
    %3274 = vmatpush1.msra.mxu0 %v3256
    %3275 = vmatprep.subr.mxu0 0.0
    %3276 = vmatpush1.msra.mxu0 0.0
    %3277 = vmatprep.subr.mxu0 0.0
    %3278 = vmatpush1.msra.mxu0 0.0
    %3279 = vmatprep.subr.mxu0 0.0
    %3280 = vmatpush1.msra.mxu0 0.0
    %3281 = vmatprep.subr.mxu0 0.0
    %3282 = vmatpush1.msra.mxu0 0.0
    %3283 = vmatprep.subr.mxu0 0.0
    %3284 = vmatpush1.msra.mxu0 0.0
    %3285 = vmatprep.subr.mxu0 0.0
    %3286 = vmatpush1.msra.mxu0 0.0
    %3287 = vmatprep.subr.mxu0 0.0
    %3288 = vmatpush1.msra.mxu0 0.0
    %3289 = vmatprep.subr.mxu0 0.0
    %3290 = vmatpush1.msra.mxu0 0.0
    %3291 = vmatprep.subr.mxu0 0.0
    %3292 = vmatpush1.msra.mxu0 0.0
    %3293 = vmatprep.subr.mxu0 0.0
    %3294 = vmatpush1.msra.mxu0 0.0
    %3295 = vmatprep.subr.mxu0 0.0
    %3296 = vmatpush1.msra.mxu0 0.0
    %3297 = vmatprep.subr.mxu0 0.0
    %3298 = vmatpush1.msra.mxu0 0.0
    %3299 = vmatprep.subr.mxu0 0.0
    %3300 = vmatpush1.msra.mxu0 0.0
    %3301 = vmatprep.subr.mxu0 0.0
    %3302 = vmatpush1.msra.mxu0 0.0
    %3303 = vmatprep.subr.mxu0 0.0
    %3304 = vmatpush1.msra.mxu0 0.0
    %3305 = vmatprep.subr.mxu0 0.0
    %3306 = vmatpush1.msra.mxu0 0.0
    %3307 = vmatprep.subr.mxu0 0.0
    %3308 = vmatpush1.msra.mxu0 0.0
    %3309 = vmatprep.subr.mxu0 0.0
    %3310 = vmatpush1.msra.mxu0 0.0
    %3311 = vmatprep.subr.mxu0 0.0
    %3312 = vmatpush1.msra.mxu0 0.0
    %3313 = vmatprep.subr.mxu0 0.0
    %3314 = vmatpush1.msra.mxu0 0.0
    %3315 = vmatprep.subr.mxu0 0.0
    %3316 = vmatpush1.msra.mxu0 0.0
    %3317 = vmatprep.subr.mxu0 0.0
    %3318 = vmatpush1.msra.mxu0 0.0
    %3319 = vmatprep.subr.mxu0 0.0
    %3320 = vmatpush1.msra.mxu0 0.0
    %3321 = vmatprep.subr.mxu0 0.0
    %3322 = vmatpush1.msra.mxu0 0.0
    %3323 = vmatprep.subr.mxu0 0.0
    %3324 = vmatpush1.msra.mxu0 0.0
    %3325 = vmatprep.subr.mxu0 0.0
    %3326 = vmatpush1.msra.mxu0 0.0
    %3327 = vmatprep.subr.mxu0 0.0
    %3328 = vmatpush1.msra.mxu0 0.0
    %3329 = vmatprep.subr.mxu0 0.0
    %3330 = vmatpush1.msra.mxu0 0.0
    %3331 = vmatprep.mubr.f32.mxu0 0.0
    %3332 = vmatmul.mubr.f32.gmra.mrb[0].mxu0 %v3262
    %v3333 = vpop.f32.mrb[0].mxu0
    %v3334 = vadd.f32 %v3260, %v3333
    %v3335 = vpop.f32.mrb[0].mxu0
    %3336 = vmatprep.mubr.f32.mxu0 0.0
    %3337 = vmatmul.mubr.f32.gmra.mrb[0].mxu0 %v3265
    %v3338 = vpop.f32.mrb[0].mxu0
    %v3339 = vadd.f32 %v3260, %v3338
    %v3340 = vpop.f32.mrb[0].mxu0
    %3341 = vdwg.mxu0
    %s3342 = scalar_lea.vmem %s2, 256
    %v3343 = vld [vmem:[%s3342] sm:$0xff]
    %v3344 = vld [vmem:[%s3342 + $0x8] sm:$0xff]
    %v3345 = vld [vmem:[%s3342 + $0x10] sm:$0xff]
    %v3346 = vld [vmem:[%s3342 + $0x18] sm:$0xff]
    %v3347 = vld [vmem:[%s3342 + $0x20] sm:$0xff]
    %v3348 = vld [vmem:[%s3342 + $0x28] sm:$0xff]
    %v3349 = vld [vmem:[%s3342 + $0x30] sm:$0xff]
    %v3350 = vld [vmem:[%s3342 + $0x38] sm:$0xff]
    %v3353 = vcombine.high %v3334, %v3334
    %v3355 = vunpack.c.l.s4 1966171168
    %v3356 = vunpack.c.0.s8 %v3355
    %v3357 = vlaneseq
    %v3358 = vshrl.u32 %v3357, 7
    %v3359 = vsub.s32 %v3356, %v3358
    %v3360 = vrot.slane %v3334, %v3359
    %v3362 = vunpack.c.l.s4 1966171168
    %v3363 = vunpack.c.0.s8 %v3362
    %v3364 = vlaneseq
    %v3365 = vshrl.u32 %v3364, 7
    %v3366 = vsub.s32 %v3363, %v3365
    %v3367 = vrot.slane %v3353, %v3366
    %v3368 = vcombine.high %v3360, %v3360
    %v3369 = vcombine.high %v3367, %v3367
    %v3371 = vunpack.c.l.s4 1966171168
    %v3372 = vunpack.c.0.s8 %v3371
    %v3373 = vlaneseq
    %v3374 = vshrl.u32 %v3373, 7
    %v3375 = vsub.s32 %v3372, %v3374
    %v3376 = vrot.slane %v3360, %v3375
    %v3378 = vunpack.c.l.s4 1966171168
    %v3379 = vunpack.c.0.s8 %v3378
    %v3380 = vlaneseq
    %v3381 = vshrl.u32 %v3380, 7
    %v3382 = vsub.s32 %v3379, %v3381
    %v3383 = vrot.slane %v3367, %v3382
    %v3385 = vunpack.c.l.s4 1966171168
    %v3386 = vunpack.c.0.s8 %v3385
    %v3387 = vlaneseq
    %v3388 = vshrl.u32 %v3387, 7
    %v3389 = vsub.s32 %v3386, %v3388
    %v3390 = vrot.slane %v3368, %v3389
    %v3392 = vunpack.c.l.s4 1966171168
    %v3393 = vunpack.c.0.s8 %v3392
    %v3394 = vlaneseq
    %v3395 = vshrl.u32 %v3394, 7
    %v3396 = vsub.s32 %v3393, %v3395
    %v3397 = vrot.slane %v3369, %v3396
    %v3398 = vcombine.high %v3376, %v3376
    %v3399 = vcombine.high %v3383, %v3383
    %v3400 = vcombine.high %v3390, %v3390
    %v3401 = vcombine.high %v3397, %v3397
    %v3402 = vcombine.high %v3339, %v3339
    %v3404 = vunpack.c.l.s4 1966171168
    %v3405 = vunpack.c.0.s8 %v3404
    %v3406 = vlaneseq
    %v3407 = vshrl.u32 %v3406, 7
    %v3408 = vsub.s32 %v3405, %v3407
    %v3409 = vrot.slane %v3339, %v3408
    %v3411 = vunpack.c.l.s4 1966171168
    %v3412 = vunpack.c.0.s8 %v3411
    %v3413 = vlaneseq
    %v3414 = vshrl.u32 %v3413, 7
    %v3415 = vsub.s32 %v3412, %v3414
    %v3416 = vrot.slane %v3402, %v3415
    %v3417 = vcombine.high %v3409, %v3409
    %v3418 = vcombine.high %v3416, %v3416
    %v3420 = vunpack.c.l.s4 1966171168
    %v3421 = vunpack.c.0.s8 %v3420
    %v3422 = vlaneseq
    %v3423 = vshrl.u32 %v3422, 7
    %v3424 = vsub.s32 %v3421, %v3423
    %v3425 = vrot.slane %v3409, %v3424
    %v3427 = vunpack.c.l.s4 1966171168
    %v3428 = vunpack.c.0.s8 %v3427
    %v3429 = vlaneseq
    %v3430 = vshrl.u32 %v3429, 7
    %v3431 = vsub.s32 %v3428, %v3430
    %v3432 = vrot.slane %v3416, %v3431
    %v3434 = vunpack.c.l.s4 1966171168
    %v3435 = vunpack.c.0.s8 %v3434
    %v3436 = vlaneseq
    %v3437 = vshrl.u32 %v3436, 7
    %v3438 = vsub.s32 %v3435, %v3437
    %v3439 = vrot.slane %v3417, %v3438
    %v3441 = vunpack.c.l.s4 1966171168
    %v3442 = vunpack.c.0.s8 %v3441
    %v3443 = vlaneseq
    %v3444 = vshrl.u32 %v3443, 7
    %v3445 = vsub.s32 %v3442, %v3444
    %v3446 = vrot.slane %v3418, %v3445
    %v3447 = vcombine.high %v3425, %v3425
    %v3448 = vcombine.high %v3432, %v3432
    %v3449 = vcombine.high %v3439, %v3439
    %v3450 = vcombine.high %v3446, %v3446
    %v3451 = vlaneseq
    %v3452 = vshrl.u32 %v3451, 7
    %v3453 = vsub.s32 0, %v3452
    %v3454 = vrot.slane %v3376, %v3453
    %v3455 = vlaneseq
    %v3456 = vshrl.u32 %v3455, 7
    %v3457 = vsub.s32 0, %v3456
    %v3458 = vrot.slane %v3390, %v3457
    %v3459 = vlaneseq
    %v3460 = vshrl.u32 %v3459, 7
    %v3461 = vsub.s32 0, %v3460
    %v3462 = vrot.slane %v3398, %v3461
    %v3463 = vlaneseq
    %v3464 = vshrl.u32 %v3463, 7
    %v3465 = vsub.s32 0, %v3464
    %v3466 = vrot.slane %v3400, %v3465
    %v3467 = vlaneseq
    %v3468 = vshrl.u32 %v3467, 7
    %v3469 = vsub.s32 0, %v3468
    %v3470 = vrot.slane %v3383, %v3469
    %v3471 = vlaneseq
    %v3472 = vshrl.u32 %v3471, 7
    %v3473 = vsub.s32 0, %v3472
    %v3474 = vrot.slane %v3397, %v3473
    %v3475 = vlaneseq
    %v3476 = vshrl.u32 %v3475, 7
    %v3477 = vsub.s32 0, %v3476
    %v3478 = vrot.slane %v3399, %v3477
    %v3479 = vlaneseq
    %v3480 = vshrl.u32 %v3479, 7
    %v3481 = vsub.s32 0, %v3480
    %v3482 = vrot.slane %v3401, %v3481
    %v3483 = vlaneseq
    %v3484 = vshrl.u32 %v3483, 7
    %v3485 = vsub.s32 0, %v3484
    %v3486 = vrot.slane %v3425, %v3485
    %v3487 = vlaneseq
    %v3488 = vshrl.u32 %v3487, 7
    %v3489 = vsub.s32 0, %v3488
    %v3490 = vrot.slane %v3439, %v3489
    %v3491 = vlaneseq
    %v3492 = vshrl.u32 %v3491, 7
    %v3493 = vsub.s32 0, %v3492
    %v3494 = vrot.slane %v3447, %v3493
    %v3495 = vlaneseq
    %v3496 = vshrl.u32 %v3495, 7
    %v3497 = vsub.s32 0, %v3496
    %v3498 = vrot.slane %v3449, %v3497
    %v3499 = vlaneseq
    %v3500 = vshrl.u32 %v3499, 7
    %v3501 = vsub.s32 0, %v3500
    %v3502 = vrot.slane %v3432, %v3501
    %v3503 = vlaneseq
    %v3504 = vshrl.u32 %v3503, 7
    %v3505 = vsub.s32 0, %v3504
    %v3506 = vrot.slane %v3446, %v3505
    %v3507 = vlaneseq
    %v3508 = vshrl.u32 %v3507, 7
    %v3509 = vsub.s32 0, %v3508
    %v3510 = vrot.slane %v3448, %v3509
    %v3511 = vlaneseq
    %v3512 = vshrl.u32 %v3511, 7
    %v3513 = vsub.s32 0, %v3512
    %v3514 = vrot.slane %v3450, %v3513
    %v3531 = vmul.f32 %v3454, %v3343
    %v3532 = vmul.f32 %v3458, %v3344
    %v3533 = vmul.f32 %v3462, %v3345
    %v3534 = vmul.f32 %v3466, %v3346
    %v3535 = vmul.f32 %v3470, %v3347
    %v3536 = vmul.f32 %v3474, %v3348
    %v3537 = vmul.f32 %v3478, %v3349
    %v3538 = vmul.f32 %v3482, %v3350
    %v3539 = vmul.f32 %v3486, %v3343
    %v3540 = vmul.f32 %v3490, %v3344
    %v3541 = vmul.f32 %v3494, %v3345
    %v3542 = vmul.f32 %v3498, %v3346
    %v3543 = vmul.f32 %v3502, %v3347
    %v3544 = vmul.f32 %v3506, %v3348
    %v3545 = vmul.f32 %v3510, %v3349
    %v3546 = vmul.f32 %v3514, %v3350
    %v3547 = vsel %vm343, %v3531, 0.0
    %3548 = vadd.xlane.f32.xlu0 %v3547
    %v3549 = vpop.xlane.xlu0 %3548
    %v3550 = vsel %vm343, %v3532, 0.0
    %3551 = vadd.xlane.f32.xlu0 %v3550
    %v3552 = vpop.xlane.xlu0 %3551
    %v3553 = vsel %vm343, %v3533, 0.0
    %3554 = vadd.xlane.f32.xlu0 %v3553
    %v3555 = vpop.xlane.xlu0 %3554
    %v3556 = vsel %vm343, %v3534, 0.0
    %3557 = vadd.xlane.f32.xlu0 %v3556
    %v3558 = vpop.xlane.xlu0 %3557
    %v3559 = vsel %vm343, %v3535, 0.0
    %3560 = vadd.xlane.f32.xlu0 %v3559
    %v3561 = vpop.xlane.xlu0 %3560
    %v3562 = vsel %vm343, %v3536, 0.0
    %3563 = vadd.xlane.f32.xlu0 %v3562
    %v3564 = vpop.xlane.xlu0 %3563
    %v3565 = vsel %vm343, %v3537, 0.0
    %3566 = vadd.xlane.f32.xlu0 %v3565
    %v3567 = vpop.xlane.xlu0 %3566
    %v3568 = vsel %vm343, %v3538, 0.0
    %3569 = vadd.xlane.f32.xlu0 %v3568
    %v3570 = vpop.xlane.xlu0 %3569
    %v3571 = vsel %vm343, %v3539, 0.0
    %3572 = vadd.xlane.f32.xlu0 %v3571
    %v3573 = vpop.xlane.xlu0 %3572
    %v3574 = vsel %vm343, %v3540, 0.0
    %3575 = vadd.xlane.f32.xlu0 %v3574
    %v3576 = vpop.xlane.xlu0 %3575
    %v3577 = vsel %vm343, %v3541, 0.0
    %3578 = vadd.xlane.f32.xlu0 %v3577
    %v3579 = vpop.xlane.xlu0 %3578
    %v3580 = vsel %vm343, %v3542, 0.0
    %3581 = vadd.xlane.f32.xlu0 %v3580
    %v3582 = vpop.xlane.xlu0 %3581
    %v3583 = vsel %vm343, %v3543, 0.0
    %3584 = vadd.xlane.f32.xlu0 %v3583
    %v3585 = vpop.xlane.xlu0 %3584
    %v3586 = vsel %vm343, %v3544, 0.0
    %3587 = vadd.xlane.f32.xlu0 %v3586
    %v3588 = vpop.xlane.xlu0 %3587
    %v3589 = vsel %vm343, %v3545, 0.0
    %3590 = vadd.xlane.f32.xlu0 %v3589
    %v3591 = vpop.xlane.xlu0 %3590
    %v3592 = vsel %vm343, %v3546, 0.0
    %3593 = vadd.xlane.f32.xlu0 %v3592
    %v3594 = vpop.xlane.xlu0 %3593
    %3595 = vrot.lane.b32.xlu0 %v3334, 96
    %v3596 = vpop.permute.xlu0 %3595
    %v3605 = vlaneseq
    %v3606 = vshrl.u32 %v3605, 7
    %v3607 = vsub.s32 %v403, %v3606
    %v3608 = vrot.slane %v3549, %v3607
    %v3609 = vlaneseq
    %v3610 = vshrl.u32 %v3609, 7
    %v3611 = vsub.s32 %v403, %v3610
    %v3612 = vrot.slane %v3552, %v3611
    %v3613 = vlaneseq
    %v3614 = vshrl.u32 %v3613, 7
    %v3615 = vsub.s32 %v403, %v3614
    %v3616 = vrot.slane %v3555, %v3615
    %v3617 = vlaneseq
    %v3618 = vshrl.u32 %v3617, 7
    %v3619 = vsub.s32 %v403, %v3618
    %v3620 = vrot.slane %v3558, %v3619
    %v3621 = vlaneseq
    %v3622 = vshrl.u32 %v3621, 7
    %v3623 = vsub.s32 %v403, %v3622
    %v3624 = vrot.slane %v3561, %v3623
    %v3625 = vlaneseq
    %v3626 = vshrl.u32 %v3625, 7
    %v3627 = vsub.s32 %v403, %v3626
    %v3628 = vrot.slane %v3564, %v3627
    %v3629 = vlaneseq
    %v3630 = vshrl.u32 %v3629, 7
    %v3631 = vsub.s32 %v403, %v3630
    %v3632 = vrot.slane %v3567, %v3631
    %v3633 = vlaneseq
    %v3634 = vshrl.u32 %v3633, 7
    %v3635 = vsub.s32 %v403, %v3634
    %v3636 = vrot.slane %v3570, %v3635
    %v3637 = vsel %vm436, %v3612, %v3608
    %v3638 = vsel %vm438, %v3616, %v3637
    %v3639 = vsel %vm440, %v3620, %v3638
    %v3640 = vsel %vm442, %v3624, %v3639
    %v3641 = vsel %vm444, %v3628, %v3640
    %v3642 = vsel %vm446, %v3632, %v3641
    %v3643 = vsel %vm448, %v3636, %v3642
    %v3645 = vsel %vm343, %v3334, 0
    %v3647 = vsel %vm343, %v3596, 0
    %3649 = vmatprep.subr.mxu0 0.0
    %3650 = vmatpush1.xpose.msra.mxu0 %v3647
    %3651 = vmatprep.subr.mxu0 0.0
    %3652 = vmatpush1.xpose.msra.mxu0 0.0
    %3653 = vmatprep.subr.mxu0 0.0
    %3654 = vmatpush1.xpose.msra.mxu0 0.0
    %3655 = vmatprep.subr.mxu0 0.0
    %3656 = vmatpush1.xpose.msra.mxu0 0.0
    %3657 = vmatprep.subr.mxu0 0.0
    %3658 = vmatpush1.xpose.msra.mxu0 0.0
    %3659 = vmatprep.subr.mxu0 0.0
    %3660 = vmatpush1.xpose.msra.mxu0 0.0
    %3661 = vmatprep.subr.mxu0 0.0
    %3662 = vmatpush1.xpose.msra.mxu0 0.0
    %3663 = vmatprep.subr.mxu0 0.0
    %3664 = vmatpush1.xpose.msra.mxu0 0.0
    %3665 = vmatprep.subr.mxu0 0.0
    %3666 = vmatpush1.xpose.msra.mxu0 0.0
    %3667 = vmatprep.subr.mxu0 0.0
    %3668 = vmatpush1.xpose.msra.mxu0 0.0
    %3669 = vmatprep.subr.mxu0 0.0
    %3670 = vmatpush1.xpose.msra.mxu0 0.0
    %3671 = vmatprep.subr.mxu0 0.0
    %3672 = vmatpush1.xpose.msra.mxu0 0.0
    %3673 = vmatprep.subr.mxu0 0.0
    %3674 = vmatpush1.xpose.msra.mxu0 0.0
    %3675 = vmatprep.subr.mxu0 0.0
    %3676 = vmatpush1.xpose.msra.mxu0 0.0
    %3677 = vmatprep.subr.mxu0 0.0
    %3678 = vmatpush1.xpose.msra.mxu0 0.0
    %3679 = vmatprep.subr.mxu0 0.0
    %3680 = vmatpush1.xpose.msra.mxu0 0.0
    %3681 = vmatprep.subr.mxu0 0.0
    %3682 = vmatpush1.xpose.msra.mxu0 0.0
    %3683 = vmatprep.subr.mxu0 0.0
    %3684 = vmatpush1.xpose.msra.mxu0 0.0
    %3685 = vmatprep.subr.mxu0 0.0
    %3686 = vmatpush1.xpose.msra.mxu0 0.0
    %3687 = vmatprep.subr.mxu0 0.0
    %3688 = vmatpush1.xpose.msra.mxu0 0.0
    %3689 = vmatprep.subr.mxu0 0.0
    %3690 = vmatpush1.xpose.msra.mxu0 0.0
    %3691 = vmatprep.subr.mxu0 0.0
    %3692 = vmatpush1.xpose.msra.mxu0 0.0
    %3693 = vmatprep.subr.mxu0 0.0
    %3694 = vmatpush1.xpose.msra.mxu0 0.0
    %3695 = vmatprep.subr.mxu0 0.0
    %3696 = vmatpush1.xpose.msra.mxu0 0.0
    %3697 = vmatprep.subr.mxu0 0.0
    %3698 = vmatpush1.xpose.msra.mxu0 0.0
    %3699 = vmatprep.subr.mxu0 0.0
    %3700 = vmatpush1.xpose.msra.mxu0 0.0
    %3701 = vmatprep.subr.mxu0 0.0
    %3702 = vmatpush1.xpose.msra.mxu0 0.0
    %3703 = vmatprep.subr.mxu0 0.0
    %3704 = vmatpush1.xpose.msra.mxu0 0.0
    %3705 = vmatprep.subr.mxu0 0.0
    %3706 = vmatpush1.xpose.msra.mxu0 0.0
    %3707 = vmatprep.subr.mxu0 0.0
    %3708 = vmatpush1.xpose.msra.mxu0 0.0
    %3709 = vmatprep.subr.mxu0 0.0
    %3710 = vmatpush1.xpose.msra.mxu0 0.0
    %3711 = vmatprep.subr.mxu0 0.0
    %3712 = vmatpush1.xpose.msra.mxu0 0.0
    %3713 = vmatprep.mubr.f32.mxu0 0.0
    %3714 = vmatmul.mubr.f32.gmra.mrb[0].mxu0 %v3645
    %v3715 = vpop.f32.mrb[0].mxu0
    %v3716 = vadd.f32 %v3643, %v3715
    %v3717 = vpop.f32.mrb[0].mxu0
    %3718 = vdwg.mxu0
    %3719 = vrot.lane.b32.xlu0 %v3339, 96
    %v3720 = vpop.permute.xlu0 %3719
    %v3729 = vlaneseq
    %v3730 = vshrl.u32 %v3729, 7
    %v3731 = vsub.s32 %v403, %v3730
    %v3732 = vrot.slane %v3573, %v3731
    %v3733 = vlaneseq
    %v3734 = vshrl.u32 %v3733, 7
    %v3735 = vsub.s32 %v403, %v3734
    %v3736 = vrot.slane %v3576, %v3735
    %v3737 = vlaneseq
    %v3738 = vshrl.u32 %v3737, 7
    %v3739 = vsub.s32 %v403, %v3738
    %v3740 = vrot.slane %v3579, %v3739
    %v3741 = vlaneseq
    %v3742 = vshrl.u32 %v3741, 7
    %v3743 = vsub.s32 %v403, %v3742
    %v3744 = vrot.slane %v3582, %v3743
    %v3745 = vlaneseq
    %v3746 = vshrl.u32 %v3745, 7
    %v3747 = vsub.s32 %v403, %v3746
    %v3748 = vrot.slane %v3585, %v3747
    %v3749 = vlaneseq
    %v3750 = vshrl.u32 %v3749, 7
    %v3751 = vsub.s32 %v403, %v3750
    %v3752 = vrot.slane %v3588, %v3751
    %v3753 = vlaneseq
    %v3754 = vshrl.u32 %v3753, 7
    %v3755 = vsub.s32 %v403, %v3754
    %v3756 = vrot.slane %v3591, %v3755
    %v3757 = vlaneseq
    %v3758 = vshrl.u32 %v3757, 7
    %v3759 = vsub.s32 %v403, %v3758
    %v3760 = vrot.slane %v3594, %v3759
    %v3761 = vsel %vm436, %v3736, %v3732
    %v3762 = vsel %vm438, %v3740, %v3761
    %v3763 = vsel %vm440, %v3744, %v3762
    %v3764 = vsel %vm442, %v3748, %v3763
    %v3765 = vsel %vm444, %v3752, %v3764
    %v3766 = vsel %vm446, %v3756, %v3765
    %v3767 = vsel %vm448, %v3760, %v3766
    %v3769 = vsel %vm343, %v3339, 0
    %v3771 = vsel %vm343, %v3720, 0
    %3773 = vmatprep.subr.mxu0 0.0
    %3774 = vmatpush1.xpose.msra.mxu0 %v3771
    %3775 = vmatprep.subr.mxu0 0.0
    %3776 = vmatpush1.xpose.msra.mxu0 0.0
    %3777 = vmatprep.subr.mxu0 0.0
    %3778 = vmatpush1.xpose.msra.mxu0 0.0
    %3779 = vmatprep.subr.mxu0 0.0
    %3780 = vmatpush1.xpose.msra.mxu0 0.0
    %3781 = vmatprep.subr.mxu0 0.0
    %3782 = vmatpush1.xpose.msra.mxu0 0.0
    %3783 = vmatprep.subr.mxu0 0.0
    %3784 = vmatpush1.xpose.msra.mxu0 0.0
    %3785 = vmatprep.subr.mxu0 0.0
    %3786 = vmatpush1.xpose.msra.mxu0 0.0
    %3787 = vmatprep.subr.mxu0 0.0
    %3788 = vmatpush1.xpose.msra.mxu0 0.0
    %3789 = vmatprep.subr.mxu0 0.0
    %3790 = vmatpush1.xpose.msra.mxu0 0.0
    %3791 = vmatprep.subr.mxu0 0.0
    %3792 = vmatpush1.xpose.msra.mxu0 0.0
    %3793 = vmatprep.subr.mxu0 0.0
    %3794 = vmatpush1.xpose.msra.mxu0 0.0
    %3795 = vmatprep.subr.mxu0 0.0
    %3796 = vmatpush1.xpose.msra.mxu0 0.0
    %3797 = vmatprep.subr.mxu0 0.0
    %3798 = vmatpush1.xpose.msra.mxu0 0.0
    %3799 = vmatprep.subr.mxu0 0.0
    %3800 = vmatpush1.xpose.msra.mxu0 0.0
    %3801 = vmatprep.subr.mxu0 0.0
    %3802 = vmatpush1.xpose.msra.mxu0 0.0
    %3803 = vmatprep.subr.mxu0 0.0
    %3804 = vmatpush1.xpose.msra.mxu0 0.0
    %3805 = vmatprep.subr.mxu0 0.0
    %3806 = vmatpush1.xpose.msra.mxu0 0.0
    %3807 = vmatprep.subr.mxu0 0.0
    %3808 = vmatpush1.xpose.msra.mxu0 0.0
    %3809 = vmatprep.subr.mxu0 0.0
    %3810 = vmatpush1.xpose.msra.mxu0 0.0
    %3811 = vmatprep.subr.mxu0 0.0
    %3812 = vmatpush1.xpose.msra.mxu0 0.0
    %3813 = vmatprep.subr.mxu0 0.0
    %3814 = vmatpush1.xpose.msra.mxu0 0.0
    %3815 = vmatprep.subr.mxu0 0.0
    %3816 = vmatpush1.xpose.msra.mxu0 0.0
    %3817 = vmatprep.subr.mxu0 0.0
    %3818 = vmatpush1.xpose.msra.mxu0 0.0
    %3819 = vmatprep.subr.mxu0 0.0
    %3820 = vmatpush1.xpose.msra.mxu0 0.0
    %3821 = vmatprep.subr.mxu0 0.0
    %3822 = vmatpush1.xpose.msra.mxu0 0.0
    %3823 = vmatprep.subr.mxu0 0.0
    %3824 = vmatpush1.xpose.msra.mxu0 0.0
    %3825 = vmatprep.subr.mxu0 0.0
    %3826 = vmatpush1.xpose.msra.mxu0 0.0
    %3827 = vmatprep.subr.mxu0 0.0
    %3828 = vmatpush1.xpose.msra.mxu0 0.0
    %3829 = vmatprep.subr.mxu0 0.0
    %3830 = vmatpush1.xpose.msra.mxu0 0.0
    %3831 = vmatprep.subr.mxu0 0.0
    %3832 = vmatpush1.xpose.msra.mxu0 0.0
    %3833 = vmatprep.subr.mxu0 0.0
    %3834 = vmatpush1.xpose.msra.mxu0 0.0
    %3835 = vmatprep.subr.mxu0 0.0
    %3836 = vmatpush1.xpose.msra.mxu0 0.0
    %3837 = vmatprep.mubr.f32.mxu0 0.0
    %3838 = vmatmul.mubr.f32.gmra.mrb[0].mxu0 %v3769
    %v3839 = vpop.f32.mrb[0].mxu0
    %v3840 = vadd.f32 %v3767, %v3839
    %v3841 = vpop.f32.mrb[0].mxu0
    %3842 = vdwg.mxu0
    %v3843 = vadd.f32 %v3716, %v654
    %v3844 = vadd.f32 %v3840, %v658
    %v3845 = vsel %vm343, %v3843, -inf
    %3846 = vmax.xlane.f32.xlu0 %v3845
    %v3847 = vpop.xlane.xlu0 %3846
    %v3848 = vsel %vm343, %v3844, -inf
    %3849 = vmax.xlane.f32.xlu0 %v3848
    %v3850 = vpop.xlane.xlu0 %3849
    %v3851 = vsub.f32 %v3843, %v3847
    %v3852 = vsub.f32 %v3844, %v3850
    %v3853 = vmul.f32 %v3851, 1.442695
    %v3854 = vpow.pop %v3853
    %v3855 = vmul.f32 %v3852, 1.442695
    %v3856 = vpow.pop %v3855
    %v3857 = vsel %vm343, %v3854, 0.0
    %3858 = vadd.xlane.f32.xlu0 %v3857
    %v3859 = vpop.xlane.xlu0 %3858
    %v3860 = vsel %vm343, %v3856, 0.0
    %3861 = vadd.xlane.f32.xlu0 %v3860
    %v3862 = vpop.xlane.xlu0 %3861
    %v3863 = vrcp.pop %v3859
    %v3864 = vmul.f32 %v3854, %v3863
    %v3865 = vrcp.pop %v3862
    %v3866 = vmul.f32 %v3856, %v3865
    %s3867 = scalar_lea.vmem %s13, 64
    %3868 = vst.msk [vmem:[%s3867] sm:$0xff] %vm343, %v3864
    %s3869 = scalar_lea.vmem %s13, 96
    %3870 = vst.msk [vmem:[%s3869] sm:$0xff] %vm343, %v3866
    %3871 = vrot.lane.b32.xlu0 %v3334, 64
    %v3872 = vpop.permute.xlu0 %3871
    %v3875 = vsel %vm343, %v3864, 0
    %3877 = vmatprep.subr.mxu0 0.0
    %3878 = vmatpush1.msra.mxu0 %v3872
    %3879 = vmatprep.subr.mxu0 0.0
    %3880 = vmatpush1.msra.mxu0 0.0
    %3881 = vmatprep.subr.mxu0 0.0
    %3882 = vmatpush1.msra.mxu0 0.0
    %3883 = vmatprep.subr.mxu0 0.0
    %3884 = vmatpush1.msra.mxu0 0.0
    %3885 = vmatprep.subr.mxu0 0.0
    %3886 = vmatpush1.msra.mxu0 0.0
    %3887 = vmatprep.subr.mxu0 0.0
    %3888 = vmatpush1.msra.mxu0 0.0
    %3889 = vmatprep.subr.mxu0 0.0
    %3890 = vmatpush1.msra.mxu0 0.0
    %3891 = vmatprep.subr.mxu0 0.0
    %3892 = vmatpush1.msra.mxu0 0.0
    %3893 = vmatprep.subr.mxu0 0.0
    %3894 = vmatpush1.msra.mxu0 0.0
    %3895 = vmatprep.subr.mxu0 0.0
    %3896 = vmatpush1.msra.mxu0 0.0
    %3897 = vmatprep.subr.mxu0 0.0
    %3898 = vmatpush1.msra.mxu0 0.0
    %3899 = vmatprep.subr.mxu0 0.0
    %3900 = vmatpush1.msra.mxu0 0.0
    %3901 = vmatprep.subr.mxu0 0.0
    %3902 = vmatpush1.msra.mxu0 0.0
    %3903 = vmatprep.subr.mxu0 0.0
    %3904 = vmatpush1.msra.mxu0 0.0
    %3905 = vmatprep.subr.mxu0 0.0
    %3906 = vmatpush1.msra.mxu0 0.0
    %3907 = vmatprep.subr.mxu0 0.0
    %3908 = vmatpush1.msra.mxu0 0.0
    %3909 = vmatprep.subr.mxu0 0.0
    %3910 = vmatpush1.msra.mxu0 0.0
    %3911 = vmatprep.subr.mxu0 0.0
    %3912 = vmatpush1.msra.mxu0 0.0
    %3913 = vmatprep.subr.mxu0 0.0
    %3914 = vmatpush1.msra.mxu0 0.0
    %3915 = vmatprep.subr.mxu0 0.0
    %3916 = vmatpush1.msra.mxu0 0.0
    %3917 = vmatprep.subr.mxu0 0.0
    %3918 = vmatpush1.msra.mxu0 0.0
    %3919 = vmatprep.subr.mxu0 0.0
    %3920 = vmatpush1.msra.mxu0 0.0
    %3921 = vmatprep.subr.mxu0 0.0
    %3922 = vmatpush1.msra.mxu0 0.0
    %3923 = vmatprep.subr.mxu0 0.0
    %3924 = vmatpush1.msra.mxu0 0.0
    %3925 = vmatprep.subr.mxu0 0.0
    %3926 = vmatpush1.msra.mxu0 0.0
    %3927 = vmatprep.subr.mxu0 0.0
    %3928 = vmatpush1.msra.mxu0 0.0
    %3929 = vmatprep.subr.mxu0 0.0
    %3930 = vmatpush1.msra.mxu0 0.0
    %3931 = vmatprep.subr.mxu0 0.0
    %3932 = vmatpush1.msra.mxu0 0.0
    %3933 = vmatprep.subr.mxu0 0.0
    %3934 = vmatpush1.msra.mxu0 0.0
    %3935 = vmatprep.subr.mxu0 0.0
    %3936 = vmatpush1.msra.mxu0 0.0
    %3937 = vmatprep.subr.mxu0 0.0
    %3938 = vmatpush1.msra.mxu0 0.0
    %3939 = vmatprep.subr.mxu0 0.0
    %3940 = vmatpush1.msra.mxu0 0.0
    %3941 = vmatprep.mubr.f32.mxu0 0.0
    %3942 = vmatmul.mubr.f32.gmra.mrb[0].mxu0 %v3875
    %v3943 = vpop.f32.mrb[0].mxu0
    %v3944 = vadd.f32 0.0, %v3943
    %v3945 = vpop.f32.mrb[0].mxu0
    %3946 = vdwg.mxu0
    %3947 = vrot.lane.b32.xlu0 %v3339, 64
    %v3948 = vpop.permute.xlu0 %3947
    %v3951 = vsel %vm343, %v3866, 0
    %3953 = vmatprep.subr.mxu0 0.0
    %3954 = vmatpush1.msra.mxu0 %v3948
    %3955 = vmatprep.subr.mxu0 0.0
    %3956 = vmatpush1.msra.mxu0 0.0
    %3957 = vmatprep.subr.mxu0 0.0
    %3958 = vmatpush1.msra.mxu0 0.0
    %3959 = vmatprep.subr.mxu0 0.0
    %3960 = vmatpush1.msra.mxu0 0.0
    %3961 = vmatprep.subr.mxu0 0.0
    %3962 = vmatpush1.msra.mxu0 0.0
    %3963 = vmatprep.subr.mxu0 0.0
    %3964 = vmatpush1.msra.mxu0 0.0
    %3965 = vmatprep.subr.mxu0 0.0
    %3966 = vmatpush1.msra.mxu0 0.0
    %3967 = vmatprep.subr.mxu0 0.0
    %3968 = vmatpush1.msra.mxu0 0.0
    %3969 = vmatprep.subr.mxu0 0.0
    %3970 = vmatpush1.msra.mxu0 0.0
    %3971 = vmatprep.subr.mxu0 0.0
    %3972 = vmatpush1.msra.mxu0 0.0
    %3973 = vmatprep.subr.mxu0 0.0
    %3974 = vmatpush1.msra.mxu0 0.0
    %3975 = vmatprep.subr.mxu0 0.0
    %3976 = vmatpush1.msra.mxu0 0.0
    %3977 = vmatprep.subr.mxu0 0.0
    %3978 = vmatpush1.msra.mxu0 0.0
    %3979 = vmatprep.subr.mxu0 0.0
    %3980 = vmatpush1.msra.mxu0 0.0
    %3981 = vmatprep.subr.mxu0 0.0
    %3982 = vmatpush1.msra.mxu0 0.0
    %3983 = vmatprep.subr.mxu0 0.0
    %3984 = vmatpush1.msra.mxu0 0.0
    %3985 = vmatprep.subr.mxu0 0.0
    %3986 = vmatpush1.msra.mxu0 0.0
    %3987 = vmatprep.subr.mxu0 0.0
    %3988 = vmatpush1.msra.mxu0 0.0
    %3989 = vmatprep.subr.mxu0 0.0
    %3990 = vmatpush1.msra.mxu0 0.0
    %3991 = vmatprep.subr.mxu0 0.0
    %3992 = vmatpush1.msra.mxu0 0.0
    %3993 = vmatprep.subr.mxu0 0.0
    %3994 = vmatpush1.msra.mxu0 0.0
    %3995 = vmatprep.subr.mxu0 0.0
    %3996 = vmatpush1.msra.mxu0 0.0
    %3997 = vmatprep.subr.mxu0 0.0
    %3998 = vmatpush1.msra.mxu0 0.0
    %3999 = vmatprep.subr.mxu0 0.0
    %4000 = vmatpush1.msra.mxu0 0.0
    %4001 = vmatprep.subr.mxu0 0.0
    %4002 = vmatpush1.msra.mxu0 0.0
    %4003 = vmatprep.subr.mxu0 0.0
    %4004 = vmatpush1.msra.mxu0 0.0
    %4005 = vmatprep.subr.mxu0 0.0
    %4006 = vmatpush1.msra.mxu0 0.0
    %4007 = vmatprep.subr.mxu0 0.0
    %4008 = vmatpush1.msra.mxu0 0.0
    %4009 = vmatprep.subr.mxu0 0.0
    %4010 = vmatpush1.msra.mxu0 0.0
    %4011 = vmatprep.subr.mxu0 0.0
    %4012 = vmatpush1.msra.mxu0 0.0
    %4013 = vmatprep.subr.mxu0 0.0
    %4014 = vmatpush1.msra.mxu0 0.0
    %4015 = vmatprep.subr.mxu0 0.0
    %4016 = vmatpush1.msra.mxu0 0.0
    %4017 = vmatprep.mubr.f32.mxu0 0.0
    %4018 = vmatmul.mubr.f32.gmra.mrb[0].mxu0 %v3951
    %v4019 = vpop.f32.mrb[0].mxu0
    %v4020 = vadd.f32 0.0, %v4019
    %v4021 = vpop.f32.mrb[0].mxu0
    %4022 = vdwg.mxu0
    %s4023 = scalar_lea.vmem %s4, 32
    %v4024 = vld [vmem:[%s4023] sm:$0xff]
    %s4025 = scalar_lea.vmem %s2, 320
    %v4026 = vld [vmem:[%s4025] sm:$0xff]
    %v4027 = vld [vmem:[%s4025 + $0x8] sm:$0xff]
    %v4028 = vld [vmem:[%s4025 + $0x10] sm:$0xff]
    %v4029 = vld [vmem:[%s4025 + $0x18] sm:$0xff]
    %v4030 = vld [vmem:[%s4025 + $0x20] sm:$0xff]
    %v4031 = vld [vmem:[%s4025 + $0x28] sm:$0xff]
    %v4032 = vld [vmem:[%s4025 + $0x30] sm:$0xff]
    %v4033 = vld [vmem:[%s4025 + $0x38] sm:$0xff]
    %4042 = vrot.lane.b32.xlu0 %v4026, 8
    %v4043 = vpop.permute.xlu0 %4042
    %4044 = vrot.lane.b32.xlu0 %v4027, 8
    %v4045 = vpop.permute.xlu0 %4044
    %4046 = vrot.lane.b32.xlu0 %v4028, 8
    %v4047 = vpop.permute.xlu0 %4046
    %4048 = vrot.lane.b32.xlu0 %v4029, 8
    %v4049 = vpop.permute.xlu0 %4048
    %4050 = vrot.lane.b32.xlu0 %v4030, 8
    %v4051 = vpop.permute.xlu0 %4050
    %4052 = vrot.lane.b32.xlu0 %v4031, 8
    %v4053 = vpop.permute.xlu0 %4052
    %4054 = vrot.lane.b32.xlu0 %v4032, 8
    %v4055 = vpop.permute.xlu0 %4054
    %4056 = vrot.lane.b32.xlu0 %v4033, 8
    %v4057 = vpop.permute.xlu0 %4056
    %v4066 = vmul.f32 %v3454, %v4043
    %v4067 = vmul.f32 %v3458, %v4045
    %v4068 = vmul.f32 %v3462, %v4047
    %v4069 = vmul.f32 %v3466, %v4049
    %v4070 = vmul.f32 %v3470, %v4051
    %v4071 = vmul.f32 %v3474, %v4053
    %v4072 = vmul.f32 %v3478, %v4055
    %v4073 = vmul.f32 %v3482, %v4057
    %v4074 = vmul.f32 %v3486, %v4043
    %v4075 = vmul.f32 %v3490, %v4045
    %v4076 = vmul.f32 %v3494, %v4047
    %v4077 = vmul.f32 %v3498, %v4049
    %v4078 = vmul.f32 %v3502, %v4051
    %v4079 = vmul.f32 %v3506, %v4053
    %v4080 = vmul.f32 %v3510, %v4055
    %v4081 = vmul.f32 %v3514, %v4057
    %4098 = vrot.lane.b32.xlu0 %v4066, 120
    %v4099 = vpop.permute.xlu0 %4098
    %4100 = vrot.lane.b32.xlu0 %v4067, 120
    %v4101 = vpop.permute.xlu0 %4100
    %4102 = vrot.lane.b32.xlu0 %v4068, 120
    %v4103 = vpop.permute.xlu0 %4102
    %4104 = vrot.lane.b32.xlu0 %v4069, 120
    %v4105 = vpop.permute.xlu0 %4104
    %4106 = vrot.lane.b32.xlu0 %v4070, 120
    %v4107 = vpop.permute.xlu0 %4106
    %4108 = vrot.lane.b32.xlu0 %v4071, 120
    %v4109 = vpop.permute.xlu0 %4108
    %4110 = vrot.lane.b32.xlu0 %v4072, 120
    %v4111 = vpop.permute.xlu0 %4110
    %4112 = vrot.lane.b32.xlu0 %v4073, 120
    %v4113 = vpop.permute.xlu0 %4112
    %4114 = vrot.lane.b32.xlu0 %v4074, 120
    %v4115 = vpop.permute.xlu0 %4114
    %4116 = vrot.lane.b32.xlu0 %v4075, 120
    %v4117 = vpop.permute.xlu0 %4116
    %4118 = vrot.lane.b32.xlu0 %v4076, 120
    %v4119 = vpop.permute.xlu0 %4118
    %4120 = vrot.lane.b32.xlu0 %v4077, 120
    %v4121 = vpop.permute.xlu0 %4120
    %4122 = vrot.lane.b32.xlu0 %v4078, 120
    %v4123 = vpop.permute.xlu0 %4122
    %4124 = vrot.lane.b32.xlu0 %v4079, 120
    %v4125 = vpop.permute.xlu0 %4124
    %4126 = vrot.lane.b32.xlu0 %v4080, 120
    %v4127 = vpop.permute.xlu0 %4126
    %4128 = vrot.lane.b32.xlu0 %v4081, 120
    %v4129 = vpop.permute.xlu0 %4128
    %v4146 = vsel %vm343, %v4099, 0.0
    %4147 = vadd.xlane.f32.xlu0 %v4146
    %v4148 = vpop.xlane.xlu0 %4147
    %v4149 = vsel %vm343, %v4101, 0.0
    %4150 = vadd.xlane.f32.xlu0 %v4149
    %v4151 = vpop.xlane.xlu0 %4150
    %v4152 = vsel %vm343, %v4103, 0.0
    %4153 = vadd.xlane.f32.xlu0 %v4152
    %v4154 = vpop.xlane.xlu0 %4153
    %v4155 = vsel %vm343, %v4105, 0.0
    %4156 = vadd.xlane.f32.xlu0 %v4155
    %v4157 = vpop.xlane.xlu0 %4156
    %v4158 = vsel %vm343, %v4107, 0.0
    %4159 = vadd.xlane.f32.xlu0 %v4158
    %v4160 = vpop.xlane.xlu0 %4159
    %v4161 = vsel %vm343, %v4109, 0.0
    %4162 = vadd.xlane.f32.xlu0 %v4161
    %v4163 = vpop.xlane.xlu0 %4162
    %v4164 = vsel %vm343, %v4111, 0.0
    %4165 = vadd.xlane.f32.xlu0 %v4164
    %v4166 = vpop.xlane.xlu0 %4165
    %v4167 = vsel %vm343, %v4113, 0.0
    %4168 = vadd.xlane.f32.xlu0 %v4167
    %v4169 = vpop.xlane.xlu0 %4168
    %v4170 = vsel %vm343, %v4115, 0.0
    %4171 = vadd.xlane.f32.xlu0 %v4170
    %v4172 = vpop.xlane.xlu0 %4171
    %v4173 = vsel %vm343, %v4117, 0.0
    %4174 = vadd.xlane.f32.xlu0 %v4173
    %v4175 = vpop.xlane.xlu0 %4174
    %v4176 = vsel %vm343, %v4119, 0.0
    %4177 = vadd.xlane.f32.xlu0 %v4176
    %v4178 = vpop.xlane.xlu0 %4177
    %v4179 = vsel %vm343, %v4121, 0.0
    %4180 = vadd.xlane.f32.xlu0 %v4179
    %v4181 = vpop.xlane.xlu0 %4180
    %v4182 = vsel %vm343, %v4123, 0.0
    %4183 = vadd.xlane.f32.xlu0 %v4182
    %v4184 = vpop.xlane.xlu0 %4183
    %v4185 = vsel %vm343, %v4125, 0.0
    %4186 = vadd.xlane.f32.xlu0 %v4185
    %v4187 = vpop.xlane.xlu0 %4186
    %v4188 = vsel %vm343, %v4127, 0.0
    %4189 = vadd.xlane.f32.xlu0 %v4188
    %v4190 = vpop.xlane.xlu0 %4189
    %v4191 = vsel %vm343, %v4129, 0.0
    %4192 = vadd.xlane.f32.xlu0 %v4191
    %v4193 = vpop.xlane.xlu0 %4192
    %4194 = vrot.lane.b32.xlu0 %v3334, 120
    %v4195 = vpop.permute.xlu0 %4194
    %4196 = vrot.lane.b32.xlu0 %v3334, 88
    %v4197 = vpop.permute.xlu0 %4196
    %v4206 = vlaneseq
    %v4207 = vshrl.u32 %v4206, 7
    %v4208 = vsub.s32 %v403, %v4207
    %v4209 = vrot.slane %v4148, %v4208
    %v4210 = vlaneseq
    %v4211 = vshrl.u32 %v4210, 7
    %v4212 = vsub.s32 %v403, %v4211
    %v4213 = vrot.slane %v4151, %v4212
    %v4214 = vlaneseq
    %v4215 = vshrl.u32 %v4214, 7
    %v4216 = vsub.s32 %v403, %v4215
    %v4217 = vrot.slane %v4154, %v4216
    %v4218 = vlaneseq
    %v4219 = vshrl.u32 %v4218, 7
    %v4220 = vsub.s32 %v403, %v4219
    %v4221 = vrot.slane %v4157, %v4220
    %v4222 = vlaneseq
    %v4223 = vshrl.u32 %v4222, 7
    %v4224 = vsub.s32 %v403, %v4223
    %v4225 = vrot.slane %v4160, %v4224
    %v4226 = vlaneseq
    %v4227 = vshrl.u32 %v4226, 7
    %v4228 = vsub.s32 %v403, %v4227
    %v4229 = vrot.slane %v4163, %v4228
    %v4230 = vlaneseq
    %v4231 = vshrl.u32 %v4230, 7
    %v4232 = vsub.s32 %v403, %v4231
    %v4233 = vrot.slane %v4166, %v4232
    %v4234 = vlaneseq
    %v4235 = vshrl.u32 %v4234, 7
    %v4236 = vsub.s32 %v403, %v4235
    %v4237 = vrot.slane %v4169, %v4236
    %v4238 = vsel %vm436, %v4213, %v4209
    %v4239 = vsel %vm438, %v4217, %v4238
    %v4240 = vsel %vm440, %v4221, %v4239
    %v4241 = vsel %vm442, %v4225, %v4240
    %v4242 = vsel %vm444, %v4229, %v4241
    %v4243 = vsel %vm446, %v4233, %v4242
    %v4244 = vsel %vm448, %v4237, %v4243
    %v4246 = vsel %vm343, %v4195, 0
    %v4248 = vsel %vm343, %v4197, 0
    %4250 = vmatprep.subr.mxu0 0.0
    %4251 = vmatpush1.xpose.msra.mxu0 %v4248
    %4252 = vmatprep.subr.mxu0 0.0
    %4253 = vmatpush1.xpose.msra.mxu0 0.0
    %4254 = vmatprep.subr.mxu0 0.0
    %4255 = vmatpush1.xpose.msra.mxu0 0.0
    %4256 = vmatprep.subr.mxu0 0.0
    %4257 = vmatpush1.xpose.msra.mxu0 0.0
    %4258 = vmatprep.subr.mxu0 0.0
    %4259 = vmatpush1.xpose.msra.mxu0 0.0
    %4260 = vmatprep.subr.mxu0 0.0
    %4261 = vmatpush1.xpose.msra.mxu0 0.0
    %4262 = vmatprep.subr.mxu0 0.0
    %4263 = vmatpush1.xpose.msra.mxu0 0.0
    %4264 = vmatprep.subr.mxu0 0.0
    %4265 = vmatpush1.xpose.msra.mxu0 0.0
    %4266 = vmatprep.subr.mxu0 0.0
    %4267 = vmatpush1.xpose.msra.mxu0 0.0
    %4268 = vmatprep.subr.mxu0 0.0
    %4269 = vmatpush1.xpose.msra.mxu0 0.0
    %4270 = vmatprep.subr.mxu0 0.0
    %4271 = vmatpush1.xpose.msra.mxu0 0.0
    %4272 = vmatprep.subr.mxu0 0.0
    %4273 = vmatpush1.xpose.msra.mxu0 0.0
    %4274 = vmatprep.subr.mxu0 0.0
    %4275 = vmatpush1.xpose.msra.mxu0 0.0
    %4276 = vmatprep.subr.mxu0 0.0
    %4277 = vmatpush1.xpose.msra.mxu0 0.0
    %4278 = vmatprep.subr.mxu0 0.0
    %4279 = vmatpush1.xpose.msra.mxu0 0.0
    %4280 = vmatprep.subr.mxu0 0.0
    %4281 = vmatpush1.xpose.msra.mxu0 0.0
    %4282 = vmatprep.subr.mxu0 0.0
    %4283 = vmatpush1.xpose.msra.mxu0 0.0
    %4284 = vmatprep.subr.mxu0 0.0
    %4285 = vmatpush1.xpose.msra.mxu0 0.0
    %4286 = vmatprep.subr.mxu0 0.0
    %4287 = vmatpush1.xpose.msra.mxu0 0.0
    %4288 = vmatprep.subr.mxu0 0.0
    %4289 = vmatpush1.xpose.msra.mxu0 0.0
    %4290 = vmatprep.subr.mxu0 0.0
    %4291 = vmatpush1.xpose.msra.mxu0 0.0
    %4292 = vmatprep.subr.mxu0 0.0
    %4293 = vmatpush1.xpose.msra.mxu0 0.0
    %4294 = vmatprep.subr.mxu0 0.0
    %4295 = vmatpush1.xpose.msra.mxu0 0.0
    %4296 = vmatprep.subr.mxu0 0.0
    %4297 = vmatpush1.xpose.msra.mxu0 0.0
    %4298 = vmatprep.subr.mxu0 0.0
    %4299 = vmatpush1.xpose.msra.mxu0 0.0
    %4300 = vmatprep.subr.mxu0 0.0
    %4301 = vmatpush1.xpose.msra.mxu0 0.0
    %4302 = vmatprep.subr.mxu0 0.0
    %4303 = vmatpush1.xpose.msra.mxu0 0.0
    %4304 = vmatprep.subr.mxu0 0.0
    %4305 = vmatpush1.xpose.msra.mxu0 0.0
    %4306 = vmatprep.subr.mxu0 0.0
    %4307 = vmatpush1.xpose.msra.mxu0 0.0
    %4308 = vmatprep.subr.mxu0 0.0
    %4309 = vmatpush1.xpose.msra.mxu0 0.0
    %4310 = vmatprep.subr.mxu0 0.0
    %4311 = vmatpush1.xpose.msra.mxu0 0.0
    %4312 = vmatprep.subr.mxu0 0.0
    %4313 = vmatpush1.xpose.msra.mxu0 0.0
    %4314 = vmatprep.mubr.f32.mxu0 0.0
    %4315 = vmatmul.mubr.f32.gmra.mrb[0].mxu0 %v4246
    %v4316 = vpop.f32.mrb[0].mxu0
    %v4317 = vadd.f32 %v4244, %v4316
    %v4318 = vpop.f32.mrb[0].mxu0
    %4319 = vdwg.mxu0
    %4320 = vrot.lane.b32.xlu0 %v3339, 120
    %v4321 = vpop.permute.xlu0 %4320
    %4322 = vrot.lane.b32.xlu0 %v3339, 88
    %v4323 = vpop.permute.xlu0 %4322
    %v4332 = vlaneseq
    %v4333 = vshrl.u32 %v4332, 7
    %v4334 = vsub.s32 %v403, %v4333
    %v4335 = vrot.slane %v4172, %v4334
    %v4336 = vlaneseq
    %v4337 = vshrl.u32 %v4336, 7
    %v4338 = vsub.s32 %v403, %v4337
    %v4339 = vrot.slane %v4175, %v4338
    %v4340 = vlaneseq
    %v4341 = vshrl.u32 %v4340, 7
    %v4342 = vsub.s32 %v403, %v4341
    %v4343 = vrot.slane %v4178, %v4342
    %v4344 = vlaneseq
    %v4345 = vshrl.u32 %v4344, 7
    %v4346 = vsub.s32 %v403, %v4345
    %v4347 = vrot.slane %v4181, %v4346
    %v4348 = vlaneseq
    %v4349 = vshrl.u32 %v4348, 7
    %v4350 = vsub.s32 %v403, %v4349
    %v4351 = vrot.slane %v4184, %v4350
    %v4352 = vlaneseq
    %v4353 = vshrl.u32 %v4352, 7
    %v4354 = vsub.s32 %v403, %v4353
    %v4355 = vrot.slane %v4187, %v4354
    %v4356 = vlaneseq
    %v4357 = vshrl.u32 %v4356, 7
    %v4358 = vsub.s32 %v403, %v4357
    %v4359 = vrot.slane %v4190, %v4358
    %v4360 = vlaneseq
    %v4361 = vshrl.u32 %v4360, 7
    %v4362 = vsub.s32 %v403, %v4361
    %v4363 = vrot.slane %v4193, %v4362
    %v4364 = vsel %vm436, %v4339, %v4335
    %v4365 = vsel %vm438, %v4343, %v4364
    %v4366 = vsel %vm440, %v4347, %v4365
    %v4367 = vsel %vm442, %v4351, %v4366
    %v4368 = vsel %vm444, %v4355, %v4367
    %v4369 = vsel %vm446, %v4359, %v4368
    %v4370 = vsel %vm448, %v4363, %v4369
    %v4372 = vsel %vm343, %v4321, 0
    %v4374 = vsel %vm343, %v4323, 0
    %4376 = vmatprep.subr.mxu0 0.0
    %4377 = vmatpush1.xpose.msra.mxu0 %v4374
    %4378 = vmatprep.subr.mxu0 0.0
    %4379 = vmatpush1.xpose.msra.mxu0 0.0
    %4380 = vmatprep.subr.mxu0 0.0
    %4381 = vmatpush1.xpose.msra.mxu0 0.0
    %4382 = vmatprep.subr.mxu0 0.0
    %4383 = vmatpush1.xpose.msra.mxu0 0.0
    %4384 = vmatprep.subr.mxu0 0.0
    %4385 = vmatpush1.xpose.msra.mxu0 0.0
    %4386 = vmatprep.subr.mxu0 0.0
    %4387 = vmatpush1.xpose.msra.mxu0 0.0
    %4388 = vmatprep.subr.mxu0 0.0
    %4389 = vmatpush1.xpose.msra.mxu0 0.0
    %4390 = vmatprep.subr.mxu0 0.0
    %4391 = vmatpush1.xpose.msra.mxu0 0.0
    %4392 = vmatprep.subr.mxu0 0.0
    %4393 = vmatpush1.xpose.msra.mxu0 0.0
    %4394 = vmatprep.subr.mxu0 0.0
    %4395 = vmatpush1.xpose.msra.mxu0 0.0
    %4396 = vmatprep.subr.mxu0 0.0
    %4397 = vmatpush1.xpose.msra.mxu0 0.0
    %4398 = vmatprep.subr.mxu0 0.0
    %4399 = vmatpush1.xpose.msra.mxu0 0.0
    %4400 = vmatprep.subr.mxu0 0.0
    %4401 = vmatpush1.xpose.msra.mxu0 0.0
    %4402 = vmatprep.subr.mxu0 0.0
    %4403 = vmatpush1.xpose.msra.mxu0 0.0
    %4404 = vmatprep.subr.mxu0 0.0
    %4405 = vmatpush1.xpose.msra.mxu0 0.0
    %4406 = vmatprep.subr.mxu0 0.0
    %4407 = vmatpush1.xpose.msra.mxu0 0.0
    %4408 = vmatprep.subr.mxu0 0.0
    %4409 = vmatpush1.xpose.msra.mxu0 0.0
    %4410 = vmatprep.subr.mxu0 0.0
    %4411 = vmatpush1.xpose.msra.mxu0 0.0
    %4412 = vmatprep.subr.mxu0 0.0
    %4413 = vmatpush1.xpose.msra.mxu0 0.0
    %4414 = vmatprep.subr.mxu0 0.0
    %4415 = vmatpush1.xpose.msra.mxu0 0.0
    %4416 = vmatprep.subr.mxu0 0.0
    %4417 = vmatpush1.xpose.msra.mxu0 0.0
    %4418 = vmatprep.subr.mxu0 0.0
    %4419 = vmatpush1.xpose.msra.mxu0 0.0
    %4420 = vmatprep.subr.mxu0 0.0
    %4421 = vmatpush1.xpose.msra.mxu0 0.0
    %4422 = vmatprep.subr.mxu0 0.0
    %4423 = vmatpush1.xpose.msra.mxu0 0.0
    %4424 = vmatprep.subr.mxu0 0.0
    %4425 = vmatpush1.xpose.msra.mxu0 0.0
    %4426 = vmatprep.subr.mxu0 0.0
    %4427 = vmatpush1.xpose.msra.mxu0 0.0
    %4428 = vmatprep.subr.mxu0 0.0
    %4429 = vmatpush1.xpose.msra.mxu0 0.0
    %4430 = vmatprep.subr.mxu0 0.0
    %4431 = vmatpush1.xpose.msra.mxu0 0.0
    %4432 = vmatprep.subr.mxu0 0.0
    %4433 = vmatpush1.xpose.msra.mxu0 0.0
    %4434 = vmatprep.subr.mxu0 0.0
    %4435 = vmatpush1.xpose.msra.mxu0 0.0
    %4436 = vmatprep.subr.mxu0 0.0
    %4437 = vmatpush1.xpose.msra.mxu0 0.0
    %4438 = vmatprep.subr.mxu0 0.0
    %4439 = vmatpush1.xpose.msra.mxu0 0.0
    %4440 = vmatprep.mubr.f32.mxu0 0.0
    %4441 = vmatmul.mubr.f32.gmra.mrb[0].mxu0 %v4372
    %v4442 = vpop.f32.mrb[0].mxu0
    %v4443 = vadd.f32 %v4370, %v4442
    %v4444 = vpop.f32.mrb[0].mxu0
    %4445 = vdwg.mxu0
    %v4446 = vadd.f32 %v4317, %v654
    %v4447 = vadd.f32 %v4443, %v658
    %v4448 = vsel %vm343, %v4446, -inf
    %4449 = vmax.xlane.f32.xlu0 %v4448
    %v4450 = vpop.xlane.xlu0 %4449
    %v4451 = vsel %vm343, %v4447, -inf
    %4452 = vmax.xlane.f32.xlu0 %v4451
    %v4453 = vpop.xlane.xlu0 %4452
    %v4454 = vsub.f32 %v4446, %v4450
    %v4455 = vsub.f32 %v4447, %v4453
    %v4456 = vmul.f32 %v4454, 1.442695
    %v4457 = vpow.pop %v4456
    %v4458 = vmul.f32 %v4455, 1.442695
    %v4459 = vpow.pop %v4458
    %v4460 = vsel %vm343, %v4457, 0.0
    %4461 = vadd.xlane.f32.xlu0 %v4460
    %v4462 = vpop.xlane.xlu0 %4461
    %v4463 = vsel %vm343, %v4459, 0.0
    %4464 = vadd.xlane.f32.xlu0 %v4463
    %v4465 = vpop.xlane.xlu0 %4464
    %v4466 = vrcp.pop %v4462
    %v4467 = vmul.f32 %v4457, %v4466
    %v4468 = vrcp.pop %v4465
    %v4469 = vmul.f32 %v4459, %v4468
    %s4470 = scalar_lea.vmem %s13, 72
    %4471 = vst.msk [vmem:[%s4470] sm:$0xff] %vm343, %v4467
    %s4472 = scalar_lea.vmem %s13, 104
    %4473 = vst.msk [vmem:[%s4472] sm:$0xff] %vm343, %v4469
    %4474 = vrot.lane.b32.xlu0 %v3334, 56
    %v4475 = vpop.permute.xlu0 %4474
    %v4478 = vsel %vm343, %v4467, 0
    %4480 = vmatprep.subr.mxu0 0.0
    %4481 = vmatpush1.msra.mxu0 %v4475
    %4482 = vmatprep.subr.mxu0 0.0
    %4483 = vmatpush1.msra.mxu0 0.0
    %4484 = vmatprep.subr.mxu0 0.0
    %4485 = vmatpush1.msra.mxu0 0.0
    %4486 = vmatprep.subr.mxu0 0.0
    %4487 = vmatpush1.msra.mxu0 0.0
    %4488 = vmatprep.subr.mxu0 0.0
    %4489 = vmatpush1.msra.mxu0 0.0
    %4490 = vmatprep.subr.mxu0 0.0
    %4491 = vmatpush1.msra.mxu0 0.0
    %4492 = vmatprep.subr.mxu0 0.0
    %4493 = vmatpush1.msra.mxu0 0.0
    %4494 = vmatprep.subr.mxu0 0.0
    %4495 = vmatpush1.msra.mxu0 0.0
    %4496 = vmatprep.subr.mxu0 0.0
    %4497 = vmatpush1.msra.mxu0 0.0
    %4498 = vmatprep.subr.mxu0 0.0
    %4499 = vmatpush1.msra.mxu0 0.0
    %4500 = vmatprep.subr.mxu0 0.0
    %4501 = vmatpush1.msra.mxu0 0.0
    %4502 = vmatprep.subr.mxu0 0.0
    %4503 = vmatpush1.msra.mxu0 0.0
    %4504 = vmatprep.subr.mxu0 0.0
    %4505 = vmatpush1.msra.mxu0 0.0
    %4506 = vmatprep.subr.mxu0 0.0
    %4507 = vmatpush1.msra.mxu0 0.0
    %4508 = vmatprep.subr.mxu0 0.0
    %4509 = vmatpush1.msra.mxu0 0.0
    %4510 = vmatprep.subr.mxu0 0.0
    %4511 = vmatpush1.msra.mxu0 0.0
    %4512 = vmatprep.subr.mxu0 0.0
    %4513 = vmatpush1.msra.mxu0 0.0
    %4514 = vmatprep.subr.mxu0 0.0
    %4515 = vmatpush1.msra.mxu0 0.0
    %4516 = vmatprep.subr.mxu0 0.0
    %4517 = vmatpush1.msra.mxu0 0.0
    %4518 = vmatprep.subr.mxu0 0.0
    %4519 = vmatpush1.msra.mxu0 0.0
    %4520 = vmatprep.subr.mxu0 0.0
    %4521 = vmatpush1.msra.mxu0 0.0
    %4522 = vmatprep.subr.mxu0 0.0
    %4523 = vmatpush1.msra.mxu0 0.0
    %4524 = vmatprep.subr.mxu0 0.0
    %4525 = vmatpush1.msra.mxu0 0.0
    %4526 = vmatprep.subr.mxu0 0.0
    %4527 = vmatpush1.msra.mxu0 0.0
    %4528 = vmatprep.subr.mxu0 0.0
    %4529 = vmatpush1.msra.mxu0 0.0
    %4530 = vmatprep.subr.mxu0 0.0
    %4531 = vmatpush1.msra.mxu0 0.0
    %4532 = vmatprep.subr.mxu0 0.0
    %4533 = vmatpush1.msra.mxu0 0.0
    %4534 = vmatprep.subr.mxu0 0.0
    %4535 = vmatpush1.msra.mxu0 0.0
    %4536 = vmatprep.subr.mxu0 0.0
    %4537 = vmatpush1.msra.mxu0 0.0
    %4538 = vmatprep.subr.mxu0 0.0
    %4539 = vmatpush1.msra.mxu0 0.0
    %4540 = vmatprep.subr.mxu0 0.0
    %4541 = vmatpush1.msra.mxu0 0.0
    %4542 = vmatprep.subr.mxu0 0.0
    %4543 = vmatpush1.msra.mxu0 0.0
    %4544 = vmatprep.mubr.f32.mxu0 0.0
    %4545 = vmatmul.mubr.f32.gmra.mrb[0].mxu0 %v4478
    %v4546 = vpop.f32.mrb[0].mxu0
    %v4547 = vadd.f32 0.0, %v4546
    %v4548 = vpop.f32.mrb[0].mxu0
    %4549 = vdwg.mxu0
    %4550 = vrot.lane.b32.xlu0 %v3339, 56
    %v4551 = vpop.permute.xlu0 %4550
    %v4554 = vsel %vm343, %v4469, 0
    %4556 = vmatprep.subr.mxu0 0.0
    %4557 = vmatpush1.msra.mxu0 %v4551
    %4558 = vmatprep.subr.mxu0 0.0
    %4559 = vmatpush1.msra.mxu0 0.0
    %4560 = vmatprep.subr.mxu0 0.0
    %4561 = vmatpush1.msra.mxu0 0.0
    %4562 = vmatprep.subr.mxu0 0.0
    %4563 = vmatpush1.msra.mxu0 0.0
    %4564 = vmatprep.subr.mxu0 0.0
    %4565 = vmatpush1.msra.mxu0 0.0
    %4566 = vmatprep.subr.mxu0 0.0
    %4567 = vmatpush1.msra.mxu0 0.0
    %4568 = vmatprep.subr.mxu0 0.0
    %4569 = vmatpush1.msra.mxu0 0.0
    %4570 = vmatprep.subr.mxu0 0.0
    %4571 = vmatpush1.msra.mxu0 0.0
    %4572 = vmatprep.subr.mxu0 0.0
    %4573 = vmatpush1.msra.mxu0 0.0
    %4574 = vmatprep.subr.mxu0 0.0
    %4575 = vmatpush1.msra.mxu0 0.0
    %4576 = vmatprep.subr.mxu0 0.0
    %4577 = vmatpush1.msra.mxu0 0.0
    %4578 = vmatprep.subr.mxu0 0.0
    %4579 = vmatpush1.msra.mxu0 0.0
    %4580 = vmatprep.subr.mxu0 0.0
    %4581 = vmatpush1.msra.mxu0 0.0
    %4582 = vmatprep.subr.mxu0 0.0
    %4583 = vmatpush1.msra.mxu0 0.0
    %4584 = vmatprep.subr.mxu0 0.0
    %4585 = vmatpush1.msra.mxu0 0.0
    %4586 = vmatprep.subr.mxu0 0.0
    %4587 = vmatpush1.msra.mxu0 0.0
    %4588 = vmatprep.subr.mxu0 0.0
    %4589 = vmatpush1.msra.mxu0 0.0
    %4590 = vmatprep.subr.mxu0 0.0
    %4591 = vmatpush1.msra.mxu0 0.0
    %4592 = vmatprep.subr.mxu0 0.0
    %4593 = vmatpush1.msra.mxu0 0.0
    %4594 = vmatprep.subr.mxu0 0.0
    %4595 = vmatpush1.msra.mxu0 0.0
    %4596 = vmatprep.subr.mxu0 0.0
    %4597 = vmatpush1.msra.mxu0 0.0
    %4598 = vmatprep.subr.mxu0 0.0
    %4599 = vmatpush1.msra.mxu0 0.0
    %4600 = vmatprep.subr.mxu0 0.0
    %4601 = vmatpush1.msra.mxu0 0.0
    %4602 = vmatprep.subr.mxu0 0.0
    %4603 = vmatpush1.msra.mxu0 0.0
    %4604 = vmatprep.subr.mxu0 0.0
    %4605 = vmatpush1.msra.mxu0 0.0
    %4606 = vmatprep.subr.mxu0 0.0
    %4607 = vmatpush1.msra.mxu0 0.0
    %4608 = vmatprep.subr.mxu0 0.0
    %4609 = vmatpush1.msra.mxu0 0.0
    %4610 = vmatprep.subr.mxu0 0.0
    %4611 = vmatpush1.msra.mxu0 0.0
    %4612 = vmatprep.subr.mxu0 0.0
    %4613 = vmatpush1.msra.mxu0 0.0
    %4614 = vmatprep.subr.mxu0 0.0
    %4615 = vmatpush1.msra.mxu0 0.0
    %4616 = vmatprep.subr.mxu0 0.0
    %4617 = vmatpush1.msra.mxu0 0.0
    %4618 = vmatprep.subr.mxu0 0.0
    %4619 = vmatpush1.msra.mxu0 0.0
    %4620 = vmatprep.mubr.f32.mxu0 0.0
    %4621 = vmatmul.mubr.f32.gmra.mrb[0].mxu0 %v4554
    %v4622 = vpop.f32.mrb[0].mxu0
    %v4623 = vadd.f32 0.0, %v4622
    %v4624 = vpop.f32.mrb[0].mxu0
    %4625 = vdwg.mxu0
    %s4626 = scalar_lea.vmem %s4, 40
    %v4627 = vld [vmem:[%s4626] sm:$0xff]
    %v4629 = vsel %vm343, %v4547, 0
    %v4632 = vsel %vm343, %v4623, 0
    %4634 = vmatprep.subr.mxu0 0.0
    %4635 = vmatpush1.msra.mxu0 %v4627
    %4636 = vmatprep.subr.mxu0 0.0
    %4637 = vmatpush1.msra.mxu0 0.0
    %4638 = vmatprep.subr.mxu0 0.0
    %4639 = vmatpush1.msra.mxu0 0.0
    %4640 = vmatprep.subr.mxu0 0.0
    %4641 = vmatpush1.msra.mxu0 0.0
    %4642 = vmatprep.subr.mxu0 0.0
    %4643 = vmatpush1.msra.mxu0 0.0
    %4644 = vmatprep.subr.mxu0 0.0
    %4645 = vmatpush1.msra.mxu0 0.0
    %4646 = vmatprep.subr.mxu0 0.0
    %4647 = vmatpush1.msra.mxu0 0.0
    %4648 = vmatprep.subr.mxu0 0.0
    %4649 = vmatpush1.msra.mxu0 0.0
    %4650 = vmatprep.subr.mxu0 0.0
    %4651 = vmatpush1.msra.mxu0 0.0
    %4652 = vmatprep.subr.mxu0 0.0
    %4653 = vmatpush1.msra.mxu0 0.0
    %4654 = vmatprep.subr.mxu0 0.0
    %4655 = vmatpush1.msra.mxu0 0.0
    %4656 = vmatprep.subr.mxu0 0.0
    %4657 = vmatpush1.msra.mxu0 0.0
    %4658 = vmatprep.subr.mxu0 0.0
    %4659 = vmatpush1.msra.mxu0 0.0
    %4660 = vmatprep.subr.mxu0 0.0
    %4661 = vmatpush1.msra.mxu0 0.0
    %4662 = vmatprep.subr.mxu0 0.0
    %4663 = vmatpush1.msra.mxu0 0.0
    %4664 = vmatprep.subr.mxu0 0.0
    %4665 = vmatpush1.msra.mxu0 0.0
    %4666 = vmatprep.subr.mxu0 0.0
    %4667 = vmatpush1.msra.mxu0 0.0
    %4668 = vmatprep.subr.mxu0 0.0
    %4669 = vmatpush1.msra.mxu0 0.0
    %4670 = vmatprep.subr.mxu0 0.0
    %4671 = vmatpush1.msra.mxu0 0.0
    %4672 = vmatprep.subr.mxu0 0.0
    %4673 = vmatpush1.msra.mxu0 0.0
    %4674 = vmatprep.subr.mxu0 0.0
    %4675 = vmatpush1.msra.mxu0 0.0
    %4676 = vmatprep.subr.mxu0 0.0
    %4677 = vmatpush1.msra.mxu0 0.0
    %4678 = vmatprep.subr.mxu0 0.0
    %4679 = vmatpush1.msra.mxu0 0.0
    %4680 = vmatprep.subr.mxu0 0.0
    %4681 = vmatpush1.msra.mxu0 0.0
    %4682 = vmatprep.subr.mxu0 0.0
    %4683 = vmatpush1.msra.mxu0 0.0
    %4684 = vmatprep.subr.mxu0 0.0
    %4685 = vmatpush1.msra.mxu0 0.0
    %4686 = vmatprep.subr.mxu0 0.0
    %4687 = vmatpush1.msra.mxu0 0.0
    %4688 = vmatprep.subr.mxu0 0.0
    %4689 = vmatpush1.msra.mxu0 0.0
    %4690 = vmatprep.subr.mxu0 0.0
    %4691 = vmatpush1.msra.mxu0 0.0
    %4692 = vmatprep.subr.mxu0 0.0
    %4693 = vmatpush1.msra.mxu0 0.0
    %4694 = vmatprep.subr.mxu0 0.0
    %4695 = vmatpush1.msra.mxu0 0.0
    %4696 = vmatprep.subr.mxu0 0.0
    %4697 = vmatpush1.msra.mxu0 0.0
    %4698 = vmatprep.mubr.f32.mxu0 0.0
    %4699 = vmatmul.mubr.f32.gmra.mrb[0].mxu0 %v4629
    %v4700 = vpop.f32.mrb[0].mxu0
    %v4701 = vadd.f32 0.0, %v4700
    %v4702 = vpop.f32.mrb[0].mxu0
    %4703 = vmatprep.mubr.f32.mxu0 0.0
    %4704 = vmatmul.mubr.f32.gmra.mrb[0].mxu0 %v4632
    %v4705 = vpop.f32.mrb[0].mxu0
    %v4706 = vadd.f32 0.0, %v4705
    %v4707 = vpop.f32.mrb[0].mxu0
    %4708 = vdwg.mxu0
    %v4710 = vsel %vm343, %v3944, 0
    %v4713 = vsel %vm343, %v4020, 0
    %4715 = vmatprep.subr.mxu0 0.0
    %4716 = vmatpush1.msra.mxu0 %v4024
    %4717 = vmatprep.subr.mxu0 0.0
    %4718 = vmatpush1.msra.mxu0 0.0
    %4719 = vmatprep.subr.mxu0 0.0
    %4720 = vmatpush1.msra.mxu0 0.0
    %4721 = vmatprep.subr.mxu0 0.0
    %4722 = vmatpush1.msra.mxu0 0.0
    %4723 = vmatprep.subr.mxu0 0.0
    %4724 = vmatpush1.msra.mxu0 0.0
    %4725 = vmatprep.subr.mxu0 0.0
    %4726 = vmatpush1.msra.mxu0 0.0
    %4727 = vmatprep.subr.mxu0 0.0
    %4728 = vmatpush1.msra.mxu0 0.0
    %4729 = vmatprep.subr.mxu0 0.0
    %4730 = vmatpush1.msra.mxu0 0.0
    %4731 = vmatprep.subr.mxu0 0.0
    %4732 = vmatpush1.msra.mxu0 0.0
    %4733 = vmatprep.subr.mxu0 0.0
    %4734 = vmatpush1.msra.mxu0 0.0
    %4735 = vmatprep.subr.mxu0 0.0
    %4736 = vmatpush1.msra.mxu0 0.0
    %4737 = vmatprep.subr.mxu0 0.0
    %4738 = vmatpush1.msra.mxu0 0.0
    %4739 = vmatprep.subr.mxu0 0.0
    %4740 = vmatpush1.msra.mxu0 0.0
    %4741 = vmatprep.subr.mxu0 0.0
    %4742 = vmatpush1.msra.mxu0 0.0
    %4743 = vmatprep.subr.mxu0 0.0
    %4744 = vmatpush1.msra.mxu0 0.0
    %4745 = vmatprep.subr.mxu0 0.0
    %4746 = vmatpush1.msra.mxu0 0.0
    %4747 = vmatprep.subr.mxu0 0.0
    %4748 = vmatpush1.msra.mxu0 0.0
    %4749 = vmatprep.subr.mxu0 0.0
    %4750 = vmatpush1.msra.mxu0 0.0
    %4751 = vmatprep.subr.mxu0 0.0
    %4752 = vmatpush1.msra.mxu0 0.0
    %4753 = vmatprep.subr.mxu0 0.0
    %4754 = vmatpush1.msra.mxu0 0.0
    %4755 = vmatprep.subr.mxu0 0.0
    %4756 = vmatpush1.msra.mxu0 0.0
    %4757 = vmatprep.subr.mxu0 0.0
    %4758 = vmatpush1.msra.mxu0 0.0
    %4759 = vmatprep.subr.mxu0 0.0
    %4760 = vmatpush1.msra.mxu0 0.0
    %4761 = vmatprep.subr.mxu0 0.0
    %4762 = vmatpush1.msra.mxu0 0.0
    %4763 = vmatprep.subr.mxu0 0.0
    %4764 = vmatpush1.msra.mxu0 0.0
    %4765 = vmatprep.subr.mxu0 0.0
    %4766 = vmatpush1.msra.mxu0 0.0
    %4767 = vmatprep.subr.mxu0 0.0
    %4768 = vmatpush1.msra.mxu0 0.0
    %4769 = vmatprep.subr.mxu0 0.0
    %4770 = vmatpush1.msra.mxu0 0.0
    %4771 = vmatprep.subr.mxu0 0.0
    %4772 = vmatpush1.msra.mxu0 0.0
    %4773 = vmatprep.subr.mxu0 0.0
    %4774 = vmatpush1.msra.mxu0 0.0
    %4775 = vmatprep.subr.mxu0 0.0
    %4776 = vmatpush1.msra.mxu0 0.0
    %4777 = vmatprep.subr.mxu0 0.0
    %4778 = vmatpush1.msra.mxu0 0.0
    %4779 = vmatprep.mubr.f32.mxu0 0.0
    %4780 = vmatmul.mubr.f32.gmra.mrb[0].mxu0 %v4710
    %v4781 = vpop.f32.mrb[0].mxu0
    %v4782 = vadd.f32 %v4701, %v4781
    %v4783 = vpop.f32.mrb[0].mxu0
    %4784 = vmatprep.mubr.f32.mxu0 0.0
    %4785 = vmatmul.mubr.f32.gmra.mrb[0].mxu0 %v4713
    %v4786 = vpop.f32.mrb[0].mxu0
    %v4787 = vadd.f32 %v4706, %v4786
    %v4788 = vpop.f32.mrb[0].mxu0
    %4789 = vdwg.mxu0
    %s4790 = scalar_lea.vmem %s2, 384
    %v4791 = vld [vmem:[%s4790] sm:$0xff]
    %v4792 = vld [vmem:[%s4790 + $0x8] sm:$0xff]
    %v4793 = vld [vmem:[%s4790 + $0x10] sm:$0xff]
    %v4794 = vld [vmem:[%s4790 + $0x18] sm:$0xff]
    %v4795 = vld [vmem:[%s4790 + $0x20] sm:$0xff]
    %v4796 = vld [vmem:[%s4790 + $0x28] sm:$0xff]
    %v4797 = vld [vmem:[%s4790 + $0x30] sm:$0xff]
    %v4798 = vld [vmem:[%s4790 + $0x38] sm:$0xff]
    %4807 = vrot.lane.b32.xlu0 %v4791, 16
    %v4808 = vpop.permute.xlu0 %4807
    %4809 = vrot.lane.b32.xlu0 %v4792, 16
    %v4810 = vpop.permute.xlu0 %4809
    %4811 = vrot.lane.b32.xlu0 %v4793, 16
    %v4812 = vpop.permute.xlu0 %4811
    %4813 = vrot.lane.b32.xlu0 %v4794, 16
    %v4814 = vpop.permute.xlu0 %4813
    %4815 = vrot.lane.b32.xlu0 %v4795, 16
    %v4816 = vpop.permute.xlu0 %4815
    %4817 = vrot.lane.b32.xlu0 %v4796, 16
    %v4818 = vpop.permute.xlu0 %4817
    %4819 = vrot.lane.b32.xlu0 %v4797, 16
    %v4820 = vpop.permute.xlu0 %4819
    %4821 = vrot.lane.b32.xlu0 %v4798, 16
    %v4822 = vpop.permute.xlu0 %4821
    %v4831 = vmul.f32 %v3454, %v4808
    %v4832 = vmul.f32 %v3458, %v4810
    %v4833 = vmul.f32 %v3462, %v4812
    %v4834 = vmul.f32 %v3466, %v4814
    %v4835 = vmul.f32 %v3470, %v4816
    %v4836 = vmul.f32 %v3474, %v4818
    %v4837 = vmul.f32 %v3478, %v4820
    %v4838 = vmul.f32 %v3482, %v4822
    %v4839 = vmul.f32 %v3486, %v4808
    %v4840 = vmul.f32 %v3490, %v4810
    %v4841 = vmul.f32 %v3494, %v4812
    %v4842 = vmul.f32 %v3498, %v4814
    %v4843 = vmul.f32 %v3502, %v4816
    %v4844 = vmul.f32 %v3506, %v4818
    %v4845 = vmul.f32 %v3510, %v4820
    %v4846 = vmul.f32 %v3514, %v4822
    %4863 = vrot.lane.b32.xlu0 %v4831, 112
    %v4864 = vpop.permute.xlu0 %4863
    %4865 = vrot.lane.b32.xlu0 %v4832, 112
    %v4866 = vpop.permute.xlu0 %4865
    %4867 = vrot.lane.b32.xlu0 %v4833, 112
    %v4868 = vpop.permute.xlu0 %4867
    %4869 = vrot.lane.b32.xlu0 %v4834, 112
    %v4870 = vpop.permute.xlu0 %4869
    %4871 = vrot.lane.b32.xlu0 %v4835, 112
    %v4872 = vpop.permute.xlu0 %4871
    %4873 = vrot.lane.b32.xlu0 %v4836, 112
    %v4874 = vpop.permute.xlu0 %4873
    %4875 = vrot.lane.b32.xlu0 %v4837, 112
    %v4876 = vpop.permute.xlu0 %4875
    %4877 = vrot.lane.b32.xlu0 %v4838, 112
    %v4878 = vpop.permute.xlu0 %4877
    %4879 = vrot.lane.b32.xlu0 %v4839, 112
    %v4880 = vpop.permute.xlu0 %4879
    %4881 = vrot.lane.b32.xlu0 %v4840, 112
    %v4882 = vpop.permute.xlu0 %4881
    %4883 = vrot.lane.b32.xlu0 %v4841, 112
    %v4884 = vpop.permute.xlu0 %4883
    %4885 = vrot.lane.b32.xlu0 %v4842, 112
    %v4886 = vpop.permute.xlu0 %4885
    %4887 = vrot.lane.b32.xlu0 %v4843, 112
    %v4888 = vpop.permute.xlu0 %4887
    %4889 = vrot.lane.b32.xlu0 %v4844, 112
    %v4890 = vpop.permute.xlu0 %4889
    %4891 = vrot.lane.b32.xlu0 %v4845, 112
    %v4892 = vpop.permute.xlu0 %4891
    %4893 = vrot.lane.b32.xlu0 %v4846, 112
    %v4894 = vpop.permute.xlu0 %4893
    %v4911 = vsel %vm343, %v4864, 0.0
    %4912 = vadd.xlane.f32.xlu0 %v4911
    %v4913 = vpop.xlane.xlu0 %4912
    %v4914 = vsel %vm343, %v4866, 0.0
    %4915 = vadd.xlane.f32.xlu0 %v4914
    %v4916 = vpop.xlane.xlu0 %4915
    %v4917 = vsel %vm343, %v4868, 0.0
    %4918 = vadd.xlane.f32.xlu0 %v4917
    %v4919 = vpop.xlane.xlu0 %4918
    %v4920 = vsel %vm343, %v4870, 0.0
    %4921 = vadd.xlane.f32.xlu0 %v4920
    %v4922 = vpop.xlane.xlu0 %4921
    %v4923 = vsel %vm343, %v4872, 0.0
    %4924 = vadd.xlane.f32.xlu0 %v4923
    %v4925 = vpop.xlane.xlu0 %4924
    %v4926 = vsel %vm343, %v4874, 0.0
    %4927 = vadd.xlane.f32.xlu0 %v4926
    %v4928 = vpop.xlane.xlu0 %4927
    %v4929 = vsel %vm343, %v4876, 0.0
    %4930 = vadd.xlane.f32.xlu0 %v4929
    %v4931 = vpop.xlane.xlu0 %4930
    %v4932 = vsel %vm343, %v4878, 0.0
    %4933 = vadd.xlane.f32.xlu0 %v4932
    %v4934 = vpop.xlane.xlu0 %4933
    %v4935 = vsel %vm343, %v4880, 0.0
    %4936 = vadd.xlane.f32.xlu0 %v4935
    %v4937 = vpop.xlane.xlu0 %4936
    %v4938 = vsel %vm343, %v4882, 0.0
    %4939 = vadd.xlane.f32.xlu0 %v4938
    %v4940 = vpop.xlane.xlu0 %4939
    %v4941 = vsel %vm343, %v4884, 0.0
    %4942 = vadd.xlane.f32.xlu0 %v4941
    %v4943 = vpop.xlane.xlu0 %4942
    %v4944 = vsel %vm343, %v4886, 0.0
    %4945 = vadd.xlane.f32.xlu0 %v4944
    %v4946 = vpop.xlane.xlu0 %4945
    %v4947 = vsel %vm343, %v4888, 0.0
    %4948 = vadd.xlane.f32.xlu0 %v4947
    %v4949 = vpop.xlane.xlu0 %4948
    %v4950 = vsel %vm343, %v4890, 0.0
    %4951 = vadd.xlane.f32.xlu0 %v4950
    %v4952 = vpop.xlane.xlu0 %4951
    %v4953 = vsel %vm343, %v4892, 0.0
    %4954 = vadd.xlane.f32.xlu0 %v4953
    %v4955 = vpop.xlane.xlu0 %4954
    %v4956 = vsel %vm343, %v4894, 0.0
    %4957 = vadd.xlane.f32.xlu0 %v4956
    %v4958 = vpop.xlane.xlu0 %4957
    %4959 = vrot.lane.b32.xlu0 %v3334, 112
    %v4960 = vpop.permute.xlu0 %4959
    %4961 = vrot.lane.b32.xlu0 %v3334, 80
    %v4962 = vpop.permute.xlu0 %4961
    %v4971 = vlaneseq
    %v4972 = vshrl.u32 %v4971, 7
    %v4973 = vsub.s32 %v403, %v4972
    %v4974 = vrot.slane %v4913, %v4973
    %v4975 = vlaneseq
    %v4976 = vshrl.u32 %v4975, 7
    %v4977 = vsub.s32 %v403, %v4976
    %v4978 = vrot.slane %v4916, %v4977
    %v4979 = vlaneseq
    %v4980 = vshrl.u32 %v4979, 7
    %v4981 = vsub.s32 %v403, %v4980
    %v4982 = vrot.slane %v4919, %v4981
    %v4983 = vlaneseq
    %v4984 = vshrl.u32 %v4983, 7
    %v4985 = vsub.s32 %v403, %v4984
    %v4986 = vrot.slane %v4922, %v4985
    %v4987 = vlaneseq
    %v4988 = vshrl.u32 %v4987, 7
    %v4989 = vsub.s32 %v403, %v4988
    %v4990 = vrot.slane %v4925, %v4989
    %v4991 = vlaneseq
    %v4992 = vshrl.u32 %v4991, 7
    %v4993 = vsub.s32 %v403, %v4992
    %v4994 = vrot.slane %v4928, %v4993
    %v4995 = vlaneseq
    %v4996 = vshrl.u32 %v4995, 7
    %v4997 = vsub.s32 %v403, %v4996
    %v4998 = vrot.slane %v4931, %v4997
    %v4999 = vlaneseq
    %v5000 = vshrl.u32 %v4999, 7
    %v5001 = vsub.s32 %v403, %v5000
    %v5002 = vrot.slane %v4934, %v5001
    %v5003 = vsel %vm436, %v4978, %v4974
    %v5004 = vsel %vm438, %v4982, %v5003
    %v5005 = vsel %vm440, %v4986, %v5004
    %v5006 = vsel %vm442, %v4990, %v5005
    %v5007 = vsel %vm444, %v4994, %v5006
    %v5008 = vsel %vm446, %v4998, %v5007
    %v5009 = vsel %vm448, %v5002, %v5008
    %v5011 = vsel %vm343, %v4960, 0
    %v5013 = vsel %vm343, %v4962, 0
    %5015 = vmatprep.subr.mxu0 0.0
    %5016 = vmatpush1.xpose.msra.mxu0 %v5013
    %5017 = vmatprep.subr.mxu0 0.0
    %5018 = vmatpush1.xpose.msra.mxu0 0.0
    %5019 = vmatprep.subr.mxu0 0.0
    %5020 = vmatpush1.xpose.msra.mxu0 0.0
    %5021 = vmatprep.subr.mxu0 0.0
    %5022 = vmatpush1.xpose.msra.mxu0 0.0
    %5023 = vmatprep.subr.mxu0 0.0
    %5024 = vmatpush1.xpose.msra.mxu0 0.0
    %5025 = vmatprep.subr.mxu0 0.0
    %5026 = vmatpush1.xpose.msra.mxu0 0.0
    %5027 = vmatprep.subr.mxu0 0.0
    %5028 = vmatpush1.xpose.msra.mxu0 0.0
    %5029 = vmatprep.subr.mxu0 0.0
    %5030 = vmatpush1.xpose.msra.mxu0 0.0
    %5031 = vmatprep.subr.mxu0 0.0
    %5032 = vmatpush1.xpose.msra.mxu0 0.0
    %5033 = vmatprep.subr.mxu0 0.0
    %5034 = vmatpush1.xpose.msra.mxu0 0.0
    %5035 = vmatprep.subr.mxu0 0.0
    %5036 = vmatpush1.xpose.msra.mxu0 0.0
    %5037 = vmatprep.subr.mxu0 0.0
    %5038 = vmatpush1.xpose.msra.mxu0 0.0
    %5039 = vmatprep.subr.mxu0 0.0
    %5040 = vmatpush1.xpose.msra.mxu0 0.0
    %5041 = vmatprep.subr.mxu0 0.0
    %5042 = vmatpush1.xpose.msra.mxu0 0.0
    %5043 = vmatprep.subr.mxu0 0.0
    %5044 = vmatpush1.xpose.msra.mxu0 0.0
    %5045 = vmatprep.subr.mxu0 0.0
    %5046 = vmatpush1.xpose.msra.mxu0 0.0
    %5047 = vmatprep.subr.mxu0 0.0
    %5048 = vmatpush1.xpose.msra.mxu0 0.0
    %5049 = vmatprep.subr.mxu0 0.0
    %5050 = vmatpush1.xpose.msra.mxu0 0.0
    %5051 = vmatprep.subr.mxu0 0.0
    %5052 = vmatpush1.xpose.msra.mxu0 0.0
    %5053 = vmatprep.subr.mxu0 0.0
    %5054 = vmatpush1.xpose.msra.mxu0 0.0
    %5055 = vmatprep.subr.mxu0 0.0
    %5056 = vmatpush1.xpose.msra.mxu0 0.0
    %5057 = vmatprep.subr.mxu0 0.0
    %5058 = vmatpush1.xpose.msra.mxu0 0.0
    %5059 = vmatprep.subr.mxu0 0.0
    %5060 = vmatpush1.xpose.msra.mxu0 0.0
    %5061 = vmatprep.subr.mxu0 0.0
    %5062 = vmatpush1.xpose.msra.mxu0 0.0
    %5063 = vmatprep.subr.mxu0 0.0
    %5064 = vmatpush1.xpose.msra.mxu0 0.0
    %5065 = vmatprep.subr.mxu0 0.0
    %5066 = vmatpush1.xpose.msra.mxu0 0.0
    %5067 = vmatprep.subr.mxu0 0.0
    %5068 = vmatpush1.xpose.msra.mxu0 0.0
    %5069 = vmatprep.subr.mxu0 0.0
    %5070 = vmatpush1.xpose.msra.mxu0 0.0
    %5071 = vmatprep.subr.mxu0 0.0
    %5072 = vmatpush1.xpose.msra.mxu0 0.0
    %5073 = vmatprep.subr.mxu0 0.0
    %5074 = vmatpush1.xpose.msra.mxu0 0.0
    %5075 = vmatprep.subr.mxu0 0.0
    %5076 = vmatpush1.xpose.msra.mxu0 0.0
    %5077 = vmatprep.subr.mxu0 0.0
    %5078 = vmatpush1.xpose.msra.mxu0 0.0
    %5079 = vmatprep.mubr.f32.mxu0 0.0
    %5080 = vmatmul.mubr.f32.gmra.mrb[0].mxu0 %v5011
    %v5081 = vpop.f32.mrb[0].mxu0
    %v5082 = vadd.f32 %v5009, %v5081
    %v5083 = vpop.f32.mrb[0].mxu0
    %5084 = vdwg.mxu0
    %5085 = vrot.lane.b32.xlu0 %v3339, 112
    %v5086 = vpop.permute.xlu0 %5085
    %5087 = vrot.lane.b32.xlu0 %v3339, 80
    %v5088 = vpop.permute.xlu0 %5087
    %v5097 = vlaneseq
    %v5098 = vshrl.u32 %v5097, 7
    %v5099 = vsub.s32 %v403, %v5098
    %v5100 = vrot.slane %v4937, %v5099
    %v5101 = vlaneseq
    %v5102 = vshrl.u32 %v5101, 7
    %v5103 = vsub.s32 %v403, %v5102
    %v5104 = vrot.slane %v4940, %v5103
    %v5105 = vlaneseq
    %v5106 = vshrl.u32 %v5105, 7
    %v5107 = vsub.s32 %v403, %v5106
    %v5108 = vrot.slane %v4943, %v5107
    %v5109 = vlaneseq
    %v5110 = vshrl.u32 %v5109, 7
    %v5111 = vsub.s32 %v403, %v5110
    %v5112 = vrot.slane %v4946, %v5111
    %v5113 = vlaneseq
    %v5114 = vshrl.u32 %v5113, 7
    %v5115 = vsub.s32 %v403, %v5114
    %v5116 = vrot.slane %v4949, %v5115
    %v5117 = vlaneseq
    %v5118 = vshrl.u32 %v5117, 7
    %v5119 = vsub.s32 %v403, %v5118
    %v5120 = vrot.slane %v4952, %v5119
    %v5121 = vlaneseq
    %v5122 = vshrl.u32 %v5121, 7
    %v5123 = vsub.s32 %v403, %v5122
    %v5124 = vrot.slane %v4955, %v5123
    %v5125 = vlaneseq
    %v5126 = vshrl.u32 %v5125, 7
    %v5127 = vsub.s32 %v403, %v5126
    %v5128 = vrot.slane %v4958, %v5127
    %v5129 = vsel %vm436, %v5104, %v5100
    %v5130 = vsel %vm438, %v5108, %v5129
    %v5131 = vsel %vm440, %v5112, %v5130
    %v5132 = vsel %vm442, %v5116, %v5131
    %v5133 = vsel %vm444, %v5120, %v5132
    %v5134 = vsel %vm446, %v5124, %v5133
    %v5135 = vsel %vm448, %v5128, %v5134
    %v5137 = vsel %vm343, %v5086, 0
    %v5139 = vsel %vm343, %v5088, 0
    %5141 = vmatprep.subr.mxu0 0.0
    %5142 = vmatpush1.xpose.msra.mxu0 %v5139
    %5143 = vmatprep.subr.mxu0 0.0
    %5144 = vmatpush1.xpose.msra.mxu0 0.0
    %5145 = vmatprep.subr.mxu0 0.0
    %5146 = vmatpush1.xpose.msra.mxu0 0.0
    %5147 = vmatprep.subr.mxu0 0.0
    %5148 = vmatpush1.xpose.msra.mxu0 0.0
    %5149 = vmatprep.subr.mxu0 0.0
    %5150 = vmatpush1.xpose.msra.mxu0 0.0
    %5151 = vmatprep.subr.mxu0 0.0
    %5152 = vmatpush1.xpose.msra.mxu0 0.0
    %5153 = vmatprep.subr.mxu0 0.0
    %5154 = vmatpush1.xpose.msra.mxu0 0.0
    %5155 = vmatprep.subr.mxu0 0.0
    %5156 = vmatpush1.xpose.msra.mxu0 0.0
    %5157 = vmatprep.subr.mxu0 0.0
    %5158 = vmatpush1.xpose.msra.mxu0 0.0
    %5159 = vmatprep.subr.mxu0 0.0
    %5160 = vmatpush1.xpose.msra.mxu0 0.0
    %5161 = vmatprep.subr.mxu0 0.0
    %5162 = vmatpush1.xpose.msra.mxu0 0.0
    %5163 = vmatprep.subr.mxu0 0.0
    %5164 = vmatpush1.xpose.msra.mxu0 0.0
    %5165 = vmatprep.subr.mxu0 0.0
    %5166 = vmatpush1.xpose.msra.mxu0 0.0
    %5167 = vmatprep.subr.mxu0 0.0
    %5168 = vmatpush1.xpose.msra.mxu0 0.0
    %5169 = vmatprep.subr.mxu0 0.0
    %5170 = vmatpush1.xpose.msra.mxu0 0.0
    %5171 = vmatprep.subr.mxu0 0.0
    %5172 = vmatpush1.xpose.msra.mxu0 0.0
    %5173 = vmatprep.subr.mxu0 0.0
    %5174 = vmatpush1.xpose.msra.mxu0 0.0
    %5175 = vmatprep.subr.mxu0 0.0
    %5176 = vmatpush1.xpose.msra.mxu0 0.0
    %5177 = vmatprep.subr.mxu0 0.0
    %5178 = vmatpush1.xpose.msra.mxu0 0.0
    %5179 = vmatprep.subr.mxu0 0.0
    %5180 = vmatpush1.xpose.msra.mxu0 0.0
    %5181 = vmatprep.subr.mxu0 0.0
    %5182 = vmatpush1.xpose.msra.mxu0 0.0
    %5183 = vmatprep.subr.mxu0 0.0
    %5184 = vmatpush1.xpose.msra.mxu0 0.0
    %5185 = vmatprep.subr.mxu0 0.0
    %5186 = vmatpush1.xpose.msra.mxu0 0.0
    %5187 = vmatprep.subr.mxu0 0.0
    %5188 = vmatpush1.xpose.msra.mxu0 0.0
    %5189 = vmatprep.subr.mxu0 0.0
    %5190 = vmatpush1.xpose.msra.mxu0 0.0
    %5191 = vmatprep.subr.mxu0 0.0
    %5192 = vmatpush1.xpose.msra.mxu0 0.0
    %5193 = vmatprep.subr.mxu0 0.0
    %5194 = vmatpush1.xpose.msra.mxu0 0.0
    %5195 = vmatprep.subr.mxu0 0.0
    %5196 = vmatpush1.xpose.msra.mxu0 0.0
    %5197 = vmatprep.subr.mxu0 0.0
    %5198 = vmatpush1.xpose.msra.mxu0 0.0
    %5199 = vmatprep.subr.mxu0 0.0
    %5200 = vmatpush1.xpose.msra.mxu0 0.0
    %5201 = vmatprep.subr.mxu0 0.0
    %5202 = vmatpush1.xpose.msra.mxu0 0.0
    %5203 = vmatprep.subr.mxu0 0.0
    %5204 = vmatpush1.xpose.msra.mxu0 0.0
    %5205 = vmatprep.mubr.f32.mxu0 0.0
    %5206 = vmatmul.mubr.f32.gmra.mrb[0].mxu0 %v5137
    %v5207 = vpop.f32.mrb[0].mxu0
    %v5208 = vadd.f32 %v5135, %v5207
    %v5209 = vpop.f32.mrb[0].mxu0
    %5210 = vdwg.mxu0
    %v5211 = vadd.f32 %v5082, %v654
    %v5212 = vadd.f32 %v5208, %v658
    %v5213 = vsel %vm343, %v5211, -inf
    %5214 = vmax.xlane.f32.xlu0 %v5213
    %v5215 = vpop.xlane.xlu0 %5214
    %v5216 = vsel %vm343, %v5212, -inf
    %5217 = vmax.xlane.f32.xlu0 %v5216
    %v5218 = vpop.xlane.xlu0 %5217
    %v5219 = vsub.f32 %v5211, %v5215
    %v5220 = vsub.f32 %v5212, %v5218
    %v5221 = vmul.f32 %v5219, 1.442695
    %v5222 = vpow.pop %v5221
    %v5223 = vmul.f32 %v5220, 1.442695
    %v5224 = vpow.pop %v5223
    %v5225 = vsel %vm343, %v5222, 0.0
    %5226 = vadd.xlane.f32.xlu0 %v5225
    %v5227 = vpop.xlane.xlu0 %5226
    %v5228 = vsel %vm343, %v5224, 0.0
    %5229 = vadd.xlane.f32.xlu0 %v5228
    %v5230 = vpop.xlane.xlu0 %5229
    %v5231 = vrcp.pop %v5227
    %v5232 = vmul.f32 %v5222, %v5231
    %v5233 = vrcp.pop %v5230
    %v5234 = vmul.f32 %v5224, %v5233
    %s5235 = scalar_lea.vmem %s13, 80
    %5236 = vst.msk [vmem:[%s5235] sm:$0xff] %vm343, %v5232
    %s5237 = scalar_lea.vmem %s13, 112
    %5238 = vst.msk [vmem:[%s5237] sm:$0xff] %vm343, %v5234
    %5239 = vrot.lane.b32.xlu0 %v3334, 48
    %v5240 = vpop.permute.xlu0 %5239
    %v5243 = vsel %vm343, %v5232, 0
    %5245 = vmatprep.subr.mxu0 0.0
    %5246 = vmatpush1.msra.mxu0 %v5240
    %5247 = vmatprep.subr.mxu0 0.0
    %5248 = vmatpush1.msra.mxu0 0.0
    %5249 = vmatprep.subr.mxu0 0.0
    %5250 = vmatpush1.msra.mxu0 0.0
    %5251 = vmatprep.subr.mxu0 0.0
    %5252 = vmatpush1.msra.mxu0 0.0
    %5253 = vmatprep.subr.mxu0 0.0
    %5254 = vmatpush1.msra.mxu0 0.0
    %5255 = vmatprep.subr.mxu0 0.0
    %5256 = vmatpush1.msra.mxu0 0.0
    %5257 = vmatprep.subr.mxu0 0.0
    %5258 = vmatpush1.msra.mxu0 0.0
    %5259 = vmatprep.subr.mxu0 0.0
    %5260 = vmatpush1.msra.mxu0 0.0
    %5261 = vmatprep.subr.mxu0 0.0
    %5262 = vmatpush1.msra.mxu0 0.0
    %5263 = vmatprep.subr.mxu0 0.0
    %5264 = vmatpush1.msra.mxu0 0.0
    %5265 = vmatprep.subr.mxu0 0.0
    %5266 = vmatpush1.msra.mxu0 0.0
    %5267 = vmatprep.subr.mxu0 0.0
    %5268 = vmatpush1.msra.mxu0 0.0
    %5269 = vmatprep.subr.mxu0 0.0
    %5270 = vmatpush1.msra.mxu0 0.0
    %5271 = vmatprep.subr.mxu0 0.0
    %5272 = vmatpush1.msra.mxu0 0.0
    %5273 = vmatprep.subr.mxu0 0.0
    %5274 = vmatpush1.msra.mxu0 0.0
    %5275 = vmatprep.subr.mxu0 0.0
    %5276 = vmatpush1.msra.mxu0 0.0
    %5277 = vmatprep.subr.mxu0 0.0
    %5278 = vmatpush1.msra.mxu0 0.0
    %5279 = vmatprep.subr.mxu0 0.0
    %5280 = vmatpush1.msra.mxu0 0.0
    %5281 = vmatprep.subr.mxu0 0.0
    %5282 = vmatpush1.msra.mxu0 0.0
    %5283 = vmatprep.subr.mxu0 0.0
    %5284 = vmatpush1.msra.mxu0 0.0
    %5285 = vmatprep.subr.mxu0 0.0
    %5286 = vmatpush1.msra.mxu0 0.0
    %5287 = vmatprep.subr.mxu0 0.0
    %5288 = vmatpush1.msra.mxu0 0.0
    %5289 = vmatprep.subr.mxu0 0.0
    %5290 = vmatpush1.msra.mxu0 0.0
    %5291 = vmatprep.subr.mxu0 0.0
    %5292 = vmatpush1.msra.mxu0 0.0
    %5293 = vmatprep.subr.mxu0 0.0
    %5294 = vmatpush1.msra.mxu0 0.0
    %5295 = vmatprep.subr.mxu0 0.0
    %5296 = vmatpush1.msra.mxu0 0.0
    %5297 = vmatprep.subr.mxu0 0.0
    %5298 = vmatpush1.msra.mxu0 0.0
    %5299 = vmatprep.subr.mxu0 0.0
    %5300 = vmatpush1.msra.mxu0 0.0
    %5301 = vmatprep.subr.mxu0 0.0
    %5302 = vmatpush1.msra.mxu0 0.0
    %5303 = vmatprep.subr.mxu0 0.0
    %5304 = vmatpush1.msra.mxu0 0.0
    %5305 = vmatprep.subr.mxu0 0.0
    %5306 = vmatpush1.msra.mxu0 0.0
    %5307 = vmatprep.subr.mxu0 0.0
    %5308 = vmatpush1.msra.mxu0 0.0
    %5309 = vmatprep.mubr.f32.mxu0 0.0
    %5310 = vmatmul.mubr.f32.gmra.mrb[0].mxu0 %v5243
    %v5311 = vpop.f32.mrb[0].mxu0
    %v5312 = vadd.f32 0.0, %v5311
    %v5313 = vpop.f32.mrb[0].mxu0
    %5314 = vdwg.mxu0
    %5315 = vrot.lane.b32.xlu0 %v3339, 48
    %v5316 = vpop.permute.xlu0 %5315
    %v5319 = vsel %vm343, %v5234, 0
    %5321 = vmatprep.subr.mxu0 0.0
    %5322 = vmatpush1.msra.mxu0 %v5316
    %5323 = vmatprep.subr.mxu0 0.0
    %5324 = vmatpush1.msra.mxu0 0.0
    %5325 = vmatprep.subr.mxu0 0.0
    %5326 = vmatpush1.msra.mxu0 0.0
    %5327 = vmatprep.subr.mxu0 0.0
    %5328 = vmatpush1.msra.mxu0 0.0
    %5329 = vmatprep.subr.mxu0 0.0
    %5330 = vmatpush1.msra.mxu0 0.0
    %5331 = vmatprep.subr.mxu0 0.0
    %5332 = vmatpush1.msra.mxu0 0.0
    %5333 = vmatprep.subr.mxu0 0.0
    %5334 = vmatpush1.msra.mxu0 0.0
    %5335 = vmatprep.subr.mxu0 0.0
    %5336 = vmatpush1.msra.mxu0 0.0
    %5337 = vmatprep.subr.mxu0 0.0
    %5338 = vmatpush1.msra.mxu0 0.0
    %5339 = vmatprep.subr.mxu0 0.0
    %5340 = vmatpush1.msra.mxu0 0.0
    %5341 = vmatprep.subr.mxu0 0.0
    %5342 = vmatpush1.msra.mxu0 0.0
    %5343 = vmatprep.subr.mxu0 0.0
    %5344 = vmatpush1.msra.mxu0 0.0
    %5345 = vmatprep.subr.mxu0 0.0
    %5346 = vmatpush1.msra.mxu0 0.0
    %5347 = vmatprep.subr.mxu0 0.0
    %5348 = vmatpush1.msra.mxu0 0.0
    %5349 = vmatprep.subr.mxu0 0.0
    %5350 = vmatpush1.msra.mxu0 0.0
    %5351 = vmatprep.subr.mxu0 0.0
    %5352 = vmatpush1.msra.mxu0 0.0
    %5353 = vmatprep.subr.mxu0 0.0
    %5354 = vmatpush1.msra.mxu0 0.0
    %5355 = vmatprep.subr.mxu0 0.0
    %5356 = vmatpush1.msra.mxu0 0.0
    %5357 = vmatprep.subr.mxu0 0.0
    %5358 = vmatpush1.msra.mxu0 0.0
    %5359 = vmatprep.subr.mxu0 0.0
    %5360 = vmatpush1.msra.mxu0 0.0
    %5361 = vmatprep.subr.mxu0 0.0
    %5362 = vmatpush1.msra.mxu0 0.0
    %5363 = vmatprep.subr.mxu0 0.0
    %5364 = vmatpush1.msra.mxu0 0.0
    %5365 = vmatprep.subr.mxu0 0.0
    %5366 = vmatpush1.msra.mxu0 0.0
    %5367 = vmatprep.subr.mxu0 0.0
    %5368 = vmatpush1.msra.mxu0 0.0
    %5369 = vmatprep.subr.mxu0 0.0
    %5370 = vmatpush1.msra.mxu0 0.0
    %5371 = vmatprep.subr.mxu0 0.0
    %5372 = vmatpush1.msra.mxu0 0.0
    %5373 = vmatprep.subr.mxu0 0.0
    %5374 = vmatpush1.msra.mxu0 0.0
    %5375 = vmatprep.subr.mxu0 0.0
    %5376 = vmatpush1.msra.mxu0 0.0
    %5377 = vmatprep.subr.mxu0 0.0
    %5378 = vmatpush1.msra.mxu0 0.0
    %5379 = vmatprep.subr.mxu0 0.0
    %5380 = vmatpush1.msra.mxu0 0.0
    %5381 = vmatprep.subr.mxu0 0.0
    %5382 = vmatpush1.msra.mxu0 0.0
    %5383 = vmatprep.subr.mxu0 0.0
    %5384 = vmatpush1.msra.mxu0 0.0
    %5385 = vmatprep.mubr.f32.mxu0 0.0
    %5386 = vmatmul.mubr.f32.gmra.mrb[0].mxu0 %v5319
    %v5387 = vpop.f32.mrb[0].mxu0
    %v5388 = vadd.f32 0.0, %v5387
    %v5389 = vpop.f32.mrb[0].mxu0
    %5390 = vdwg.mxu0
    %s5391 = scalar_lea.vmem %s4, 48
    %v5392 = vld [vmem:[%s5391] sm:$0xff]
    %v5394 = vsel %vm343, %v5312, 0
    %v5397 = vsel %vm343, %v5388, 0
    %5399 = vmatprep.subr.mxu0 0.0
    %5400 = vmatpush1.msra.mxu0 %v5392
    %5401 = vmatprep.subr.mxu0 0.0
    %5402 = vmatpush1.msra.mxu0 0.0
    %5403 = vmatprep.subr.mxu0 0.0
    %5404 = vmatpush1.msra.mxu0 0.0
    %5405 = vmatprep.subr.mxu0 0.0
    %5406 = vmatpush1.msra.mxu0 0.0
    %5407 = vmatprep.subr.mxu0 0.0
    %5408 = vmatpush1.msra.mxu0 0.0
    %5409 = vmatprep.subr.mxu0 0.0
    %5410 = vmatpush1.msra.mxu0 0.0
    %5411 = vmatprep.subr.mxu0 0.0
    %5412 = vmatpush1.msra.mxu0 0.0
    %5413 = vmatprep.subr.mxu0 0.0
    %5414 = vmatpush1.msra.mxu0 0.0
    %5415 = vmatprep.subr.mxu0 0.0
    %5416 = vmatpush1.msra.mxu0 0.0
    %5417 = vmatprep.subr.mxu0 0.0
    %5418 = vmatpush1.msra.mxu0 0.0
    %5419 = vmatprep.subr.mxu0 0.0
    %5420 = vmatpush1.msra.mxu0 0.0
    %5421 = vmatprep.subr.mxu0 0.0
    %5422 = vmatpush1.msra.mxu0 0.0
    %5423 = vmatprep.subr.mxu0 0.0
    %5424 = vmatpush1.msra.mxu0 0.0
    %5425 = vmatprep.subr.mxu0 0.0
    %5426 = vmatpush1.msra.mxu0 0.0
    %5427 = vmatprep.subr.mxu0 0.0
    %5428 = vmatpush1.msra.mxu0 0.0
    %5429 = vmatprep.subr.mxu0 0.0
    %5430 = vmatpush1.msra.mxu0 0.0
    %5431 = vmatprep.subr.mxu0 0.0
    %5432 = vmatpush1.msra.mxu0 0.0
    %5433 = vmatprep.subr.mxu0 0.0
    %5434 = vmatpush1.msra.mxu0 0.0
    %5435 = vmatprep.subr.mxu0 0.0
    %5436 = vmatpush1.msra.mxu0 0.0
    %5437 = vmatprep.subr.mxu0 0.0
    %5438 = vmatpush1.msra.mxu0 0.0
    %5439 = vmatprep.subr.mxu0 0.0
    %5440 = vmatpush1.msra.mxu0 0.0
    %5441 = vmatprep.subr.mxu0 0.0
    %5442 = vmatpush1.msra.mxu0 0.0
    %5443 = vmatprep.subr.mxu0 0.0
    %5444 = vmatpush1.msra.mxu0 0.0
    %5445 = vmatprep.subr.mxu0 0.0
    %5446 = vmatpush1.msra.mxu0 0.0
    %5447 = vmatprep.subr.mxu0 0.0
    %5448 = vmatpush1.msra.mxu0 0.0
    %5449 = vmatprep.subr.mxu0 0.0
    %5450 = vmatpush1.msra.mxu0 0.0
    %5451 = vmatprep.subr.mxu0 0.0
    %5452 = vmatpush1.msra.mxu0 0.0
    %5453 = vmatprep.subr.mxu0 0.0
    %5454 = vmatpush1.msra.mxu0 0.0
    %5455 = vmatprep.subr.mxu0 0.0
    %5456 = vmatpush1.msra.mxu0 0.0
    %5457 = vmatprep.subr.mxu0 0.0
    %5458 = vmatpush1.msra.mxu0 0.0
    %5459 = vmatprep.subr.mxu0 0.0
    %5460 = vmatpush1.msra.mxu0 0.0
    %5461 = vmatprep.subr.mxu0 0.0
    %5462 = vmatpush1.msra.mxu0 0.0
    %5463 = vmatprep.mubr.f32.mxu0 0.0
    %5464 = vmatmul.mubr.f32.gmra.mrb[0].mxu0 %v5394
    %v5465 = vpop.f32.mrb[0].mxu0
    %v5466 = vadd.f32 0.0, %v5465
    %v5467 = vpop.f32.mrb[0].mxu0
    %5468 = vmatprep.mubr.f32.mxu0 0.0
    %5469 = vmatmul.mubr.f32.gmra.mrb[0].mxu0 %v5397
    %v5470 = vpop.f32.mrb[0].mxu0
    %v5471 = vadd.f32 0.0, %v5470
    %v5472 = vpop.f32.mrb[0].mxu0
    %5473 = vdwg.mxu0
    %v5474 = vadd.f32 %v4782, %v5466
    %v5475 = vadd.f32 %v4787, %v5471
    %s5476 = scalar_lea.vmem %s2, 448
    %v5477 = vld [vmem:[%s5476] sm:$0xff]
    %v5478 = vld [vmem:[%s5476 + $0x8] sm:$0xff]
    %v5479 = vld [vmem:[%s5476 + $0x10] sm:$0xff]
    %v5480 = vld [vmem:[%s5476 + $0x18] sm:$0xff]
    %v5481 = vld [vmem:[%s5476 + $0x20] sm:$0xff]
    %v5482 = vld [vmem:[%s5476 + $0x28] sm:$0xff]
    %v5483 = vld [vmem:[%s5476 + $0x30] sm:$0xff]
    %v5484 = vld [vmem:[%s5476 + $0x38] sm:$0xff]
    %5493 = vrot.lane.b32.xlu0 %v5477, 24
    %v5494 = vpop.permute.xlu0 %5493
    %5495 = vrot.lane.b32.xlu0 %v5478, 24
    %v5496 = vpop.permute.xlu0 %5495
    %5497 = vrot.lane.b32.xlu0 %v5479, 24
    %v5498 = vpop.permute.xlu0 %5497
    %5499 = vrot.lane.b32.xlu0 %v5480, 24
    %v5500 = vpop.permute.xlu0 %5499
    %5501 = vrot.lane.b32.xlu0 %v5481, 24
    %v5502 = vpop.permute.xlu0 %5501
    %5503 = vrot.lane.b32.xlu0 %v5482, 24
    %v5504 = vpop.permute.xlu0 %5503
    %5505 = vrot.lane.b32.xlu0 %v5483, 24
    %v5506 = vpop.permute.xlu0 %5505
    %5507 = vrot.lane.b32.xlu0 %v5484, 24
    %v5508 = vpop.permute.xlu0 %5507
    %v5517 = vmul.f32 %v3454, %v5494
    %v5518 = vmul.f32 %v3458, %v5496
    %v5519 = vmul.f32 %v3462, %v5498
    %v5520 = vmul.f32 %v3466, %v5500
    %v5521 = vmul.f32 %v3470, %v5502
    %v5522 = vmul.f32 %v3474, %v5504
    %v5523 = vmul.f32 %v3478, %v5506
    %v5524 = vmul.f32 %v3482, %v5508
    %v5525 = vmul.f32 %v3486, %v5494
    %v5526 = vmul.f32 %v3490, %v5496
    %v5527 = vmul.f32 %v3494, %v5498
    %v5528 = vmul.f32 %v3498, %v5500
    %v5529 = vmul.f32 %v3502, %v5502
    %v5530 = vmul.f32 %v3506, %v5504
    %v5531 = vmul.f32 %v3510, %v5506
    %v5532 = vmul.f32 %v3514, %v5508
    %5549 = vrot.lane.b32.xlu0 %v5517, 104
    %v5550 = vpop.permute.xlu0 %5549
    %5551 = vrot.lane.b32.xlu0 %v5518, 104
    %v5552 = vpop.permute.xlu0 %5551
    %5553 = vrot.lane.b32.xlu0 %v5519, 104
    %v5554 = vpop.permute.xlu0 %5553
    %5555 = vrot.lane.b32.xlu0 %v5520, 104
    %v5556 = vpop.permute.xlu0 %5555
    %5557 = vrot.lane.b32.xlu0 %v5521, 104
    %v5558 = vpop.permute.xlu0 %5557
    %5559 = vrot.lane.b32.xlu0 %v5522, 104
    %v5560 = vpop.permute.xlu0 %5559
    %5561 = vrot.lane.b32.xlu0 %v5523, 104
    %v5562 = vpop.permute.xlu0 %5561
    %5563 = vrot.lane.b32.xlu0 %v5524, 104
    %v5564 = vpop.permute.xlu0 %5563
    %5565 = vrot.lane.b32.xlu0 %v5525, 104
    %v5566 = vpop.permute.xlu0 %5565
    %5567 = vrot.lane.b32.xlu0 %v5526, 104
    %v5568 = vpop.permute.xlu0 %5567
    %5569 = vrot.lane.b32.xlu0 %v5527, 104
    %v5570 = vpop.permute.xlu0 %5569
    %5571 = vrot.lane.b32.xlu0 %v5528, 104
    %v5572 = vpop.permute.xlu0 %5571
    %5573 = vrot.lane.b32.xlu0 %v5529, 104
    %v5574 = vpop.permute.xlu0 %5573
    %5575 = vrot.lane.b32.xlu0 %v5530, 104
    %v5576 = vpop.permute.xlu0 %5575
    %5577 = vrot.lane.b32.xlu0 %v5531, 104
    %v5578 = vpop.permute.xlu0 %5577
    %5579 = vrot.lane.b32.xlu0 %v5532, 104
    %v5580 = vpop.permute.xlu0 %5579
    %v5597 = vsel %vm343, %v5550, 0.0
    %5598 = vadd.xlane.f32.xlu0 %v5597
    %v5599 = vpop.xlane.xlu0 %5598
    %v5600 = vsel %vm343, %v5552, 0.0
    %5601 = vadd.xlane.f32.xlu0 %v5600
    %v5602 = vpop.xlane.xlu0 %5601
    %v5603 = vsel %vm343, %v5554, 0.0
    %5604 = vadd.xlane.f32.xlu0 %v5603
    %v5605 = vpop.xlane.xlu0 %5604
    %v5606 = vsel %vm343, %v5556, 0.0
    %5607 = vadd.xlane.f32.xlu0 %v5606
    %v5608 = vpop.xlane.xlu0 %5607
    %v5609 = vsel %vm343, %v5558, 0.0
    %5610 = vadd.xlane.f32.xlu0 %v5609
    %v5611 = vpop.xlane.xlu0 %5610
    %v5612 = vsel %vm343, %v5560, 0.0
    %5613 = vadd.xlane.f32.xlu0 %v5612
    %v5614 = vpop.xlane.xlu0 %5613
    %v5615 = vsel %vm343, %v5562, 0.0
    %5616 = vadd.xlane.f32.xlu0 %v5615
    %v5617 = vpop.xlane.xlu0 %5616
    %v5618 = vsel %vm343, %v5564, 0.0
    %5619 = vadd.xlane.f32.xlu0 %v5618
    %v5620 = vpop.xlane.xlu0 %5619
    %v5621 = vsel %vm343, %v5566, 0.0
    %5622 = vadd.xlane.f32.xlu0 %v5621
    %v5623 = vpop.xlane.xlu0 %5622
    %v5624 = vsel %vm343, %v5568, 0.0
    %5625 = vadd.xlane.f32.xlu0 %v5624
    %v5626 = vpop.xlane.xlu0 %5625
    %v5627 = vsel %vm343, %v5570, 0.0
    %5628 = vadd.xlane.f32.xlu0 %v5627
    %v5629 = vpop.xlane.xlu0 %5628
    %v5630 = vsel %vm343, %v5572, 0.0
    %5631 = vadd.xlane.f32.xlu0 %v5630
    %v5632 = vpop.xlane.xlu0 %5631
    %v5633 = vsel %vm343, %v5574, 0.0
    %5634 = vadd.xlane.f32.xlu0 %v5633
    %v5635 = vpop.xlane.xlu0 %5634
    %v5636 = vsel %vm343, %v5576, 0.0
    %5637 = vadd.xlane.f32.xlu0 %v5636
    %v5638 = vpop.xlane.xlu0 %5637
    %v5639 = vsel %vm343, %v5578, 0.0
    %5640 = vadd.xlane.f32.xlu0 %v5639
    %v5641 = vpop.xlane.xlu0 %5640
    %v5642 = vsel %vm343, %v5580, 0.0
    %5643 = vadd.xlane.f32.xlu0 %v5642
    %v5644 = vpop.xlane.xlu0 %5643
    %5645 = vrot.lane.b32.xlu0 %v3334, 104
    %v5646 = vpop.permute.xlu0 %5645
    %5647 = vrot.lane.b32.xlu0 %v3334, 72
    %v5648 = vpop.permute.xlu0 %5647
    %v5657 = vlaneseq
    %v5658 = vshrl.u32 %v5657, 7
    %v5659 = vsub.s32 %v403, %v5658
    %v5660 = vrot.slane %v5599, %v5659
    %v5661 = vlaneseq
    %v5662 = vshrl.u32 %v5661, 7
    %v5663 = vsub.s32 %v403, %v5662
    %v5664 = vrot.slane %v5602, %v5663
    %v5665 = vlaneseq
    %v5666 = vshrl.u32 %v5665, 7
    %v5667 = vsub.s32 %v403, %v5666
    %v5668 = vrot.slane %v5605, %v5667
    %v5669 = vlaneseq
    %v5670 = vshrl.u32 %v5669, 7
    %v5671 = vsub.s32 %v403, %v5670
    %v5672 = vrot.slane %v5608, %v5671
    %v5673 = vlaneseq
    %v5674 = vshrl.u32 %v5673, 7
    %v5675 = vsub.s32 %v403, %v5674
    %v5676 = vrot.slane %v5611, %v5675
    %v5677 = vlaneseq
    %v5678 = vshrl.u32 %v5677, 7
    %v5679 = vsub.s32 %v403, %v5678
    %v5680 = vrot.slane %v5614, %v5679
    %v5681 = vlaneseq
    %v5682 = vshrl.u32 %v5681, 7
    %v5683 = vsub.s32 %v403, %v5682
    %v5684 = vrot.slane %v5617, %v5683
    %v5685 = vlaneseq
    %v5686 = vshrl.u32 %v5685, 7
    %v5687 = vsub.s32 %v403, %v5686
    %v5688 = vrot.slane %v5620, %v5687
    %v5689 = vsel %vm436, %v5664, %v5660
    %v5690 = vsel %vm438, %v5668, %v5689
    %v5691 = vsel %vm440, %v5672, %v5690
    %v5692 = vsel %vm442, %v5676, %v5691
    %v5693 = vsel %vm444, %v5680, %v5692
    %v5694 = vsel %vm446, %v5684, %v5693
    %v5695 = vsel %vm448, %v5688, %v5694
    %v5697 = vsel %vm343, %v5646, 0
    %v5699 = vsel %vm343, %v5648, 0
    %5701 = vmatprep.subr.mxu0 0.0
    %5702 = vmatpush1.xpose.msra.mxu0 %v5699
    %5703 = vmatprep.subr.mxu0 0.0
    %5704 = vmatpush1.xpose.msra.mxu0 0.0
    %5705 = vmatprep.subr.mxu0 0.0
    %5706 = vmatpush1.xpose.msra.mxu0 0.0
    %5707 = vmatprep.subr.mxu0 0.0
    %5708 = vmatpush1.xpose.msra.mxu0 0.0
    %5709 = vmatprep.subr.mxu0 0.0
    %5710 = vmatpush1.xpose.msra.mxu0 0.0
    %5711 = vmatprep.subr.mxu0 0.0
    %5712 = vmatpush1.xpose.msra.mxu0 0.0
    %5713 = vmatprep.subr.mxu0 0.0
    %5714 = vmatpush1.xpose.msra.mxu0 0.0
    %5715 = vmatprep.subr.mxu0 0.0
    %5716 = vmatpush1.xpose.msra.mxu0 0.0
    %5717 = vmatprep.subr.mxu0 0.0
    %5718 = vmatpush1.xpose.msra.mxu0 0.0
    %5719 = vmatprep.subr.mxu0 0.0
    %5720 = vmatpush1.xpose.msra.mxu0 0.0
    %5721 = vmatprep.subr.mxu0 0.0
    %5722 = vmatpush1.xpose.msra.mxu0 0.0
    %5723 = vmatprep.subr.mxu0 0.0
    %5724 = vmatpush1.xpose.msra.mxu0 0.0
    %5725 = vmatprep.subr.mxu0 0.0
    %5726 = vmatpush1.xpose.msra.mxu0 0.0
    %5727 = vmatprep.subr.mxu0 0.0
    %5728 = vmatpush1.xpose.msra.mxu0 0.0
    %5729 = vmatprep.subr.mxu0 0.0
    %5730 = vmatpush1.xpose.msra.mxu0 0.0
    %5731 = vmatprep.subr.mxu0 0.0
    %5732 = vmatpush1.xpose.msra.mxu0 0.0
    %5733 = vmatprep.subr.mxu0 0.0
    %5734 = vmatpush1.xpose.msra.mxu0 0.0
    %5735 = vmatprep.subr.mxu0 0.0
    %5736 = vmatpush1.xpose.msra.mxu0 0.0
    %5737 = vmatprep.subr.mxu0 0.0
    %5738 = vmatpush1.xpose.msra.mxu0 0.0
    %5739 = vmatprep.subr.mxu0 0.0
    %5740 = vmatpush1.xpose.msra.mxu0 0.0
    %5741 = vmatprep.subr.mxu0 0.0
    %5742 = vmatpush1.xpose.msra.mxu0 0.0
    %5743 = vmatprep.subr.mxu0 0.0
    %5744 = vmatpush1.xpose.msra.mxu0 0.0
    %5745 = vmatprep.subr.mxu0 0.0
    %5746 = vmatpush1.xpose.msra.mxu0 0.0
    %5747 = vmatprep.subr.mxu0 0.0
    %5748 = vmatpush1.xpose.msra.mxu0 0.0
    %5749 = vmatprep.subr.mxu0 0.0
    %5750 = vmatpush1.xpose.msra.mxu0 0.0
    %5751 = vmatprep.subr.mxu0 0.0
    %5752 = vmatpush1.xpose.msra.mxu0 0.0
    %5753 = vmatprep.subr.mxu0 0.0
    %5754 = vmatpush1.xpose.msra.mxu0 0.0
    %5755 = vmatprep.subr.mxu0 0.0
    %5756 = vmatpush1.xpose.msra.mxu0 0.0
    %5757 = vmatprep.subr.mxu0 0.0
    %5758 = vmatpush1.xpose.msra.mxu0 0.0
    %5759 = vmatprep.subr.mxu0 0.0
    %5760 = vmatpush1.xpose.msra.mxu0 0.0
    %5761 = vmatprep.subr.mxu0 0.0
    %5762 = vmatpush1.xpose.msra.mxu0 0.0
    %5763 = vmatprep.subr.mxu0 0.0
    %5764 = vmatpush1.xpose.msra.mxu0 0.0
    %5765 = vmatprep.mubr.f32.mxu0 0.0
    %5766 = vmatmul.mubr.f32.gmra.mrb[0].mxu0 %v5697
    %v5767 = vpop.f32.mrb[0].mxu0
    %v5768 = vadd.f32 %v5695, %v5767
    %v5769 = vpop.f32.mrb[0].mxu0
    %5770 = vdwg.mxu0
    %5771 = vrot.lane.b32.xlu0 %v3339, 104
    %v5772 = vpop.permute.xlu0 %5771
    %5773 = vrot.lane.b32.xlu0 %v3339, 72
    %v5774 = vpop.permute.xlu0 %5773
    %v5783 = vlaneseq
    %v5784 = vshrl.u32 %v5783, 7
    %v5785 = vsub.s32 %v403, %v5784
    %v5786 = vrot.slane %v5623, %v5785
    %v5787 = vlaneseq
    %v5788 = vshrl.u32 %v5787, 7
    %v5789 = vsub.s32 %v403, %v5788
    %v5790 = vrot.slane %v5626, %v5789
    %v5791 = vlaneseq
    %v5792 = vshrl.u32 %v5791, 7
    %v5793 = vsub.s32 %v403, %v5792
    %v5794 = vrot.slane %v5629, %v5793
    %v5795 = vlaneseq
    %v5796 = vshrl.u32 %v5795, 7
    %v5797 = vsub.s32 %v403, %v5796
    %v5798 = vrot.slane %v5632, %v5797
    %v5799 = vlaneseq
    %v5800 = vshrl.u32 %v5799, 7
    %v5801 = vsub.s32 %v403, %v5800
    %v5802 = vrot.slane %v5635, %v5801
    %v5803 = vlaneseq
    %v5804 = vshrl.u32 %v5803, 7
    %v5805 = vsub.s32 %v403, %v5804
    %v5806 = vrot.slane %v5638, %v5805
    %v5807 = vlaneseq
    %v5808 = vshrl.u32 %v5807, 7
    %v5809 = vsub.s32 %v403, %v5808
    %v5810 = vrot.slane %v5641, %v5809
    %v5811 = vlaneseq
    %v5812 = vshrl.u32 %v5811, 7
    %v5813 = vsub.s32 %v403, %v5812
    %v5814 = vrot.slane %v5644, %v5813
    %v5815 = vsel %vm436, %v5790, %v5786
    %v5816 = vsel %vm438, %v5794, %v5815
    %v5817 = vsel %vm440, %v5798, %v5816
    %v5818 = vsel %vm442, %v5802, %v5817
    %v5819 = vsel %vm444, %v5806, %v5818
    %v5820 = vsel %vm446, %v5810, %v5819
    %v5821 = vsel %vm448, %v5814, %v5820
    %v5823 = vsel %vm343, %v5772, 0
    %v5825 = vsel %vm343, %v5774, 0
    %5827 = vmatprep.subr.mxu0 0.0
    %5828 = vmatpush1.xpose.msra.mxu0 %v5825
    %5829 = vmatprep.subr.mxu0 0.0
    %5830 = vmatpush1.xpose.msra.mxu0 0.0
    %5831 = vmatprep.subr.mxu0 0.0
    %5832 = vmatpush1.xpose.msra.mxu0 0.0
    %5833 = vmatprep.subr.mxu0 0.0
    %5834 = vmatpush1.xpose.msra.mxu0 0.0
    %5835 = vmatprep.subr.mxu0 0.0
    %5836 = vmatpush1.xpose.msra.mxu0 0.0
    %5837 = vmatprep.subr.mxu0 0.0
    %5838 = vmatpush1.xpose.msra.mxu0 0.0
    %5839 = vmatprep.subr.mxu0 0.0
    %5840 = vmatpush1.xpose.msra.mxu0 0.0
    %5841 = vmatprep.subr.mxu0 0.0
    %5842 = vmatpush1.xpose.msra.mxu0 0.0
    %5843 = vmatprep.subr.mxu0 0.0
    %5844 = vmatpush1.xpose.msra.mxu0 0.0
    %5845 = vmatprep.subr.mxu0 0.0
    %5846 = vmatpush1.xpose.msra.mxu0 0.0
    %5847 = vmatprep.subr.mxu0 0.0
    %5848 = vmatpush1.xpose.msra.mxu0 0.0
    %5849 = vmatprep.subr.mxu0 0.0
    %5850 = vmatpush1.xpose.msra.mxu0 0.0
    %5851 = vmatprep.subr.mxu0 0.0
    %5852 = vmatpush1.xpose.msra.mxu0 0.0
    %5853 = vmatprep.subr.mxu0 0.0
    %5854 = vmatpush1.xpose.msra.mxu0 0.0
    %5855 = vmatprep.subr.mxu0 0.0
    %5856 = vmatpush1.xpose.msra.mxu0 0.0
    %5857 = vmatprep.subr.mxu0 0.0
    %5858 = vmatpush1.xpose.msra.mxu0 0.0
    %5859 = vmatprep.subr.mxu0 0.0
    %5860 = vmatpush1.xpose.msra.mxu0 0.0
    %5861 = vmatprep.subr.mxu0 0.0
    %5862 = vmatpush1.xpose.msra.mxu0 0.0
    %5863 = vmatprep.subr.mxu0 0.0
    %5864 = vmatpush1.xpose.msra.mxu0 0.0
    %5865 = vmatprep.subr.mxu0 0.0
    %5866 = vmatpush1.xpose.msra.mxu0 0.0
    %5867 = vmatprep.subr.mxu0 0.0
    %5868 = vmatpush1.xpose.msra.mxu0 0.0
    %5869 = vmatprep.subr.mxu0 0.0
    %5870 = vmatpush1.xpose.msra.mxu0 0.0
    %5871 = vmatprep.subr.mxu0 0.0
    %5872 = vmatpush1.xpose.msra.mxu0 0.0
    %5873 = vmatprep.subr.mxu0 0.0
    %5874 = vmatpush1.xpose.msra.mxu0 0.0
    %5875 = vmatprep.subr.mxu0 0.0
    %5876 = vmatpush1.xpose.msra.mxu0 0.0
    %5877 = vmatprep.subr.mxu0 0.0
    %5878 = vmatpush1.xpose.msra.mxu0 0.0
    %5879 = vmatprep.subr.mxu0 0.0
    %5880 = vmatpush1.xpose.msra.mxu0 0.0
    %5881 = vmatprep.subr.mxu0 0.0
    %5882 = vmatpush1.xpose.msra.mxu0 0.0
    %5883 = vmatprep.subr.mxu0 0.0
    %5884 = vmatpush1.xpose.msra.mxu0 0.0
    %5885 = vmatprep.subr.mxu0 0.0
    %5886 = vmatpush1.xpose.msra.mxu0 0.0
    %5887 = vmatprep.subr.mxu0 0.0
    %5888 = vmatpush1.xpose.msra.mxu0 0.0
    %5889 = vmatprep.subr.mxu0 0.0
    %5890 = vmatpush1.xpose.msra.mxu0 0.0
    %5891 = vmatprep.mubr.f32.mxu0 0.0
    %5892 = vmatmul.mubr.f32.gmra.mrb[0].mxu0 %v5823
    %v5893 = vpop.f32.mrb[0].mxu0
    %v5894 = vadd.f32 %v5821, %v5893
    %v5895 = vpop.f32.mrb[0].mxu0
    %5896 = vdwg.mxu0
    %v5897 = vadd.f32 %v5768, %v654
    %v5898 = vadd.f32 %v5894, %v658
    %v5899 = vsel %vm343, %v5897, -inf
    %5900 = vmax.xlane.f32.xlu0 %v5899
    %v5901 = vpop.xlane.xlu0 %5900
    %v5902 = vsel %vm343, %v5898, -inf
    %5903 = vmax.xlane.f32.xlu0 %v5902
    %v5904 = vpop.xlane.xlu0 %5903
    %v5905 = vsub.f32 %v5897, %v5901
    %v5906 = vsub.f32 %v5898, %v5904
    %v5907 = vmul.f32 %v5905, 1.442695
    %v5908 = vpow.pop %v5907
    %v5909 = vmul.f32 %v5906, 1.442695
    %v5910 = vpow.pop %v5909
    %v5911 = vsel %vm343, %v5908, 0.0
    %5912 = vadd.xlane.f32.xlu0 %v5911
    %v5913 = vpop.xlane.xlu0 %5912
    %v5914 = vsel %vm343, %v5910, 0.0
    %5915 = vadd.xlane.f32.xlu0 %v5914
    %v5916 = vpop.xlane.xlu0 %5915
    %v5917 = vrcp.pop %v5913
    %v5918 = vmul.f32 %v5908, %v5917
    %v5919 = vrcp.pop %v5916
    %v5920 = vmul.f32 %v5910, %v5919
    %s5921 = scalar_lea.vmem %s13, 88
    %5922 = vst.msk [vmem:[%s5921] sm:$0xff] %vm343, %v5918
    %s5923 = scalar_lea.vmem %s13, 120
    %5924 = vst.msk [vmem:[%s5923] sm:$0xff] %vm343, %v5920
    %5925 = vrot.lane.b32.xlu0 %v3334, 40
    %v5926 = vpop.permute.xlu0 %5925
    %v5929 = vsel %vm343, %v5918, 0
    %5931 = vmatprep.subr.mxu0 0.0
    %5932 = vmatpush1.msra.mxu0 %v5926
    %5933 = vmatprep.subr.mxu0 0.0
    %5934 = vmatpush1.msra.mxu0 0.0
    %5935 = vmatprep.subr.mxu0 0.0
    %5936 = vmatpush1.msra.mxu0 0.0
    %5937 = vmatprep.subr.mxu0 0.0
    %5938 = vmatpush1.msra.mxu0 0.0
    %5939 = vmatprep.subr.mxu0 0.0
    %5940 = vmatpush1.msra.mxu0 0.0
    %5941 = vmatprep.subr.mxu0 0.0
    %5942 = vmatpush1.msra.mxu0 0.0
    %5943 = vmatprep.subr.mxu0 0.0
    %5944 = vmatpush1.msra.mxu0 0.0
    %5945 = vmatprep.subr.mxu0 0.0
    %5946 = vmatpush1.msra.mxu0 0.0
    %5947 = vmatprep.subr.mxu0 0.0
    %5948 = vmatpush1.msra.mxu0 0.0
    %5949 = vmatprep.subr.mxu0 0.0
    %5950 = vmatpush1.msra.mxu0 0.0
    %5951 = vmatprep.subr.mxu0 0.0
    %5952 = vmatpush1.msra.mxu0 0.0
    %5953 = vmatprep.subr.mxu0 0.0
    %5954 = vmatpush1.msra.mxu0 0.0
    %5955 = vmatprep.subr.mxu0 0.0
    %5956 = vmatpush1.msra.mxu0 0.0
    %5957 = vmatprep.subr.mxu0 0.0
    %5958 = vmatpush1.msra.mxu0 0.0
    %5959 = vmatprep.subr.mxu0 0.0
    %5960 = vmatpush1.msra.mxu0 0.0
    %5961 = vmatprep.subr.mxu0 0.0
    %5962 = vmatpush1.msra.mxu0 0.0
    %5963 = vmatprep.subr.mxu0 0.0
    %5964 = vmatpush1.msra.mxu0 0.0
    %5965 = vmatprep.subr.mxu0 0.0
    %5966 = vmatpush1.msra.mxu0 0.0
    %5967 = vmatprep.subr.mxu0 0.0
    %5968 = vmatpush1.msra.mxu0 0.0
    %5969 = vmatprep.subr.mxu0 0.0
    %5970 = vmatpush1.msra.mxu0 0.0
    %5971 = vmatprep.subr.mxu0 0.0
    %5972 = vmatpush1.msra.mxu0 0.0
    %5973 = vmatprep.subr.mxu0 0.0
    %5974 = vmatpush1.msra.mxu0 0.0
    %5975 = vmatprep.subr.mxu0 0.0
    %5976 = vmatpush1.msra.mxu0 0.0
    %5977 = vmatprep.subr.mxu0 0.0
    %5978 = vmatpush1.msra.mxu0 0.0
    %5979 = vmatprep.subr.mxu0 0.0
    %5980 = vmatpush1.msra.mxu0 0.0
    %5981 = vmatprep.subr.mxu0 0.0
    %5982 = vmatpush1.msra.mxu0 0.0
    %5983 = vmatprep.subr.mxu0 0.0
    %5984 = vmatpush1.msra.mxu0 0.0
    %5985 = vmatprep.subr.mxu0 0.0
    %5986 = vmatpush1.msra.mxu0 0.0
    %5987 = vmatprep.subr.mxu0 0.0
    %5988 = vmatpush1.msra.mxu0 0.0
    %5989 = vmatprep.subr.mxu0 0.0
    %5990 = vmatpush1.msra.mxu0 0.0
    %5991 = vmatprep.subr.mxu0 0.0
    %5992 = vmatpush1.msra.mxu0 0.0
    %5993 = vmatprep.subr.mxu0 0.0
    %5994 = vmatpush1.msra.mxu0 0.0
    %5995 = vmatprep.mubr.f32.mxu0 0.0
    %5996 = vmatmul.mubr.f32.gmra.mrb[0].mxu0 %v5929
    %v5997 = vpop.f32.mrb[0].mxu0
    %v5998 = vadd.f32 0.0, %v5997
    %v5999 = vpop.f32.mrb[0].mxu0
    %6000 = vdwg.mxu0
    %6001 = vrot.lane.b32.xlu0 %v3339, 40
    %v6002 = vpop.permute.xlu0 %6001
    %v6005 = vsel %vm343, %v5920, 0
    %6007 = vmatprep.subr.mxu0 0.0
    %6008 = vmatpush1.msra.mxu0 %v6002
    %6009 = vmatprep.subr.mxu0 0.0
    %6010 = vmatpush1.msra.mxu0 0.0
    %6011 = vmatprep.subr.mxu0 0.0
    %6012 = vmatpush1.msra.mxu0 0.0
    %6013 = vmatprep.subr.mxu0 0.0
    %6014 = vmatpush1.msra.mxu0 0.0
    %6015 = vmatprep.subr.mxu0 0.0
    %6016 = vmatpush1.msra.mxu0 0.0
    %6017 = vmatprep.subr.mxu0 0.0
    %6018 = vmatpush1.msra.mxu0 0.0
    %6019 = vmatprep.subr.mxu0 0.0
    %6020 = vmatpush1.msra.mxu0 0.0
    %6021 = vmatprep.subr.mxu0 0.0
    %6022 = vmatpush1.msra.mxu0 0.0
    %6023 = vmatprep.subr.mxu0 0.0
    %6024 = vmatpush1.msra.mxu0 0.0
    %6025 = vmatprep.subr.mxu0 0.0
    %6026 = vmatpush1.msra.mxu0 0.0
    %6027 = vmatprep.subr.mxu0 0.0
    %6028 = vmatpush1.msra.mxu0 0.0
    %6029 = vmatprep.subr.mxu0 0.0
    %6030 = vmatpush1.msra.mxu0 0.0
    %6031 = vmatprep.subr.mxu0 0.0
    %6032 = vmatpush1.msra.mxu0 0.0
    %6033 = vmatprep.subr.mxu0 0.0
    %6034 = vmatpush1.msra.mxu0 0.0
    %6035 = vmatprep.subr.mxu0 0.0
    %6036 = vmatpush1.msra.mxu0 0.0
    %6037 = vmatprep.subr.mxu0 0.0
    %6038 = vmatpush1.msra.mxu0 0.0
    %6039 = vmatprep.subr.mxu0 0.0
    %6040 = vmatpush1.msra.mxu0 0.0
    %6041 = vmatprep.subr.mxu0 0.0
    %6042 = vmatpush1.msra.mxu0 0.0
    %6043 = vmatprep.subr.mxu0 0.0
    %6044 = vmatpush1.msra.mxu0 0.0
    %6045 = vmatprep.subr.mxu0 0.0
    %6046 = vmatpush1.msra.mxu0 0.0
    %6047 = vmatprep.subr.mxu0 0.0
    %6048 = vmatpush1.msra.mxu0 0.0
    %6049 = vmatprep.subr.mxu0 0.0
    %6050 = vmatpush1.msra.mxu0 0.0
    %6051 = vmatprep.subr.mxu0 0.0
    %6052 = vmatpush1.msra.mxu0 0.0
    %6053 = vmatprep.subr.mxu0 0.0
    %6054 = vmatpush1.msra.mxu0 0.0
    %6055 = vmatprep.subr.mxu0 0.0
    %6056 = vmatpush1.msra.mxu0 0.0
    %6057 = vmatprep.subr.mxu0 0.0
    %6058 = vmatpush1.msra.mxu0 0.0
    %6059 = vmatprep.subr.mxu0 0.0
    %6060 = vmatpush1.msra.mxu0 0.0
    %6061 = vmatprep.subr.mxu0 0.0
    %6062 = vmatpush1.msra.mxu0 0.0
    %6063 = vmatprep.subr.mxu0 0.0
    %6064 = vmatpush1.msra.mxu0 0.0
    %6065 = vmatprep.subr.mxu0 0.0
    %6066 = vmatpush1.msra.mxu0 0.0
    %6067 = vmatprep.subr.mxu0 0.0
    %6068 = vmatpush1.msra.mxu0 0.0
    %6069 = vmatprep.subr.mxu0 0.0
    %6070 = vmatpush1.msra.mxu0 0.0
    %6071 = vmatprep.mubr.f32.mxu0 0.0
    %6072 = vmatmul.mubr.f32.gmra.mrb[0].mxu0 %v6005
    %v6073 = vpop.f32.mrb[0].mxu0
    %v6074 = vadd.f32 0.0, %v6073
    %v6075 = vpop.f32.mrb[0].mxu0
    %6076 = vdwg.mxu0
    %s6077 = scalar_lea.vmem %s4, 56
    %v6078 = vld [vmem:[%s6077] sm:$0xff]
    %v6080 = vsel %vm343, %v5998, 0
    %v6083 = vsel %vm343, %v6074, 0
    %6085 = vmatprep.subr.mxu0 0.0
    %6086 = vmatpush1.msra.mxu0 %v6078
    %6087 = vmatprep.subr.mxu0 0.0
    %6088 = vmatpush1.msra.mxu0 0.0
    %6089 = vmatprep.subr.mxu0 0.0
    %6090 = vmatpush1.msra.mxu0 0.0
    %6091 = vmatprep.subr.mxu0 0.0
    %6092 = vmatpush1.msra.mxu0 0.0
    %6093 = vmatprep.subr.mxu0 0.0
    %6094 = vmatpush1.msra.mxu0 0.0
    %6095 = vmatprep.subr.mxu0 0.0
    %6096 = vmatpush1.msra.mxu0 0.0
    %6097 = vmatprep.subr.mxu0 0.0
    %6098 = vmatpush1.msra.mxu0 0.0
    %6099 = vmatprep.subr.mxu0 0.0
    %6100 = vmatpush1.msra.mxu0 0.0
    %6101 = vmatprep.subr.mxu0 0.0
    %6102 = vmatpush1.msra.mxu0 0.0
    %6103 = vmatprep.subr.mxu0 0.0
    %6104 = vmatpush1.msra.mxu0 0.0
    %6105 = vmatprep.subr.mxu0 0.0
    %6106 = vmatpush1.msra.mxu0 0.0
    %6107 = vmatprep.subr.mxu0 0.0
    %6108 = vmatpush1.msra.mxu0 0.0
    %6109 = vmatprep.subr.mxu0 0.0
    %6110 = vmatpush1.msra.mxu0 0.0
    %6111 = vmatprep.subr.mxu0 0.0
    %6112 = vmatpush1.msra.mxu0 0.0
    %6113 = vmatprep.subr.mxu0 0.0
    %6114 = vmatpush1.msra.mxu0 0.0
    %6115 = vmatprep.subr.mxu0 0.0
    %6116 = vmatpush1.msra.mxu0 0.0
    %6117 = vmatprep.subr.mxu0 0.0
    %6118 = vmatpush1.msra.mxu0 0.0
    %6119 = vmatprep.subr.mxu0 0.0
    %6120 = vmatpush1.msra.mxu0 0.0
    %6121 = vmatprep.subr.mxu0 0.0
    %6122 = vmatpush1.msra.mxu0 0.0
    %6123 = vmatprep.subr.mxu0 0.0
    %6124 = vmatpush1.msra.mxu0 0.0
    %6125 = vmatprep.subr.mxu0 0.0
    %6126 = vmatpush1.msra.mxu0 0.0
    %6127 = vmatprep.subr.mxu0 0.0
    %6128 = vmatpush1.msra.mxu0 0.0
    %6129 = vmatprep.subr.mxu0 0.0
    %6130 = vmatpush1.msra.mxu0 0.0
    %6131 = vmatprep.subr.mxu0 0.0
    %6132 = vmatpush1.msra.mxu0 0.0
    %6133 = vmatprep.subr.mxu0 0.0
    %6134 = vmatpush1.msra.mxu0 0.0
    %6135 = vmatprep.subr.mxu0 0.0
    %6136 = vmatpush1.msra.mxu0 0.0
    %6137 = vmatprep.subr.mxu0 0.0
    %6138 = vmatpush1.msra.mxu0 0.0
    %6139 = vmatprep.subr.mxu0 0.0
    %6140 = vmatpush1.msra.mxu0 0.0
    %6141 = vmatprep.subr.mxu0 0.0
    %6142 = vmatpush1.msra.mxu0 0.0
    %6143 = vmatprep.subr.mxu0 0.0
    %6144 = vmatpush1.msra.mxu0 0.0
    %6145 = vmatprep.subr.mxu0 0.0
    %6146 = vmatpush1.msra.mxu0 0.0
    %6147 = vmatprep.subr.mxu0 0.0
    %6148 = vmatpush1.msra.mxu0 0.0
    %6149 = vmatprep.mubr.f32.mxu0 0.0
    %6150 = vmatmul.mubr.f32.gmra.mrb[0].mxu0 %v6080
    %v6151 = vpop.f32.mrb[0].mxu0
    %v6152 = vadd.f32 0.0, %v6151
    %v6153 = vpop.f32.mrb[0].mxu0
    %6154 = vmatprep.mubr.f32.mxu0 0.0
    %6155 = vmatmul.mubr.f32.gmra.mrb[0].mxu0 %v6083
    %v6156 = vpop.f32.mrb[0].mxu0
    %v6157 = vadd.f32 0.0, %v6156
    %v6158 = vpop.f32.mrb[0].mxu0
    %6159 = vdwg.mxu0
    %v6160 = vadd.f32 %v5474, %v6152
    %v6161 = vadd.f32 %v5475, %v6157
    %v6162 = vlaneseq
    %v6163 = vshrl.u32 %v6162, 7
    %v6164 = vsub.s32 1, %v6163
    %v6165 = vrot.slane %v3251, %v6164
    %v6166 = vadd.f32 %v6160, %v6165
    %v6167 = vadd.f32 %v6161, %v6165
    %v6168 = vadd.f32 %v6166, %v3248
    %v6169 = vadd.f32 %v6167, %v3249
    %v6170 = vsel %vm57, %v6168, 0.0
    %6171 = vadd.xlane.f32.xlu0 %v6170
    %v6172 = vpop.xlane.xlu0 %6171
    %v6173 = vsel %vm57, %v6169, 0.0
    %6174 = vadd.xlane.f32.xlu0 %v6173
    %v6175 = vpop.xlane.xlu0 %6174
    %v6176 = vmul.f32 %v6172, %v2992
    %v6177 = vmul.f32 %v6175, %v2992
    %v6178 = vsub.f32 %v6168, %v6176
    %v6179 = vsub.f32 %v6169, %v6177
    %v6180 = vmul.f32 %v6178, %v6178
    %v6181 = vmul.f32 %v6179, %v6179
    %v6182 = vsel %vm57, %v6180, 0.0
    %6183 = vadd.xlane.f32.xlu0 %v6182
    %v6184 = vpop.xlane.xlu0 %6183
    %v6185 = vsel %vm57, %v6181, 0.0
    %6186 = vadd.xlane.f32.xlu0 %v6185
    %v6187 = vpop.xlane.xlu0 %6186
    %v6188 = vmul.f32 %v6184, %v2992
    %v6189 = vmul.f32 %v6187, %v2992
    %v6190 = vadd.f32 %v6188, 1e-05
    %v6191 = vadd.f32 %v6189, 1e-05
    %v6192 = vrsqrt.pop %v6190
    %v6193 = vrsqrt.pop %v6191
    %v6194 = vmul.f32 %v6178, %v6192
    %v6195 = vmul.f32 %v6179, %v6193
    %v6196 = vlaneseq
    %v6197 = vshrl.u32 %v6196, 7
    %v6198 = vsub.s32 4, %v6197
    %v6199 = vrot.slane %v3251, %v6198
    %v6200 = vmul.f32 %v6194, %v6199
    %v6201 = vmul.f32 %v6195, %v6199
    %v6202 = vlaneseq
    %v6203 = vshrl.u32 %v6202, 7
    %v6204 = vsub.s32 5, %v6203
    %v6205 = vrot.slane %v3251, %v6204
    %v6206 = vadd.f32 %v6200, %v6205
    %v6207 = vadd.f32 %v6201, %v6205
    %s6208 = scalar_lea.vmem %s5, 32
    %v6209 = vld [vmem:[%s6208] sm:$0xff]
    %v6210 = vld [vmem:[%s6208 + $0x8] sm:$0xff]
    %v6211 = vld [vmem:[%s6208 + $0x10] sm:$0xff]
    %v6212 = vld [vmem:[%s6208 + $0x18] sm:$0xff]
    %v6213 = vlaneseq
    %v6214 = vshrl.u32 %v6213, 7
    %v6215 = vsub.s32 2, %v6214
    %v6216 = vrot.slane %v3251, %v6215
    %v6218 = vsel %vm57, %v6206, 0
    %v6221 = vsel %vm57, %v6207, 0
    %6223 = vmatprep.subr.mxu0 0.0
    %6224 = vmatpush1.msra.mxu0 %v6209
    %6225 = vmatprep.subr.mxu0 0.0
    %6226 = vmatpush1.msra.mxu0 %v6210
    %6227 = vmatprep.subr.mxu0 0.0
    %6228 = vmatpush1.msra.mxu0 %v6211
    %6229 = vmatprep.subr.mxu0 0.0
    %6230 = vmatpush1.msra.mxu0 %v6212
    %6231 = vmatprep.subr.mxu0 0.0
    %6232 = vmatpush1.msra.mxu0 0.0
    %6233 = vmatprep.subr.mxu0 0.0
    %6234 = vmatpush1.msra.mxu0 0.0
    %6235 = vmatprep.subr.mxu0 0.0
    %6236 = vmatpush1.msra.mxu0 0.0
    %6237 = vmatprep.subr.mxu0 0.0
    %6238 = vmatpush1.msra.mxu0 0.0
    %6239 = vmatprep.subr.mxu0 0.0
    %6240 = vmatpush1.msra.mxu0 0.0
    %6241 = vmatprep.subr.mxu0 0.0
    %6242 = vmatpush1.msra.mxu0 0.0
    %6243 = vmatprep.subr.mxu0 0.0
    %6244 = vmatpush1.msra.mxu0 0.0
    %6245 = vmatprep.subr.mxu0 0.0
    %6246 = vmatpush1.msra.mxu0 0.0
    %6247 = vmatprep.subr.mxu0 0.0
    %6248 = vmatpush1.msra.mxu0 0.0
    %6249 = vmatprep.subr.mxu0 0.0
    %6250 = vmatpush1.msra.mxu0 0.0
    %6251 = vmatprep.subr.mxu0 0.0
    %6252 = vmatpush1.msra.mxu0 0.0
    %6253 = vmatprep.subr.mxu0 0.0
    %6254 = vmatpush1.msra.mxu0 0.0
    %6255 = vmatprep.subr.mxu0 0.0
    %6256 = vmatpush1.msra.mxu0 0.0
    %6257 = vmatprep.subr.mxu0 0.0
    %6258 = vmatpush1.msra.mxu0 0.0
    %6259 = vmatprep.subr.mxu0 0.0
    %6260 = vmatpush1.msra.mxu0 0.0
    %6261 = vmatprep.subr.mxu0 0.0
    %6262 = vmatpush1.msra.mxu0 0.0
    %6263 = vmatprep.subr.mxu0 0.0
    %6264 = vmatpush1.msra.mxu0 0.0
    %6265 = vmatprep.subr.mxu0 0.0
    %6266 = vmatpush1.msra.mxu0 0.0
    %6267 = vmatprep.subr.mxu0 0.0
    %6268 = vmatpush1.msra.mxu0 0.0
    %6269 = vmatprep.subr.mxu0 0.0
    %6270 = vmatpush1.msra.mxu0 0.0
    %6271 = vmatprep.subr.mxu0 0.0
    %6272 = vmatpush1.msra.mxu0 0.0
    %6273 = vmatprep.subr.mxu0 0.0
    %6274 = vmatpush1.msra.mxu0 0.0
    %6275 = vmatprep.subr.mxu0 0.0
    %6276 = vmatpush1.msra.mxu0 0.0
    %6277 = vmatprep.subr.mxu0 0.0
    %6278 = vmatpush1.msra.mxu0 0.0
    %6279 = vmatprep.subr.mxu0 0.0
    %6280 = vmatpush1.msra.mxu0 0.0
    %6281 = vmatprep.subr.mxu0 0.0
    %6282 = vmatpush1.msra.mxu0 0.0
    %6283 = vmatprep.subr.mxu0 0.0
    %6284 = vmatpush1.msra.mxu0 0.0
    %6285 = vmatprep.subr.mxu0 0.0
    %6286 = vmatpush1.msra.mxu0 0.0
    %6287 = vmatprep.mubr.f32.mxu0 0.0
    %6288 = vmatmul.mubr.f32.gmra.mrb[0].mxu0 %v6218
    %v6289 = vpop.f32.mrb[0].mxu0
    %v6290 = vadd.f32 %v6216, %v6289
    %v6291 = vpop.f32.mrb[0].mxu0
    %6292 = vmatprep.mubr.f32.mxu0 0.0
    %6293 = vmatmul.mubr.f32.gmra.mrb[0].mxu0 %v6221
    %v6294 = vpop.f32.mrb[0].mxu0
    %v6295 = vadd.f32 %v6216, %v6294
    %v6296 = vpop.f32.mrb[0].mxu0
    %6297 = vdwg.mxu0
    %v6298 = vmax.f32 %v6290, 0.0
    %v6299 = vmax.f32 %v6295, 0.0
    %s6300 = scalar_lea.vmem %s6, 64
    %v6301 = vld [vmem:[%s6300] sm:$0xff]
    %v6302 = vld [vmem:[%s6300 + $0x8] sm:$0xff]
    %v6303 = vld [vmem:[%s6300 + $0x10] sm:$0xff]
    %v6304 = vld [vmem:[%s6300 + $0x18] sm:$0xff]
    %v6305 = vld [vmem:[%s6300 + $0x20] sm:$0xff]
    %v6306 = vld [vmem:[%s6300 + $0x28] sm:$0xff]
    %v6307 = vld [vmem:[%s6300 + $0x30] sm:$0xff]
    %v6308 = vld [vmem:[%s6300 + $0x38] sm:$0xff]
    %v6309 = vlaneseq
    %v6310 = vshrl.u32 %v6309, 7
    %v6311 = vsub.s32 3, %v6310
    %v6312 = vrot.slane %v3251, %v6311
    %v6314 = vsel %vm3128, %v6298, 0
    %v6317 = vsel %vm3128, %v6299, 0
    %6319 = vmatprep.subr.mxu0 0.0
    %6320 = vmatpush1.msra.mxu0 %v6301
    %6321 = vmatprep.subr.mxu0 0.0
    %6322 = vmatpush1.msra.mxu0 %v6302
    %6323 = vmatprep.subr.mxu0 0.0
    %6324 = vmatpush1.msra.mxu0 %v6303
    %6325 = vmatprep.subr.mxu0 0.0
    %6326 = vmatpush1.msra.mxu0 %v6304
    %6327 = vmatprep.subr.mxu0 0.0
    %6328 = vmatpush1.msra.mxu0 %v6305
    %6329 = vmatprep.subr.mxu0 0.0
    %6330 = vmatpush1.msra.mxu0 %v6306
    %6331 = vmatprep.subr.mxu0 0.0
    %6332 = vmatpush1.msra.mxu0 %v6307
    %6333 = vmatprep.subr.mxu0 0.0
    %6334 = vmatpush1.msra.mxu0 %v6308
    %6335 = vmatprep.subr.mxu0 0.0
    %6336 = vmatpush1.msra.mxu0 0.0
    %6337 = vmatprep.subr.mxu0 0.0
    %6338 = vmatpush1.msra.mxu0 0.0
    %6339 = vmatprep.subr.mxu0 0.0
    %6340 = vmatpush1.msra.mxu0 0.0
    %6341 = vmatprep.subr.mxu0 0.0
    %6342 = vmatpush1.msra.mxu0 0.0
    %6343 = vmatprep.subr.mxu0 0.0
    %6344 = vmatpush1.msra.mxu0 0.0
    %6345 = vmatprep.subr.mxu0 0.0
    %6346 = vmatpush1.msra.mxu0 0.0
    %6347 = vmatprep.subr.mxu0 0.0
    %6348 = vmatpush1.msra.mxu0 0.0
    %6349 = vmatprep.subr.mxu0 0.0
    %6350 = vmatpush1.msra.mxu0 0.0
    %6351 = vmatprep.subr.mxu0 0.0
    %6352 = vmatpush1.msra.mxu0 0.0
    %6353 = vmatprep.subr.mxu0 0.0
    %6354 = vmatpush1.msra.mxu0 0.0
    %6355 = vmatprep.subr.mxu0 0.0
    %6356 = vmatpush1.msra.mxu0 0.0
    %6357 = vmatprep.subr.mxu0 0.0
    %6358 = vmatpush1.msra.mxu0 0.0
    %6359 = vmatprep.subr.mxu0 0.0
    %6360 = vmatpush1.msra.mxu0 0.0
    %6361 = vmatprep.subr.mxu0 0.0
    %6362 = vmatpush1.msra.mxu0 0.0
    %6363 = vmatprep.subr.mxu0 0.0
    %6364 = vmatpush1.msra.mxu0 0.0
    %6365 = vmatprep.subr.mxu0 0.0
    %6366 = vmatpush1.msra.mxu0 0.0
    %6367 = vmatprep.subr.mxu0 0.0
    %6368 = vmatpush1.msra.mxu0 0.0
    %6369 = vmatprep.subr.mxu0 0.0
    %6370 = vmatpush1.msra.mxu0 0.0
    %6371 = vmatprep.subr.mxu0 0.0
    %6372 = vmatpush1.msra.mxu0 0.0
    %6373 = vmatprep.subr.mxu0 0.0
    %6374 = vmatpush1.msra.mxu0 0.0
    %6375 = vmatprep.subr.mxu0 0.0
    %6376 = vmatpush1.msra.mxu0 0.0
    %6377 = vmatprep.subr.mxu0 0.0
    %6378 = vmatpush1.msra.mxu0 0.0
    %6379 = vmatprep.subr.mxu0 0.0
    %6380 = vmatpush1.msra.mxu0 0.0
    %6381 = vmatprep.subr.mxu0 0.0
    %6382 = vmatpush1.msra.mxu0 0.0
    %6383 = vmatprep.mubr.f32.mxu0 0.0
    %6384 = vmatmul.mubr.f32.gmra.mrb[0].mxu0 %v6314
    %v6385 = vpop.f32.mrb[0].mxu0
    %v6386 = vadd.f32 %v6312, %v6385
    %v6387 = vpop.f32.mrb[0].mxu0
    %6388 = vmatprep.mubr.f32.mxu0 0.0
    %6389 = vmatmul.mubr.f32.gmra.mrb[0].mxu0 %v6317
    %v6390 = vpop.f32.mrb[0].mxu0
    %v6391 = vadd.f32 %v6312, %v6390
    %v6392 = vpop.f32.mrb[0].mxu0
    %6393 = vdwg.mxu0
    %v6394 = vadd.f32 %v6386, %v6206
    %v6395 = vadd.f32 %v6391, %v6207
    %v6396 = vsel %vm57, %v6394, 0.0
    %6397 = vadd.xlane.f32.xlu0 %v6396
    %v6398 = vpop.xlane.xlu0 %6397
    %v6399 = vsel %vm57, %v6395, 0.0
    %6400 = vadd.xlane.f32.xlu0 %v6399
    %v6401 = vpop.xlane.xlu0 %6400
    %v6402 = vmul.f32 %v6398, %v2992
    %v6403 = vmul.f32 %v6401, %v2992
    %v6404 = vsub.f32 %v6394, %v6402
    %v6405 = vsub.f32 %v6395, %v6403
    %v6406 = vmul.f32 %v6404, %v6404
    %v6407 = vmul.f32 %v6405, %v6405
    %v6408 = vsel %vm57, %v6406, 0.0
    %6409 = vadd.xlane.f32.xlu0 %v6408
    %v6410 = vpop.xlane.xlu0 %6409
    %v6411 = vsel %vm57, %v6407, 0.0
    %6412 = vadd.xlane.f32.xlu0 %v6411
    %v6413 = vpop.xlane.xlu0 %6412
    %v6414 = vmul.f32 %v6410, %v2992
    %v6415 = vmul.f32 %v6413, %v2992
    %v6416 = vadd.f32 %v6414, 1e-05
    %v6417 = vadd.f32 %v6415, 1e-05
    %v6418 = vrsqrt.pop %v6416
    %v6419 = vrsqrt.pop %v6417
    %v6420 = vmul.f32 %v6404, %v6418
    %v6421 = vmul.f32 %v6405, %v6419
    %v6422 = vlaneseq
    %v6423 = vshrl.u32 %v6422, 7
    %v6424 = vsub.s32 6, %v6423
    %v6425 = vrot.slane %v3251, %v6424
    %v6426 = vmul.f32 %v6420, %v6425
    %v6427 = vmul.f32 %v6421, %v6425
    %v6428 = vlaneseq
    %v6429 = vshrl.u32 %v6428, 7
    %v6430 = vsub.s32 7, %v6429
    %v6431 = vrot.slane %v3251, %v6430
    %v6432 = vadd.f32 %v6426, %v6431
    %v6433 = vadd.f32 %v6427, %v6431
    %v6434 = vsel %vm57, %v6432, 0.0
    %v6435 = vrot.slane %v6434, 4
    %v6436 = vadd.f32 %v6434, %v6435
    %v6437 = vrot.slane %v6436, 2
    %v6438 = vadd.f32 %v6436, %v6437
    %v6439 = vrot.slane %v6438, 1
    %v6440 = vadd.f32 %v6438, %v6439
    %v6441 = vsel %vm57, %v6433, 0.0
    %v6442 = vrot.slane %v6441, 4
    %v6443 = vadd.f32 %v6441, %v6442
    %v6444 = vrot.slane %v6443, 2
    %v6445 = vadd.f32 %v6443, %v6444
    %v6446 = vrot.slane %v6445, 1
    %v6447 = vadd.f32 %v6445, %v6446
    %v6448 = vrcp.pop 8.0
    %v6449 = vmul.f32 %v6440, %v6448
    %v6450 = vmul.f32 %v6447, %v6448
    %v6451 = vld [vmem:[%s8] sm:$0xff]
    %v6452 = vld [vmem:[%s8 + $0x8] sm:$0xff]
    %v6453 = vld [vmem:[%s8 + $0x10] sm:$0xff]
    %v6454 = vld [vmem:[%s8 + $0x18] sm:$0xff]
    %v6455 = vld [vmem:[%s9] sm:$0x1]
    %v6457 = vlaneseq
    %v6458 = vshrl.u32 %v6457, 7
    %v6459 = vsub.s32 0, %v6458
    %v6460 = vrot.slane %v6455, %v6459
    %v6464 = vsel %vm436, %v6450, %v6449
    %v6465 = vsel %vm57, %v6464, 0
    %6467 = vmatprep.subr.mxu0 0.0
    %6468 = vmatpush1.msra.mxu0 %v6451
    %6469 = vmatprep.subr.mxu0 0.0
    %6470 = vmatpush1.msra.mxu0 %v6452
    %6471 = vmatprep.subr.mxu0 0.0
    %6472 = vmatpush1.msra.mxu0 %v6453
    %6473 = vmatprep.subr.mxu0 0.0
    %6474 = vmatpush1.msra.mxu0 %v6454
    %6475 = vmatprep.subr.mxu0 0.0
    %6476 = vmatpush1.msra.mxu0 0.0
    %6477 = vmatprep.subr.mxu0 0.0
    %6478 = vmatpush1.msra.mxu0 0.0
    %6479 = vmatprep.subr.mxu0 0.0
    %6480 = vmatpush1.msra.mxu0 0.0
    %6481 = vmatprep.subr.mxu0 0.0
    %6482 = vmatpush1.msra.mxu0 0.0
    %6483 = vmatprep.subr.mxu0 0.0
    %6484 = vmatpush1.msra.mxu0 0.0
    %6485 = vmatprep.subr.mxu0 0.0
    %6486 = vmatpush1.msra.mxu0 0.0
    %6487 = vmatprep.subr.mxu0 0.0
    %6488 = vmatpush1.msra.mxu0 0.0
    %6489 = vmatprep.subr.mxu0 0.0
    %6490 = vmatpush1.msra.mxu0 0.0
    %6491 = vmatprep.subr.mxu0 0.0
    %6492 = vmatpush1.msra.mxu0 0.0
    %6493 = vmatprep.subr.mxu0 0.0
    %6494 = vmatpush1.msra.mxu0 0.0
    %6495 = vmatprep.subr.mxu0 0.0
    %6496 = vmatpush1.msra.mxu0 0.0
    %6497 = vmatprep.subr.mxu0 0.0
    %6498 = vmatpush1.msra.mxu0 0.0
    %6499 = vmatprep.subr.mxu0 0.0
    %6500 = vmatpush1.msra.mxu0 0.0
    %6501 = vmatprep.subr.mxu0 0.0
    %6502 = vmatpush1.msra.mxu0 0.0
    %6503 = vmatprep.subr.mxu0 0.0
    %6504 = vmatpush1.msra.mxu0 0.0
    %6505 = vmatprep.subr.mxu0 0.0
    %6506 = vmatpush1.msra.mxu0 0.0
    %6507 = vmatprep.subr.mxu0 0.0
    %6508 = vmatpush1.msra.mxu0 0.0
    %6509 = vmatprep.subr.mxu0 0.0
    %6510 = vmatpush1.msra.mxu0 0.0
    %6511 = vmatprep.subr.mxu0 0.0
    %6512 = vmatpush1.msra.mxu0 0.0
    %6513 = vmatprep.subr.mxu0 0.0
    %6514 = vmatpush1.msra.mxu0 0.0
    %6515 = vmatprep.subr.mxu0 0.0
    %6516 = vmatpush1.msra.mxu0 0.0
    %6517 = vmatprep.subr.mxu0 0.0
    %6518 = vmatpush1.msra.mxu0 0.0
    %6519 = vmatprep.subr.mxu0 0.0
    %6520 = vmatpush1.msra.mxu0 0.0
    %6521 = vmatprep.subr.mxu0 0.0
    %6522 = vmatpush1.msra.mxu0 0.0
    %6523 = vmatprep.subr.mxu0 0.0
    %6524 = vmatpush1.msra.mxu0 0.0
    %6525 = vmatprep.subr.mxu0 0.0
    %6526 = vmatpush1.msra.mxu0 0.0
    %6527 = vmatprep.subr.mxu0 0.0
    %6528 = vmatpush1.msra.mxu0 0.0
    %6529 = vmatprep.subr.mxu0 0.0
    %6530 = vmatpush1.msra.mxu0 0.0
    %6531 = vmatprep.mubr.f32.mxu0 0.0
    %6532 = vmatmul.mubr.f32.gmra.mrb[0].mxu0 %v6465
    %v6533 = vpop.f32.mrb[0].mxu0
    %v6534 = vadd.f32 %v6460, %v6533
    %v6535 = vpop.f32.mrb[0].mxu0
    %6536 = vdwg.mxu0
    %v6537 = vld [vmem:[%s10] sm:$0xff]
    %v6538 = vld [vmem:[%s10 + $0x8] sm:$0xff]
    %v6539 = vld [vmem:[%s11] sm:$0x1]
    %v6541 = vlaneseq
    %v6542 = vshrl.u32 %v6541, 7
    %v6543 = vsub.s32 0, %v6542
    %v6544 = vrot.slane %v6539, %v6543
    %vm6546 = vcmask 130048
    %v6548 = vsel %vm6546, %v6534, 0
    %6550 = vmatprep.subr.mxu0 0.0
    %6551 = vmatpush1.msra.mxu0 %v6537
    %6552 = vmatprep.subr.mxu0 0.0
    %6553 = vmatpush1.msra.mxu0 %v6538
    %6554 = vmatprep.subr.mxu0 0.0
    %6555 = vmatpush1.msra.mxu0 0.0
    %6556 = vmatprep.subr.mxu0 0.0
    %6557 = vmatpush1.msra.mxu0 0.0
    %6558 = vmatprep.subr.mxu0 0.0
    %6559 = vmatpush1.msra.mxu0 0.0
    %6560 = vmatprep.subr.mxu0 0.0
    %6561 = vmatpush1.msra.mxu0 0.0
    %6562 = vmatprep.subr.mxu0 0.0
    %6563 = vmatpush1.msra.mxu0 0.0
    %6564 = vmatprep.subr.mxu0 0.0
    %6565 = vmatpush1.msra.mxu0 0.0
    %6566 = vmatprep.subr.mxu0 0.0
    %6567 = vmatpush1.msra.mxu0 0.0
    %6568 = vmatprep.subr.mxu0 0.0
    %6569 = vmatpush1.msra.mxu0 0.0
    %6570 = vmatprep.subr.mxu0 0.0
    %6571 = vmatpush1.msra.mxu0 0.0
    %6572 = vmatprep.subr.mxu0 0.0
    %6573 = vmatpush1.msra.mxu0 0.0
    %6574 = vmatprep.subr.mxu0 0.0
    %6575 = vmatpush1.msra.mxu0 0.0
    %6576 = vmatprep.subr.mxu0 0.0
    %6577 = vmatpush1.msra.mxu0 0.0
    %6578 = vmatprep.subr.mxu0 0.0
    %6579 = vmatpush1.msra.mxu0 0.0
    %6580 = vmatprep.subr.mxu0 0.0
    %6581 = vmatpush1.msra.mxu0 0.0
    %6582 = vmatprep.subr.mxu0 0.0
    %6583 = vmatpush1.msra.mxu0 0.0
    %6584 = vmatprep.subr.mxu0 0.0
    %6585 = vmatpush1.msra.mxu0 0.0
    %6586 = vmatprep.subr.mxu0 0.0
    %6587 = vmatpush1.msra.mxu0 0.0
    %6588 = vmatprep.subr.mxu0 0.0
    %6589 = vmatpush1.msra.mxu0 0.0
    %6590 = vmatprep.subr.mxu0 0.0
    %6591 = vmatpush1.msra.mxu0 0.0
    %6592 = vmatprep.subr.mxu0 0.0
    %6593 = vmatpush1.msra.mxu0 0.0
    %6594 = vmatprep.subr.mxu0 0.0
    %6595 = vmatpush1.msra.mxu0 0.0
    %6596 = vmatprep.subr.mxu0 0.0
    %6597 = vmatpush1.msra.mxu0 0.0
    %6598 = vmatprep.subr.mxu0 0.0
    %6599 = vmatpush1.msra.mxu0 0.0
    %6600 = vmatprep.subr.mxu0 0.0
    %6601 = vmatpush1.msra.mxu0 0.0
    %6602 = vmatprep.subr.mxu0 0.0
    %6603 = vmatpush1.msra.mxu0 0.0
    %6604 = vmatprep.subr.mxu0 0.0
    %6605 = vmatpush1.msra.mxu0 0.0
    %6606 = vmatprep.subr.mxu0 0.0
    %6607 = vmatpush1.msra.mxu0 0.0
    %6608 = vmatprep.subr.mxu0 0.0
    %6609 = vmatpush1.msra.mxu0 0.0
    %6610 = vmatprep.subr.mxu0 0.0
    %6611 = vmatpush1.msra.mxu0 0.0
    %6612 = vmatprep.subr.mxu0 0.0
    %6613 = vmatpush1.msra.mxu0 0.0
    %6614 = vmatprep.mubr.f32.mxu0 0.0
    %6615 = vmatmul.mubr.f32.gmra.mrb[0].mxu0 %v6548
    %v6616 = vpop.f32.mrb[0].mxu0
    %v6617 = vadd.f32 %v6544, %v6616
    %v6618 = vpop.f32.mrb[0].mxu0
    %6619 = vdwg.mxu0
    %vm6620 = vcmask 17408
    %6621 = vst.msk [vmem:[#allocation2] sm:$0x3] %vm6620, %v6617
    // Predicated region
    $region50: #{forward.1} parent=1 // pred_check
      _
    $region51: #{forward.1} parent=1 // pred_check_branch
      %6623 = sbr.rel (0) target = $region53
    $region52: #{forward.1} parent=1 // pred_region
      %s6625 = ssub.s32 32, 32
      %6626 = vsyncadd [#allocation3], %s6625
      %s6628 = sshll.u32 [#allocation2], 4
      %s6629 = int_to_ptr.vmem [resolvable:$true] %s6628
      %6631 = dma.vmem_to_hbm [thread:$0]  %s6629, 32, %s12, [#allocation3]
    $region53: #{forward.1} parent=1 // pred_fallthru
      _
    // Predicated region
    $region54: #{forward.1} parent=1 // pred_check
      _
    $region55: #{forward.1} parent=1 // pred_check_branch
      %6633 = sbr.rel (0) target = $region57
    $region56: #{forward.1} parent=1 // pred_region
      _
    $region57: #{forward.1} parent=1 // pred_fallthru
      _
    // Predicated region
    $region58: #{forward.1} parent=1 // pred_check
      _
    $region59: #{forward.1} parent=1 // pred_check_branch
      %6635 = sbr.rel (0) target = $region61
    $region60: #{forward.1} parent=1 // pred_region
      %6636 = dma.done [#allocation3], 32
    $region61: #{forward.1} parent=1 // pred_fallthru
      _
    // Predicated region
    $region62: #{forward.1} parent=1 // pred_check
      _
    $region63: #{forward.1} parent=1 // pred_check_branch
      %6638 = sbr.rel (0) target = $region65
    $region64: #{forward.1} parent=1 // pred_region
      _
    $region65: #{forward.1} parent=1 // pred_fallthru
      _
    %6639 = vsyncpa [#allocation3], 1

</llo_original>
